<compile_context>
chip_gen: v7x
topology: tpu7x:2x2x1
jax: 0.10.0
libtpu: 0.0.40
codegen_flags: <defaults>
</compile_context>

<pallas_src>
import math

import jax
import jax.numpy as jnp
import numpy as np
from jax.experimental import pallas as pl
from jax.experimental.pallas import tpu as pltpu

BN_EPS = 1e-5


def _bn_rows(y, gb, eps=BN_EPS):
    """Training-mode BatchNorm on (R, C) f32 rows; single-pass batch stats.

    gb: (2, C) with row 0 = gamma, row 1 = beta.  Folds stats into one
    per-channel scale/shift and applies a single fused multiply-add.
    """
    n = y.shape[0]
    s1 = jnp.sum(y, axis=0, keepdims=True)
    s2 = jnp.sum(y * y, axis=0, keepdims=True)
    mu = s1 * (1.0 / n)
    var = jnp.maximum(s2 * (1.0 / n) - mu * mu, 0.0)
    scale = gb[0:1, :] * jax.lax.rsqrt(var + eps)
    shift = gb[1:2, :] - scale * mu
    return y * scale + shift


def bottleneck_kernel(x_ref, w1_ref, bn1_ref, w2_ref, bn2_ref,
                      w3_ref, bn3_ref, wc_ref, bnc_ref,
                      out_ref, pad_ref):
    B, H, W, Cin = x_ref.shape
    Cmid = w1_ref.shape[1]
    Cout = w3_ref.shape[1]
    R = B * H * W

    xb = x_ref[...].reshape(R, Cin)   # bf16 activations, channels on lanes

    # ---- main branch: 1x1 conv (bf16 MXU, f32 acc) + BN + ReLU ----
    # (conv bias omitted: cancelled exactly by BN's batch-mean subtraction)
    h = jnp.dot(xb, w1_ref[...], preferred_element_type=jnp.float32)
    h = jnp.maximum(_bn_rows(h, bn1_ref[...]), 0.0)

    # ---- 3x3 conv (stride 1, pad 1) as a single im2col matmul, K = 9*Cmid ----
    # Zero only the 1-pixel halo of the scratch, then store the interior once.
    pad_ref[:, 0:1, :, :] = jnp.zeros((B, 1, W + 2, Cmid), jnp.float32)
    pad_ref[:, H + 1:H + 2, :, :] = jnp.zeros((B, 1, W + 2, Cmid), jnp.float32)
    pad_ref[:, :, 0:1, :] = jnp.zeros((B, H + 2, 1, Cmid), jnp.float32)
    pad_ref[:, :, W + 1:W + 2, :] = jnp.zeros((B, H + 2, 1, Cmid), jnp.float32)
    pad_ref[:, 1:H + 1, 1:W + 1, :] = h.reshape(B, H, W, Cmid)
    padded = pad_ref[...]
    taps = [padded[:, dy:dy + H, dx:dx + W, :]
            for dy in range(3) for dx in range(3)]
    slab = jnp.concatenate(taps, axis=-1).reshape(R, 9 * Cmid).astype(jnp.bfloat16)
    h = jnp.dot(slab, w2_ref[...], preferred_element_type=jnp.float32)
    h = jnp.maximum(_bn_rows(h, bn2_ref[...]), 0.0)

    # ---- 1x1 conv + BN ----
    h = jnp.dot(h.astype(jnp.bfloat16), w3_ref[...],
                preferred_element_type=jnp.float32)
    h = _bn_rows(h, bn3_ref[...])

    # ---- shortcut branch (changedim) computed last: 1x1 conv + BN ----
    idn = jnp.dot(xb, wc_ref[...], preferred_element_type=jnp.float32)
    idn = _bn_rows(idn, bnc_ref[...])

    # ---- residual add + ReLU ----
    out_ref[...] = jnp.maximum(h + idn, 0.0).reshape(B, H, W, Cout)


def bottleneck_forward(x_nchw, params, down=False):
    # In this module, down=True puts stride 2 on the FIRST 1x1 conv and on the
    # shortcut 1x1 conv (both kernel 1, pad 0), so stride-2 is exactly
    # spatial subsampling followed by the stride-1 conv.
    if down:
        x_nchw = x_nchw[:, :, ::2, ::2]
    x = jnp.transpose(x_nchw, (0, 2, 3, 1)).astype(jnp.bfloat16)  # NCHW -> NHWC, bf16
    B, H, W, _ = x.shape
    Cmid = params['w1'].shape[1]
    Cout = params['w3'].shape[1]

    bf = lambda a: a.astype(jnp.bfloat16)
    w2_flat = bf(params['w2']).reshape(9 * Cmid, Cmid)   # rows: (tap, cin), matches slab

    args = (x,
            bf(params['w1']), params['bn1'],
            w2_flat, params['bn2'],
            bf(params['w3']), params['bn3'],
            bf(params['wc']), params['bnc'])

    vmem = pl.BlockSpec(memory_space=pltpu.MemorySpace.VMEM)
    out = pl.pallas_call(
        bottleneck_kernel,
        out_shape=jax.ShapeDtypeStruct((B, H, W, Cout), jnp.float32),
        in_specs=[vmem] * len(args),
        out_specs=vmem,
        scratch_shapes=[pltpu.VMEM((B, H + 2, W + 2, Cmid), jnp.float32)],
        compiler_params=pltpu.CompilerParams(vmem_limit_bytes=48 * 1024 * 1024),
    )(*args)
    # Kept for PyTorch NCHW I/O fidelity; in a full network, stay NHWC across blocks.
    return jnp.transpose(out, (0, 3, 1, 2))  # NHWC -> NCHW


def init_params(key, in_dim, mid_dim, out_dim):
    """Deterministic synthetic init (PyTorch-like uniform bounds).

    Conv weights pre-transposed for the kernel:
      1x1: (cin, cout); 3x3: (9, cin, cout) with flat index kh*3+kw.
    Conv biases (b1/b2/b3/bc) are kept for the reference model but unused by the
    kernel (mathematically cancelled by training-mode BatchNorm).
    BN params packed as (2, C): row 0 = gamma (ones), row 1 = beta (zeros).
    """
    keys = jax.random.split(key, 8)

    def conv_w(k, cin, cout, ksize=1):
        bound = 1.0 / math.sqrt(cin * ksize * ksize)
        shape = (ksize * ksize, cin, cout) if ksize > 1 else (cin, cout)
        return jax.random.uniform(k, shape, jnp.float32, -bound, bound)

    def conv_b(k, cin, cout, ksize=1):
        bound = 1.0 / math.sqrt(cin * ksize * ksize)
        return jax.random.uniform(k, (1, cout), jnp.float32, -bound, bound)

    def bn(c):
        return jnp.concatenate([jnp.ones((1, c), jnp.float32),
                                jnp.zeros((1, c), jnp.float32)], axis=0)

    return dict(
        w1=conv_w(keys[0], in_dim, mid_dim), b1=conv_b(keys[1], in_dim, mid_dim),
        bn1=bn(mid_dim),
        w2=conv_w(keys[2], mid_dim, mid_dim, 3), b2=conv_b(keys[3], mid_dim, mid_dim, 3),
        bn2=bn(mid_dim),
        w3=conv_w(keys[4], mid_dim, out_dim), b3=conv_b(keys[5], mid_dim, out_dim),
        bn3=bn(out_dim),
        wc=conv_w(keys[6], in_dim, out_dim), bc=conv_b(keys[7], in_dim, out_dim),
        bnc=bn(out_dim),
    )


def bottleneck_reference(x_nchw, p, down=False):
    """Pure-JAX reference (same math incl. conv biases; bf16 matmul operands with
    f32 accumulation, matching the kernel's rounding)."""
    if down:
        x_nchw = x_nchw[:, :, ::2, ::2]
    x = jnp.transpose(x_nchw, (0, 2, 3, 1)).astype(jnp.bfloat16)

    def bn(y, gb):
        mu = jnp.mean(y, axis=(0, 1, 2), keepdims=True)
        var = jnp.mean((y - mu) ** 2, axis=(0, 1, 2), keepdims=True)
        return gb[0] * (y - mu) * jax.lax.rsqrt(var + BN_EPS) + gb[1]

    def conv1x1(z, w, b):
        y = jnp.einsum('bhwc,cd->bhwd', z.astype(jnp.bfloat16),
                       w.astype(jnp.bfloat16),
                       preferred_element_type=jnp.float32)
        return y + b[0]

    cmid = p['w1'].shape[1]
    h = jax.nn.relu(bn(conv1x1(x, p['w1'], p['b1']), p['bn1']))
    w2 = p['w2'].reshape(3, 3, cmid, cmid)
    h = jax.lax.conv_general_dilated(
        h.astype(jnp.bfloat16), w2.astype(jnp.bfloat16),
        window_strides=(1, 1), padding='SAME',
        dimension_numbers=('NHWC', 'HWIO', 'NHWC'),
        preferred_element_type=jnp.float32) + p['b2'][0]
    h = jax.nn.relu(bn(h, p['bn2']))
    h = bn(conv1x1(h, p['w3'], p['b3']), p['bn3'])
    idn = bn(conv1x1(x, p['wc'], p['bc']), p['bnc'])
    y = jax.nn.relu(h + idn)
    return jnp.transpose(y, (0, 3, 1, 2))


if __name__ == "__main__":
    key = jax.random.PRNGKey(0)
    kx, kp = jax.random.split(key)

    in_dim, mid_dim, out_dim = 4, 4, 8
    B, H, W = 2, 16, 16

    x = jax.random.normal(kx, (B, in_dim, H, W), jnp.float32)
    params = init_params(kp, in_dim, mid_dim, out_dim)

    # down=False path
    y = jax.block_until_ready(bottleneck_forward(x, params, down=False))
    assert y.shape == (B, out_dim, H, W)
    y_ref = bottleneck_reference(x, params, down=False)
    np.testing.assert_allclose(np.asarray(y), np.asarray(y_ref), atol=5e-3, rtol=5e-3)

    # down=True path (stride-2 1x1 convs on conv1 and the shortcut)
    yd = jax.block_until_ready(bottleneck_forward(x, params, down=True))
    assert yd.shape == (B, out_dim, H // 2, W // 2)
    yd_ref = bottleneck_reference(x, params, down=True)
    np.testing.assert_allclose(np.asarray(yd), np.asarray(yd_ref), atol=5e-3, rtol=5e-3)

    # TODO(synk): BatchNorm running-stat (buffer) updates are training-state side
    # effects with no effect on the forward output; not modeled.
    print("KERNEL_OK")
</pallas_src>

<mosaic_0001>
module attributes {stable_mosaic.version = 11 : i64} {
  func.func @bottleneck_kernel(%arg0: memref<2x16x16x4xbf16, #tpu.memory_space<vmem>>, %arg1: memref<4x4xbf16, #tpu.memory_space<vmem>>, %arg2: memref<2x4xf32, #tpu.memory_space<vmem>>, %arg3: memref<36x4xbf16, #tpu.memory_space<vmem>>, %arg4: memref<2x4xf32, #tpu.memory_space<vmem>>, %arg5: memref<4x8xbf16, #tpu.memory_space<vmem>>, %arg6: memref<2x8xf32, #tpu.memory_space<vmem>>, %arg7: memref<4x8xbf16, #tpu.memory_space<vmem>>, %arg8: memref<2x8xf32, #tpu.memory_space<vmem>>, %arg9: memref<2x16x16x8xf32, #tpu.memory_space<vmem>>, %arg10: memref<2x18x18x4xf32, #tpu.memory_space<vmem>>) attributes {dimension_semantics = [], scalar_prefetch = 0 : i64, scratch_operands = 1 : i64, tpu.core_type = #tpu.core_type<tc>} {
    %c0 = arith.constant 0 : index
    %c0_0 = arith.constant 0 : index
    %c0_1 = arith.constant 0 : index
    %c0_2 = arith.constant 0 : index
    %0 = vector.load %arg0[%c0, %c0_0, %c0_1, %c0_2] : memref<2x16x16x4xbf16, #tpu.memory_space<vmem>>, vector<2x16x16x4xbf16>
    %1 = vector.shape_cast %0 : vector<2x16x16x4xbf16> to vector<512x4xbf16>
    %c0_3 = arith.constant 0 : index
    %c0_4 = arith.constant 0 : index
    %2 = vector.load %arg1[%c0_3, %c0_4] : memref<4x4xbf16, #tpu.memory_space<vmem>>, vector<4x4xbf16>
    %cst = arith.constant dense<0.000000e+00> : vector<512x4xf32>
    %3 = tpu.matmul %1, %2, %cst {dimension_numbers = #tpu.dot_dimension_numbers<[1], [0], [0], [1], [0, 0, 1, 1], [], []>} : vector<512x4xbf16>, vector<4x4xbf16>, vector<512x4xf32> -> vector<512x4xf32>
    %c0_5 = arith.constant 0 : index
    %c0_6 = arith.constant 0 : index
    %4 = vector.load %arg2[%c0_5, %c0_6] : memref<2x4xf32, #tpu.memory_space<vmem>>, vector<2x4xf32>
    %cst_7 = arith.constant dense<0.000000e+00> : vector<4xf32>
    %5 = vector.multi_reduction <add>, %3, %cst_7 [0] : vector<512x4xf32> to vector<4xf32>
    %6 = vector.shape_cast %5 : vector<4xf32> to vector<1x4xf32>
    %7 = arith.mulf %3, %3 : vector<512x4xf32>
    %cst_8 = arith.constant dense<0.000000e+00> : vector<4xf32>
    %8 = vector.multi_reduction <add>, %7, %cst_8 [0] : vector<512x4xf32> to vector<4xf32>
    %9 = vector.shape_cast %8 : vector<4xf32> to vector<1x4xf32>
    %cst_9 = arith.constant 0.001953125 : f32
    %10 = vector.broadcast %cst_9 : f32 to vector<1x4xf32>
    %11 = arith.mulf %6, %10 : vector<1x4xf32>
    %cst_10 = arith.constant 0.001953125 : f32
    %12 = vector.broadcast %cst_10 : f32 to vector<1x4xf32>
    %13 = arith.mulf %9, %12 : vector<1x4xf32>
    %14 = arith.mulf %11, %11 : vector<1x4xf32>
    %15 = arith.subf %13, %14 : vector<1x4xf32>
    %cst_11 = arith.constant 0.000000e+00 : f32
    %16 = vector.broadcast %cst_11 : f32 to vector<1x4xf32>
    %17 = arith.maximumf %15, %16 : vector<1x4xf32>
    %18 = vector.extract_strided_slice %4 {offsets = [0, 0], sizes = [1, 4], strides = [1, 1]} : vector<2x4xf32> to vector<1x4xf32>
    %cst_12 = arith.constant 9.99999974E-6 : f32
    %19 = vector.broadcast %cst_12 : f32 to vector<1x4xf32>
    %20 = arith.addf %17, %19 : vector<1x4xf32>
    %21 = math.rsqrt %20 : vector<1x4xf32>
    %22 = arith.mulf %18, %21 : vector<1x4xf32>
    %23 = vector.extract_strided_slice %4 {offsets = [1, 0], sizes = [1, 4], strides = [1, 1]} : vector<2x4xf32> to vector<1x4xf32>
    %24 = arith.mulf %22, %11 : vector<1x4xf32>
    %25 = arith.subf %23, %24 : vector<1x4xf32>
    %26 = vector.broadcast %22 : vector<1x4xf32> to vector<512x4xf32>
    %27 = arith.mulf %3, %26 : vector<512x4xf32>
    %28 = vector.broadcast %25 : vector<1x4xf32> to vector<512x4xf32>
    %29 = arith.addf %27, %28 : vector<512x4xf32>
    %cst_13 = arith.constant 0.000000e+00 : f32
    %30 = vector.broadcast %cst_13 : f32 to vector<512x4xf32>
    %31 = arith.maximumf %29, %30 : vector<512x4xf32>
    %cst_14 = arith.constant 0.000000e+00 : f32
    %32 = vector.broadcast %cst_14 : f32 to vector<2x1x18x4xf32>
    %c0_15 = arith.constant 0 : index
    %c0_16 = arith.constant 0 : index
    %c0_17 = arith.constant 0 : index
    %c0_18 = arith.constant 0 : index
    %33 = vector.load %arg10[%c0_15, %c0_16, %c0_17, %c0_18] : memref<2x18x18x4xf32, #tpu.memory_space<vmem>>, vector<2x1x18x4xf32>
    tpu.vector_store %arg10[%c0_15, %c0_16, %c0_17, %c0_18], %32 {strides = array<i32>} : memref<2x18x18x4xf32, #tpu.memory_space<vmem>>, vector<2x1x18x4xf32>,
    %cst_19 = arith.constant 0.000000e+00 : f32
    %34 = vector.broadcast %cst_19 : f32 to vector<2x1x18x4xf32>
    %c0_20 = arith.constant 0 : index
    %c17 = arith.constant 17 : index
    %c0_21 = arith.constant 0 : index
    %c0_22 = arith.constant 0 : index
    %35 = vector.load %arg10[%c0_20, %c17, %c0_21, %c0_22] : memref<2x18x18x4xf32, #tpu.memory_space<vmem>>, vector<2x1x18x4xf32>
    tpu.vector_store %arg10[%c0_20, %c17, %c0_21, %c0_22], %34 {strides = array<i32>} : memref<2x18x18x4xf32, #tpu.memory_space<vmem>>, vector<2x1x18x4xf32>,
    %cst_23 = arith.constant 0.000000e+00 : f32
    %36 = vector.broadcast %cst_23 : f32 to vector<2x18x1x4xf32>
    %c0_24 = arith.constant 0 : index
    %c0_25 = arith.constant 0 : index
    %c0_26 = arith.constant 0 : index
    %c0_27 = arith.constant 0 : index
    %37 = vector.load %arg10[%c0_24, %c0_25, %c0_26, %c0_27] : memref<2x18x18x4xf32, #tpu.memory_space<vmem>>, vector<2x18x1x4xf32>
    tpu.vector_store %arg10[%c0_24, %c0_25, %c0_26, %c0_27], %36 {strides = array<i32>} : memref<2x18x18x4xf32, #tpu.memory_space<vmem>>, vector<2x18x1x4xf32>,
    %cst_28 = arith.constant 0.000000e+00 : f32
    %38 = vector.broadcast %cst_28 : f32 to vector<2x18x1x4xf32>
    %c0_29 = arith.constant 0 : index
    %c0_30 = arith.constant 0 : index
    %c17_31 = arith.constant 17 : index
    %c0_32 = arith.constant 0 : index
    %39 = vector.load %arg10[%c0_29, %c0_30, %c17_31, %c0_32] : memref<2x18x18x4xf32, #tpu.memory_space<vmem>>, vector<2x18x1x4xf32>
    tpu.vector_store %arg10[%c0_29, %c0_30, %c17_31, %c0_32], %38 {strides = array<i32>} : memref<2x18x18x4xf32, #tpu.memory_space<vmem>>, vector<2x18x1x4xf32>,
    %40 = vector.shape_cast %31 : vector<512x4xf32> to vector<2x16x16x4xf32>
    %c0_33 = arith.constant 0 : index
    %c1 = arith.constant 1 : index
    %c1_34 = arith.constant 1 : index
    %c0_35 = arith.constant 0 : index
    %41 = vector.load %arg10[%c0_33, %c1, %c1_34, %c0_35] : memref<2x18x18x4xf32, #tpu.memory_space<vmem>>, vector<2x16x16x4xf32>
    tpu.vector_store %arg10[%c0_33, %c1, %c1_34, %c0_35], %40 {strides = array<i32>} : memref<2x18x18x4xf32, #tpu.memory_space<vmem>>, vector<2x16x16x4xf32>,
    %c0_36 = arith.constant 0 : index
    %c0_37 = arith.constant 0 : index
    %c0_38 = arith.constant 0 : index
    %c0_39 = arith.constant 0 : index
    %42 = vector.load %arg10[%c0_36, %c0_37, %c0_38, %c0_39] : memref<2x18x18x4xf32, #tpu.memory_space<vmem>>, vector<2x18x18x4xf32>
    %43 = vector.extract_strided_slice %42 {offsets = [0, 0, 0, 0], sizes = [2, 16, 16, 4], strides = [1, 1, 1, 1]} : vector<2x18x18x4xf32> to vector<2x16x16x4xf32>
    %44 = vector.extract_strided_slice %42 {offsets = [0, 0, 1, 0], sizes = [2, 16, 16, 4], strides = [1, 1, 1, 1]} : vector<2x18x18x4xf32> to vector<2x16x16x4xf32>
    %45 = vector.extract_strided_slice %42 {offsets = [0, 0, 2, 0], sizes = [2, 16, 16, 4], strides = [1, 1, 1, 1]} : vector<2x18x18x4xf32> to vector<2x16x16x4xf32>
    %46 = vector.extract_strided_slice %42 {offsets = [0, 1, 0, 0], sizes = [2, 16, 16, 4], strides = [1, 1, 1, 1]} : vector<2x18x18x4xf32> to vector<2x16x16x4xf32>
    %47 = vector.extract_strided_slice %42 {offsets = [0, 1, 1, 0], sizes = [2, 16, 16, 4], strides = [1, 1, 1, 1]} : vector<2x18x18x4xf32> to vector<2x16x16x4xf32>
    %48 = vector.extract_strided_slice %42 {offsets = [0, 1, 2, 0], sizes = [2, 16, 16, 4], strides = [1, 1, 1, 1]} : vector<2x18x18x4xf32> to vector<2x16x16x4xf32>
    %49 = vector.extract_strided_slice %42 {offsets = [0, 2, 0, 0], sizes = [2, 16, 16, 4], strides = [1, 1, 1, 1]} : vector<2x18x18x4xf32> to vector<2x16x16x4xf32>
    %50 = vector.extract_strided_slice %42 {offsets = [0, 2, 1, 0], sizes = [2, 16, 16, 4], strides = [1, 1, 1, 1]} : vector<2x18x18x4xf32> to vector<2x16x16x4xf32>
    %51 = vector.extract_strided_slice %42 {offsets = [0, 2, 2, 0], sizes = [2, 16, 16, 4], strides = [1, 1, 1, 1]} : vector<2x18x18x4xf32> to vector<2x16x16x4xf32>
    %52 = tpu.concatenate %43, %44, %45, %46, %47, %48, %49, %50, %51 in 3 : vector<2x16x16x4xf32>, vector<2x16x16x4xf32>, vector<2x16x16x4xf32>, vector<2x16x16x4xf32>, vector<2x16x16x4xf32>, vector<2x16x16x4xf32>, vector<2x16x16x4xf32>, vector<2x16x16x4xf32>, vector<2x16x16x4xf32> -> vector<2x16x16x36xf32>
    %53 = vector.shape_cast %52 : vector<2x16x16x36xf32> to vector<512x36xf32>
    %54 = arith.truncf %53 : vector<512x36xf32> to vector<512x36xbf16>
    %c0_40 = arith.constant 0 : index
    %c0_41 = arith.constant 0 : index
    %55 = vector.load %arg3[%c0_40, %c0_41] : memref<36x4xbf16, #tpu.memory_space<vmem>>, vector<36x4xbf16>
    %cst_42 = arith.constant dense<0.000000e+00> : vector<512x4xf32>
    %56 = tpu.matmul %54, %55, %cst_42 {dimension_numbers = #tpu.dot_dimension_numbers<[1], [0], [0], [1], [0, 0, 1, 1], [], []>} : vector<512x36xbf16>, vector<36x4xbf16>, vector<512x4xf32> -> vector<512x4xf32>
    %c0_43 = arith.constant 0 : index
    %c0_44 = arith.constant 0 : index
    %57 = vector.load %arg4[%c0_43, %c0_44] : memref<2x4xf32, #tpu.memory_space<vmem>>, vector<2x4xf32>
    %cst_45 = arith.constant dense<0.000000e+00> : vector<4xf32>
    %58 = vector.multi_reduction <add>, %56, %cst_45 [0] : vector<512x4xf32> to vector<4xf32>
    %59 = vector.shape_cast %58 : vector<4xf32> to vector<1x4xf32>
    %60 = arith.mulf %56, %56 : vector<512x4xf32>
    %cst_46 = arith.constant dense<0.000000e+00> : vector<4xf32>
    %61 = vector.multi_reduction <add>, %60, %cst_46 [0] : vector<512x4xf32> to vector<4xf32>
    %62 = vector.shape_cast %61 : vector<4xf32> to vector<1x4xf32>
    %cst_47 = arith.constant 0.001953125 : f32
    %63 = vector.broadcast %cst_47 : f32 to vector<1x4xf32>
    %64 = arith.mulf %59, %63 : vector<1x4xf32>
    %cst_48 = arith.constant 0.001953125 : f32
    %65 = vector.broadcast %cst_48 : f32 to vector<1x4xf32>
    %66 = arith.mulf %62, %65 : vector<1x4xf32>
    %67 = arith.mulf %64, %64 : vector<1x4xf32>
    %68 = arith.subf %66, %67 : vector<1x4xf32>
    %cst_49 = arith.constant 0.000000e+00 : f32
    %69 = vector.broadcast %cst_49 : f32 to vector<1x4xf32>
    %70 = arith.maximumf %68, %69 : vector<1x4xf32>
    %71 = vector.extract_strided_slice %57 {offsets = [0, 0], sizes = [1, 4], strides = [1, 1]} : vector<2x4xf32> to vector<1x4xf32>
    %cst_50 = arith.constant 9.99999974E-6 : f32
    %72 = vector.broadcast %cst_50 : f32 to vector<1x4xf32>
    %73 = arith.addf %70, %72 : vector<1x4xf32>
    %74 = math.rsqrt %73 : vector<1x4xf32>
    %75 = arith.mulf %71, %74 : vector<1x4xf32>
    %76 = vector.extract_strided_slice %57 {offsets = [1, 0], sizes = [1, 4], strides = [1, 1]} : vector<2x4xf32> to vector<1x4xf32>
    %77 = arith.mulf %75, %64 : vector<1x4xf32>
    %78 = arith.subf %76, %77 : vector<1x4xf32>
    %79 = vector.broadcast %75 : vector<1x4xf32> to vector<512x4xf32>
    %80 = arith.mulf %56, %79 : vector<512x4xf32>
    %81 = vector.broadcast %78 : vector<1x4xf32> to vector<512x4xf32>
    %82 = arith.addf %80, %81 : vector<512x4xf32>
    %cst_51 = arith.constant 0.000000e+00 : f32
    %83 = vector.broadcast %cst_51 : f32 to vector<512x4xf32>
    %84 = arith.maximumf %82, %83 : vector<512x4xf32>
    %85 = arith.truncf %84 : vector<512x4xf32> to vector<512x4xbf16>
    %c0_52 = arith.constant 0 : index
    %c0_53 = arith.constant 0 : index
    %86 = vector.load %arg5[%c0_52, %c0_53] : memref<4x8xbf16, #tpu.memory_space<vmem>>, vector<4x8xbf16>
    %cst_54 = arith.constant dense<0.000000e+00> : vector<512x8xf32>
    %87 = tpu.matmul %85, %86, %cst_54 {dimension_numbers = #tpu.dot_dimension_numbers<[1], [0], [0], [1], [0, 0, 1, 1], [], []>} : vector<512x4xbf16>, vector<4x8xbf16>, vector<512x8xf32> -> vector<512x8xf32>
    %c0_55 = arith.constant 0 : index
    %c0_56 = arith.constant 0 : index
    %88 = vector.load %arg6[%c0_55, %c0_56] : memref<2x8xf32, #tpu.memory_space<vmem>>, vector<2x8xf32>
    %cst_57 = arith.constant dense<0.000000e+00> : vector<8xf32>
    %89 = vector.multi_reduction <add>, %87, %cst_57 [0] : vector<512x8xf32> to vector<8xf32>
    %90 = vector.shape_cast %89 : vector<8xf32> to vector<1x8xf32>
    %91 = arith.mulf %87, %87 : vector<512x8xf32>
    %cst_58 = arith.constant dense<0.000000e+00> : vector<8xf32>
    %92 = vector.multi_reduction <add>, %91, %cst_58 [0] : vector<512x8xf32> to vector<8xf32>
    %93 = vector.shape_cast %92 : vector<8xf32> to vector<1x8xf32>
    %cst_59 = arith.constant 0.001953125 : f32
    %94 = vector.broadcast %cst_59 : f32 to vector<1x8xf32>
    %95 = arith.mulf %90, %94 : vector<1x8xf32>
    %cst_60 = arith.constant 0.001953125 : f32
    %96 = vector.broadcast %cst_60 : f32 to vector<1x8xf32>
    %97 = arith.mulf %93, %96 : vector<1x8xf32>
    %98 = arith.mulf %95, %95 : vector<1x8xf32>
    %99 = arith.subf %97, %98 : vector<1x8xf32>
    %cst_61 = arith.constant 0.000000e+00 : f32
    %100 = vector.broadcast %cst_61 : f32 to vector<1x8xf32>
    %101 = arith.maximumf %99, %100 : vector<1x8xf32>
    %102 = vector.extract_strided_slice %88 {offsets = [0, 0], sizes = [1, 8], strides = [1, 1]} : vector<2x8xf32> to vector<1x8xf32>
    %cst_62 = arith.constant 9.99999974E-6 : f32
    %103 = vector.broadcast %cst_62 : f32 to vector<1x8xf32>
    %104 = arith.addf %101, %103 : vector<1x8xf32>
    %105 = math.rsqrt %104 : vector<1x8xf32>
    %106 = arith.mulf %102, %105 : vector<1x8xf32>
    %107 = vector.extract_strided_slice %88 {offsets = [1, 0], sizes = [1, 8], strides = [1, 1]} : vector<2x8xf32> to vector<1x8xf32>
    %108 = arith.mulf %106, %95 : vector<1x8xf32>
    %109 = arith.subf %107, %108 : vector<1x8xf32>
    %110 = vector.broadcast %106 : vector<1x8xf32> to vector<512x8xf32>
    %111 = arith.mulf %87, %110 : vector<512x8xf32>
    %112 = vector.broadcast %109 : vector<1x8xf32> to vector<512x8xf32>
    %113 = arith.addf %111, %112 : vector<512x8xf32>
    %c0_63 = arith.constant 0 : index
    %c0_64 = arith.constant 0 : index
    %114 = vector.load %arg7[%c0_63, %c0_64] : memref<4x8xbf16, #tpu.memory_space<vmem>>, vector<4x8xbf16>
    %cst_65 = arith.constant dense<0.000000e+00> : vector<512x8xf32>
    %115 = tpu.matmul %1, %114, %cst_65 {dimension_numbers = #tpu.dot_dimension_numbers<[1], [0], [0], [1], [0, 0, 1, 1], [], []>} : vector<512x4xbf16>, vector<4x8xbf16>, vector<512x8xf32> -> vector<512x8xf32>
    %c0_66 = arith.constant 0 : index
    %c0_67 = arith.constant 0 : index
    %116 = vector.load %arg8[%c0_66, %c0_67] : memref<2x8xf32, #tpu.memory_space<vmem>>, vector<2x8xf32>
    %cst_68 = arith.constant dense<0.000000e+00> : vector<8xf32>
    %117 = vector.multi_reduction <add>, %115, %cst_68 [0] : vector<512x8xf32> to vector<8xf32>
    %118 = vector.shape_cast %117 : vector<8xf32> to vector<1x8xf32>
    %119 = arith.mulf %115, %115 : vector<512x8xf32>
    %cst_69 = arith.constant dense<0.000000e+00> : vector<8xf32>
    %120 = vector.multi_reduction <add>, %119, %cst_69 [0] : vector<512x8xf32> to vector<8xf32>
    %121 = vector.shape_cast %120 : vector<8xf32> to vector<1x8xf32>
    %cst_70 = arith.constant 0.001953125 : f32
    %122 = vector.broadcast %cst_70 : f32 to vector<1x8xf32>
    %123 = arith.mulf %118, %122 : vector<1x8xf32>
    %cst_71 = arith.constant 0.001953125 : f32
    %124 = vector.broadcast %cst_71 : f32 to vector<1x8xf32>
    %125 = arith.mulf %121, %124 : vector<1x8xf32>
    %126 = arith.mulf %123, %123 : vector<1x8xf32>
    %127 = arith.subf %125, %126 : vector<1x8xf32>
    %cst_72 = arith.constant 0.000000e+00 : f32
    %128 = vector.broadcast %cst_72 : f32 to vector<1x8xf32>
    %129 = arith.maximumf %127, %128 : vector<1x8xf32>
    %130 = vector.extract_strided_slice %116 {offsets = [0, 0], sizes = [1, 8], strides = [1, 1]} : vector<2x8xf32> to vector<1x8xf32>
    %cst_73 = arith.constant 9.99999974E-6 : f32
    %131 = vector.broadcast %cst_73 : f32 to vector<1x8xf32>
    %132 = arith.addf %129, %131 : vector<1x8xf32>
    %133 = math.rsqrt %132 : vector<1x8xf32>
    %134 = arith.mulf %130, %133 : vector<1x8xf32>
    %135 = vector.extract_strided_slice %116 {offsets = [1, 0], sizes = [1, 8], strides = [1, 1]} : vector<2x8xf32> to vector<1x8xf32>
    %136 = arith.mulf %134, %123 : vector<1x8xf32>
    %137 = arith.subf %135, %136 : vector<1x8xf32>
    %138 = vector.broadcast %134 : vector<1x8xf32> to vector<512x8xf32>
    %139 = arith.mulf %115, %138 : vector<512x8xf32>
    %140 = vector.broadcast %137 : vector<1x8xf32> to vector<512x8xf32>
    %141 = arith.addf %139, %140 : vector<512x8xf32>
    %142 = arith.addf %113, %141 : vector<512x8xf32>
    %cst_74 = arith.constant 0.000000e+00 : f32
    %143 = vector.broadcast %cst_74 : f32 to vector<512x8xf32>
    %144 = arith.maximumf %142, %143 : vector<512x8xf32>
    %145 = vector.shape_cast %144 : vector<512x8xf32> to vector<2x16x16x8xf32>
    %c0_75 = arith.constant 0 : index
    %c0_76 = arith.constant 0 : index
    %c0_77 = arith.constant 0 : index
    %c0_78 = arith.constant 0 : index
    %146 = vector.load %arg9[%c0_75, %c0_76, %c0_77, %c0_78] : memref<2x16x16x8xf32, #tpu.memory_space<vmem>>, vector<2x16x16x8xf32>
    tpu.vector_store %arg9[%c0_75, %c0_76, %c0_77, %c0_78], %145 {strides = array<i32>} : memref<2x16x16x8xf32, #tpu.memory_space<vmem>>, vector<2x16x16x8xf32>,
    return
  }
}

</mosaic_0001>

<llo_original>
// kernel: tpu_custom_call.1
$region0: #{tpu_custom_call.1}
  #allocation0 [shape = 'u32[]', space=smem, size = 0x4, offset = 0x4, fixed_abs, tag = 'smem constant byte address 0x4 - core index']
  #allocation1 [shape = 'u32[144,128]{1,0:T(1,128)}', space=vmem, size = 0x12000, scoped, tag = 'internal scratch']
  #allocation2 [shape = 'f32[2,18,18,4]{3,2,1,0:T(8,128)}', space=vmem, size = 0x6c000, scoped, tag = 'scratch operand']
  %s0 = inlined_call_operand.vmem [shape: bf16[2,16,16,4], index: 0, kind: input, shape index: {}]
  %s1 = inlined_call_operand.vmem [shape: bf16[4,4], index: 1, kind: input, shape index: {}]
  %s2 = inlined_call_operand.vmem [shape: f32[2,4], index: 2, kind: input, shape index: {}]
  %s3 = inlined_call_operand.vmem [shape: bf16[36,4], index: 3, kind: input, shape index: {}]
  %s4 = inlined_call_operand.vmem [shape: f32[2,4], index: 4, kind: input, shape index: {}]
  %s5 = inlined_call_operand.vmem [shape: bf16[4,8], index: 5, kind: input, shape index: {}]
  %s6 = inlined_call_operand.vmem [shape: f32[2,8], index: 6, kind: input, shape index: {}]
  %s7 = inlined_call_operand.vmem [shape: bf16[4,8], index: 7, kind: input, shape index: {}]
  %s8 = inlined_call_operand.vmem [shape: f32[2,8], index: 8, kind: input, shape index: {}]
  %s9 = inlined_call_operand.vmem [shape: f32[2,16,16,8], index: 9, kind: output, shape index: {}]
  %s10 = sld [smem:[#allocation0]]
  $region46: #{tpu_custom_call.1} parent=0
    _
  %s12 = ssub.s32 1, %s10
  %s13 = scalar_select 0, %s12, %s10
  // Predicated region
  $region2: #{tpu_custom_call.1} parent=0 // pred_check
    _
  $region3: #{tpu_custom_call.1} parent=0 // pred_check_branch
    %15 = sbr.rel (0) target = $region5
  $region4: #{tpu_custom_call.1} parent=0 // pred_region
    _
  $region5: #{tpu_custom_call.1} parent=0 // pred_fallthru
    _
  // Predicated region
  $region6: #{tpu_custom_call.1} parent=0 // pred_check
    _
  $region7: #{tpu_custom_call.1} parent=0 // pred_check_branch
    %17 = sbr.rel (0) target = $region9
  $region8: #{tpu_custom_call.1} parent=0 // pred_region
    _
  $region9: #{tpu_custom_call.1} parent=0 // pred_fallthru
    _
  // Predicated region
  $region10: #{tpu_custom_call.1} parent=0 // pred_check
    _
  $region11: #{tpu_custom_call.1} parent=0 // pred_check_branch
    %19 = sbr.rel (0) target = $region13
  $region12: #{tpu_custom_call.1} parent=0 // pred_region
    _
  $region13: #{tpu_custom_call.1} parent=0 // pred_fallthru
    _
  // Predicated region
  $region14: #{tpu_custom_call.1} parent=0 // pred_check
    _
  $region15: #{tpu_custom_call.1} parent=0 // pred_check_branch
    %21 = sbr.rel (0) target = $region17
  $region16: #{tpu_custom_call.1} parent=0 // pred_region
    _
  $region17: #{tpu_custom_call.1} parent=0 // pred_fallthru
    _
  // Predicated region
  $region18: #{tpu_custom_call.1} parent=0 // pred_check
    _
  $region19: #{tpu_custom_call.1} parent=0 // pred_check_branch
    %23 = sbr.rel (0) target = $region21
  $region20: #{tpu_custom_call.1} parent=0 // pred_region
    _
  $region21: #{tpu_custom_call.1} parent=0 // pred_fallthru
    _
  // Predicated region
  $region22: #{tpu_custom_call.1} parent=0 // pred_check
    _
  $region23: #{tpu_custom_call.1} parent=0 // pred_check_branch
    %25 = sbr.rel (0) target = $region25
  $region24: #{tpu_custom_call.1} parent=0 // pred_region
    _
  $region25: #{tpu_custom_call.1} parent=0 // pred_fallthru
    _
  // Predicated region
  $region26: #{tpu_custom_call.1} parent=0 // pred_check
    _
  $region27: #{tpu_custom_call.1} parent=0 // pred_check_branch
    %27 = sbr.rel (0) target = $region29
  $region28: #{tpu_custom_call.1} parent=0 // pred_region
    _
  $region29: #{tpu_custom_call.1} parent=0 // pred_fallthru
    _
  // Predicated region
  $region30: #{tpu_custom_call.1} parent=0 // pred_check
    _
  $region31: #{tpu_custom_call.1} parent=0 // pred_check_branch
    %29 = sbr.rel (0) target = $region33
  $region32: #{tpu_custom_call.1} parent=0 // pred_region
    _
  $region33: #{tpu_custom_call.1} parent=0 // pred_fallthru
    _
  // Predicated region
  $region34: #{tpu_custom_call.1} parent=0 // pred_check
    _
  $region35: #{tpu_custom_call.1} parent=0 // pred_check_branch
    %31 = sbr.rel (0) target = $region37
  $region36: #{tpu_custom_call.1} parent=0 // pred_region
    _
  $region37: #{tpu_custom_call.1} parent=0 // pred_fallthru
    _
  %v33 = vld [vmem:[%s0] sm:$0xf]
  %v34 = vld [vmem:[%s0 + $0x4] sm:$0xf]
  %v35 = vld [vmem:[%s0 + $0x8] sm:$0xf]
  %v36 = vld [vmem:[%s0 + $0xc] sm:$0xf]
  %v37 = vld [vmem:[%s0 + $0x10] sm:$0xf]
  %v38 = vld [vmem:[%s0 + $0x14] sm:$0xf]
  %v39 = vld [vmem:[%s0 + $0x18] sm:$0xf]
  %v40 = vld [vmem:[%s0 + $0x1c] sm:$0xf]
  %v41 = vld [vmem:[%s0 + $0x20] sm:$0xf]
  %v42 = vld [vmem:[%s0 + $0x24] sm:$0xf]
  %v43 = vld [vmem:[%s0 + $0x28] sm:$0xf]
  %v44 = vld [vmem:[%s0 + $0x2c] sm:$0xf]
  %v45 = vld [vmem:[%s0 + $0x30] sm:$0xf]
  %v46 = vld [vmem:[%s0 + $0x34] sm:$0xf]
  %v47 = vld [vmem:[%s0 + $0x38] sm:$0xf]
  %v48 = vld [vmem:[%s0 + $0x3c] sm:$0xf]
  %v49 = vld [vmem:[%s0 + $0x40] sm:$0xf]
  %v50 = vld [vmem:[%s0 + $0x44] sm:$0xf]
  %v51 = vld [vmem:[%s0 + $0x48] sm:$0xf]
  %v52 = vld [vmem:[%s0 + $0x4c] sm:$0xf]
  %v53 = vld [vmem:[%s0 + $0x50] sm:$0xf]
  %v54 = vld [vmem:[%s0 + $0x54] sm:$0xf]
  %v55 = vld [vmem:[%s0 + $0x58] sm:$0xf]
  %v56 = vld [vmem:[%s0 + $0x5c] sm:$0xf]
  %v57 = vld [vmem:[%s0 + $0x60] sm:$0xf]
  %v58 = vld [vmem:[%s0 + $0x64] sm:$0xf]
  %v59 = vld [vmem:[%s0 + $0x68] sm:$0xf]
  %v60 = vld [vmem:[%s0 + $0x6c] sm:$0xf]
  %v61 = vld [vmem:[%s0 + $0x70] sm:$0xf]
  %v62 = vld [vmem:[%s0 + $0x74] sm:$0xf]
  %v63 = vld [vmem:[%s0 + $0x78] sm:$0xf]
  %v64 = vld [vmem:[%s0 + $0x7c] sm:$0xf]
  %v65 = vld [vmem:[%s0 + $0x80] sm:$0xf]
  %v66 = vld [vmem:[%s0 + $0x84] sm:$0xf]
  %v67 = vld [vmem:[%s0 + $0x88] sm:$0xf]
  %v68 = vld [vmem:[%s0 + $0x8c] sm:$0xf]
  %v69 = vld [vmem:[%s0 + $0x90] sm:$0xf]
  %v70 = vld [vmem:[%s0 + $0x94] sm:$0xf]
  %v71 = vld [vmem:[%s0 + $0x98] sm:$0xf]
  %v72 = vld [vmem:[%s0 + $0x9c] sm:$0xf]
  %v73 = vld [vmem:[%s0 + $0xa0] sm:$0xf]
  %v74 = vld [vmem:[%s0 + $0xa4] sm:$0xf]
  %v75 = vld [vmem:[%s0 + $0xa8] sm:$0xf]
  %v76 = vld [vmem:[%s0 + $0xac] sm:$0xf]
  %v77 = vld [vmem:[%s0 + $0xb0] sm:$0xf]
  %v78 = vld [vmem:[%s0 + $0xb4] sm:$0xf]
  %v79 = vld [vmem:[%s0 + $0xb8] sm:$0xf]
  %v80 = vld [vmem:[%s0 + $0xbc] sm:$0xf]
  %v81 = vld [vmem:[%s0 + $0xc0] sm:$0xf]
  %v82 = vld [vmem:[%s0 + $0xc4] sm:$0xf]
  %v83 = vld [vmem:[%s0 + $0xc8] sm:$0xf]
  %v84 = vld [vmem:[%s0 + $0xcc] sm:$0xf]
  %v85 = vld [vmem:[%s0 + $0xd0] sm:$0xf]
  %v86 = vld [vmem:[%s0 + $0xd4] sm:$0xf]
  %v87 = vld [vmem:[%s0 + $0xd8] sm:$0xf]
  %v88 = vld [vmem:[%s0 + $0xdc] sm:$0xf]
  %v89 = vld [vmem:[%s0 + $0xe0] sm:$0xf]
  %v90 = vld [vmem:[%s0 + $0xe4] sm:$0xf]
  %v91 = vld [vmem:[%s0 + $0xe8] sm:$0xf]
  %v92 = vld [vmem:[%s0 + $0xec] sm:$0xf]
  %v93 = vld [vmem:[%s0 + $0xf0] sm:$0xf]
  %v94 = vld [vmem:[%s0 + $0xf4] sm:$0xf]
  %v95 = vld [vmem:[%s0 + $0xf8] sm:$0xf]
  %v96 = vld [vmem:[%s0 + $0xfc] sm:$0xf]
  %v97 = vld [vmem:[%s1] sm:$0x3]
  %v162 = vunpack.c.l.b16 %v33
  %v163 = vunpack.c.l.b16 %v34
  %v164 = vunpack.c.l.b16 %v35
  %v165 = vunpack.c.l.b16 %v36
  %v166 = vunpack.c.l.b16 %v37
  %v167 = vunpack.c.l.b16 %v38
  %v168 = vunpack.c.l.b16 %v39
  %v169 = vunpack.c.l.b16 %v40
  %v170 = vunpack.c.l.b16 %v41
  %v171 = vunpack.c.l.b16 %v42
  %v172 = vunpack.c.l.b16 %v43
  %v173 = vunpack.c.l.b16 %v44
  %v174 = vunpack.c.l.b16 %v45
  %v175 = vunpack.c.l.b16 %v46
  %v176 = vunpack.c.l.b16 %v47
  %v177 = vunpack.c.l.b16 %v48
  %v178 = vunpack.c.l.b16 %v49
  %v179 = vunpack.c.l.b16 %v50
  %v180 = vunpack.c.l.b16 %v51
  %v181 = vunpack.c.l.b16 %v52
  %v182 = vunpack.c.l.b16 %v53
  %v183 = vunpack.c.l.b16 %v54
  %v184 = vunpack.c.l.b16 %v55
  %v185 = vunpack.c.l.b16 %v56
  %v186 = vunpack.c.l.b16 %v57
  %v187 = vunpack.c.l.b16 %v58
  %v188 = vunpack.c.l.b16 %v59
  %v189 = vunpack.c.l.b16 %v60
  %v190 = vunpack.c.l.b16 %v61
  %v191 = vunpack.c.l.b16 %v62
  %v192 = vunpack.c.l.b16 %v63
  %v193 = vunpack.c.l.b16 %v64
  %v194 = vunpack.c.l.b16 %v65
  %v195 = vunpack.c.l.b16 %v66
  %v196 = vunpack.c.l.b16 %v67
  %v197 = vunpack.c.l.b16 %v68
  %v198 = vunpack.c.l.b16 %v69
  %v199 = vunpack.c.l.b16 %v70
  %v200 = vunpack.c.l.b16 %v71
  %v201 = vunpack.c.l.b16 %v72
  %v202 = vunpack.c.l.b16 %v73
  %v203 = vunpack.c.l.b16 %v74
  %v204 = vunpack.c.l.b16 %v75
  %v205 = vunpack.c.l.b16 %v76
  %v206 = vunpack.c.l.b16 %v77
  %v207 = vunpack.c.l.b16 %v78
  %v208 = vunpack.c.l.b16 %v79
  %v209 = vunpack.c.l.b16 %v80
  %v210 = vunpack.c.l.b16 %v81
  %v211 = vunpack.c.l.b16 %v82
  %v212 = vunpack.c.l.b16 %v83
  %v213 = vunpack.c.l.b16 %v84
  %v214 = vunpack.c.l.b16 %v85
  %v215 = vunpack.c.l.b16 %v86
  %v216 = vunpack.c.l.b16 %v87
  %v217 = vunpack.c.l.b16 %v88
  %v218 = vunpack.c.l.b16 %v89
  %v219 = vunpack.c.l.b16 %v90
  %v220 = vunpack.c.l.b16 %v91
  %v221 = vunpack.c.l.b16 %v92
  %v222 = vunpack.c.l.b16 %v93
  %v223 = vunpack.c.l.b16 %v94
  %v224 = vunpack.c.l.b16 %v95
  %v225 = vunpack.c.l.b16 %v96
  %v226 = vpack.c.b16 %v163, %v162
  %v227 = vpack.c.b16 %v165, %v164
  %v228 = vpack.c.b16 %v167, %v166
  %v229 = vpack.c.b16 %v169, %v168
  %v230 = vpack.c.b16 %v171, %v170
  %v231 = vpack.c.b16 %v173, %v172
  %v232 = vpack.c.b16 %v175, %v174
  %v233 = vpack.c.b16 %v177, %v176
  %v234 = vpack.c.b16 %v179, %v178
  %v235 = vpack.c.b16 %v181, %v180
  %v236 = vpack.c.b16 %v183, %v182
  %v237 = vpack.c.b16 %v185, %v184
  %v238 = vpack.c.b16 %v187, %v186
  %v239 = vpack.c.b16 %v189, %v188
  %v240 = vpack.c.b16 %v191, %v190
  %v241 = vpack.c.b16 %v193, %v192
  %v242 = vpack.c.b16 %v195, %v194
  %v243 = vpack.c.b16 %v197, %v196
  %v244 = vpack.c.b16 %v199, %v198
  %v245 = vpack.c.b16 %v201, %v200
  %v246 = vpack.c.b16 %v203, %v202
  %v247 = vpack.c.b16 %v205, %v204
  %v248 = vpack.c.b16 %v207, %v206
  %v249 = vpack.c.b16 %v209, %v208
  %v250 = vpack.c.b16 %v211, %v210
  %v251 = vpack.c.b16 %v213, %v212
  %v252 = vpack.c.b16 %v215, %v214
  %v253 = vpack.c.b16 %v217, %v216
  %v254 = vpack.c.b16 %v219, %v218
  %v255 = vpack.c.b16 %v221, %v220
  %v256 = vpack.c.b16 %v223, %v222
  %v257 = vpack.c.b16 %v225, %v224
  %vm258 = vcmask 31744
  %v260 = vsel %vm258, %v226, 0
  %v263 = vsel %vm258, %v227, 0
  %v266 = vsel %vm258, %v228, 0
  %v269 = vsel %vm258, %v229, 0
  %v272 = vsel %vm258, %v230, 0
  %v275 = vsel %vm258, %v231, 0
  %v278 = vsel %vm258, %v232, 0
  %v281 = vsel %vm258, %v233, 0
  %v284 = vsel %vm258, %v234, 0
  %v287 = vsel %vm258, %v235, 0
  %v290 = vsel %vm258, %v236, 0
  %v293 = vsel %vm258, %v237, 0
  %v296 = vsel %vm258, %v238, 0
  %v299 = vsel %vm258, %v239, 0
  %v302 = vsel %vm258, %v240, 0
  %v305 = vsel %vm258, %v241, 0
  %v308 = vsel %vm258, %v242, 0
  %v311 = vsel %vm258, %v243, 0
  %v314 = vsel %vm258, %v244, 0
  %v317 = vsel %vm258, %v245, 0
  %v320 = vsel %vm258, %v246, 0
  %v323 = vsel %vm258, %v247, 0
  %v326 = vsel %vm258, %v248, 0
  %v329 = vsel %vm258, %v249, 0
  %v332 = vsel %vm258, %v250, 0
  %v335 = vsel %vm258, %v251, 0
  %v338 = vsel %vm258, %v252, 0
  %v341 = vsel %vm258, %v253, 0
  %v344 = vsel %vm258, %v254, 0
  %v347 = vsel %vm258, %v255, 0
  %v350 = vsel %vm258, %v256, 0
  %v353 = vsel %vm258, %v257, 0
  %vm355 = vcmask 1041408
  %v357 = vsel %vm355, %v97, 0
  %359 = vmatprep.subr.bf16.mxu0 0
  %360 = vmatpush1.bf16.msra.mxu0 %v357
  %361 = vmatprep.subr.bf16.mxu0 0
  %362 = vmatpush1.bf16.msra.mxu0 0
  %363 = vmatprep.subr.bf16.mxu0 0
  %364 = vmatpush1.bf16.msra.mxu0 0
  %365 = vmatprep.subr.bf16.mxu0 0
  %366 = vmatpush1.bf16.msra.mxu0 0
  %367 = vmatprep.subr.bf16.mxu0 0
  %368 = vmatpush1.bf16.msra.mxu0 0
  %369 = vmatprep.subr.bf16.mxu0 0
  %370 = vmatpush1.bf16.msra.mxu0 0
  %371 = vmatprep.subr.bf16.mxu0 0
  %372 = vmatpush1.bf16.msra.mxu0 0
  %373 = vmatprep.subr.bf16.mxu0 0
  %374 = vmatpush1.bf16.msra.mxu0 0
  %375 = vmatprep.subr.bf16.mxu0 0
  %376 = vmatpush1.bf16.msra.mxu0 0
  %377 = vmatprep.subr.bf16.mxu0 0
  %378 = vmatpush1.bf16.msra.mxu0 0
  %379 = vmatprep.subr.bf16.mxu0 0
  %380 = vmatpush1.bf16.msra.mxu0 0
  %381 = vmatprep.subr.bf16.mxu0 0
  %382 = vmatpush1.bf16.msra.mxu0 0
  %383 = vmatprep.subr.bf16.mxu0 0
  %384 = vmatpush1.bf16.msra.mxu0 0
  %385 = vmatprep.subr.bf16.mxu0 0
  %386 = vmatpush1.bf16.msra.mxu0 0
  %387 = vmatprep.subr.bf16.mxu0 0
  %388 = vmatpush1.bf16.msra.mxu0 0
  %389 = vmatprep.subr.bf16.mxu0 0
  %390 = vmatpush1.bf16.msra.mxu0 0
  %391 = vmatprep.mubr.bf16.mxu0 0
  %392 = vmatmul.mubr.bf16.gmra.mrb[0].mxu0 %v260
  %v393 = vpop.f32.mrb[0].mxu0
  %v394 = vadd.f32 0.0, %v393
  %v395 = vpop.f32.mrb[0].mxu0
  %v396 = vpop.f32.mrb[0].mxu0
  %v397 = vadd.f32 0.0, %v396
  %v398 = vpop.f32.mrb[0].mxu0
  %399 = vmatprep.mubr.bf16.mxu0 0
  %400 = vmatmul.mubr.bf16.gmra.mrb[0].mxu0 %v263
  %v401 = vpop.f32.mrb[0].mxu0
  %v402 = vadd.f32 0.0, %v401
  %v403 = vpop.f32.mrb[0].mxu0
  %v404 = vpop.f32.mrb[0].mxu0
  %v405 = vadd.f32 0.0, %v404
  %v406 = vpop.f32.mrb[0].mxu0
  %407 = vmatprep.mubr.bf16.mxu0 0
  %408 = vmatmul.mubr.bf16.gmra.mrb[0].mxu0 %v266
  %v409 = vpop.f32.mrb[0].mxu0
  %v410 = vadd.f32 0.0, %v409
  %v411 = vpop.f32.mrb[0].mxu0
  %v412 = vpop.f32.mrb[0].mxu0
  %v413 = vadd.f32 0.0, %v412
  %v414 = vpop.f32.mrb[0].mxu0
  %415 = vmatprep.mubr.bf16.mxu0 0
  %416 = vmatmul.mubr.bf16.gmra.mrb[0].mxu0 %v269
  %v417 = vpop.f32.mrb[0].mxu0
  %v418 = vadd.f32 0.0, %v417
  %v419 = vpop.f32.mrb[0].mxu0
  %v420 = vpop.f32.mrb[0].mxu0
  %v421 = vadd.f32 0.0, %v420
  %v422 = vpop.f32.mrb[0].mxu0
  %423 = vmatprep.mubr.bf16.mxu0 0
  %424 = vmatmul.mubr.bf16.gmra.mrb[0].mxu0 %v272
  %v425 = vpop.f32.mrb[0].mxu0
  %v426 = vadd.f32 0.0, %v425
  %v427 = vpop.f32.mrb[0].mxu0
  %v428 = vpop.f32.mrb[0].mxu0
  %v429 = vadd.f32 0.0, %v428
  %v430 = vpop.f32.mrb[0].mxu0
  %431 = vmatprep.mubr.bf16.mxu0 0
  %432 = vmatmul.mubr.bf16.gmra.mrb[0].mxu0 %v275
  %v433 = vpop.f32.mrb[0].mxu0
  %v434 = vadd.f32 0.0, %v433
  %v435 = vpop.f32.mrb[0].mxu0
  %v436 = vpop.f32.mrb[0].mxu0
  %v437 = vadd.f32 0.0, %v436
  %v438 = vpop.f32.mrb[0].mxu0
  %439 = vmatprep.mubr.bf16.mxu0 0
  %440 = vmatmul.mubr.bf16.gmra.mrb[0].mxu0 %v278
  %v441 = vpop.f32.mrb[0].mxu0
  %v442 = vadd.f32 0.0, %v441
  %v443 = vpop.f32.mrb[0].mxu0
  %v444 = vpop.f32.mrb[0].mxu0
  %v445 = vadd.f32 0.0, %v444
  %v446 = vpop.f32.mrb[0].mxu0
  %447 = vmatprep.mubr.bf16.mxu0 0
  %448 = vmatmul.mubr.bf16.gmra.mrb[0].mxu0 %v281
  %v449 = vpop.f32.mrb[0].mxu0
  %v450 = vadd.f32 0.0, %v449
  %v451 = vpop.f32.mrb[0].mxu0
  %v452 = vpop.f32.mrb[0].mxu0
  %v453 = vadd.f32 0.0, %v452
  %v454 = vpop.f32.mrb[0].mxu0
  %455 = vmatprep.mubr.bf16.mxu0 0
  %456 = vmatmul.mubr.bf16.gmra.mrb[0].mxu0 %v284
  %v457 = vpop.f32.mrb[0].mxu0
  %v458 = vadd.f32 0.0, %v457
  %v459 = vpop.f32.mrb[0].mxu0
  %v460 = vpop.f32.mrb[0].mxu0
  %v461 = vadd.f32 0.0, %v460
  %v462 = vpop.f32.mrb[0].mxu0
  %463 = vmatprep.mubr.bf16.mxu0 0
  %464 = vmatmul.mubr.bf16.gmra.mrb[0].mxu0 %v287
  %v465 = vpop.f32.mrb[0].mxu0
  %v466 = vadd.f32 0.0, %v465
  %v467 = vpop.f32.mrb[0].mxu0
  %v468 = vpop.f32.mrb[0].mxu0
  %v469 = vadd.f32 0.0, %v468
  %v470 = vpop.f32.mrb[0].mxu0
  %471 = vmatprep.mubr.bf16.mxu0 0
  %472 = vmatmul.mubr.bf16.gmra.mrb[0].mxu0 %v290
  %v473 = vpop.f32.mrb[0].mxu0
  %v474 = vadd.f32 0.0, %v473
  %v475 = vpop.f32.mrb[0].mxu0
  %v476 = vpop.f32.mrb[0].mxu0
  %v477 = vadd.f32 0.0, %v476
  %v478 = vpop.f32.mrb[0].mxu0
  %479 = vmatprep.mubr.bf16.mxu0 0
  %480 = vmatmul.mubr.bf16.gmra.mrb[0].mxu0 %v293
  %v481 = vpop.f32.mrb[0].mxu0
  %v482 = vadd.f32 0.0, %v481
  %v483 = vpop.f32.mrb[0].mxu0
  %v484 = vpop.f32.mrb[0].mxu0
  %v485 = vadd.f32 0.0, %v484
  %v486 = vpop.f32.mrb[0].mxu0
  %487 = vmatprep.mubr.bf16.mxu0 0
  %488 = vmatmul.mubr.bf16.gmra.mrb[0].mxu0 %v296
  %v489 = vpop.f32.mrb[0].mxu0
  %v490 = vadd.f32 0.0, %v489
  %v491 = vpop.f32.mrb[0].mxu0
  %v492 = vpop.f32.mrb[0].mxu0
  %v493 = vadd.f32 0.0, %v492
  %v494 = vpop.f32.mrb[0].mxu0
  %495 = vmatprep.mubr.bf16.mxu0 0
  %496 = vmatmul.mubr.bf16.gmra.mrb[0].mxu0 %v299
  %v497 = vpop.f32.mrb[0].mxu0
  %v498 = vadd.f32 0.0, %v497
  %v499 = vpop.f32.mrb[0].mxu0
  %v500 = vpop.f32.mrb[0].mxu0
  %v501 = vadd.f32 0.0, %v500
  %v502 = vpop.f32.mrb[0].mxu0
  %503 = vmatprep.mubr.bf16.mxu0 0
  %504 = vmatmul.mubr.bf16.gmra.mrb[0].mxu0 %v302
  %v505 = vpop.f32.mrb[0].mxu0
  %v506 = vadd.f32 0.0, %v505
  %v507 = vpop.f32.mrb[0].mxu0
  %v508 = vpop.f32.mrb[0].mxu0
  %v509 = vadd.f32 0.0, %v508
  %v510 = vpop.f32.mrb[0].mxu0
  %511 = vmatprep.mubr.bf16.mxu0 0
  %512 = vmatmul.mubr.bf16.gmra.mrb[0].mxu0 %v305
  %v513 = vpop.f32.mrb[0].mxu0
  %v514 = vadd.f32 0.0, %v513
  %v515 = vpop.f32.mrb[0].mxu0
  %v516 = vpop.f32.mrb[0].mxu0
  %v517 = vadd.f32 0.0, %v516
  %v518 = vpop.f32.mrb[0].mxu0
  %519 = vmatprep.mubr.bf16.mxu0 0
  %520 = vmatmul.mubr.bf16.gmra.mrb[0].mxu0 %v308
  %v521 = vpop.f32.mrb[0].mxu0
  %v522 = vadd.f32 0.0, %v521
  %v523 = vpop.f32.mrb[0].mxu0
  %v524 = vpop.f32.mrb[0].mxu0
  %v525 = vadd.f32 0.0, %v524
  %v526 = vpop.f32.mrb[0].mxu0
  %527 = vmatprep.mubr.bf16.mxu0 0
  %528 = vmatmul.mubr.bf16.gmra.mrb[0].mxu0 %v311
  %v529 = vpop.f32.mrb[0].mxu0
  %v530 = vadd.f32 0.0, %v529
  %v531 = vpop.f32.mrb[0].mxu0
  %v532 = vpop.f32.mrb[0].mxu0
  %v533 = vadd.f32 0.0, %v532
  %v534 = vpop.f32.mrb[0].mxu0
  %535 = vmatprep.mubr.bf16.mxu0 0
  %536 = vmatmul.mubr.bf16.gmra.mrb[0].mxu0 %v314
  %v537 = vpop.f32.mrb[0].mxu0
  %v538 = vadd.f32 0.0, %v537
  %v539 = vpop.f32.mrb[0].mxu0
  %v540 = vpop.f32.mrb[0].mxu0
  %v541 = vadd.f32 0.0, %v540
  %v542 = vpop.f32.mrb[0].mxu0
  %543 = vmatprep.mubr.bf16.mxu0 0
  %544 = vmatmul.mubr.bf16.gmra.mrb[0].mxu0 %v317
  %v545 = vpop.f32.mrb[0].mxu0
  %v546 = vadd.f32 0.0, %v545
  %v547 = vpop.f32.mrb[0].mxu0
  %v548 = vpop.f32.mrb[0].mxu0
  %v549 = vadd.f32 0.0, %v548
  %v550 = vpop.f32.mrb[0].mxu0
  %551 = vmatprep.mubr.bf16.mxu0 0
  %552 = vmatmul.mubr.bf16.gmra.mrb[0].mxu0 %v320
  %v553 = vpop.f32.mrb[0].mxu0
  %v554 = vadd.f32 0.0, %v553
  %v555 = vpop.f32.mrb[0].mxu0
  %v556 = vpop.f32.mrb[0].mxu0
  %v557 = vadd.f32 0.0, %v556
  %v558 = vpop.f32.mrb[0].mxu0
  %559 = vmatprep.mubr.bf16.mxu0 0
  %560 = vmatmul.mubr.bf16.gmra.mrb[0].mxu0 %v323
  %v561 = vpop.f32.mrb[0].mxu0
  %v562 = vadd.f32 0.0, %v561
  %v563 = vpop.f32.mrb[0].mxu0
  %v564 = vpop.f32.mrb[0].mxu0
  %v565 = vadd.f32 0.0, %v564
  %v566 = vpop.f32.mrb[0].mxu0
  %567 = vmatprep.mubr.bf16.mxu0 0
  %568 = vmatmul.mubr.bf16.gmra.mrb[0].mxu0 %v326
  %v569 = vpop.f32.mrb[0].mxu0
  %v570 = vadd.f32 0.0, %v569
  %v571 = vpop.f32.mrb[0].mxu0
  %v572 = vpop.f32.mrb[0].mxu0
  %v573 = vadd.f32 0.0, %v572
  %v574 = vpop.f32.mrb[0].mxu0
  %575 = vmatprep.mubr.bf16.mxu0 0
  %576 = vmatmul.mubr.bf16.gmra.mrb[0].mxu0 %v329
  %v577 = vpop.f32.mrb[0].mxu0
  %v578 = vadd.f32 0.0, %v577
  %v579 = vpop.f32.mrb[0].mxu0
  %v580 = vpop.f32.mrb[0].mxu0
  %v581 = vadd.f32 0.0, %v580
  %v582 = vpop.f32.mrb[0].mxu0
  %583 = vmatprep.mubr.bf16.mxu0 0
  %584 = vmatmul.mubr.bf16.gmra.mrb[0].mxu0 %v332
  %v585 = vpop.f32.mrb[0].mxu0
  %v586 = vadd.f32 0.0, %v585
  %v587 = vpop.f32.mrb[0].mxu0
  %v588 = vpop.f32.mrb[0].mxu0
  %v589 = vadd.f32 0.0, %v588
  %v590 = vpop.f32.mrb[0].mxu0
  %591 = vmatprep.mubr.bf16.mxu0 0
  %592 = vmatmul.mubr.bf16.gmra.mrb[0].mxu0 %v335
  %v593 = vpop.f32.mrb[0].mxu0
  %v594 = vadd.f32 0.0, %v593
  %v595 = vpop.f32.mrb[0].mxu0
  %v596 = vpop.f32.mrb[0].mxu0
  %v597 = vadd.f32 0.0, %v596
  %v598 = vpop.f32.mrb[0].mxu0
  %599 = vmatprep.mubr.bf16.mxu0 0
  %600 = vmatmul.mubr.bf16.gmra.mrb[0].mxu0 %v338
  %v601 = vpop.f32.mrb[0].mxu0
  %v602 = vadd.f32 0.0, %v601
  %v603 = vpop.f32.mrb[0].mxu0
  %v604 = vpop.f32.mrb[0].mxu0
  %v605 = vadd.f32 0.0, %v604
  %v606 = vpop.f32.mrb[0].mxu0
  %607 = vmatprep.mubr.bf16.mxu0 0
  %608 = vmatmul.mubr.bf16.gmra.mrb[0].mxu0 %v341
  %v609 = vpop.f32.mrb[0].mxu0
  %v610 = vadd.f32 0.0, %v609
  %v611 = vpop.f32.mrb[0].mxu0
  %v612 = vpop.f32.mrb[0].mxu0
  %v613 = vadd.f32 0.0, %v612
  %v614 = vpop.f32.mrb[0].mxu0
  %615 = vmatprep.mubr.bf16.mxu0 0
  %616 = vmatmul.mubr.bf16.gmra.mrb[0].mxu0 %v344
  %v617 = vpop.f32.mrb[0].mxu0
  %v618 = vadd.f32 0.0, %v617
  %v619 = vpop.f32.mrb[0].mxu0
  %v620 = vpop.f32.mrb[0].mxu0
  %v621 = vadd.f32 0.0, %v620
  %v622 = vpop.f32.mrb[0].mxu0
  %623 = vmatprep.mubr.bf16.mxu0 0
  %624 = vmatmul.mubr.bf16.gmra.mrb[0].mxu0 %v347
  %v625 = vpop.f32.mrb[0].mxu0
  %v626 = vadd.f32 0.0, %v625
  %v627 = vpop.f32.mrb[0].mxu0
  %v628 = vpop.f32.mrb[0].mxu0
  %v629 = vadd.f32 0.0, %v628
  %v630 = vpop.f32.mrb[0].mxu0
  %631 = vmatprep.mubr.bf16.mxu0 0
  %632 = vmatmul.mubr.bf16.gmra.mrb[0].mxu0 %v350
  %v633 = vpop.f32.mrb[0].mxu0
  %v634 = vadd.f32 0.0, %v633
  %v635 = vpop.f32.mrb[0].mxu0
  %v636 = vpop.f32.mrb[0].mxu0
  %v637 = vadd.f32 0.0, %v636
  %v638 = vpop.f32.mrb[0].mxu0
  %639 = vmatprep.mubr.bf16.mxu0 0
  %640 = vmatmul.mubr.bf16.gmra.mrb[0].mxu0 %v353
  %v641 = vpop.f32.mrb[0].mxu0
  %v642 = vadd.f32 0.0, %v641
  %v643 = vpop.f32.mrb[0].mxu0
  %v644 = vpop.f32.mrb[0].mxu0
  %v645 = vadd.f32 0.0, %v644
  %v646 = vpop.f32.mrb[0].mxu0
  %647 = vdwg.mxu0
  %v648 = vld [vmem:[%s2] sm:$0x3]
  %v649 = vsel %vm258, %v394, 0.0
  %v650 = vsel %vm258, %v397, 0.0
  %v651 = vadd.f32 %v649, %v650
  %v652 = vsel %vm258, %v402, 0.0
  %v653 = vadd.f32 %v651, %v652
  %v654 = vsel %vm258, %v405, 0.0
  %v655 = vadd.f32 %v653, %v654
  %v656 = vsel %vm258, %v410, 0.0
  %v657 = vadd.f32 %v655, %v656
  %v658 = vsel %vm258, %v413, 0.0
  %v659 = vadd.f32 %v657, %v658
  %v660 = vsel %vm258, %v418, 0.0
  %v661 = vadd.f32 %v659, %v660
  %v662 = vsel %vm258, %v421, 0.0
  %v663 = vadd.f32 %v661, %v662
  %v664 = vsel %vm258, %v426, 0.0
  %v665 = vadd.f32 %v663, %v664
  %v666 = vsel %vm258, %v429, 0.0
  %v667 = vadd.f32 %v665, %v666
  %v668 = vsel %vm258, %v434, 0.0
  %v669 = vadd.f32 %v667, %v668
  %v670 = vsel %vm258, %v437, 0.0
  %v671 = vadd.f32 %v669, %v670
  %v672 = vsel %vm258, %v442, 0.0
  %v673 = vadd.f32 %v671, %v672
  %v674 = vsel %vm258, %v445, 0.0
  %v675 = vadd.f32 %v673, %v674
  %v676 = vsel %vm258, %v450, 0.0
  %v677 = vadd.f32 %v675, %v676
  %v678 = vsel %vm258, %v453, 0.0
  %v679 = vadd.f32 %v677, %v678
  %v680 = vsel %vm258, %v458, 0.0
  %v681 = vadd.f32 %v679, %v680
  %v682 = vsel %vm258, %v461, 0.0
  %v683 = vadd.f32 %v681, %v682
  %v684 = vsel %vm258, %v466, 0.0
  %v685 = vadd.f32 %v683, %v684
  %v686 = vsel %vm258, %v469, 0.0
  %v687 = vadd.f32 %v685, %v686
  %v688 = vsel %vm258, %v474, 0.0
  %v689 = vadd.f32 %v687, %v688
  %v690 = vsel %vm258, %v477, 0.0
  %v691 = vadd.f32 %v689, %v690
  %v692 = vsel %vm258, %v482, 0.0
  %v693 = vadd.f32 %v691, %v692
  %v694 = vsel %vm258, %v485, 0.0
  %v695 = vadd.f32 %v693, %v694
  %v696 = vsel %vm258, %v490, 0.0
  %v697 = vadd.f32 %v695, %v696
  %v698 = vsel %vm258, %v493, 0.0
  %v699 = vadd.f32 %v697, %v698
  %v700 = vsel %vm258, %v498, 0.0
  %v701 = vadd.f32 %v699, %v700
  %v702 = vsel %vm258, %v501, 0.0
  %v703 = vadd.f32 %v701, %v702
  %v704 = vsel %vm258, %v506, 0.0
  %v705 = vadd.f32 %v703, %v704
  %v706 = vsel %vm258, %v509, 0.0
  %v707 = vadd.f32 %v705, %v706
  %v708 = vsel %vm258, %v514, 0.0
  %v709 = vadd.f32 %v707, %v708
  %v710 = vsel %vm258, %v517, 0.0
  %v711 = vadd.f32 %v709, %v710
  %v712 = vsel %vm258, %v522, 0.0
  %v713 = vadd.f32 %v711, %v712
  %v714 = vsel %vm258, %v525, 0.0
  %v715 = vadd.f32 %v713, %v714
  %v716 = vsel %vm258, %v530, 0.0
  %v717 = vadd.f32 %v715, %v716
  %v718 = vsel %vm258, %v533, 0.0
  %v719 = vadd.f32 %v717, %v718
  %v720 = vsel %vm258, %v538, 0.0
  %v721 = vadd.f32 %v719, %v720
  %v722 = vsel %vm258, %v541, 0.0
  %v723 = vadd.f32 %v721, %v722
  %v724 = vsel %vm258, %v546, 0.0
  %v725 = vadd.f32 %v723, %v724
  %v726 = vsel %vm258, %v549, 0.0
  %v727 = vadd.f32 %v725, %v726
  %v728 = vsel %vm258, %v554, 0.0
  %v729 = vadd.f32 %v727, %v728
  %v730 = vsel %vm258, %v557, 0.0
  %v731 = vadd.f32 %v729, %v730
  %v732 = vsel %vm258, %v562, 0.0
  %v733 = vadd.f32 %v731, %v732
  %v734 = vsel %vm258, %v565, 0.0
  %v735 = vadd.f32 %v733, %v734
  %v736 = vsel %vm258, %v570, 0.0
  %v737 = vadd.f32 %v735, %v736
  %v738 = vsel %vm258, %v573, 0.0
  %v739 = vadd.f32 %v737, %v738
  %v740 = vsel %vm258, %v578, 0.0
  %v741 = vadd.f32 %v739, %v740
  %v742 = vsel %vm258, %v581, 0.0
  %v743 = vadd.f32 %v741, %v742
  %v744 = vsel %vm258, %v586, 0.0
  %v745 = vadd.f32 %v743, %v744
  %v746 = vsel %vm258, %v589, 0.0
  %v747 = vadd.f32 %v745, %v746
  %v748 = vsel %vm258, %v594, 0.0
  %v749 = vadd.f32 %v747, %v748
  %v750 = vsel %vm258, %v597, 0.0
  %v751 = vadd.f32 %v749, %v750
  %v752 = vsel %vm258, %v602, 0.0
  %v753 = vadd.f32 %v751, %v752
  %v754 = vsel %vm258, %v605, 0.0
  %v755 = vadd.f32 %v753, %v754
  %v756 = vsel %vm258, %v610, 0.0
  %v757 = vadd.f32 %v755, %v756
  %v758 = vsel %vm258, %v613, 0.0
  %v759 = vadd.f32 %v757, %v758
  %v760 = vsel %vm258, %v618, 0.0
  %v761 = vadd.f32 %v759, %v760
  %v762 = vsel %vm258, %v621, 0.0
  %v763 = vadd.f32 %v761, %v762
  %v764 = vsel %vm258, %v626, 0.0
  %v765 = vadd.f32 %v763, %v764
  %v766 = vsel %vm258, %v629, 0.0
  %v767 = vadd.f32 %v765, %v766
  %v768 = vsel %vm258, %v634, 0.0
  %v769 = vadd.f32 %v767, %v768
  %v770 = vsel %vm258, %v637, 0.0
  %v771 = vadd.f32 %v769, %v770
  %v772 = vsel %vm258, %v642, 0.0
  %v773 = vadd.f32 %v771, %v772
  %v774 = vsel %vm258, %v645, 0.0
  %v775 = vadd.f32 %v773, %v774
  %v776 = vrot.slane %v775, 4
  %v777 = vadd.f32 %v775, %v776
  %v778 = vrot.slane %v777, 2
  %v779 = vadd.f32 %v777, %v778
  %v780 = vrot.slane %v779, 1
  %v781 = vadd.f32 %v779, %v780
  %v782 = vmul.f32 %v394, %v394
  %v783 = vmul.f32 %v397, %v397
  %v784 = vmul.f32 %v402, %v402
  %v785 = vmul.f32 %v405, %v405
  %v786 = vmul.f32 %v410, %v410
  %v787 = vmul.f32 %v413, %v413
  %v788 = vmul.f32 %v418, %v418
  %v789 = vmul.f32 %v421, %v421
  %v790 = vmul.f32 %v426, %v426
  %v791 = vmul.f32 %v429, %v429
  %v792 = vmul.f32 %v434, %v434
  %v793 = vmul.f32 %v437, %v437
  %v794 = vmul.f32 %v442, %v442
  %v795 = vmul.f32 %v445, %v445
  %v796 = vmul.f32 %v450, %v450
  %v797 = vmul.f32 %v453, %v453
  %v798 = vmul.f32 %v458, %v458
  %v799 = vmul.f32 %v461, %v461
  %v800 = vmul.f32 %v466, %v466
  %v801 = vmul.f32 %v469, %v469
  %v802 = vmul.f32 %v474, %v474
  %v803 = vmul.f32 %v477, %v477
  %v804 = vmul.f32 %v482, %v482
  %v805 = vmul.f32 %v485, %v485
  %v806 = vmul.f32 %v490, %v490
  %v807 = vmul.f32 %v493, %v493
  %v808 = vmul.f32 %v498, %v498
  %v809 = vmul.f32 %v501, %v501
  %v810 = vmul.f32 %v506, %v506
  %v811 = vmul.f32 %v509, %v509
  %v812 = vmul.f32 %v514, %v514
  %v813 = vmul.f32 %v517, %v517
  %v814 = vmul.f32 %v522, %v522
  %v815 = vmul.f32 %v525, %v525
  %v816 = vmul.f32 %v530, %v530
  %v817 = vmul.f32 %v533, %v533
  %v818 = vmul.f32 %v538, %v538
  %v819 = vmul.f32 %v541, %v541
  %v820 = vmul.f32 %v546, %v546
  %v821 = vmul.f32 %v549, %v549
  %v822 = vmul.f32 %v554, %v554
  %v823 = vmul.f32 %v557, %v557
  %v824 = vmul.f32 %v562, %v562
  %v825 = vmul.f32 %v565, %v565
  %v826 = vmul.f32 %v570, %v570
  %v827 = vmul.f32 %v573, %v573
  %v828 = vmul.f32 %v578, %v578
  %v829 = vmul.f32 %v581, %v581
  %v830 = vmul.f32 %v586, %v586
  %v831 = vmul.f32 %v589, %v589
  %v832 = vmul.f32 %v594, %v594
  %v833 = vmul.f32 %v597, %v597
  %v834 = vmul.f32 %v602, %v602
  %v835 = vmul.f32 %v605, %v605
  %v836 = vmul.f32 %v610, %v610
  %v837 = vmul.f32 %v613, %v613
  %v838 = vmul.f32 %v618, %v618
  %v839 = vmul.f32 %v621, %v621
  %v840 = vmul.f32 %v626, %v626
  %v841 = vmul.f32 %v629, %v629
  %v842 = vmul.f32 %v634, %v634
  %v843 = vmul.f32 %v637, %v637
  %v844 = vmul.f32 %v642, %v642
  %v845 = vmul.f32 %v645, %v645
  %v846 = vsel %vm258, %v782, 0.0
  %v847 = vsel %vm258, %v783, 0.0
  %v848 = vadd.f32 %v846, %v847
  %v849 = vsel %vm258, %v784, 0.0
  %v850 = vadd.f32 %v848, %v849
  %v851 = vsel %vm258, %v785, 0.0
  %v852 = vadd.f32 %v850, %v851
  %v853 = vsel %vm258, %v786, 0.0
  %v854 = vadd.f32 %v852, %v853
  %v855 = vsel %vm258, %v787, 0.0
  %v856 = vadd.f32 %v854, %v855
  %v857 = vsel %vm258, %v788, 0.0
  %v858 = vadd.f32 %v856, %v857
  %v859 = vsel %vm258, %v789, 0.0
  %v860 = vadd.f32 %v858, %v859
  %v861 = vsel %vm258, %v790, 0.0
  %v862 = vadd.f32 %v860, %v861
  %v863 = vsel %vm258, %v791, 0.0
  %v864 = vadd.f32 %v862, %v863
  %v865 = vsel %vm258, %v792, 0.0
  %v866 = vadd.f32 %v864, %v865
  %v867 = vsel %vm258, %v793, 0.0
  %v868 = vadd.f32 %v866, %v867
  %v869 = vsel %vm258, %v794, 0.0
  %v870 = vadd.f32 %v868, %v869
  %v871 = vsel %vm258, %v795, 0.0
  %v872 = vadd.f32 %v870, %v871
  %v873 = vsel %vm258, %v796, 0.0
  %v874 = vadd.f32 %v872, %v873
  %v875 = vsel %vm258, %v797, 0.0
  %v876 = vadd.f32 %v874, %v875
  %v877 = vsel %vm258, %v798, 0.0
  %v878 = vadd.f32 %v876, %v877
  %v879 = vsel %vm258, %v799, 0.0
  %v880 = vadd.f32 %v878, %v879
  %v881 = vsel %vm258, %v800, 0.0
  %v882 = vadd.f32 %v880, %v881
  %v883 = vsel %vm258, %v801, 0.0
  %v884 = vadd.f32 %v882, %v883
  %v885 = vsel %vm258, %v802, 0.0
  %v886 = vadd.f32 %v884, %v885
  %v887 = vsel %vm258, %v803, 0.0
  %v888 = vadd.f32 %v886, %v887
  %v889 = vsel %vm258, %v804, 0.0
  %v890 = vadd.f32 %v888, %v889
  %v891 = vsel %vm258, %v805, 0.0
  %v892 = vadd.f32 %v890, %v891
  %v893 = vsel %vm258, %v806, 0.0
  %v894 = vadd.f32 %v892, %v893
  %v895 = vsel %vm258, %v807, 0.0
  %v896 = vadd.f32 %v894, %v895
  %v897 = vsel %vm258, %v808, 0.0
  %v898 = vadd.f32 %v896, %v897
  %v899 = vsel %vm258, %v809, 0.0
  %v900 = vadd.f32 %v898, %v899
  %v901 = vsel %vm258, %v810, 0.0
  %v902 = vadd.f32 %v900, %v901
  %v903 = vsel %vm258, %v811, 0.0
  %v904 = vadd.f32 %v902, %v903
  %v905 = vsel %vm258, %v812, 0.0
  %v906 = vadd.f32 %v904, %v905
  %v907 = vsel %vm258, %v813, 0.0
  %v908 = vadd.f32 %v906, %v907
  %v909 = vsel %vm258, %v814, 0.0
  %v910 = vadd.f32 %v908, %v909
  %v911 = vsel %vm258, %v815, 0.0
  %v912 = vadd.f32 %v910, %v911
  %v913 = vsel %vm258, %v816, 0.0
  %v914 = vadd.f32 %v912, %v913
  %v915 = vsel %vm258, %v817, 0.0
  %v916 = vadd.f32 %v914, %v915
  %v917 = vsel %vm258, %v818, 0.0
  %v918 = vadd.f32 %v916, %v917
  %v919 = vsel %vm258, %v819, 0.0
  %v920 = vadd.f32 %v918, %v919
  %v921 = vsel %vm258, %v820, 0.0
  %v922 = vadd.f32 %v920, %v921
  %v923 = vsel %vm258, %v821, 0.0
  %v924 = vadd.f32 %v922, %v923
  %v925 = vsel %vm258, %v822, 0.0
  %v926 = vadd.f32 %v924, %v925
  %v927 = vsel %vm258, %v823, 0.0
  %v928 = vadd.f32 %v926, %v927
  %v929 = vsel %vm258, %v824, 0.0
  %v930 = vadd.f32 %v928, %v929
  %v931 = vsel %vm258, %v825, 0.0
  %v932 = vadd.f32 %v930, %v931
  %v933 = vsel %vm258, %v826, 0.0
  %v934 = vadd.f32 %v932, %v933
  %v935 = vsel %vm258, %v827, 0.0
  %v936 = vadd.f32 %v934, %v935
  %v937 = vsel %vm258, %v828, 0.0
  %v938 = vadd.f32 %v936, %v937
  %v939 = vsel %vm258, %v829, 0.0
  %v940 = vadd.f32 %v938, %v939
  %v941 = vsel %vm258, %v830, 0.0
  %v942 = vadd.f32 %v940, %v941
  %v943 = vsel %vm258, %v831, 0.0
  %v944 = vadd.f32 %v942, %v943
  %v945 = vsel %vm258, %v832, 0.0
  %v946 = vadd.f32 %v944, %v945
  %v947 = vsel %vm258, %v833, 0.0
  %v948 = vadd.f32 %v946, %v947
  %v949 = vsel %vm258, %v834, 0.0
  %v950 = vadd.f32 %v948, %v949
  %v951 = vsel %vm258, %v835, 0.0
  %v952 = vadd.f32 %v950, %v951
  %v953 = vsel %vm258, %v836, 0.0
  %v954 = vadd.f32 %v952, %v953
  %v955 = vsel %vm258, %v837, 0.0
  %v956 = vadd.f32 %v954, %v955
  %v957 = vsel %vm258, %v838, 0.0
  %v958 = vadd.f32 %v956, %v957
  %v959 = vsel %vm258, %v839, 0.0
  %v960 = vadd.f32 %v958, %v959
  %v961 = vsel %vm258, %v840, 0.0
  %v962 = vadd.f32 %v960, %v961
  %v963 = vsel %vm258, %v841, 0.0
  %v964 = vadd.f32 %v962, %v963
  %v965 = vsel %vm258, %v842, 0.0
  %v966 = vadd.f32 %v964, %v965
  %v967 = vsel %vm258, %v843, 0.0
  %v968 = vadd.f32 %v966, %v967
  %v969 = vsel %vm258, %v844, 0.0
  %v970 = vadd.f32 %v968, %v969
  %v971 = vsel %vm258, %v845, 0.0
  %v972 = vadd.f32 %v970, %v971
  %v973 = vrot.slane %v972, 4
  %v974 = vadd.f32 %v972, %v973
  %v975 = vrot.slane %v974, 2
  %v976 = vadd.f32 %v974, %v975
  %v977 = vrot.slane %v976, 1
  %v978 = vadd.f32 %v976, %v977
  %v979 = vmul.f32 %v781, 0.001953125
  %v980 = vmul.f32 %v978, 0.001953125
  %v981 = vmul.f32 %v979, %v979
  %v982 = vsub.f32 %v980, %v981
  %v983 = vmax.f32 %v982, 0.0
  %v984 = vadd.f32 %v983, 1e-05
  %v985 = vrsqrt.pop %v984
  %v986 = vmul.f32 %v648, %v985
  %v987 = vmul.f32 %v986, %v979
  %v989 = vrot.slane %v987, 7
  %v991 = vsub.f32 %v648, %v989
  %v992 = vlaneseq
  %v993 = vshrl.u32 %v992, 7
  %v994 = vsub.s32 0, %v993
  %v995 = vrot.slane %v986, %v994
  %v996 = vmul.f32 %v394, %v995
  %v997 = vmul.f32 %v397, %v995
  %v998 = vmul.f32 %v402, %v995
  %v999 = vmul.f32 %v405, %v995
  %v1000 = vmul.f32 %v410, %v995
  %v1001 = vmul.f32 %v413, %v995
  %v1002 = vmul.f32 %v418, %v995
  %v1003 = vmul.f32 %v421, %v995
  %v1004 = vmul.f32 %v426, %v995
  %v1005 = vmul.f32 %v429, %v995
  %v1006 = vmul.f32 %v434, %v995
  %v1007 = vmul.f32 %v437, %v995
  %v1008 = vmul.f32 %v442, %v995
  %v1009 = vmul.f32 %v445, %v995
  %v1010 = vmul.f32 %v450, %v995
  %v1011 = vmul.f32 %v453, %v995
  %v1012 = vmul.f32 %v458, %v995
  %v1013 = vmul.f32 %v461, %v995
  %v1014 = vmul.f32 %v466, %v995
  %v1015 = vmul.f32 %v469, %v995
  %v1016 = vmul.f32 %v474, %v995
  %v1017 = vmul.f32 %v477, %v995
  %v1018 = vmul.f32 %v482, %v995
  %v1019 = vmul.f32 %v485, %v995
  %v1020 = vmul.f32 %v490, %v995
  %v1021 = vmul.f32 %v493, %v995
  %v1022 = vmul.f32 %v498, %v995
  %v1023 = vmul.f32 %v501, %v995
  %v1024 = vmul.f32 %v506, %v995
  %v1025 = vmul.f32 %v509, %v995
  %v1026 = vmul.f32 %v514, %v995
  %v1027 = vmul.f32 %v517, %v995
  %v1028 = vmul.f32 %v522, %v995
  %v1029 = vmul.f32 %v525, %v995
  %v1030 = vmul.f32 %v530, %v995
  %v1031 = vmul.f32 %v533, %v995
  %v1032 = vmul.f32 %v538, %v995
  %v1033 = vmul.f32 %v541, %v995
  %v1034 = vmul.f32 %v546, %v995
  %v1035 = vmul.f32 %v549, %v995
  %v1036 = vmul.f32 %v554, %v995
  %v1037 = vmul.f32 %v557, %v995
  %v1038 = vmul.f32 %v562, %v995
  %v1039 = vmul.f32 %v565, %v995
  %v1040 = vmul.f32 %v570, %v995
  %v1041 = vmul.f32 %v573, %v995
  %v1042 = vmul.f32 %v578, %v995
  %v1043 = vmul.f32 %v581, %v995
  %v1044 = vmul.f32 %v586, %v995
  %v1045 = vmul.f32 %v589, %v995
  %v1046 = vmul.f32 %v594, %v995
  %v1047 = vmul.f32 %v597, %v995
  %v1048 = vmul.f32 %v602, %v995
  %v1049 = vmul.f32 %v605, %v995
  %v1050 = vmul.f32 %v610, %v995
  %v1051 = vmul.f32 %v613, %v995
  %v1052 = vmul.f32 %v618, %v995
  %v1053 = vmul.f32 %v621, %v995
  %v1054 = vmul.f32 %v626, %v995
  %v1055 = vmul.f32 %v629, %v995
  %v1056 = vmul.f32 %v634, %v995
  %v1057 = vmul.f32 %v637, %v995
  %v1058 = vmul.f32 %v642, %v995
  %v1059 = vmul.f32 %v645, %v995
  %v1060 = vlaneseq
  %v1061 = vshrl.u32 %v1060, 7
  %v1062 = vsub.s32 1, %v1061
  %v1063 = vrot.slane %v991, %v1062
  %v1064 = vadd.f32 %v996, %v1063
  %v1065 = vadd.f32 %v997, %v1063
  %v1066 = vadd.f32 %v998, %v1063
  %v1067 = vadd.f32 %v999, %v1063
  %v1068 = vadd.f32 %v1000, %v1063
  %v1069 = vadd.f32 %v1001, %v1063
  %v1070 = vadd.f32 %v1002, %v1063
  %v1071 = vadd.f32 %v1003, %v1063
  %v1072 = vadd.f32 %v1004, %v1063
  %v1073 = vadd.f32 %v1005, %v1063
  %v1074 = vadd.f32 %v1006, %v1063
  %v1075 = vadd.f32 %v1007, %v1063
  %v1076 = vadd.f32 %v1008, %v1063
  %v1077 = vadd.f32 %v1009, %v1063
  %v1078 = vadd.f32 %v1010, %v1063
  %v1079 = vadd.f32 %v1011, %v1063
  %v1080 = vadd.f32 %v1012, %v1063
  %v1081 = vadd.f32 %v1013, %v1063
  %v1082 = vadd.f32 %v1014, %v1063
  %v1083 = vadd.f32 %v1015, %v1063
  %v1084 = vadd.f32 %v1016, %v1063
  %v1085 = vadd.f32 %v1017, %v1063
  %v1086 = vadd.f32 %v1018, %v1063
  %v1087 = vadd.f32 %v1019, %v1063
  %v1088 = vadd.f32 %v1020, %v1063
  %v1089 = vadd.f32 %v1021, %v1063
  %v1090 = vadd.f32 %v1022, %v1063
  %v1091 = vadd.f32 %v1023, %v1063
  %v1092 = vadd.f32 %v1024, %v1063
  %v1093 = vadd.f32 %v1025, %v1063
  %v1094 = vadd.f32 %v1026, %v1063
  %v1095 = vadd.f32 %v1027, %v1063
  %v1096 = vadd.f32 %v1028, %v1063
  %v1097 = vadd.f32 %v1029, %v1063
  %v1098 = vadd.f32 %v1030, %v1063
  %v1099 = vadd.f32 %v1031, %v1063
  %v1100 = vadd.f32 %v1032, %v1063
  %v1101 = vadd.f32 %v1033, %v1063
  %v1102 = vadd.f32 %v1034, %v1063
  %v1103 = vadd.f32 %v1035, %v1063
  %v1104 = vadd.f32 %v1036, %v1063
  %v1105 = vadd.f32 %v1037, %v1063
  %v1106 = vadd.f32 %v1038, %v1063
  %v1107 = vadd.f32 %v1039, %v1063
  %v1108 = vadd.f32 %v1040, %v1063
  %v1109 = vadd.f32 %v1041, %v1063
  %v1110 = vadd.f32 %v1042, %v1063
  %v1111 = vadd.f32 %v1043, %v1063
  %v1112 = vadd.f32 %v1044, %v1063
  %v1113 = vadd.f32 %v1045, %v1063
  %v1114 = vadd.f32 %v1046, %v1063
  %v1115 = vadd.f32 %v1047, %v1063
  %v1116 = vadd.f32 %v1048, %v1063
  %v1117 = vadd.f32 %v1049, %v1063
  %v1118 = vadd.f32 %v1050, %v1063
  %v1119 = vadd.f32 %v1051, %v1063
  %v1120 = vadd.f32 %v1052, %v1063
  %v1121 = vadd.f32 %v1053, %v1063
  %v1122 = vadd.f32 %v1054, %v1063
  %v1123 = vadd.f32 %v1055, %v1063
  %v1124 = vadd.f32 %v1056, %v1063
  %v1125 = vadd.f32 %v1057, %v1063
  %v1126 = vadd.f32 %v1058, %v1063
  %v1127 = vadd.f32 %v1059, %v1063
  %v1128 = vmax.f32 %v1064, 0.0
  %v1129 = vmax.f32 %v1065, 0.0
  %v1130 = vmax.f32 %v1066, 0.0
  %v1131 = vmax.f32 %v1067, 0.0
  %v1132 = vmax.f32 %v1068, 0.0
  %v1133 = vmax.f32 %v1069, 0.0
  %v1134 = vmax.f32 %v1070, 0.0
  %v1135 = vmax.f32 %v1071, 0.0
  %v1136 = vmax.f32 %v1072, 0.0
  %v1137 = vmax.f32 %v1073, 0.0
  %v1138 = vmax.f32 %v1074, 0.0
  %v1139 = vmax.f32 %v1075, 0.0
  %v1140 = vmax.f32 %v1076, 0.0
  %v1141 = vmax.f32 %v1077, 0.0
  %v1142 = vmax.f32 %v1078, 0.0
  %v1143 = vmax.f32 %v1079, 0.0
  %v1144 = vmax.f32 %v1080, 0.0
  %v1145 = vmax.f32 %v1081, 0.0
  %v1146 = vmax.f32 %v1082, 0.0
  %v1147 = vmax.f32 %v1083, 0.0
  %v1148 = vmax.f32 %v1084, 0.0
  %v1149 = vmax.f32 %v1085, 0.0
  %v1150 = vmax.f32 %v1086, 0.0
  %v1151 = vmax.f32 %v1087, 0.0
  %v1152 = vmax.f32 %v1088, 0.0
  %v1153 = vmax.f32 %v1089, 0.0
  %v1154 = vmax.f32 %v1090, 0.0
  %v1155 = vmax.f32 %v1091, 0.0
  %v1156 = vmax.f32 %v1092, 0.0
  %v1157 = vmax.f32 %v1093, 0.0
  %v1158 = vmax.f32 %v1094, 0.0
  %v1159 = vmax.f32 %v1095, 0.0
  %v1160 = vmax.f32 %v1096, 0.0
  %v1161 = vmax.f32 %v1097, 0.0
  %v1162 = vmax.f32 %v1098, 0.0
  %v1163 = vmax.f32 %v1099, 0.0
  %v1164 = vmax.f32 %v1100, 0.0
  %v1165 = vmax.f32 %v1101, 0.0
  %v1166 = vmax.f32 %v1102, 0.0
  %v1167 = vmax.f32 %v1103, 0.0
  %v1168 = vmax.f32 %v1104, 0.0
  %v1169 = vmax.f32 %v1105, 0.0
  %v1170 = vmax.f32 %v1106, 0.0
  %v1171 = vmax.f32 %v1107, 0.0
  %v1172 = vmax.f32 %v1108, 0.0
  %v1173 = vmax.f32 %v1109, 0.0
  %v1174 = vmax.f32 %v1110, 0.0
  %v1175 = vmax.f32 %v1111, 0.0
  %v1176 = vmax.f32 %v1112, 0.0
  %v1177 = vmax.f32 %v1113, 0.0
  %v1178 = vmax.f32 %v1114, 0.0
  %v1179 = vmax.f32 %v1115, 0.0
  %v1180 = vmax.f32 %v1116, 0.0
  %v1181 = vmax.f32 %v1117, 0.0
  %v1182 = vmax.f32 %v1118, 0.0
  %v1183 = vmax.f32 %v1119, 0.0
  %v1184 = vmax.f32 %v1120, 0.0
  %v1185 = vmax.f32 %v1121, 0.0
  %v1186 = vmax.f32 %v1122, 0.0
  %v1187 = vmax.f32 %v1123, 0.0
  %v1188 = vmax.f32 %v1124, 0.0
  %v1189 = vmax.f32 %v1125, 0.0
  %v1190 = vmax.f32 %v1126, 0.0
  %v1191 = vmax.f32 %v1127, 0.0
  %1192 = vst.msk [vmem:[#allocation2] sm:$0xff] %vm258, 0.0
  %1193 = vst.msk [vmem:[#allocation2 + $0x8] sm:$0xff] %vm258, 0.0
  %vm1194 = vcmask 25600
  %1195 = vst.msk [vmem:[#allocation2 + $0x10] sm:$0x3] %vm1194, 0.0
  %1196 = vst.msk [vmem:[#allocation2 + $0x1b0] sm:$0xff] %vm258, 0.0
  %1197 = vst.msk [vmem:[#allocation2 + $0x1b8] sm:$0xff] %vm258, 0.0
  %1198 = vst.msk [vmem:[#allocation2 + $0x1c0] sm:$0x3] %vm1194, 0.0
  %s1199 = scalar_lea.vmem [#allocation2], 408
  %1200 = vst.msk [vmem:[%s1199] sm:$0xff] %vm258, 0.0
  %1201 = vst.msk [vmem:[%s1199 + $0x8] sm:$0xff] %vm258, 0.0
  %1202 = vst.msk [vmem:[%s1199 + $0x10] sm:$0x3] %vm1194, 0.0
  %1203 = vst.msk [vmem:[%s1199 + $0x1b0] sm:$0xff] %vm258, 0.0
  %1204 = vst.msk [vmem:[%s1199 + $0x1b8] sm:$0xff] %vm258, 0.0
  %1205 = vst.msk [vmem:[%s1199 + $0x1c0] sm:$0x3] %vm1194, 0.0
  %vm1206 = vcmask 24576
  %1207 = vst.msk [vmem:[#allocation2] sm:$0x1] %vm1206, 0.0
  %1208 = vst.msk [vmem:[#allocation2 + $0x18] sm:$0x1] %vm1206, 0.0
  %1209 = vst.msk [vmem:[#allocation2 + $0x30] sm:$0x1] %vm1206, 0.0
  %1210 = vst.msk [vmem:[#allocation2 + $0x48] sm:$0x1] %vm1206, 0.0
  %1211 = vst.msk [vmem:[#allocation2 + $0x60] sm:$0x1] %vm1206, 0.0
  %1212 = vst.msk [vmem:[#allocation2 + $0x78] sm:$0x1] %vm1206, 0.0
  %1213 = vst.msk [vmem:[#allocation2 + $0x90] sm:$0x1] %vm1206, 0.0
  %1214 = vst.msk [vmem:[#allocation2 + $0xa8] sm:$0x1] %vm1206, 0.0
  %1215 = vst.msk [vmem:[#allocation2 + $0xc0] sm:$0x1] %vm1206, 0.0
  %1216 = vst.msk [vmem:[#allocation2 + $0xd8] sm:$0x1] %vm1206, 0.0
  %1217 = vst.msk [vmem:[#allocation2 + $0xf0] sm:$0x1] %vm1206, 0.0
  %1218 = vst.msk [vmem:[#allocation2 + $0x108] sm:$0x1] %vm1206, 0.0
  %1219 = vst.msk [vmem:[#allocation2 + $0x120] sm:$0x1] %vm1206, 0.0
  %1220 = vst.msk [vmem:[#allocation2 + $0x138] sm:$0x1] %vm1206, 0.0
  %1221 = vst.msk [vmem:[#allocation2 + $0x150] sm:$0x1] %vm1206, 0.0
  %1222 = vst.msk [vmem:[#allocation2 + $0x168] sm:$0x1] %vm1206, 0.0
  %1223 = vst.msk [vmem:[#allocation2 + $0x180] sm:$0x1] %vm1206, 0.0
  %1224 = vst.msk [vmem:[#allocation2 + $0x198] sm:$0x1] %vm1206, 0.0
  %1225 = vst.msk [vmem:[#allocation2 + $0x1b0] sm:$0x1] %vm1206, 0.0
  %1226 = vst.msk [vmem:[#allocation2 + $0x1c8] sm:$0x1] %vm1206, 0.0
  %1227 = vst.msk [vmem:[#allocation2 + $0x1e0] sm:$0x1] %vm1206, 0.0
  %1228 = vst.msk [vmem:[#allocation2 + $0x1f8] sm:$0x1] %vm1206, 0.0
  %1229 = vst.msk [vmem:[#allocation2 + $0x210] sm:$0x1] %vm1206, 0.0
  %1230 = vst.msk [vmem:[#allocation2 + $0x228] sm:$0x1] %vm1206, 0.0
  %1231 = vst.msk [vmem:[#allocation2 + $0x240] sm:$0x1] %vm1206, 0.0
  %1232 = vst.msk [vmem:[#allocation2 + $0x258] sm:$0x1] %vm1206, 0.0
  %1233 = vst.msk [vmem:[#allocation2 + $0x270] sm:$0x1] %vm1206, 0.0
  %1234 = vst.msk [vmem:[#allocation2 + $0x288] sm:$0x1] %vm1206, 0.0
  %1235 = vst.msk [vmem:[#allocation2 + $0x2a0] sm:$0x1] %vm1206, 0.0
  %1236 = vst.msk [vmem:[#allocation2 + $0x2b8] sm:$0x1] %vm1206, 0.0
  %1237 = vst.msk [vmem:[#allocation2 + $0x2d0] sm:$0x1] %vm1206, 0.0
  %1238 = vst.msk [vmem:[#allocation2 + $0x2e8] sm:$0x1] %vm1206, 0.0
  %1239 = vst.msk [vmem:[#allocation2 + $0x300] sm:$0x1] %vm1206, 0.0
  %1240 = vst.msk [vmem:[#allocation2 + $0x318] sm:$0x1] %vm1206, 0.0
  %1241 = vst.msk [vmem:[#allocation2 + $0x330] sm:$0x1] %vm1206, 0.0
  %1242 = vst.msk [vmem:[#allocation2 + $0x348] sm:$0x1] %vm1206, 0.0
  %1243 = vst.msk [vmem:[#allocation2 + $0x11] sm:$0x1] %vm1206, 0.0
  %1244 = vst.msk [vmem:[#allocation2 + $0x29] sm:$0x1] %vm1206, 0.0
  %1245 = vst.msk [vmem:[#allocation2 + $0x41] sm:$0x1] %vm1206, 0.0
  %1246 = vst.msk [vmem:[#allocation2 + $0x59] sm:$0x1] %vm1206, 0.0
  %1247 = vst.msk [vmem:[#allocation2 + $0x71] sm:$0x1] %vm1206, 0.0
  %1248 = vst.msk [vmem:[#allocation2 + $0x89] sm:$0x1] %vm1206, 0.0
  %1249 = vst.msk [vmem:[#allocation2 + $0xa1] sm:$0x1] %vm1206, 0.0
  %1250 = vst.msk [vmem:[#allocation2 + $0xb9] sm:$0x1] %vm1206, 0.0
  %1251 = vst.msk [vmem:[#allocation2 + $0xd1] sm:$0x1] %vm1206, 0.0
  %1252 = vst.msk [vmem:[#allocation2 + $0xe9] sm:$0x1] %vm1206, 0.0
  %1253 = vst.msk [vmem:[#allocation2 + $0x101] sm:$0x1] %vm1206, 0.0
  %1254 = vst.msk [vmem:[#allocation2 + $0x119] sm:$0x1] %vm1206, 0.0
  %1255 = vst.msk [vmem:[#allocation2 + $0x131] sm:$0x1] %vm1206, 0.0
  %1256 = vst.msk [vmem:[#allocation2 + $0x149] sm:$0x1] %vm1206, 0.0
  %1257 = vst.msk [vmem:[#allocation2 + $0x161] sm:$0x1] %vm1206, 0.0
  %1258 = vst.msk [vmem:[#allocation2 + $0x179] sm:$0x1] %vm1206, 0.0
  %1259 = vst.msk [vmem:[#allocation2 + $0x191] sm:$0x1] %vm1206, 0.0
  %1260 = vst.msk [vmem:[#allocation2 + $0x1a9] sm:$0x1] %vm1206, 0.0
  %1261 = vst.msk [vmem:[#allocation2 + $0x1c1] sm:$0x1] %vm1206, 0.0
  %1262 = vst.msk [vmem:[#allocation2 + $0x1d9] sm:$0x1] %vm1206, 0.0
  %1263 = vst.msk [vmem:[#allocation2 + $0x1f1] sm:$0x1] %vm1206, 0.0
  %1264 = vst.msk [vmem:[#allocation2 + $0x209] sm:$0x1] %vm1206, 0.0
  %1265 = vst.msk [vmem:[#allocation2 + $0x221] sm:$0x1] %vm1206, 0.0
  %1266 = vst.msk [vmem:[#allocation2 + $0x239] sm:$0x1] %vm1206, 0.0
  %1267 = vst.msk [vmem:[#allocation2 + $0x251] sm:$0x1] %vm1206, 0.0
  %1268 = vst.msk [vmem:[#allocation2 + $0x269] sm:$0x1] %vm1206, 0.0
  %1269 = vst.msk [vmem:[#allocation2 + $0x281] sm:$0x1] %vm1206, 0.0
  %1270 = vst.msk [vmem:[#allocation2 + $0x299] sm:$0x1] %vm1206, 0.0
  %1271 = vst.msk [vmem:[#allocation2 + $0x2b1] sm:$0x1] %vm1206, 0.0
  %1272 = vst.msk [vmem:[#allocation2 + $0x2c9] sm:$0x1] %vm1206, 0.0
  %1273 = vst.msk [vmem:[#allocation2 + $0x2e1] sm:$0x1] %vm1206, 0.0
  %1274 = vst.msk [vmem:[#allocation2 + $0x2f9] sm:$0x1] %vm1206, 0.0
  %1275 = vst.msk [vmem:[#allocation2 + $0x311] sm:$0x1] %vm1206, 0.0
  %1276 = vst.msk [vmem:[#allocation2 + $0x329] sm:$0x1] %vm1206, 0.0
  %1277 = vst.msk [vmem:[#allocation2 + $0x341] sm:$0x1] %vm1206, 0.0
  %1278 = vst.msk [vmem:[#allocation2 + $0x359] sm:$0x1] %vm1206, 0.0
  %s1279 = scalar_lea.vmem [#allocation2], 24
  %1280 = vst.msk [vmem:[%s1279 + $0x1] sm:$0xff] %vm258, %v1128
  %1281 = vst.msk [vmem:[%s1279 + $0x9] sm:$0xff] %vm258, %v1129
  %1282 = vst.msk [vmem:[%s1279 + $0x19] sm:$0xff] %vm258, %v1130
  %1283 = vst.msk [vmem:[%s1279 + $0x21] sm:$0xff] %vm258, %v1131
  %1284 = vst.msk [vmem:[%s1279 + $0x31] sm:$0xff] %vm258, %v1132
  %1285 = vst.msk [vmem:[%s1279 + $0x39] sm:$0xff] %vm258, %v1133
  %1286 = vst.msk [vmem:[%s1279 + $0x49] sm:$0xff] %vm258, %v1134
  %1287 = vst.msk [vmem:[%s1279 + $0x51] sm:$0xff] %vm258, %v1135
  %1288 = vst.msk [vmem:[%s1279 + $0x61] sm:$0xff] %vm258, %v1136
  %1289 = vst.msk [vmem:[%s1279 + $0x69] sm:$0xff] %vm258, %v1137
  %1290 = vst.msk [vmem:[%s1279 + $0x79] sm:$0xff] %vm258, %v1138
  %1291 = vst.msk [vmem:[%s1279 + $0x81] sm:$0xff] %vm258, %v1139
  %1292 = vst.msk [vmem:[%s1279 + $0x91] sm:$0xff] %vm258, %v1140
  %1293 = vst.msk [vmem:[%s1279 + $0x99] sm:$0xff] %vm258, %v1141
  %1294 = vst.msk [vmem:[%s1279 + $0xa9] sm:$0xff] %vm258, %v1142
  %1295 = vst.msk [vmem:[%s1279 + $0xb1] sm:$0xff] %vm258, %v1143
  %1296 = vst.msk [vmem:[%s1279 + $0xc1] sm:$0xff] %vm258, %v1144
  %1297 = vst.msk [vmem:[%s1279 + $0xc9] sm:$0xff] %vm258, %v1145
  %1298 = vst.msk [vmem:[%s1279 + $0xd9] sm:$0xff] %vm258, %v1146
  %1299 = vst.msk [vmem:[%s1279 + $0xe1] sm:$0xff] %vm258, %v1147
  %1300 = vst.msk [vmem:[%s1279 + $0xf1] sm:$0xff] %vm258, %v1148
  %1301 = vst.msk [vmem:[%s1279 + $0xf9] sm:$0xff] %vm258, %v1149
  %1302 = vst.msk [vmem:[%s1279 + $0x109] sm:$0xff] %vm258, %v1150
  %1303 = vst.msk [vmem:[%s1279 + $0x111] sm:$0xff] %vm258, %v1151
  %1304 = vst.msk [vmem:[%s1279 + $0x121] sm:$0xff] %vm258, %v1152
  %1305 = vst.msk [vmem:[%s1279 + $0x129] sm:$0xff] %vm258, %v1153
  %1306 = vst.msk [vmem:[%s1279 + $0x139] sm:$0xff] %vm258, %v1154
  %1307 = vst.msk [vmem:[%s1279 + $0x141] sm:$0xff] %vm258, %v1155
  %1308 = vst.msk [vmem:[%s1279 + $0x151] sm:$0xff] %vm258, %v1156
  %1309 = vst.msk [vmem:[%s1279 + $0x159] sm:$0xff] %vm258, %v1157
  %1310 = vst.msk [vmem:[%s1279 + $0x169] sm:$0xff] %vm258, %v1158
  %1311 = vst.msk [vmem:[%s1279 + $0x171] sm:$0xff] %vm258, %v1159
  %1312 = vst.msk [vmem:[%s1279 + $0x1b1] sm:$0xff] %vm258, %v1160
  %1313 = vst.msk [vmem:[%s1279 + $0x1b9] sm:$0xff] %vm258, %v1161
  %1314 = vst.msk [vmem:[%s1279 + $0x1c9] sm:$0xff] %vm258, %v1162
  %1315 = vst.msk [vmem:[%s1279 + $0x1d1] sm:$0xff] %vm258, %v1163
  %1316 = vst.msk [vmem:[%s1279 + $0x1e1] sm:$0xff] %vm258, %v1164
  %1317 = vst.msk [vmem:[%s1279 + $0x1e9] sm:$0xff] %vm258, %v1165
  %1318 = vst.msk [vmem:[%s1279 + $0x1f9] sm:$0xff] %vm258, %v1166
  %1319 = vst.msk [vmem:[%s1279 + $0x201] sm:$0xff] %vm258, %v1167
  %1320 = vst.msk [vmem:[%s1279 + $0x211] sm:$0xff] %vm258, %v1168
  %1321 = vst.msk [vmem:[%s1279 + $0x219] sm:$0xff] %vm258, %v1169
  %1322 = vst.msk [vmem:[%s1279 + $0x229] sm:$0xff] %vm258, %v1170
  %1323 = vst.msk [vmem:[%s1279 + $0x231] sm:$0xff] %vm258, %v1171
  %1324 = vst.msk [vmem:[%s1279 + $0x241] sm:$0xff] %vm258, %v1172
  %1325 = vst.msk [vmem:[%s1279 + $0x249] sm:$0xff] %vm258, %v1173
  %1326 = vst.msk [vmem:[%s1279 + $0x259] sm:$0xff] %vm258, %v1174
  %1327 = vst.msk [vmem:[%s1279 + $0x261] sm:$0xff] %vm258, %v1175
  %1328 = vst.msk [vmem:[%s1279 + $0x271] sm:$0xff] %vm258, %v1176
  %1329 = vst.msk [vmem:[%s1279 + $0x279] sm:$0xff] %vm258, %v1177
  %1330 = vst.msk [vmem:[%s1279 + $0x289] sm:$0xff] %vm258, %v1178
  %1331 = vst.msk [vmem:[%s1279 + $0x291] sm:$0xff] %vm258, %v1179
  %1332 = vst.msk [vmem:[%s1279 + $0x2a1] sm:$0xff] %vm258, %v1180
  %1333 = vst.msk [vmem:[%s1279 + $0x2a9] sm:$0xff] %vm258, %v1181
  %1334 = vst.msk [vmem:[%s1279 + $0x2b9] sm:$0xff] %vm258, %v1182
  %1335 = vst.msk [vmem:[%s1279 + $0x2c1] sm:$0xff] %vm258, %v1183
  %1336 = vst.msk [vmem:[%s1279 + $0x2d1] sm:$0xff] %vm258, %v1184
  %1337 = vst.msk [vmem:[%s1279 + $0x2d9] sm:$0xff] %vm258, %v1185
  %1338 = vst.msk [vmem:[%s1279 + $0x2e9] sm:$0xff] %vm258, %v1186
  %1339 = vst.msk [vmem:[%s1279 + $0x2f1] sm:$0xff] %vm258, %v1187
  %1340 = vst.msk [vmem:[%s1279 + $0x301] sm:$0xff] %vm258, %v1188
  %1341 = vst.msk [vmem:[%s1279 + $0x309] sm:$0xff] %vm258, %v1189
  %1342 = vst.msk [vmem:[%s1279 + $0x319] sm:$0xff] %vm258, %v1190
  %1343 = vst.msk [vmem:[%s1279 + $0x321] sm:$0xff] %vm258, %v1191
  %v1344 = vld [vmem:[#allocation2] sm:$0xff]
  %v1345 = vld [vmem:[#allocation2 + $0x8] sm:$0xff]
  %v1346 = vld [vmem:[#allocation2 + $0x10] sm:$0x3]
  %v1347 = vld [vmem:[#allocation2 + $0x18] sm:$0xff]
  %v1348 = vld [vmem:[#allocation2 + $0x20] sm:$0xff]
  %v1349 = vld [vmem:[#allocation2 + $0x28] sm:$0x3]
  %v1350 = vld [vmem:[#allocation2 + $0x30] sm:$0xff]
  %v1351 = vld [vmem:[#allocation2 + $0x38] sm:$0xff]
  %v1352 = vld [vmem:[#allocation2 + $0x40] sm:$0x3]
  %v1353 = vld [vmem:[#allocation2 + $0x48] sm:$0xff]
  %v1354 = vld [vmem:[#allocation2 + $0x50] sm:$0xff]
  %v1355 = vld [vmem:[#allocation2 + $0x58] sm:$0x3]
  %v1356 = vld [vmem:[#allocation2 + $0x60] sm:$0xff]
  %v1357 = vld [vmem:[#allocation2 + $0x68] sm:$0xff]
  %v1358 = vld [vmem:[#allocation2 + $0x70] sm:$0x3]
  %v1359 = vld [vmem:[#allocation2 + $0x78] sm:$0xff]
  %v1360 = vld [vmem:[#allocation2 + $0x80] sm:$0xff]
  %v1361 = vld [vmem:[#allocation2 + $0x88] sm:$0x3]
  %v1362 = vld [vmem:[#allocation2 + $0x90] sm:$0xff]
  %v1363 = vld [vmem:[#allocation2 + $0x98] sm:$0xff]
  %v1364 = vld [vmem:[#allocation2 + $0xa0] sm:$0x3]
  %v1365 = vld [vmem:[#allocation2 + $0xa8] sm:$0xff]
  %v1366 = vld [vmem:[#allocation2 + $0xb0] sm:$0xff]
  %v1367 = vld [vmem:[#allocation2 + $0xb8] sm:$0x3]
  %v1368 = vld [vmem:[#allocation2 + $0xc0] sm:$0xff]
  %v1369 = vld [vmem:[#allocation2 + $0xc8] sm:$0xff]
  %v1370 = vld [vmem:[#allocation2 + $0xd0] sm:$0x3]
  %v1371 = vld [vmem:[#allocation2 + $0xd8] sm:$0xff]
  %v1372 = vld [vmem:[#allocation2 + $0xe0] sm:$0xff]
  %v1373 = vld [vmem:[#allocation2 + $0xe8] sm:$0x3]
  %v1374 = vld [vmem:[#allocation2 + $0xf0] sm:$0xff]
  %v1375 = vld [vmem:[#allocation2 + $0xf8] sm:$0xff]
  %v1376 = vld [vmem:[#allocation2 + $0x100] sm:$0x3]
  %v1377 = vld [vmem:[#allocation2 + $0x108] sm:$0xff]
  %v1378 = vld [vmem:[#allocation2 + $0x110] sm:$0xff]
  %v1379 = vld [vmem:[#allocation2 + $0x118] sm:$0x3]
  %v1380 = vld [vmem:[#allocation2 + $0x120] sm:$0xff]
  %v1381 = vld [vmem:[#allocation2 + $0x128] sm:$0xff]
  %v1382 = vld [vmem:[#allocation2 + $0x130] sm:$0x3]
  %v1383 = vld [vmem:[#allocation2 + $0x138] sm:$0xff]
  %v1384 = vld [vmem:[#allocation2 + $0x140] sm:$0xff]
  %v1385 = vld [vmem:[#allocation2 + $0x148] sm:$0x3]
  %v1386 = vld [vmem:[#allocation2 + $0x150] sm:$0xff]
  %v1387 = vld [vmem:[#allocation2 + $0x158] sm:$0xff]
  %v1388 = vld [vmem:[#allocation2 + $0x160] sm:$0x3]
  %v1389 = vld [vmem:[#allocation2 + $0x168] sm:$0xff]
  %v1390 = vld [vmem:[#allocation2 + $0x170] sm:$0xff]
  %v1391 = vld [vmem:[#allocation2 + $0x178] sm:$0x3]
  %v1392 = vld [vmem:[#allocation2 + $0x180] sm:$0xff]
  %v1393 = vld [vmem:[#allocation2 + $0x188] sm:$0xff]
  %v1394 = vld [vmem:[#allocation2 + $0x190] sm:$0x3]
  %v1395 = vld [vmem:[#allocation2 + $0x198] sm:$0xff]
  %v1396 = vld [vmem:[#allocation2 + $0x1a0] sm:$0xff]
  %v1397 = vld [vmem:[#allocation2 + $0x1a8] sm:$0x3]
  %v1398 = vld [vmem:[#allocation2 + $0x1b0] sm:$0xff]
  %v1399 = vld [vmem:[#allocation2 + $0x1b8] sm:$0xff]
  %v1400 = vld [vmem:[#allocation2 + $0x1c0] sm:$0x3]
  %v1401 = vld [vmem:[#allocation2 + $0x1c8] sm:$0xff]
  %v1402 = vld [vmem:[#allocation2 + $0x1d0] sm:$0xff]
  %v1403 = vld [vmem:[#allocation2 + $0x1d8] sm:$0x3]
  %v1404 = vld [vmem:[#allocation2 + $0x1e0] sm:$0xff]
  %v1405 = vld [vmem:[#allocation2 + $0x1e8] sm:$0xff]
  %v1406 = vld [vmem:[#allocation2 + $0x1f0] sm:$0x3]
  %v1407 = vld [vmem:[#allocation2 + $0x1f8] sm:$0xff]
  %v1408 = vld [vmem:[#allocation2 + $0x200] sm:$0xff]
  %v1409 = vld [vmem:[#allocation2 + $0x208] sm:$0x3]
  %v1410 = vld [vmem:[#allocation2 + $0x210] sm:$0xff]
  %v1411 = vld [vmem:[#allocation2 + $0x218] sm:$0xff]
  %v1412 = vld [vmem:[#allocation2 + $0x220] sm:$0x3]
  %v1413 = vld [vmem:[#allocation2 + $0x228] sm:$0xff]
  %v1414 = vld [vmem:[#allocation2 + $0x230] sm:$0xff]
  %v1415 = vld [vmem:[#allocation2 + $0x238] sm:$0x3]
  %v1416 = vld [vmem:[#allocation2 + $0x240] sm:$0xff]
  %v1417 = vld [vmem:[#allocation2 + $0x248] sm:$0xff]
  %v1418 = vld [vmem:[#allocation2 + $0x250] sm:$0x3]
  %v1419 = vld [vmem:[#allocation2 + $0x258] sm:$0xff]
  %v1420 = vld [vmem:[#allocation2 + $0x260] sm:$0xff]
  %v1421 = vld [vmem:[#allocation2 + $0x268] sm:$0x3]
  %v1422 = vld [vmem:[#allocation2 + $0x270] sm:$0xff]
  %v1423 = vld [vmem:[#allocation2 + $0x278] sm:$0xff]
  %v1424 = vld [vmem:[#allocation2 + $0x280] sm:$0x3]
  %v1425 = vld [vmem:[#allocation2 + $0x288] sm:$0xff]
  %v1426 = vld [vmem:[#allocation2 + $0x290] sm:$0xff]
  %v1427 = vld [vmem:[#allocation2 + $0x298] sm:$0x3]
  %v1428 = vld [vmem:[#allocation2 + $0x2a0] sm:$0xff]
  %v1429 = vld [vmem:[#allocation2 + $0x2a8] sm:$0xff]
  %v1430 = vld [vmem:[#allocation2 + $0x2b0] sm:$0x3]
  %v1431 = vld [vmem:[#allocation2 + $0x2b8] sm:$0xff]
  %v1432 = vld [vmem:[#allocation2 + $0x2c0] sm:$0xff]
  %v1433 = vld [vmem:[#allocation2 + $0x2c8] sm:$0x3]
  %v1434 = vld [vmem:[#allocation2 + $0x2d0] sm:$0xff]
  %v1435 = vld [vmem:[#allocation2 + $0x2d8] sm:$0xff]
  %v1436 = vld [vmem:[#allocation2 + $0x2e0] sm:$0x3]
  %v1437 = vld [vmem:[#allocation2 + $0x2e8] sm:$0xff]
  %v1438 = vld [vmem:[#allocation2 + $0x2f0] sm:$0xff]
  %v1439 = vld [vmem:[#allocation2 + $0x2f8] sm:$0x3]
  %v1440 = vld [vmem:[#allocation2 + $0x300] sm:$0xff]
  %v1441 = vld [vmem:[#allocation2 + $0x308] sm:$0xff]
  %v1442 = vld [vmem:[#allocation2 + $0x310] sm:$0x3]
  %v1443 = vld [vmem:[#allocation2 + $0x318] sm:$0xff]
  %v1444 = vld [vmem:[#allocation2 + $0x320] sm:$0xff]
  %v1445 = vld [vmem:[#allocation2 + $0x328] sm:$0x3]
  %v1446 = vld [vmem:[#allocation2 + $0x330] sm:$0xff]
  %v1447 = vld [vmem:[#allocation2 + $0x338] sm:$0xff]
  %v1448 = vld [vmem:[#allocation2 + $0x340] sm:$0x3]
  %v1449 = vld [vmem:[#allocation2 + $0x348] sm:$0xff]
  %v1450 = vld [vmem:[#allocation2 + $0x350] sm:$0xff]
  %v1451 = vld [vmem:[#allocation2 + $0x358] sm:$0x3]
  %vm1548 = vcmask 1046528
  %v1549 = vrot.slane %v1344, 1
  %v1550 = vrot.slane %v1345, 1
  %v1551 = vsel %vm1548, %v1549, %v1550
  %v1552 = vrot.slane %v1346, 1
  %v1553 = vsel %vm1548, %v1550, %v1552
  %v1554 = vrot.slane %v1347, 1
  %v1555 = vrot.slane %v1348, 1
  %v1556 = vsel %vm1548, %v1554, %v1555
  %v1557 = vrot.slane %v1349, 1
  %v1558 = vsel %vm1548, %v1555, %v1557
  %v1559 = vrot.slane %v1350, 1
  %v1560 = vrot.slane %v1351, 1
  %v1561 = vsel %vm1548, %v1559, %v1560
  %v1562 = vrot.slane %v1352, 1
  %v1563 = vsel %vm1548, %v1560, %v1562
  %v1564 = vrot.slane %v1353, 1
  %v1565 = vrot.slane %v1354, 1
  %v1566 = vsel %vm1548, %v1564, %v1565
  %v1567 = vrot.slane %v1355, 1
  %v1568 = vsel %vm1548, %v1565, %v1567
  %v1569 = vrot.slane %v1356, 1
  %v1570 = vrot.slane %v1357, 1
  %v1571 = vsel %vm1548, %v1569, %v1570
  %v1572 = vrot.slane %v1358, 1
  %v1573 = vsel %vm1548, %v1570, %v1572
  %v1574 = vrot.slane %v1359, 1
  %v1575 = vrot.slane %v1360, 1
  %v1576 = vsel %vm1548, %v1574, %v1575
  %v1577 = vrot.slane %v1361, 1
  %v1578 = vsel %vm1548, %v1575, %v1577
  %v1579 = vrot.slane %v1362, 1
  %v1580 = vrot.slane %v1363, 1
  %v1581 = vsel %vm1548, %v1579, %v1580
  %v1582 = vrot.slane %v1364, 1
  %v1583 = vsel %vm1548, %v1580, %v1582
  %v1584 = vrot.slane %v1365, 1
  %v1585 = vrot.slane %v1366, 1
  %v1586 = vsel %vm1548, %v1584, %v1585
  %v1587 = vrot.slane %v1367, 1
  %v1588 = vsel %vm1548, %v1585, %v1587
  %v1589 = vrot.slane %v1368, 1
  %v1590 = vrot.slane %v1369, 1
  %v1591 = vsel %vm1548, %v1589, %v1590
  %v1592 = vrot.slane %v1370, 1
  %v1593 = vsel %vm1548, %v1590, %v1592
  %v1594 = vrot.slane %v1371, 1
  %v1595 = vrot.slane %v1372, 1
  %v1596 = vsel %vm1548, %v1594, %v1595
  %v1597 = vrot.slane %v1373, 1
  %v1598 = vsel %vm1548, %v1595, %v1597
  %v1599 = vrot.slane %v1374, 1
  %v1600 = vrot.slane %v1375, 1
  %v1601 = vsel %vm1548, %v1599, %v1600
  %v1602 = vrot.slane %v1376, 1
  %v1603 = vsel %vm1548, %v1600, %v1602
  %v1604 = vrot.slane %v1377, 1
  %v1605 = vrot.slane %v1378, 1
  %v1606 = vsel %vm1548, %v1604, %v1605
  %v1607 = vrot.slane %v1379, 1
  %v1608 = vsel %vm1548, %v1605, %v1607
  %v1609 = vrot.slane %v1380, 1
  %v1610 = vrot.slane %v1381, 1
  %v1611 = vsel %vm1548, %v1609, %v1610
  %v1612 = vrot.slane %v1382, 1
  %v1613 = vsel %vm1548, %v1610, %v1612
  %v1614 = vrot.slane %v1383, 1
  %v1615 = vrot.slane %v1384, 1
  %v1616 = vsel %vm1548, %v1614, %v1615
  %v1617 = vrot.slane %v1385, 1
  %v1618 = vsel %vm1548, %v1615, %v1617
  %v1619 = vrot.slane %v1386, 1
  %v1620 = vrot.slane %v1387, 1
  %v1621 = vsel %vm1548, %v1619, %v1620
  %v1622 = vrot.slane %v1388, 1
  %v1623 = vsel %vm1548, %v1620, %v1622
  %v1624 = vrot.slane %v1389, 1
  %v1625 = vrot.slane %v1390, 1
  %v1626 = vsel %vm1548, %v1624, %v1625
  %v1627 = vrot.slane %v1391, 1
  %v1628 = vsel %vm1548, %v1625, %v1627
  %v1629 = vrot.slane %v1398, 1
  %v1630 = vrot.slane %v1399, 1
  %v1631 = vsel %vm1548, %v1629, %v1630
  %v1632 = vrot.slane %v1400, 1
  %v1633 = vsel %vm1548, %v1630, %v1632
  %v1634 = vrot.slane %v1401, 1
  %v1635 = vrot.slane %v1402, 1
  %v1636 = vsel %vm1548, %v1634, %v1635
  %v1637 = vrot.slane %v1403, 1
  %v1638 = vsel %vm1548, %v1635, %v1637
  %v1639 = vrot.slane %v1404, 1
  %v1640 = vrot.slane %v1405, 1
  %v1641 = vsel %vm1548, %v1639, %v1640
  %v1642 = vrot.slane %v1406, 1
  %v1643 = vsel %vm1548, %v1640, %v1642
  %v1644 = vrot.slane %v1407, 1
  %v1645 = vrot.slane %v1408, 1
  %v1646 = vsel %vm1548, %v1644, %v1645
  %v1647 = vrot.slane %v1409, 1
  %v1648 = vsel %vm1548, %v1645, %v1647
  %v1649 = vrot.slane %v1410, 1
  %v1650 = vrot.slane %v1411, 1
  %v1651 = vsel %vm1548, %v1649, %v1650
  %v1652 = vrot.slane %v1412, 1
  %v1653 = vsel %vm1548, %v1650, %v1652
  %v1654 = vrot.slane %v1413, 1
  %v1655 = vrot.slane %v1414, 1
  %v1656 = vsel %vm1548, %v1654, %v1655
  %v1657 = vrot.slane %v1415, 1
  %v1658 = vsel %vm1548, %v1655, %v1657
  %v1659 = vrot.slane %v1416, 1
  %v1660 = vrot.slane %v1417, 1
  %v1661 = vsel %vm1548, %v1659, %v1660
  %v1662 = vrot.slane %v1418, 1
  %v1663 = vsel %vm1548, %v1660, %v1662
  %v1664 = vrot.slane %v1419, 1
  %v1665 = vrot.slane %v1420, 1
  %v1666 = vsel %vm1548, %v1664, %v1665
  %v1667 = vrot.slane %v1421, 1
  %v1668 = vsel %vm1548, %v1665, %v1667
  %v1669 = vrot.slane %v1422, 1
  %v1670 = vrot.slane %v1423, 1
  %v1671 = vsel %vm1548, %v1669, %v1670
  %v1672 = vrot.slane %v1424, 1
  %v1673 = vsel %vm1548, %v1670, %v1672
  %v1674 = vrot.slane %v1425, 1
  %v1675 = vrot.slane %v1426, 1
  %v1676 = vsel %vm1548, %v1674, %v1675
  %v1677 = vrot.slane %v1427, 1
  %v1678 = vsel %vm1548, %v1675, %v1677
  %v1679 = vrot.slane %v1428, 1
  %v1680 = vrot.slane %v1429, 1
  %v1681 = vsel %vm1548, %v1679, %v1680
  %v1682 = vrot.slane %v1430, 1
  %v1683 = vsel %vm1548, %v1680, %v1682
  %v1684 = vrot.slane %v1431, 1
  %v1685 = vrot.slane %v1432, 1
  %v1686 = vsel %vm1548, %v1684, %v1685
  %v1687 = vrot.slane %v1433, 1
  %v1688 = vsel %vm1548, %v1685, %v1687
  %v1689 = vrot.slane %v1434, 1
  %v1690 = vrot.slane %v1435, 1
  %v1691 = vsel %vm1548, %v1689, %v1690
  %v1692 = vrot.slane %v1436, 1
  %v1693 = vsel %vm1548, %v1690, %v1692
  %v1694 = vrot.slane %v1437, 1
  %v1695 = vrot.slane %v1438, 1
  %v1696 = vsel %vm1548, %v1694, %v1695
  %v1697 = vrot.slane %v1439, 1
  %v1698 = vsel %vm1548, %v1695, %v1697
  %v1699 = vrot.slane %v1440, 1
  %v1700 = vrot.slane %v1441, 1
  %v1701 = vsel %vm1548, %v1699, %v1700
  %v1702 = vrot.slane %v1442, 1
  %v1703 = vsel %vm1548, %v1700, %v1702
  %v1704 = vrot.slane %v1443, 1
  %v1705 = vrot.slane %v1444, 1
  %v1706 = vsel %vm1548, %v1704, %v1705
  %v1707 = vrot.slane %v1445, 1
  %v1708 = vsel %vm1548, %v1705, %v1707
  %1709 = vrot.lane.b32.xlu0 %v1551, 4
  %v1710 = vpop.permute.xlu0 %1709
  %1711 = vrot.lane.b32.xlu0 %v1553, 4
  %v1712 = vpop.permute.xlu0 %1711
  %1713 = vrot.lane.b32.xlu0 %v1556, 4
  %v1714 = vpop.permute.xlu0 %1713
  %1715 = vrot.lane.b32.xlu0 %v1558, 4
  %v1716 = vpop.permute.xlu0 %1715
  %1717 = vrot.lane.b32.xlu0 %v1561, 4
  %v1718 = vpop.permute.xlu0 %1717
  %1719 = vrot.lane.b32.xlu0 %v1563, 4
  %v1720 = vpop.permute.xlu0 %1719
  %1721 = vrot.lane.b32.xlu0 %v1566, 4
  %v1722 = vpop.permute.xlu0 %1721
  %1723 = vrot.lane.b32.xlu0 %v1568, 4
  %v1724 = vpop.permute.xlu0 %1723
  %1725 = vrot.lane.b32.xlu0 %v1571, 4
  %v1726 = vpop.permute.xlu0 %1725
  %1727 = vrot.lane.b32.xlu0 %v1573, 4
  %v1728 = vpop.permute.xlu0 %1727
  %1729 = vrot.lane.b32.xlu0 %v1576, 4
  %v1730 = vpop.permute.xlu0 %1729
  %1731 = vrot.lane.b32.xlu0 %v1578, 4
  %v1732 = vpop.permute.xlu0 %1731
  %1733 = vrot.lane.b32.xlu0 %v1581, 4
  %v1734 = vpop.permute.xlu0 %1733
  %1735 = vrot.lane.b32.xlu0 %v1583, 4
  %v1736 = vpop.permute.xlu0 %1735
  %1737 = vrot.lane.b32.xlu0 %v1586, 4
  %v1738 = vpop.permute.xlu0 %1737
  %1739 = vrot.lane.b32.xlu0 %v1588, 4
  %v1740 = vpop.permute.xlu0 %1739
  %1741 = vrot.lane.b32.xlu0 %v1591, 4
  %v1742 = vpop.permute.xlu0 %1741
  %1743 = vrot.lane.b32.xlu0 %v1593, 4
  %v1744 = vpop.permute.xlu0 %1743
  %1745 = vrot.lane.b32.xlu0 %v1596, 4
  %v1746 = vpop.permute.xlu0 %1745
  %1747 = vrot.lane.b32.xlu0 %v1598, 4
  %v1748 = vpop.permute.xlu0 %1747
  %1749 = vrot.lane.b32.xlu0 %v1601, 4
  %v1750 = vpop.permute.xlu0 %1749
  %1751 = vrot.lane.b32.xlu0 %v1603, 4
  %v1752 = vpop.permute.xlu0 %1751
  %1753 = vrot.lane.b32.xlu0 %v1606, 4
  %v1754 = vpop.permute.xlu0 %1753
  %1755 = vrot.lane.b32.xlu0 %v1608, 4
  %v1756 = vpop.permute.xlu0 %1755
  %1757 = vrot.lane.b32.xlu0 %v1611, 4
  %v1758 = vpop.permute.xlu0 %1757
  %1759 = vrot.lane.b32.xlu0 %v1613, 4
  %v1760 = vpop.permute.xlu0 %1759
  %1761 = vrot.lane.b32.xlu0 %v1616, 4
  %v1762 = vpop.permute.xlu0 %1761
  %1763 = vrot.lane.b32.xlu0 %v1618, 4
  %v1764 = vpop.permute.xlu0 %1763
  %1765 = vrot.lane.b32.xlu0 %v1621, 4
  %v1766 = vpop.permute.xlu0 %1765
  %1767 = vrot.lane.b32.xlu0 %v1623, 4
  %v1768 = vpop.permute.xlu0 %1767
  %1769 = vrot.lane.b32.xlu0 %v1626, 4
  %v1770 = vpop.permute.xlu0 %1769
  %1771 = vrot.lane.b32.xlu0 %v1628, 4
  %v1772 = vpop.permute.xlu0 %1771
  %1773 = vrot.lane.b32.xlu0 %v1631, 4
  %v1774 = vpop.permute.xlu0 %1773
  %1775 = vrot.lane.b32.xlu0 %v1633, 4
  %v1776 = vpop.permute.xlu0 %1775
  %1777 = vrot.lane.b32.xlu0 %v1636, 4
  %v1778 = vpop.permute.xlu0 %1777
  %1779 = vrot.lane.b32.xlu0 %v1638, 4
  %v1780 = vpop.permute.xlu0 %1779
  %1781 = vrot.lane.b32.xlu0 %v1641, 4
  %v1782 = vpop.permute.xlu0 %1781
  %1783 = vrot.lane.b32.xlu0 %v1643, 4
  %v1784 = vpop.permute.xlu0 %1783
  %1785 = vrot.lane.b32.xlu0 %v1646, 4
  %v1786 = vpop.permute.xlu0 %1785
  %1787 = vrot.lane.b32.xlu0 %v1648, 4
  %v1788 = vpop.permute.xlu0 %1787
  %1789 = vrot.lane.b32.xlu0 %v1651, 4
  %v1790 = vpop.permute.xlu0 %1789
  %1791 = vrot.lane.b32.xlu0 %v1653, 4
  %v1792 = vpop.permute.xlu0 %1791
  %1793 = vrot.lane.b32.xlu0 %v1656, 4
  %v1794 = vpop.permute.xlu0 %1793
  %1795 = vrot.lane.b32.xlu0 %v1658, 4
  %v1796 = vpop.permute.xlu0 %1795
  %1797 = vrot.lane.b32.xlu0 %v1661, 4
  %v1798 = vpop.permute.xlu0 %1797
  %1799 = vrot.lane.b32.xlu0 %v1663, 4
  %v1800 = vpop.permute.xlu0 %1799
  %1801 = vrot.lane.b32.xlu0 %v1666, 4
  %v1802 = vpop.permute.xlu0 %1801
  %1803 = vrot.lane.b32.xlu0 %v1668, 4
  %v1804 = vpop.permute.xlu0 %1803
  %1805 = vrot.lane.b32.xlu0 %v1671, 4
  %v1806 = vpop.permute.xlu0 %1805
  %1807 = vrot.lane.b32.xlu0 %v1673, 4
  %v1808 = vpop.permute.xlu0 %1807
  %1809 = vrot.lane.b32.xlu0 %v1676, 4
  %v1810 = vpop.permute.xlu0 %1809
  %1811 = vrot.lane.b32.xlu0 %v1678, 4
  %v1812 = vpop.permute.xlu0 %1811
  %1813 = vrot.lane.b32.xlu0 %v1681, 4
  %v1814 = vpop.permute.xlu0 %1813
  %1815 = vrot.lane.b32.xlu0 %v1683, 4
  %v1816 = vpop.permute.xlu0 %1815
  %1817 = vrot.lane.b32.xlu0 %v1686, 4
  %v1818 = vpop.permute.xlu0 %1817
  %1819 = vrot.lane.b32.xlu0 %v1688, 4
  %v1820 = vpop.permute.xlu0 %1819
  %1821 = vrot.lane.b32.xlu0 %v1691, 4
  %v1822 = vpop.permute.xlu0 %1821
  %1823 = vrot.lane.b32.xlu0 %v1693, 4
  %v1824 = vpop.permute.xlu0 %1823
  %1825 = vrot.lane.b32.xlu0 %v1696, 4
  %v1826 = vpop.permute.xlu0 %1825
  %1827 = vrot.lane.b32.xlu0 %v1698, 4
  %v1828 = vpop.permute.xlu0 %1827
  %1829 = vrot.lane.b32.xlu0 %v1701, 4
  %v1830 = vpop.permute.xlu0 %1829
  %1831 = vrot.lane.b32.xlu0 %v1703, 4
  %v1832 = vpop.permute.xlu0 %1831
  %1833 = vrot.lane.b32.xlu0 %v1706, 4
  %v1834 = vpop.permute.xlu0 %1833
  %1835 = vrot.lane.b32.xlu0 %v1708, 4
  %v1836 = vpop.permute.xlu0 %1835
  %vm1901 = vcmask 1045504
  %v1902 = vrot.slane %v1344, 2
  %v1903 = vrot.slane %v1345, 2
  %v1904 = vsel %vm1901, %v1902, %v1903
  %v1905 = vrot.slane %v1346, 2
  %v1906 = vsel %vm1901, %v1903, %v1905
  %v1907 = vrot.slane %v1347, 2
  %v1908 = vrot.slane %v1348, 2
  %v1909 = vsel %vm1901, %v1907, %v1908
  %v1910 = vrot.slane %v1349, 2
  %v1911 = vsel %vm1901, %v1908, %v1910
  %v1912 = vrot.slane %v1350, 2
  %v1913 = vrot.slane %v1351, 2
  %v1914 = vsel %vm1901, %v1912, %v1913
  %v1915 = vrot.slane %v1352, 2
  %v1916 = vsel %vm1901, %v1913, %v1915
  %v1917 = vrot.slane %v1353, 2
  %v1918 = vrot.slane %v1354, 2
  %v1919 = vsel %vm1901, %v1917, %v1918
  %v1920 = vrot.slane %v1355, 2
  %v1921 = vsel %vm1901, %v1918, %v1920
  %v1922 = vrot.slane %v1356, 2
  %v1923 = vrot.slane %v1357, 2
  %v1924 = vsel %vm1901, %v1922, %v1923
  %v1925 = vrot.slane %v1358, 2
  %v1926 = vsel %vm1901, %v1923, %v1925
  %v1927 = vrot.slane %v1359, 2
  %v1928 = vrot.slane %v1360, 2
  %v1929 = vsel %vm1901, %v1927, %v1928
  %v1930 = vrot.slane %v1361, 2
  %v1931 = vsel %vm1901, %v1928, %v1930
  %v1932 = vrot.slane %v1362, 2
  %v1933 = vrot.slane %v1363, 2
  %v1934 = vsel %vm1901, %v1932, %v1933
  %v1935 = vrot.slane %v1364, 2
  %v1936 = vsel %vm1901, %v1933, %v1935
  %v1937 = vrot.slane %v1365, 2
  %v1938 = vrot.slane %v1366, 2
  %v1939 = vsel %vm1901, %v1937, %v1938
  %v1940 = vrot.slane %v1367, 2
  %v1941 = vsel %vm1901, %v1938, %v1940
  %v1942 = vrot.slane %v1368, 2
  %v1943 = vrot.slane %v1369, 2
  %v1944 = vsel %vm1901, %v1942, %v1943
  %v1945 = vrot.slane %v1370, 2
  %v1946 = vsel %vm1901, %v1943, %v1945
  %v1947 = vrot.slane %v1371, 2
  %v1948 = vrot.slane %v1372, 2
  %v1949 = vsel %vm1901, %v1947, %v1948
  %v1950 = vrot.slane %v1373, 2
  %v1951 = vsel %vm1901, %v1948, %v1950
  %v1952 = vrot.slane %v1374, 2
  %v1953 = vrot.slane %v1375, 2
  %v1954 = vsel %vm1901, %v1952, %v1953
  %v1955 = vrot.slane %v1376, 2
  %v1956 = vsel %vm1901, %v1953, %v1955
  %v1957 = vrot.slane %v1377, 2
  %v1958 = vrot.slane %v1378, 2
  %v1959 = vsel %vm1901, %v1957, %v1958
  %v1960 = vrot.slane %v1379, 2
  %v1961 = vsel %vm1901, %v1958, %v1960
  %v1962 = vrot.slane %v1380, 2
  %v1963 = vrot.slane %v1381, 2
  %v1964 = vsel %vm1901, %v1962, %v1963
  %v1965 = vrot.slane %v1382, 2
  %v1966 = vsel %vm1901, %v1963, %v1965
  %v1967 = vrot.slane %v1383, 2
  %v1968 = vrot.slane %v1384, 2
  %v1969 = vsel %vm1901, %v1967, %v1968
  %v1970 = vrot.slane %v1385, 2
  %v1971 = vsel %vm1901, %v1968, %v1970
  %v1972 = vrot.slane %v1386, 2
  %v1973 = vrot.slane %v1387, 2
  %v1974 = vsel %vm1901, %v1972, %v1973
  %v1975 = vrot.slane %v1388, 2
  %v1976 = vsel %vm1901, %v1973, %v1975
  %v1977 = vrot.slane %v1389, 2
  %v1978 = vrot.slane %v1390, 2
  %v1979 = vsel %vm1901, %v1977, %v1978
  %v1980 = vrot.slane %v1391, 2
  %v1981 = vsel %vm1901, %v1978, %v1980
  %v1982 = vrot.slane %v1398, 2
  %v1983 = vrot.slane %v1399, 2
  %v1984 = vsel %vm1901, %v1982, %v1983
  %v1985 = vrot.slane %v1400, 2
  %v1986 = vsel %vm1901, %v1983, %v1985
  %v1987 = vrot.slane %v1401, 2
  %v1988 = vrot.slane %v1402, 2
  %v1989 = vsel %vm1901, %v1987, %v1988
  %v1990 = vrot.slane %v1403, 2
  %v1991 = vsel %vm1901, %v1988, %v1990
  %v1992 = vrot.slane %v1404, 2
  %v1993 = vrot.slane %v1405, 2
  %v1994 = vsel %vm1901, %v1992, %v1993
  %v1995 = vrot.slane %v1406, 2
  %v1996 = vsel %vm1901, %v1993, %v1995
  %v1997 = vrot.slane %v1407, 2
  %v1998 = vrot.slane %v1408, 2
  %v1999 = vsel %vm1901, %v1997, %v1998
  %v2000 = vrot.slane %v1409, 2
  %v2001 = vsel %vm1901, %v1998, %v2000
  %v2002 = vrot.slane %v1410, 2
  %v2003 = vrot.slane %v1411, 2
  %v2004 = vsel %vm1901, %v2002, %v2003
  %v2005 = vrot.slane %v1412, 2
  %v2006 = vsel %vm1901, %v2003, %v2005
  %v2007 = vrot.slane %v1413, 2
  %v2008 = vrot.slane %v1414, 2
  %v2009 = vsel %vm1901, %v2007, %v2008
  %v2010 = vrot.slane %v1415, 2
  %v2011 = vsel %vm1901, %v2008, %v2010
  %v2012 = vrot.slane %v1416, 2
  %v2013 = vrot.slane %v1417, 2
  %v2014 = vsel %vm1901, %v2012, %v2013
  %v2015 = vrot.slane %v1418, 2
  %v2016 = vsel %vm1901, %v2013, %v2015
  %v2017 = vrot.slane %v1419, 2
  %v2018 = vrot.slane %v1420, 2
  %v2019 = vsel %vm1901, %v2017, %v2018
  %v2020 = vrot.slane %v1421, 2
  %v2021 = vsel %vm1901, %v2018, %v2020
  %v2022 = vrot.slane %v1422, 2
  %v2023 = vrot.slane %v1423, 2
  %v2024 = vsel %vm1901, %v2022, %v2023
  %v2025 = vrot.slane %v1424, 2
  %v2026 = vsel %vm1901, %v2023, %v2025
  %v2027 = vrot.slane %v1425, 2
  %v2028 = vrot.slane %v1426, 2
  %v2029 = vsel %vm1901, %v2027, %v2028
  %v2030 = vrot.slane %v1427, 2
  %v2031 = vsel %vm1901, %v2028, %v2030
  %v2032 = vrot.slane %v1428, 2
  %v2033 = vrot.slane %v1429, 2
  %v2034 = vsel %vm1901, %v2032, %v2033
  %v2035 = vrot.slane %v1430, 2
  %v2036 = vsel %vm1901, %v2033, %v2035
  %v2037 = vrot.slane %v1431, 2
  %v2038 = vrot.slane %v1432, 2
  %v2039 = vsel %vm1901, %v2037, %v2038
  %v2040 = vrot.slane %v1433, 2
  %v2041 = vsel %vm1901, %v2038, %v2040
  %v2042 = vrot.slane %v1434, 2
  %v2043 = vrot.slane %v1435, 2
  %v2044 = vsel %vm1901, %v2042, %v2043
  %v2045 = vrot.slane %v1436, 2
  %v2046 = vsel %vm1901, %v2043, %v2045
  %v2047 = vrot.slane %v1437, 2
  %v2048 = vrot.slane %v1438, 2
  %v2049 = vsel %vm1901, %v2047, %v2048
  %v2050 = vrot.slane %v1439, 2
  %v2051 = vsel %vm1901, %v2048, %v2050
  %v2052 = vrot.slane %v1440, 2
  %v2053 = vrot.slane %v1441, 2
  %v2054 = vsel %vm1901, %v2052, %v2053
  %v2055 = vrot.slane %v1442, 2
  %v2056 = vsel %vm1901, %v2053, %v2055
  %v2057 = vrot.slane %v1443, 2
  %v2058 = vrot.slane %v1444, 2
  %v2059 = vsel %vm1901, %v2057, %v2058
  %v2060 = vrot.slane %v1445, 2
  %v2061 = vsel %vm1901, %v2058, %v2060
  %2062 = vrot.lane.b32.xlu0 %v1904, 8
  %v2063 = vpop.permute.xlu0 %2062
  %2064 = vrot.lane.b32.xlu0 %v1906, 8
  %v2065 = vpop.permute.xlu0 %2064
  %2066 = vrot.lane.b32.xlu0 %v1909, 8
  %v2067 = vpop.permute.xlu0 %2066
  %2068 = vrot.lane.b32.xlu0 %v1911, 8
  %v2069 = vpop.permute.xlu0 %2068
  %2070 = vrot.lane.b32.xlu0 %v1914, 8
  %v2071 = vpop.permute.xlu0 %2070
  %2072 = vrot.lane.b32.xlu0 %v1916, 8
  %v2073 = vpop.permute.xlu0 %2072
  %2074 = vrot.lane.b32.xlu0 %v1919, 8
  %v2075 = vpop.permute.xlu0 %2074
  %2076 = vrot.lane.b32.xlu0 %v1921, 8
  %v2077 = vpop.permute.xlu0 %2076
  %2078 = vrot.lane.b32.xlu0 %v1924, 8
  %v2079 = vpop.permute.xlu0 %2078
  %2080 = vrot.lane.b32.xlu0 %v1926, 8
  %v2081 = vpop.permute.xlu0 %2080
  %2082 = vrot.lane.b32.xlu0 %v1929, 8
  %v2083 = vpop.permute.xlu0 %2082
  %2084 = vrot.lane.b32.xlu0 %v1931, 8
  %v2085 = vpop.permute.xlu0 %2084
  %2086 = vrot.lane.b32.xlu0 %v1934, 8
  %v2087 = vpop.permute.xlu0 %2086
  %2088 = vrot.lane.b32.xlu0 %v1936, 8
  %v2089 = vpop.permute.xlu0 %2088
  %2090 = vrot.lane.b32.xlu0 %v1939, 8
  %v2091 = vpop.permute.xlu0 %2090
  %2092 = vrot.lane.b32.xlu0 %v1941, 8
  %v2093 = vpop.permute.xlu0 %2092
  %2094 = vrot.lane.b32.xlu0 %v1944, 8
  %v2095 = vpop.permute.xlu0 %2094
  %2096 = vrot.lane.b32.xlu0 %v1946, 8
  %v2097 = vpop.permute.xlu0 %2096
  %2098 = vrot.lane.b32.xlu0 %v1949, 8
  %v2099 = vpop.permute.xlu0 %2098
  %2100 = vrot.lane.b32.xlu0 %v1951, 8
  %v2101 = vpop.permute.xlu0 %2100
  %2102 = vrot.lane.b32.xlu0 %v1954, 8
  %v2103 = vpop.permute.xlu0 %2102
  %2104 = vrot.lane.b32.xlu0 %v1956, 8
  %v2105 = vpop.permute.xlu0 %2104
  %2106 = vrot.lane.b32.xlu0 %v1959, 8
  %v2107 = vpop.permute.xlu0 %2106
  %2108 = vrot.lane.b32.xlu0 %v1961, 8
  %v2109 = vpop.permute.xlu0 %2108
  %2110 = vrot.lane.b32.xlu0 %v1964, 8
  %v2111 = vpop.permute.xlu0 %2110
  %2112 = vrot.lane.b32.xlu0 %v1966, 8
  %v2113 = vpop.permute.xlu0 %2112
  %2114 = vrot.lane.b32.xlu0 %v1969, 8
  %v2115 = vpop.permute.xlu0 %2114
  %2116 = vrot.lane.b32.xlu0 %v1971, 8
  %v2117 = vpop.permute.xlu0 %2116
  %2118 = vrot.lane.b32.xlu0 %v1974, 8
  %v2119 = vpop.permute.xlu0 %2118
  %2120 = vrot.lane.b32.xlu0 %v1976, 8
  %v2121 = vpop.permute.xlu0 %2120
  %2122 = vrot.lane.b32.xlu0 %v1979, 8
  %v2123 = vpop.permute.xlu0 %2122
  %2124 = vrot.lane.b32.xlu0 %v1981, 8
  %v2125 = vpop.permute.xlu0 %2124
  %2126 = vrot.lane.b32.xlu0 %v1984, 8
  %v2127 = vpop.permute.xlu0 %2126
  %2128 = vrot.lane.b32.xlu0 %v1986, 8
  %v2129 = vpop.permute.xlu0 %2128
  %2130 = vrot.lane.b32.xlu0 %v1989, 8
  %v2131 = vpop.permute.xlu0 %2130
  %2132 = vrot.lane.b32.xlu0 %v1991, 8
  %v2133 = vpop.permute.xlu0 %2132
  %2134 = vrot.lane.b32.xlu0 %v1994, 8
  %v2135 = vpop.permute.xlu0 %2134
  %2136 = vrot.lane.b32.xlu0 %v1996, 8
  %v2137 = vpop.permute.xlu0 %2136
  %2138 = vrot.lane.b32.xlu0 %v1999, 8
  %v2139 = vpop.permute.xlu0 %2138
  %2140 = vrot.lane.b32.xlu0 %v2001, 8
  %v2141 = vpop.permute.xlu0 %2140
  %2142 = vrot.lane.b32.xlu0 %v2004, 8
  %v2143 = vpop.permute.xlu0 %2142
  %2144 = vrot.lane.b32.xlu0 %v2006, 8
  %v2145 = vpop.permute.xlu0 %2144
  %2146 = vrot.lane.b32.xlu0 %v2009, 8
  %v2147 = vpop.permute.xlu0 %2146
  %2148 = vrot.lane.b32.xlu0 %v2011, 8
  %v2149 = vpop.permute.xlu0 %2148
  %2150 = vrot.lane.b32.xlu0 %v2014, 8
  %v2151 = vpop.permute.xlu0 %2150
  %2152 = vrot.lane.b32.xlu0 %v2016, 8
  %v2153 = vpop.permute.xlu0 %2152
  %2154 = vrot.lane.b32.xlu0 %v2019, 8
  %v2155 = vpop.permute.xlu0 %2154
  %2156 = vrot.lane.b32.xlu0 %v2021, 8
  %v2157 = vpop.permute.xlu0 %2156
  %2158 = vrot.lane.b32.xlu0 %v2024, 8
  %v2159 = vpop.permute.xlu0 %2158
  %2160 = vrot.lane.b32.xlu0 %v2026, 8
  %v2161 = vpop.permute.xlu0 %2160
  %2162 = vrot.lane.b32.xlu0 %v2029, 8
  %v2163 = vpop.permute.xlu0 %2162
  %2164 = vrot.lane.b32.xlu0 %v2031, 8
  %v2165 = vpop.permute.xlu0 %2164
  %2166 = vrot.lane.b32.xlu0 %v2034, 8
  %v2167 = vpop.permute.xlu0 %2166
  %2168 = vrot.lane.b32.xlu0 %v2036, 8
  %v2169 = vpop.permute.xlu0 %2168
  %2170 = vrot.lane.b32.xlu0 %v2039, 8
  %v2171 = vpop.permute.xlu0 %2170
  %2172 = vrot.lane.b32.xlu0 %v2041, 8
  %v2173 = vpop.permute.xlu0 %2172
  %2174 = vrot.lane.b32.xlu0 %v2044, 8
  %v2175 = vpop.permute.xlu0 %2174
  %2176 = vrot.lane.b32.xlu0 %v2046, 8
  %v2177 = vpop.permute.xlu0 %2176
  %2178 = vrot.lane.b32.xlu0 %v2049, 8
  %v2179 = vpop.permute.xlu0 %2178
  %2180 = vrot.lane.b32.xlu0 %v2051, 8
  %v2181 = vpop.permute.xlu0 %2180
  %2182 = vrot.lane.b32.xlu0 %v2054, 8
  %v2183 = vpop.permute.xlu0 %2182
  %2184 = vrot.lane.b32.xlu0 %v2056, 8
  %v2185 = vpop.permute.xlu0 %2184
  %2186 = vrot.lane.b32.xlu0 %v2059, 8
  %v2187 = vpop.permute.xlu0 %2186
  %2188 = vrot.lane.b32.xlu0 %v2061, 8
  %v2189 = vpop.permute.xlu0 %2188
  %2258 = vrot.lane.b32.xlu0 %v1347, 12
  %v2259 = vpop.permute.xlu0 %2258
  %2260 = vrot.lane.b32.xlu0 %v1348, 12
  %v2261 = vpop.permute.xlu0 %2260
  %2262 = vrot.lane.b32.xlu0 %v1350, 12
  %v2263 = vpop.permute.xlu0 %2262
  %2264 = vrot.lane.b32.xlu0 %v1351, 12
  %v2265 = vpop.permute.xlu0 %2264
  %2266 = vrot.lane.b32.xlu0 %v1353, 12
  %v2267 = vpop.permute.xlu0 %2266
  %2268 = vrot.lane.b32.xlu0 %v1354, 12
  %v2269 = vpop.permute.xlu0 %2268
  %2270 = vrot.lane.b32.xlu0 %v1356, 12
  %v2271 = vpop.permute.xlu0 %2270
  %2272 = vrot.lane.b32.xlu0 %v1357, 12
  %v2273 = vpop.permute.xlu0 %2272
  %2274 = vrot.lane.b32.xlu0 %v1359, 12
  %v2275 = vpop.permute.xlu0 %2274
  %2276 = vrot.lane.b32.xlu0 %v1360, 12
  %v2277 = vpop.permute.xlu0 %2276
  %2278 = vrot.lane.b32.xlu0 %v1362, 12
  %v2279 = vpop.permute.xlu0 %2278
  %2280 = vrot.lane.b32.xlu0 %v1363, 12
  %v2281 = vpop.permute.xlu0 %2280
  %2282 = vrot.lane.b32.xlu0 %v1365, 12
  %v2283 = vpop.permute.xlu0 %2282
  %2284 = vrot.lane.b32.xlu0 %v1366, 12
  %v2285 = vpop.permute.xlu0 %2284
  %2286 = vrot.lane.b32.xlu0 %v1368, 12
  %v2287 = vpop.permute.xlu0 %2286
  %2288 = vrot.lane.b32.xlu0 %v1369, 12
  %v2289 = vpop.permute.xlu0 %2288
  %2290 = vrot.lane.b32.xlu0 %v1371, 12
  %v2291 = vpop.permute.xlu0 %2290
  %2292 = vrot.lane.b32.xlu0 %v1372, 12
  %v2293 = vpop.permute.xlu0 %2292
  %2294 = vrot.lane.b32.xlu0 %v1374, 12
  %v2295 = vpop.permute.xlu0 %2294
  %2296 = vrot.lane.b32.xlu0 %v1375, 12
  %v2297 = vpop.permute.xlu0 %2296
  %2298 = vrot.lane.b32.xlu0 %v1377, 12
  %v2299 = vpop.permute.xlu0 %2298
  %2300 = vrot.lane.b32.xlu0 %v1378, 12
  %v2301 = vpop.permute.xlu0 %2300
  %2302 = vrot.lane.b32.xlu0 %v1380, 12
  %v2303 = vpop.permute.xlu0 %2302
  %2304 = vrot.lane.b32.xlu0 %v1381, 12
  %v2305 = vpop.permute.xlu0 %2304
  %2306 = vrot.lane.b32.xlu0 %v1383, 12
  %v2307 = vpop.permute.xlu0 %2306
  %2308 = vrot.lane.b32.xlu0 %v1384, 12
  %v2309 = vpop.permute.xlu0 %2308
  %2310 = vrot.lane.b32.xlu0 %v1386, 12
  %v2311 = vpop.permute.xlu0 %2310
  %2312 = vrot.lane.b32.xlu0 %v1387, 12
  %v2313 = vpop.permute.xlu0 %2312
  %2314 = vrot.lane.b32.xlu0 %v1389, 12
  %v2315 = vpop.permute.xlu0 %2314
  %2316 = vrot.lane.b32.xlu0 %v1390, 12
  %v2317 = vpop.permute.xlu0 %2316
  %2318 = vrot.lane.b32.xlu0 %v1392, 12
  %v2319 = vpop.permute.xlu0 %2318
  %2320 = vrot.lane.b32.xlu0 %v1393, 12
  %v2321 = vpop.permute.xlu0 %2320
  %2322 = vrot.lane.b32.xlu0 %v1401, 12
  %v2323 = vpop.permute.xlu0 %2322
  %2324 = vrot.lane.b32.xlu0 %v1402, 12
  %v2325 = vpop.permute.xlu0 %2324
  %2326 = vrot.lane.b32.xlu0 %v1404, 12
  %v2327 = vpop.permute.xlu0 %2326
  %2328 = vrot.lane.b32.xlu0 %v1405, 12
  %v2329 = vpop.permute.xlu0 %2328
  %2330 = vrot.lane.b32.xlu0 %v1407, 12
  %v2331 = vpop.permute.xlu0 %2330
  %2332 = vrot.lane.b32.xlu0 %v1408, 12
  %v2333 = vpop.permute.xlu0 %2332
  %2334 = vrot.lane.b32.xlu0 %v1410, 12
  %v2335 = vpop.permute.xlu0 %2334
  %2336 = vrot.lane.b32.xlu0 %v1411, 12
  %v2337 = vpop.permute.xlu0 %2336
  %2338 = vrot.lane.b32.xlu0 %v1413, 12
  %v2339 = vpop.permute.xlu0 %2338
  %2340 = vrot.lane.b32.xlu0 %v1414, 12
  %v2341 = vpop.permute.xlu0 %2340
  %2342 = vrot.lane.b32.xlu0 %v1416, 12
  %v2343 = vpop.permute.xlu0 %2342
  %2344 = vrot.lane.b32.xlu0 %v1417, 12
  %v2345 = vpop.permute.xlu0 %2344
  %2346 = vrot.lane.b32.xlu0 %v1419, 12
  %v2347 = vpop.permute.xlu0 %2346
  %2348 = vrot.lane.b32.xlu0 %v1420, 12
  %v2349 = vpop.permute.xlu0 %2348
  %2350 = vrot.lane.b32.xlu0 %v1422, 12
  %v2351 = vpop.permute.xlu0 %2350
  %2352 = vrot.lane.b32.xlu0 %v1423, 12
  %v2353 = vpop.permute.xlu0 %2352
  %2354 = vrot.lane.b32.xlu0 %v1425, 12
  %v2355 = vpop.permute.xlu0 %2354
  %2356 = vrot.lane.b32.xlu0 %v1426, 12
  %v2357 = vpop.permute.xlu0 %2356
  %2358 = vrot.lane.b32.xlu0 %v1428, 12
  %v2359 = vpop.permute.xlu0 %2358
  %2360 = vrot.lane.b32.xlu0 %v1429, 12
  %v2361 = vpop.permute.xlu0 %2360
  %2362 = vrot.lane.b32.xlu0 %v1431, 12
  %v2363 = vpop.permute.xlu0 %2362
  %2364 = vrot.lane.b32.xlu0 %v1432, 12
  %v2365 = vpop.permute.xlu0 %2364
  %2366 = vrot.lane.b32.xlu0 %v1434, 12
  %v2367 = vpop.permute.xlu0 %2366
  %2368 = vrot.lane.b32.xlu0 %v1435, 12
  %v2369 = vpop.permute.xlu0 %2368
  %2370 = vrot.lane.b32.xlu0 %v1437, 12
  %v2371 = vpop.permute.xlu0 %2370
  %2372 = vrot.lane.b32.xlu0 %v1438, 12
  %v2373 = vpop.permute.xlu0 %2372
  %2374 = vrot.lane.b32.xlu0 %v1440, 12
  %v2375 = vpop.permute.xlu0 %2374
  %2376 = vrot.lane.b32.xlu0 %v1441, 12
  %v2377 = vpop.permute.xlu0 %2376
  %2378 = vrot.lane.b32.xlu0 %v1443, 12
  %v2379 = vpop.permute.xlu0 %2378
  %2380 = vrot.lane.b32.xlu0 %v1444, 12
  %v2381 = vpop.permute.xlu0 %2380
  %2382 = vrot.lane.b32.xlu0 %v1446, 12
  %v2383 = vpop.permute.xlu0 %2382
  %2384 = vrot.lane.b32.xlu0 %v1447, 12
  %v2385 = vpop.permute.xlu0 %2384
  %v2452 = vrot.slane %v1392, 1
  %v2453 = vrot.slane %v1393, 1
  %v2454 = vsel %vm1548, %v2452, %v2453
  %v2455 = vrot.slane %v1394, 1
  %v2456 = vsel %vm1548, %v2453, %v2455
  %v2457 = vrot.slane %v1446, 1
  %v2458 = vrot.slane %v1447, 1
  %v2459 = vsel %vm1548, %v2457, %v2458
  %v2460 = vrot.slane %v1448, 1
  %v2461 = vsel %vm1548, %v2458, %v2460
  %2462 = vrot.lane.b32.xlu0 %v1556, 16
  %v2463 = vpop.permute.xlu0 %2462
  %2464 = vrot.lane.b32.xlu0 %v1558, 16
  %v2465 = vpop.permute.xlu0 %2464
  %2466 = vrot.lane.b32.xlu0 %v1561, 16
  %v2467 = vpop.permute.xlu0 %2466
  %2468 = vrot.lane.b32.xlu0 %v1563, 16
  %v2469 = vpop.permute.xlu0 %2468
  %2470 = vrot.lane.b32.xlu0 %v1566, 16
  %v2471 = vpop.permute.xlu0 %2470
  %2472 = vrot.lane.b32.xlu0 %v1568, 16
  %v2473 = vpop.permute.xlu0 %2472
  %2474 = vrot.lane.b32.xlu0 %v1571, 16
  %v2475 = vpop.permute.xlu0 %2474
  %2476 = vrot.lane.b32.xlu0 %v1573, 16
  %v2477 = vpop.permute.xlu0 %2476
  %2478 = vrot.lane.b32.xlu0 %v1576, 16
  %v2479 = vpop.permute.xlu0 %2478
  %2480 = vrot.lane.b32.xlu0 %v1578, 16
  %v2481 = vpop.permute.xlu0 %2480
  %2482 = vrot.lane.b32.xlu0 %v1581, 16
  %v2483 = vpop.permute.xlu0 %2482
  %2484 = vrot.lane.b32.xlu0 %v1583, 16
  %v2485 = vpop.permute.xlu0 %2484
  %2486 = vrot.lane.b32.xlu0 %v1586, 16
  %v2487 = vpop.permute.xlu0 %2486
  %2488 = vrot.lane.b32.xlu0 %v1588, 16
  %v2489 = vpop.permute.xlu0 %2488
  %2490 = vrot.lane.b32.xlu0 %v1591, 16
  %v2491 = vpop.permute.xlu0 %2490
  %2492 = vrot.lane.b32.xlu0 %v1593, 16
  %v2493 = vpop.permute.xlu0 %2492
  %2494 = vrot.lane.b32.xlu0 %v1596, 16
  %v2495 = vpop.permute.xlu0 %2494
  %2496 = vrot.lane.b32.xlu0 %v1598, 16
  %v2497 = vpop.permute.xlu0 %2496
  %2498 = vrot.lane.b32.xlu0 %v1601, 16
  %v2499 = vpop.permute.xlu0 %2498
  %2500 = vrot.lane.b32.xlu0 %v1603, 16
  %v2501 = vpop.permute.xlu0 %2500
  %2502 = vrot.lane.b32.xlu0 %v1606, 16
  %v2503 = vpop.permute.xlu0 %2502
  %2504 = vrot.lane.b32.xlu0 %v1608, 16
  %v2505 = vpop.permute.xlu0 %2504
  %2506 = vrot.lane.b32.xlu0 %v1611, 16
  %v2507 = vpop.permute.xlu0 %2506
  %2508 = vrot.lane.b32.xlu0 %v1613, 16
  %v2509 = vpop.permute.xlu0 %2508
  %2510 = vrot.lane.b32.xlu0 %v1616, 16
  %v2511 = vpop.permute.xlu0 %2510
  %2512 = vrot.lane.b32.xlu0 %v1618, 16
  %v2513 = vpop.permute.xlu0 %2512
  %2514 = vrot.lane.b32.xlu0 %v1621, 16
  %v2515 = vpop.permute.xlu0 %2514
  %2516 = vrot.lane.b32.xlu0 %v1623, 16
  %v2517 = vpop.permute.xlu0 %2516
  %2518 = vrot.lane.b32.xlu0 %v1626, 16
  %v2519 = vpop.permute.xlu0 %2518
  %2520 = vrot.lane.b32.xlu0 %v1628, 16
  %v2521 = vpop.permute.xlu0 %2520
  %2522 = vrot.lane.b32.xlu0 %v2454, 16
  %v2523 = vpop.permute.xlu0 %2522
  %2524 = vrot.lane.b32.xlu0 %v2456, 16
  %v2525 = vpop.permute.xlu0 %2524
  %2526 = vrot.lane.b32.xlu0 %v1636, 16
  %v2527 = vpop.permute.xlu0 %2526
  %2528 = vrot.lane.b32.xlu0 %v1638, 16
  %v2529 = vpop.permute.xlu0 %2528
  %2530 = vrot.lane.b32.xlu0 %v1641, 16
  %v2531 = vpop.permute.xlu0 %2530
  %2532 = vrot.lane.b32.xlu0 %v1643, 16
  %v2533 = vpop.permute.xlu0 %2532
  %2534 = vrot.lane.b32.xlu0 %v1646, 16
  %v2535 = vpop.permute.xlu0 %2534
  %2536 = vrot.lane.b32.xlu0 %v1648, 16
  %v2537 = vpop.permute.xlu0 %2536
  %2538 = vrot.lane.b32.xlu0 %v1651, 16
  %v2539 = vpop.permute.xlu0 %2538
  %2540 = vrot.lane.b32.xlu0 %v1653, 16
  %v2541 = vpop.permute.xlu0 %2540
  %2542 = vrot.lane.b32.xlu0 %v1656, 16
  %v2543 = vpop.permute.xlu0 %2542
  %2544 = vrot.lane.b32.xlu0 %v1658, 16
  %v2545 = vpop.permute.xlu0 %2544
  %2546 = vrot.lane.b32.xlu0 %v1661, 16
  %v2547 = vpop.permute.xlu0 %2546
  %2548 = vrot.lane.b32.xlu0 %v1663, 16
  %v2549 = vpop.permute.xlu0 %2548
  %2550 = vrot.lane.b32.xlu0 %v1666, 16
  %v2551 = vpop.permute.xlu0 %2550
  %2552 = vrot.lane.b32.xlu0 %v1668, 16
  %v2553 = vpop.permute.xlu0 %2552
  %2554 = vrot.lane.b32.xlu0 %v1671, 16
  %v2555 = vpop.permute.xlu0 %2554
  %2556 = vrot.lane.b32.xlu0 %v1673, 16
  %v2557 = vpop.permute.xlu0 %2556
  %2558 = vrot.lane.b32.xlu0 %v1676, 16
  %v2559 = vpop.permute.xlu0 %2558
  %2560 = vrot.lane.b32.xlu0 %v1678, 16
  %v2561 = vpop.permute.xlu0 %2560
  %2562 = vrot.lane.b32.xlu0 %v1681, 16
  %v2563 = vpop.permute.xlu0 %2562
  %2564 = vrot.lane.b32.xlu0 %v1683, 16
  %v2565 = vpop.permute.xlu0 %2564
  %2566 = vrot.lane.b32.xlu0 %v1686, 16
  %v2567 = vpop.permute.xlu0 %2566
  %2568 = vrot.lane.b32.xlu0 %v1688, 16
  %v2569 = vpop.permute.xlu0 %2568
  %2570 = vrot.lane.b32.xlu0 %v1691, 16
  %v2571 = vpop.permute.xlu0 %2570
  %2572 = vrot.lane.b32.xlu0 %v1693, 16
  %v2573 = vpop.permute.xlu0 %2572
  %2574 = vrot.lane.b32.xlu0 %v1696, 16
  %v2575 = vpop.permute.xlu0 %2574
  %2576 = vrot.lane.b32.xlu0 %v1698, 16
  %v2577 = vpop.permute.xlu0 %2576
  %2578 = vrot.lane.b32.xlu0 %v1701, 16
  %v2579 = vpop.permute.xlu0 %2578
  %2580 = vrot.lane.b32.xlu0 %v1703, 16
  %v2581 = vpop.permute.xlu0 %2580
  %2582 = vrot.lane.b32.xlu0 %v1706, 16
  %v2583 = vpop.permute.xlu0 %2582
  %2584 = vrot.lane.b32.xlu0 %v1708, 16
  %v2585 = vpop.permute.xlu0 %2584
  %2586 = vrot.lane.b32.xlu0 %v2459, 16
  %v2587 = vpop.permute.xlu0 %2586
  %2588 = vrot.lane.b32.xlu0 %v2461, 16
  %v2589 = vpop.permute.xlu0 %2588
  %v2654 = vrot.slane %v1392, 2
  %v2655 = vrot.slane %v1393, 2
  %v2656 = vsel %vm1901, %v2654, %v2655
  %v2657 = vrot.slane %v1394, 2
  %v2658 = vsel %vm1901, %v2655, %v2657
  %v2659 = vrot.slane %v1446, 2
  %v2660 = vrot.slane %v1447, 2
  %v2661 = vsel %vm1901, %v2659, %v2660
  %v2662 = vrot.slane %v1448, 2
  %v2663 = vsel %vm1901, %v2660, %v2662
  %2664 = vrot.lane.b32.xlu0 %v1909, 20
  %v2665 = vpop.permute.xlu0 %2664
  %2666 = vrot.lane.b32.xlu0 %v1911, 20
  %v2667 = vpop.permute.xlu0 %2666
  %2668 = vrot.lane.b32.xlu0 %v1914, 20
  %v2669 = vpop.permute.xlu0 %2668
  %2670 = vrot.lane.b32.xlu0 %v1916, 20
  %v2671 = vpop.permute.xlu0 %2670
  %2672 = vrot.lane.b32.xlu0 %v1919, 20
  %v2673 = vpop.permute.xlu0 %2672
  %2674 = vrot.lane.b32.xlu0 %v1921, 20
  %v2675 = vpop.permute.xlu0 %2674
  %2676 = vrot.lane.b32.xlu0 %v1924, 20
  %v2677 = vpop.permute.xlu0 %2676
  %2678 = vrot.lane.b32.xlu0 %v1926, 20
  %v2679 = vpop.permute.xlu0 %2678
  %2680 = vrot.lane.b32.xlu0 %v1929, 20
  %v2681 = vpop.permute.xlu0 %2680
  %2682 = vrot.lane.b32.xlu0 %v1931, 20
  %v2683 = vpop.permute.xlu0 %2682
  %2684 = vrot.lane.b32.xlu0 %v1934, 20
  %v2685 = vpop.permute.xlu0 %2684
  %2686 = vrot.lane.b32.xlu0 %v1936, 20
  %v2687 = vpop.permute.xlu0 %2686
  %2688 = vrot.lane.b32.xlu0 %v1939, 20
  %v2689 = vpop.permute.xlu0 %2688
  %2690 = vrot.lane.b32.xlu0 %v1941, 20
  %v2691 = vpop.permute.xlu0 %2690
  %2692 = vrot.lane.b32.xlu0 %v1944, 20
  %v2693 = vpop.permute.xlu0 %2692
  %2694 = vrot.lane.b32.xlu0 %v1946, 20
  %v2695 = vpop.permute.xlu0 %2694
  %2696 = vrot.lane.b32.xlu0 %v1949, 20
  %v2697 = vpop.permute.xlu0 %2696
  %2698 = vrot.lane.b32.xlu0 %v1951, 20
  %v2699 = vpop.permute.xlu0 %2698
  %2700 = vrot.lane.b32.xlu0 %v1954, 20
  %v2701 = vpop.permute.xlu0 %2700
  %2702 = vrot.lane.b32.xlu0 %v1956, 20
  %v2703 = vpop.permute.xlu0 %2702
  %2704 = vrot.lane.b32.xlu0 %v1959, 20
  %v2705 = vpop.permute.xlu0 %2704
  %2706 = vrot.lane.b32.xlu0 %v1961, 20
  %v2707 = vpop.permute.xlu0 %2706
  %2708 = vrot.lane.b32.xlu0 %v1964, 20
  %v2709 = vpop.permute.xlu0 %2708
  %2710 = vrot.lane.b32.xlu0 %v1966, 20
  %v2711 = vpop.permute.xlu0 %2710
  %2712 = vrot.lane.b32.xlu0 %v1969, 20
  %v2713 = vpop.permute.xlu0 %2712
  %2714 = vrot.lane.b32.xlu0 %v1971, 20
  %v2715 = vpop.permute.xlu0 %2714
  %2716 = vrot.lane.b32.xlu0 %v1974, 20
  %v2717 = vpop.permute.xlu0 %2716
  %2718 = vrot.lane.b32.xlu0 %v1976, 20
  %v2719 = vpop.permute.xlu0 %2718
  %2720 = vrot.lane.b32.xlu0 %v1979, 20
  %v2721 = vpop.permute.xlu0 %2720
  %2722 = vrot.lane.b32.xlu0 %v1981, 20
  %v2723 = vpop.permute.xlu0 %2722
  %2724 = vrot.lane.b32.xlu0 %v2656, 20
  %v2725 = vpop.permute.xlu0 %2724
  %2726 = vrot.lane.b32.xlu0 %v2658, 20
  %v2727 = vpop.permute.xlu0 %2726
  %2728 = vrot.lane.b32.xlu0 %v1989, 20
  %v2729 = vpop.permute.xlu0 %2728
  %2730 = vrot.lane.b32.xlu0 %v1991, 20
  %v2731 = vpop.permute.xlu0 %2730
  %2732 = vrot.lane.b32.xlu0 %v1994, 20
  %v2733 = vpop.permute.xlu0 %2732
  %2734 = vrot.lane.b32.xlu0 %v1996, 20
  %v2735 = vpop.permute.xlu0 %2734
  %2736 = vrot.lane.b32.xlu0 %v1999, 20
  %v2737 = vpop.permute.xlu0 %2736
  %2738 = vrot.lane.b32.xlu0 %v2001, 20
  %v2739 = vpop.permute.xlu0 %2738
  %2740 = vrot.lane.b32.xlu0 %v2004, 20
  %v2741 = vpop.permute.xlu0 %2740
  %2742 = vrot.lane.b32.xlu0 %v2006, 20
  %v2743 = vpop.permute.xlu0 %2742
  %2744 = vrot.lane.b32.xlu0 %v2009, 20
  %v2745 = vpop.permute.xlu0 %2744
  %2746 = vrot.lane.b32.xlu0 %v2011, 20
  %v2747 = vpop.permute.xlu0 %2746
  %2748 = vrot.lane.b32.xlu0 %v2014, 20
  %v2749 = vpop.permute.xlu0 %2748
  %2750 = vrot.lane.b32.xlu0 %v2016, 20
  %v2751 = vpop.permute.xlu0 %2750
  %2752 = vrot.lane.b32.xlu0 %v2019, 20
  %v2753 = vpop.permute.xlu0 %2752
  %2754 = vrot.lane.b32.xlu0 %v2021, 20
  %v2755 = vpop.permute.xlu0 %2754
  %2756 = vrot.lane.b32.xlu0 %v2024, 20
  %v2757 = vpop.permute.xlu0 %2756
  %2758 = vrot.lane.b32.xlu0 %v2026, 20
  %v2759 = vpop.permute.xlu0 %2758
  %2760 = vrot.lane.b32.xlu0 %v2029, 20
  %v2761 = vpop.permute.xlu0 %2760
  %2762 = vrot.lane.b32.xlu0 %v2031, 20
  %v2763 = vpop.permute.xlu0 %2762
  %2764 = vrot.lane.b32.xlu0 %v2034, 20
  %v2765 = vpop.permute.xlu0 %2764
  %2766 = vrot.lane.b32.xlu0 %v2036, 20
  %v2767 = vpop.permute.xlu0 %2766
  %2768 = vrot.lane.b32.xlu0 %v2039, 20
  %v2769 = vpop.permute.xlu0 %2768
  %2770 = vrot.lane.b32.xlu0 %v2041, 20
  %v2771 = vpop.permute.xlu0 %2770
  %2772 = vrot.lane.b32.xlu0 %v2044, 20
  %v2773 = vpop.permute.xlu0 %2772
  %2774 = vrot.lane.b32.xlu0 %v2046, 20
  %v2775 = vpop.permute.xlu0 %2774
  %2776 = vrot.lane.b32.xlu0 %v2049, 20
  %v2777 = vpop.permute.xlu0 %2776
  %2778 = vrot.lane.b32.xlu0 %v2051, 20
  %v2779 = vpop.permute.xlu0 %2778
  %2780 = vrot.lane.b32.xlu0 %v2054, 20
  %v2781 = vpop.permute.xlu0 %2780
  %2782 = vrot.lane.b32.xlu0 %v2056, 20
  %v2783 = vpop.permute.xlu0 %2782
  %2784 = vrot.lane.b32.xlu0 %v2059, 20
  %v2785 = vpop.permute.xlu0 %2784
  %2786 = vrot.lane.b32.xlu0 %v2061, 20
  %v2787 = vpop.permute.xlu0 %2786
  %2788 = vrot.lane.b32.xlu0 %v2661, 20
  %v2789 = vpop.permute.xlu0 %2788
  %2790 = vrot.lane.b32.xlu0 %v2663, 20
  %v2791 = vpop.permute.xlu0 %2790
  %2860 = vrot.lane.b32.xlu0 %v1350, 24
  %v2861 = vpop.permute.xlu0 %2860
  %2862 = vrot.lane.b32.xlu0 %v1351, 24
  %v2863 = vpop.permute.xlu0 %2862
  %2864 = vrot.lane.b32.xlu0 %v1353, 24
  %v2865 = vpop.permute.xlu0 %2864
  %2866 = vrot.lane.b32.xlu0 %v1354, 24
  %v2867 = vpop.permute.xlu0 %2866
  %2868 = vrot.lane.b32.xlu0 %v1356, 24
  %v2869 = vpop.permute.xlu0 %2868
  %2870 = vrot.lane.b32.xlu0 %v1357, 24
  %v2871 = vpop.permute.xlu0 %2870
  %2872 = vrot.lane.b32.xlu0 %v1359, 24
  %v2873 = vpop.permute.xlu0 %2872
  %2874 = vrot.lane.b32.xlu0 %v1360, 24
  %v2875 = vpop.permute.xlu0 %2874
  %2876 = vrot.lane.b32.xlu0 %v1362, 24
  %v2877 = vpop.permute.xlu0 %2876
  %2878 = vrot.lane.b32.xlu0 %v1363, 24
  %v2879 = vpop.permute.xlu0 %2878
  %2880 = vrot.lane.b32.xlu0 %v1365, 24
  %v2881 = vpop.permute.xlu0 %2880
  %2882 = vrot.lane.b32.xlu0 %v1366, 24
  %v2883 = vpop.permute.xlu0 %2882
  %2884 = vrot.lane.b32.xlu0 %v1368, 24
  %v2885 = vpop.permute.xlu0 %2884
  %2886 = vrot.lane.b32.xlu0 %v1369, 24
  %v2887 = vpop.permute.xlu0 %2886
  %2888 = vrot.lane.b32.xlu0 %v1371, 24
  %v2889 = vpop.permute.xlu0 %2888
  %2890 = vrot.lane.b32.xlu0 %v1372, 24
  %v2891 = vpop.permute.xlu0 %2890
  %2892 = vrot.lane.b32.xlu0 %v1374, 24
  %v2893 = vpop.permute.xlu0 %2892
  %2894 = vrot.lane.b32.xlu0 %v1375, 24
  %v2895 = vpop.permute.xlu0 %2894
  %2896 = vrot.lane.b32.xlu0 %v1377, 24
  %v2897 = vpop.permute.xlu0 %2896
  %2898 = vrot.lane.b32.xlu0 %v1378, 24
  %v2899 = vpop.permute.xlu0 %2898
  %2900 = vrot.lane.b32.xlu0 %v1380, 24
  %v2901 = vpop.permute.xlu0 %2900
  %2902 = vrot.lane.b32.xlu0 %v1381, 24
  %v2903 = vpop.permute.xlu0 %2902
  %2904 = vrot.lane.b32.xlu0 %v1383, 24
  %v2905 = vpop.permute.xlu0 %2904
  %2906 = vrot.lane.b32.xlu0 %v1384, 24
  %v2907 = vpop.permute.xlu0 %2906
  %2908 = vrot.lane.b32.xlu0 %v1386, 24
  %v2909 = vpop.permute.xlu0 %2908
  %2910 = vrot.lane.b32.xlu0 %v1387, 24
  %v2911 = vpop.permute.xlu0 %2910
  %2912 = vrot.lane.b32.xlu0 %v1389, 24
  %v2913 = vpop.permute.xlu0 %2912
  %2914 = vrot.lane.b32.xlu0 %v1390, 24
  %v2915 = vpop.permute.xlu0 %2914
  %2916 = vrot.lane.b32.xlu0 %v1392, 24
  %v2917 = vpop.permute.xlu0 %2916
  %2918 = vrot.lane.b32.xlu0 %v1393, 24
  %v2919 = vpop.permute.xlu0 %2918
  %2920 = vrot.lane.b32.xlu0 %v1395, 24
  %v2921 = vpop.permute.xlu0 %2920
  %2922 = vrot.lane.b32.xlu0 %v1396, 24
  %v2923 = vpop.permute.xlu0 %2922
  %2924 = vrot.lane.b32.xlu0 %v1404, 24
  %v2925 = vpop.permute.xlu0 %2924
  %2926 = vrot.lane.b32.xlu0 %v1405, 24
  %v2927 = vpop.permute.xlu0 %2926
  %2928 = vrot.lane.b32.xlu0 %v1407, 24
  %v2929 = vpop.permute.xlu0 %2928
  %2930 = vrot.lane.b32.xlu0 %v1408, 24
  %v2931 = vpop.permute.xlu0 %2930
  %2932 = vrot.lane.b32.xlu0 %v1410, 24
  %v2933 = vpop.permute.xlu0 %2932
  %2934 = vrot.lane.b32.xlu0 %v1411, 24
  %v2935 = vpop.permute.xlu0 %2934
  %2936 = vrot.lane.b32.xlu0 %v1413, 24
  %v2937 = vpop.permute.xlu0 %2936
  %2938 = vrot.lane.b32.xlu0 %v1414, 24
  %v2939 = vpop.permute.xlu0 %2938
  %2940 = vrot.lane.b32.xlu0 %v1416, 24
  %v2941 = vpop.permute.xlu0 %2940
  %2942 = vrot.lane.b32.xlu0 %v1417, 24
  %v2943 = vpop.permute.xlu0 %2942
  %2944 = vrot.lane.b32.xlu0 %v1419, 24
  %v2945 = vpop.permute.xlu0 %2944
  %2946 = vrot.lane.b32.xlu0 %v1420, 24
  %v2947 = vpop.permute.xlu0 %2946
  %2948 = vrot.lane.b32.xlu0 %v1422, 24
  %v2949 = vpop.permute.xlu0 %2948
  %2950 = vrot.lane.b32.xlu0 %v1423, 24
  %v2951 = vpop.permute.xlu0 %2950
  %2952 = vrot.lane.b32.xlu0 %v1425, 24
  %v2953 = vpop.permute.xlu0 %2952
  %2954 = vrot.lane.b32.xlu0 %v1426, 24
  %v2955 = vpop.permute.xlu0 %2954
  %2956 = vrot.lane.b32.xlu0 %v1428, 24
  %v2957 = vpop.permute.xlu0 %2956
  %2958 = vrot.lane.b32.xlu0 %v1429, 24
  %v2959 = vpop.permute.xlu0 %2958
  %2960 = vrot.lane.b32.xlu0 %v1431, 24
  %v2961 = vpop.permute.xlu0 %2960
  %2962 = vrot.lane.b32.xlu0 %v1432, 24
  %v2963 = vpop.permute.xlu0 %2962
  %2964 = vrot.lane.b32.xlu0 %v1434, 24
  %v2965 = vpop.permute.xlu0 %2964
  %2966 = vrot.lane.b32.xlu0 %v1435, 24
  %v2967 = vpop.permute.xlu0 %2966
  %2968 = vrot.lane.b32.xlu0 %v1437, 24
  %v2969 = vpop.permute.xlu0 %2968
  %2970 = vrot.lane.b32.xlu0 %v1438, 24
  %v2971 = vpop.permute.xlu0 %2970
  %2972 = vrot.lane.b32.xlu0 %v1440, 24
  %v2973 = vpop.permute.xlu0 %2972
  %2974 = vrot.lane.b32.xlu0 %v1441, 24
  %v2975 = vpop.permute.xlu0 %2974
  %2976 = vrot.lane.b32.xlu0 %v1443, 24
  %v2977 = vpop.permute.xlu0 %2976
  %2978 = vrot.lane.b32.xlu0 %v1444, 24
  %v2979 = vpop.permute.xlu0 %2978
  %2980 = vrot.lane.b32.xlu0 %v1446, 24
  %v2981 = vpop.permute.xlu0 %2980
  %2982 = vrot.lane.b32.xlu0 %v1447, 24
  %v2983 = vpop.permute.xlu0 %2982
  %2984 = vrot.lane.b32.xlu0 %v1449, 24
  %v2985 = vpop.permute.xlu0 %2984
  %2986 = vrot.lane.b32.xlu0 %v1450, 24
  %v2987 = vpop.permute.xlu0 %2986
  %v3054 = vrot.slane %v1395, 1
  %v3055 = vrot.slane %v1396, 1
  %v3056 = vsel %vm1548, %v3054, %v3055
  %v3057 = vrot.slane %v1397, 1
  %v3058 = vsel %vm1548, %v3055, %v3057
  %v3059 = vrot.slane %v1449, 1
  %v3060 = vrot.slane %v1450, 1
  %v3061 = vsel %vm1548, %v3059, %v3060
  %v3062 = vrot.slane %v1451, 1
  %v3063 = vsel %vm1548, %v3060, %v3062
  %3064 = vrot.lane.b32.xlu0 %v1561, 28
  %v3065 = vpop.permute.xlu0 %3064
  %3066 = vrot.lane.b32.xlu0 %v1563, 28
  %v3067 = vpop.permute.xlu0 %3066
  %3068 = vrot.lane.b32.xlu0 %v1566, 28
  %v3069 = vpop.permute.xlu0 %3068
  %3070 = vrot.lane.b32.xlu0 %v1568, 28
  %v3071 = vpop.permute.xlu0 %3070
  %3072 = vrot.lane.b32.xlu0 %v1571, 28
  %v3073 = vpop.permute.xlu0 %3072
  %3074 = vrot.lane.b32.xlu0 %v1573, 28
  %v3075 = vpop.permute.xlu0 %3074
  %3076 = vrot.lane.b32.xlu0 %v1576, 28
  %v3077 = vpop.permute.xlu0 %3076
  %3078 = vrot.lane.b32.xlu0 %v1578, 28
  %v3079 = vpop.permute.xlu0 %3078
  %3080 = vrot.lane.b32.xlu0 %v1581, 28
  %v3081 = vpop.permute.xlu0 %3080
  %3082 = vrot.lane.b32.xlu0 %v1583, 28
  %v3083 = vpop.permute.xlu0 %3082
  %3084 = vrot.lane.b32.xlu0 %v1586, 28
  %v3085 = vpop.permute.xlu0 %3084
  %3086 = vrot.lane.b32.xlu0 %v1588, 28
  %v3087 = vpop.permute.xlu0 %3086
  %3088 = vrot.lane.b32.xlu0 %v1591, 28
  %v3089 = vpop.permute.xlu0 %3088
  %3090 = vrot.lane.b32.xlu0 %v1593, 28
  %v3091 = vpop.permute.xlu0 %3090
  %3092 = vrot.lane.b32.xlu0 %v1596, 28
  %v3093 = vpop.permute.xlu0 %3092
  %3094 = vrot.lane.b32.xlu0 %v1598, 28
  %v3095 = vpop.permute.xlu0 %3094
  %3096 = vrot.lane.b32.xlu0 %v1601, 28
  %v3097 = vpop.permute.xlu0 %3096
  %3098 = vrot.lane.b32.xlu0 %v1603, 28
  %v3099 = vpop.permute.xlu0 %3098
  %3100 = vrot.lane.b32.xlu0 %v1606, 28
  %v3101 = vpop.permute.xlu0 %3100
  %3102 = vrot.lane.b32.xlu0 %v1608, 28
  %v3103 = vpop.permute.xlu0 %3102
  %3104 = vrot.lane.b32.xlu0 %v1611, 28
  %v3105 = vpop.permute.xlu0 %3104
  %3106 = vrot.lane.b32.xlu0 %v1613, 28
  %v3107 = vpop.permute.xlu0 %3106
  %3108 = vrot.lane.b32.xlu0 %v1616, 28
  %v3109 = vpop.permute.xlu0 %3108
  %3110 = vrot.lane.b32.xlu0 %v1618, 28
  %v3111 = vpop.permute.xlu0 %3110
  %3112 = vrot.lane.b32.xlu0 %v1621, 28
  %v3113 = vpop.permute.xlu0 %3112
  %3114 = vrot.lane.b32.xlu0 %v1623, 28
  %v3115 = vpop.permute.xlu0 %3114
  %3116 = vrot.lane.b32.xlu0 %v1626, 28
  %v3117 = vpop.permute.xlu0 %3116
  %3118 = vrot.lane.b32.xlu0 %v1628, 28
  %v3119 = vpop.permute.xlu0 %3118
  %3120 = vrot.lane.b32.xlu0 %v2454, 28
  %v3121 = vpop.permute.xlu0 %3120
  %3122 = vrot.lane.b32.xlu0 %v2456, 28
  %v3123 = vpop.permute.xlu0 %3122
  %3124 = vrot.lane.b32.xlu0 %v3056, 28
  %v3125 = vpop.permute.xlu0 %3124
  %3126 = vrot.lane.b32.xlu0 %v3058, 28
  %v3127 = vpop.permute.xlu0 %3126
  %3128 = vrot.lane.b32.xlu0 %v1641, 28
  %v3129 = vpop.permute.xlu0 %3128
  %3130 = vrot.lane.b32.xlu0 %v1643, 28
  %v3131 = vpop.permute.xlu0 %3130
  %3132 = vrot.lane.b32.xlu0 %v1646, 28
  %v3133 = vpop.permute.xlu0 %3132
  %3134 = vrot.lane.b32.xlu0 %v1648, 28
  %v3135 = vpop.permute.xlu0 %3134
  %3136 = vrot.lane.b32.xlu0 %v1651, 28
  %v3137 = vpop.permute.xlu0 %3136
  %3138 = vrot.lane.b32.xlu0 %v1653, 28
  %v3139 = vpop.permute.xlu0 %3138
  %3140 = vrot.lane.b32.xlu0 %v1656, 28
  %v3141 = vpop.permute.xlu0 %3140
  %3142 = vrot.lane.b32.xlu0 %v1658, 28
  %v3143 = vpop.permute.xlu0 %3142
  %3144 = vrot.lane.b32.xlu0 %v1661, 28
  %v3145 = vpop.permute.xlu0 %3144
  %3146 = vrot.lane.b32.xlu0 %v1663, 28
  %v3147 = vpop.permute.xlu0 %3146
  %3148 = vrot.lane.b32.xlu0 %v1666, 28
  %v3149 = vpop.permute.xlu0 %3148
  %3150 = vrot.lane.b32.xlu0 %v1668, 28
  %v3151 = vpop.permute.xlu0 %3150
  %3152 = vrot.lane.b32.xlu0 %v1671, 28
  %v3153 = vpop.permute.xlu0 %3152
  %3154 = vrot.lane.b32.xlu0 %v1673, 28
  %v3155 = vpop.permute.xlu0 %3154
  %3156 = vrot.lane.b32.xlu0 %v1676, 28
  %v3157 = vpop.permute.xlu0 %3156
  %3158 = vrot.lane.b32.xlu0 %v1678, 28
  %v3159 = vpop.permute.xlu0 %3158
  %3160 = vrot.lane.b32.xlu0 %v1681, 28
  %v3161 = vpop.permute.xlu0 %3160
  %3162 = vrot.lane.b32.xlu0 %v1683, 28
  %v3163 = vpop.permute.xlu0 %3162
  %3164 = vrot.lane.b32.xlu0 %v1686, 28
  %v3165 = vpop.permute.xlu0 %3164
  %3166 = vrot.lane.b32.xlu0 %v1688, 28
  %v3167 = vpop.permute.xlu0 %3166
  %3168 = vrot.lane.b32.xlu0 %v1691, 28
  %v3169 = vpop.permute.xlu0 %3168
  %3170 = vrot.lane.b32.xlu0 %v1693, 28
  %v3171 = vpop.permute.xlu0 %3170
  %3172 = vrot.lane.b32.xlu0 %v1696, 28
  %v3173 = vpop.permute.xlu0 %3172
  %3174 = vrot.lane.b32.xlu0 %v1698, 28
  %v3175 = vpop.permute.xlu0 %3174
  %3176 = vrot.lane.b32.xlu0 %v1701, 28
  %v3177 = vpop.permute.xlu0 %3176
  %3178 = vrot.lane.b32.xlu0 %v1703, 28
  %v3179 = vpop.permute.xlu0 %3178
  %3180 = vrot.lane.b32.xlu0 %v1706, 28
  %v3181 = vpop.permute.xlu0 %3180
  %3182 = vrot.lane.b32.xlu0 %v1708, 28
  %v3183 = vpop.permute.xlu0 %3182
  %3184 = vrot.lane.b32.xlu0 %v2459, 28
  %v3185 = vpop.permute.xlu0 %3184
  %3186 = vrot.lane.b32.xlu0 %v2461, 28
  %v3187 = vpop.permute.xlu0 %3186
  %3188 = vrot.lane.b32.xlu0 %v3061, 28
  %v3189 = vpop.permute.xlu0 %3188
  %3190 = vrot.lane.b32.xlu0 %v3063, 28
  %v3191 = vpop.permute.xlu0 %3190
  %v3256 = vrot.slane %v1395, 2
  %v3257 = vrot.slane %v1396, 2
  %v3258 = vsel %vm1901, %v3256, %v3257
  %v3259 = vrot.slane %v1397, 2
  %v3260 = vsel %vm1901, %v3257, %v3259
  %v3261 = vrot.slane %v1449, 2
  %v3262 = vrot.slane %v1450, 2
  %v3263 = vsel %vm1901, %v3261, %v3262
  %v3264 = vrot.slane %v1451, 2
  %v3265 = vsel %vm1901, %v3262, %v3264
  %3266 = vrot.lane.b32.xlu0 %v1914, 32
  %v3267 = vpop.permute.xlu0 %3266
  %3268 = vrot.lane.b32.xlu0 %v1916, 32
  %v3269 = vpop.permute.xlu0 %3268
  %3270 = vrot.lane.b32.xlu0 %v1919, 32
  %v3271 = vpop.permute.xlu0 %3270
  %3272 = vrot.lane.b32.xlu0 %v1921, 32
  %v3273 = vpop.permute.xlu0 %3272
  %3274 = vrot.lane.b32.xlu0 %v1924, 32
  %v3275 = vpop.permute.xlu0 %3274
  %3276 = vrot.lane.b32.xlu0 %v1926, 32
  %v3277 = vpop.permute.xlu0 %3276
  %3278 = vrot.lane.b32.xlu0 %v1929, 32
  %v3279 = vpop.permute.xlu0 %3278
  %3280 = vrot.lane.b32.xlu0 %v1931, 32
  %v3281 = vpop.permute.xlu0 %3280
  %3282 = vrot.lane.b32.xlu0 %v1934, 32
  %v3283 = vpop.permute.xlu0 %3282
  %3284 = vrot.lane.b32.xlu0 %v1936, 32
  %v3285 = vpop.permute.xlu0 %3284
  %3286 = vrot.lane.b32.xlu0 %v1939, 32
  %v3287 = vpop.permute.xlu0 %3286
  %3288 = vrot.lane.b32.xlu0 %v1941, 32
  %v3289 = vpop.permute.xlu0 %3288
  %3290 = vrot.lane.b32.xlu0 %v1944, 32
  %v3291 = vpop.permute.xlu0 %3290
  %3292 = vrot.lane.b32.xlu0 %v1946, 32
  %v3293 = vpop.permute.xlu0 %3292
  %3294 = vrot.lane.b32.xlu0 %v1949, 32
  %v3295 = vpop.permute.xlu0 %3294
  %3296 = vrot.lane.b32.xlu0 %v1951, 32
  %v3297 = vpop.permute.xlu0 %3296
  %3298 = vrot.lane.b32.xlu0 %v1954, 32
  %v3299 = vpop.permute.xlu0 %3298
  %3300 = vrot.lane.b32.xlu0 %v1956, 32
  %v3301 = vpop.permute.xlu0 %3300
  %3302 = vrot.lane.b32.xlu0 %v1959, 32
  %v3303 = vpop.permute.xlu0 %3302
  %3304 = vrot.lane.b32.xlu0 %v1961, 32
  %v3305 = vpop.permute.xlu0 %3304
  %3306 = vrot.lane.b32.xlu0 %v1964, 32
  %v3307 = vpop.permute.xlu0 %3306
  %3308 = vrot.lane.b32.xlu0 %v1966, 32
  %v3309 = vpop.permute.xlu0 %3308
  %3310 = vrot.lane.b32.xlu0 %v1969, 32
  %v3311 = vpop.permute.xlu0 %3310
  %3312 = vrot.lane.b32.xlu0 %v1971, 32
  %v3313 = vpop.permute.xlu0 %3312
  %3314 = vrot.lane.b32.xlu0 %v1974, 32
  %v3315 = vpop.permute.xlu0 %3314
  %3316 = vrot.lane.b32.xlu0 %v1976, 32
  %v3317 = vpop.permute.xlu0 %3316
  %3318 = vrot.lane.b32.xlu0 %v1979, 32
  %v3319 = vpop.permute.xlu0 %3318
  %3320 = vrot.lane.b32.xlu0 %v1981, 32
  %v3321 = vpop.permute.xlu0 %3320
  %3322 = vrot.lane.b32.xlu0 %v2656, 32
  %v3323 = vpop.permute.xlu0 %3322
  %3324 = vrot.lane.b32.xlu0 %v2658, 32
  %v3325 = vpop.permute.xlu0 %3324
  %3326 = vrot.lane.b32.xlu0 %v3258, 32
  %v3327 = vpop.permute.xlu0 %3326
  %3328 = vrot.lane.b32.xlu0 %v3260, 32
  %v3329 = vpop.permute.xlu0 %3328
  %3330 = vrot.lane.b32.xlu0 %v1994, 32
  %v3331 = vpop.permute.xlu0 %3330
  %3332 = vrot.lane.b32.xlu0 %v1996, 32
  %v3333 = vpop.permute.xlu0 %3332
  %3334 = vrot.lane.b32.xlu0 %v1999, 32
  %v3335 = vpop.permute.xlu0 %3334
  %3336 = vrot.lane.b32.xlu0 %v2001, 32
  %v3337 = vpop.permute.xlu0 %3336
  %3338 = vrot.lane.b32.xlu0 %v2004, 32
  %v3339 = vpop.permute.xlu0 %3338
  %3340 = vrot.lane.b32.xlu0 %v2006, 32
  %v3341 = vpop.permute.xlu0 %3340
  %3342 = vrot.lane.b32.xlu0 %v2009, 32
  %v3343 = vpop.permute.xlu0 %3342
  %3344 = vrot.lane.b32.xlu0 %v2011, 32
  %v3345 = vpop.permute.xlu0 %3344
  %3346 = vrot.lane.b32.xlu0 %v2014, 32
  %v3347 = vpop.permute.xlu0 %3346
  %3348 = vrot.lane.b32.xlu0 %v2016, 32
  %v3349 = vpop.permute.xlu0 %3348
  %3350 = vrot.lane.b32.xlu0 %v2019, 32
  %v3351 = vpop.permute.xlu0 %3350
  %3352 = vrot.lane.b32.xlu0 %v2021, 32
  %v3353 = vpop.permute.xlu0 %3352
  %3354 = vrot.lane.b32.xlu0 %v2024, 32
  %v3355 = vpop.permute.xlu0 %3354
  %3356 = vrot.lane.b32.xlu0 %v2026, 32
  %v3357 = vpop.permute.xlu0 %3356
  %3358 = vrot.lane.b32.xlu0 %v2029, 32
  %v3359 = vpop.permute.xlu0 %3358
  %3360 = vrot.lane.b32.xlu0 %v2031, 32
  %v3361 = vpop.permute.xlu0 %3360
  %3362 = vrot.lane.b32.xlu0 %v2034, 32
  %v3363 = vpop.permute.xlu0 %3362
  %3364 = vrot.lane.b32.xlu0 %v2036, 32
  %v3365 = vpop.permute.xlu0 %3364
  %3366 = vrot.lane.b32.xlu0 %v2039, 32
  %v3367 = vpop.permute.xlu0 %3366
  %3368 = vrot.lane.b32.xlu0 %v2041, 32
  %v3369 = vpop.permute.xlu0 %3368
  %3370 = vrot.lane.b32.xlu0 %v2044, 32
  %v3371 = vpop.permute.xlu0 %3370
  %3372 = vrot.lane.b32.xlu0 %v2046, 32
  %v3373 = vpop.permute.xlu0 %3372
  %3374 = vrot.lane.b32.xlu0 %v2049, 32
  %v3375 = vpop.permute.xlu0 %3374
  %3376 = vrot.lane.b32.xlu0 %v2051, 32
  %v3377 = vpop.permute.xlu0 %3376
  %3378 = vrot.lane.b32.xlu0 %v2054, 32
  %v3379 = vpop.permute.xlu0 %3378
  %3380 = vrot.lane.b32.xlu0 %v2056, 32
  %v3381 = vpop.permute.xlu0 %3380
  %3382 = vrot.lane.b32.xlu0 %v2059, 32
  %v3383 = vpop.permute.xlu0 %3382
  %3384 = vrot.lane.b32.xlu0 %v2061, 32
  %v3385 = vpop.permute.xlu0 %3384
  %3386 = vrot.lane.b32.xlu0 %v2661, 32
  %v3387 = vpop.permute.xlu0 %3386
  %3388 = vrot.lane.b32.xlu0 %v2663, 32
  %v3389 = vpop.permute.xlu0 %3388
  %3390 = vrot.lane.b32.xlu0 %v3263, 32
  %v3391 = vpop.permute.xlu0 %3390
  %3392 = vrot.lane.b32.xlu0 %v3265, 32
  %v3393 = vpop.permute.xlu0 %3392
  %v3458 = vsel %vm258, %v1344, %v1710
  %v3459 = vsel %vm258, %v1345, %v1712
  %v3460 = vsel %vm258, %v1347, %v1714
  %v3461 = vsel %vm258, %v1348, %v1716
  %v3462 = vsel %vm258, %v1350, %v1718
  %v3463 = vsel %vm258, %v1351, %v1720
  %v3464 = vsel %vm258, %v1353, %v1722
  %v3465 = vsel %vm258, %v1354, %v1724
  %v3466 = vsel %vm258, %v1356, %v1726
  %v3467 = vsel %vm258, %v1357, %v1728
  %v3468 = vsel %vm258, %v1359, %v1730
  %v3469 = vsel %vm258, %v1360, %v1732
  %v3470 = vsel %vm258, %v1362, %v1734
  %v3471 = vsel %vm258, %v1363, %v1736
  %v3472 = vsel %vm258, %v1365, %v1738
  %v3473 = vsel %vm258, %v1366, %v1740
  %v3474 = vsel %vm258, %v1368, %v1742
  %v3475 = vsel %vm258, %v1369, %v1744
  %v3476 = vsel %vm258, %v1371, %v1746
  %v3477 = vsel %vm258, %v1372, %v1748
  %v3478 = vsel %vm258, %v1374, %v1750
  %v3479 = vsel %vm258, %v1375, %v1752
  %v3480 = vsel %vm258, %v1377, %v1754
  %v3481 = vsel %vm258, %v1378, %v1756
  %v3482 = vsel %vm258, %v1380, %v1758
  %v3483 = vsel %vm258, %v1381, %v1760
  %v3484 = vsel %vm258, %v1383, %v1762
  %v3485 = vsel %vm258, %v1384, %v1764
  %v3486 = vsel %vm258, %v1386, %v1766
  %v3487 = vsel %vm258, %v1387, %v1768
  %v3488 = vsel %vm258, %v1389, %v1770
  %v3489 = vsel %vm258, %v1390, %v1772
  %v3490 = vsel %vm258, %v1398, %v1774
  %v3491 = vsel %vm258, %v1399, %v1776
  %v3492 = vsel %vm258, %v1401, %v1778
  %v3493 = vsel %vm258, %v1402, %v1780
  %v3494 = vsel %vm258, %v1404, %v1782
  %v3495 = vsel %vm258, %v1405, %v1784
  %v3496 = vsel %vm258, %v1407, %v1786
  %v3497 = vsel %vm258, %v1408, %v1788
  %v3498 = vsel %vm258, %v1410, %v1790
  %v3499 = vsel %vm258, %v1411, %v1792
  %v3500 = vsel %vm258, %v1413, %v1794
  %v3501 = vsel %vm258, %v1414, %v1796
  %v3502 = vsel %vm258, %v1416, %v1798
  %v3503 = vsel %vm258, %v1417, %v1800
  %v3504 = vsel %vm258, %v1419, %v1802
  %v3505 = vsel %vm258, %v1420, %v1804
  %v3506 = vsel %vm258, %v1422, %v1806
  %v3507 = vsel %vm258, %v1423, %v1808
  %v3508 = vsel %vm258, %v1425, %v1810
  %v3509 = vsel %vm258, %v1426, %v1812
  %v3510 = vsel %vm258, %v1428, %v1814
  %v3511 = vsel %vm258, %v1429, %v1816
  %v3512 = vsel %vm258, %v1431, %v1818
  %v3513 = vsel %vm258, %v1432, %v1820
  %v3514 = vsel %vm258, %v1434, %v1822
  %v3515 = vsel %vm258, %v1435, %v1824
  %v3516 = vsel %vm258, %v1437, %v1826
  %v3517 = vsel %vm258, %v1438, %v1828
  %v3518 = vsel %vm258, %v1440, %v1830
  %v3519 = vsel %vm258, %v1441, %v1832
  %v3520 = vsel %vm258, %v1443, %v1834
  %v3521 = vsel %vm258, %v1444, %v1836
  %vm3522 = vcmask 64512
  %v3523 = vsel %vm3522, %v3458, %v2063
  %v3524 = vsel %vm3522, %v3459, %v2065
  %v3525 = vsel %vm3522, %v3460, %v2067
  %v3526 = vsel %vm3522, %v3461, %v2069
  %v3527 = vsel %vm3522, %v3462, %v2071
  %v3528 = vsel %vm3522, %v3463, %v2073
  %v3529 = vsel %vm3522, %v3464, %v2075
  %v3530 = vsel %vm3522, %v3465, %v2077
  %v3531 = vsel %vm3522, %v3466, %v2079
  %v3532 = vsel %vm3522, %v3467, %v2081
  %v3533 = vsel %vm3522, %v3468, %v2083
  %v3534 = vsel %vm3522, %v3469, %v2085
  %v3535 = vsel %vm3522, %v3470, %v2087
  %v3536 = vsel %vm3522, %v3471, %v2089
  %v3537 = vsel %vm3522, %v3472, %v2091
  %v3538 = vsel %vm3522, %v3473, %v2093
  %v3539 = vsel %vm3522, %v3474, %v2095
  %v3540 = vsel %vm3522, %v3475, %v2097
  %v3541 = vsel %vm3522, %v3476, %v2099
  %v3542 = vsel %vm3522, %v3477, %v2101
  %v3543 = vsel %vm3522, %v3478, %v2103
  %v3544 = vsel %vm3522, %v3479, %v2105
  %v3545 = vsel %vm3522, %v3480, %v2107
  %v3546 = vsel %vm3522, %v3481, %v2109
  %v3547 = vsel %vm3522, %v3482, %v2111
  %v3548 = vsel %vm3522, %v3483, %v2113
  %v3549 = vsel %vm3522, %v3484, %v2115
  %v3550 = vsel %vm3522, %v3485, %v2117
  %v3551 = vsel %vm3522, %v3486, %v2119
  %v3552 = vsel %vm3522, %v3487, %v2121
  %v3553 = vsel %vm3522, %v3488, %v2123
  %v3554 = vsel %vm3522, %v3489, %v2125
  %v3555 = vsel %vm3522, %v3490, %v2127
  %v3556 = vsel %vm3522, %v3491, %v2129
  %v3557 = vsel %vm3522, %v3492, %v2131
  %v3558 = vsel %vm3522, %v3493, %v2133
  %v3559 = vsel %vm3522, %v3494, %v2135
  %v3560 = vsel %vm3522, %v3495, %v2137
  %v3561 = vsel %vm3522, %v3496, %v2139
  %v3562 = vsel %vm3522, %v3497, %v2141
  %v3563 = vsel %vm3522, %v3498, %v2143
  %v3564 = vsel %vm3522, %v3499, %v2145
  %v3565 = vsel %vm3522, %v3500, %v2147
  %v3566 = vsel %vm3522, %v3501, %v2149
  %v3567 = vsel %vm3522, %v3502, %v2151
  %v3568 = vsel %vm3522, %v3503, %v2153
  %v3569 = vsel %vm3522, %v3504, %v2155
  %v3570 = vsel %vm3522, %v3505, %v2157
  %v3571 = vsel %vm3522, %v3506, %v2159
  %v3572 = vsel %vm3522, %v3507, %v2161
  %v3573 = vsel %vm3522, %v3508, %v2163
  %v3574 = vsel %vm3522, %v3509, %v2165
  %v3575 = vsel %vm3522, %v3510, %v2167
  %v3576 = vsel %vm3522, %v3511, %v2169
  %v3577 = vsel %vm3522, %v3512, %v2171
  %v3578 = vsel %vm3522, %v3513, %v2173
  %v3579 = vsel %vm3522, %v3514, %v2175
  %v3580 = vsel %vm3522, %v3515, %v2177
  %v3581 = vsel %vm3522, %v3516, %v2179
  %v3582 = vsel %vm3522, %v3517, %v2181
  %v3583 = vsel %vm3522, %v3518, %v2183
  %v3584 = vsel %vm3522, %v3519, %v2185
  %v3585 = vsel %vm3522, %v3520, %v2187
  %v3586 = vsel %vm3522, %v3521, %v2189
  %vm3587 = vcmask 97280
  %v3588 = vsel %vm3587, %v3523, %v2259
  %v3589 = vsel %vm3587, %v3524, %v2261
  %v3590 = vsel %vm3587, %v3525, %v2263
  %v3591 = vsel %vm3587, %v3526, %v2265
  %v3592 = vsel %vm3587, %v3527, %v2267
  %v3593 = vsel %vm3587, %v3528, %v2269
  %v3594 = vsel %vm3587, %v3529, %v2271
  %v3595 = vsel %vm3587, %v3530, %v2273
  %v3596 = vsel %vm3587, %v3531, %v2275
  %v3597 = vsel %vm3587, %v3532, %v2277
  %v3598 = vsel %vm3587, %v3533, %v2279
  %v3599 = vsel %vm3587, %v3534, %v2281
  %v3600 = vsel %vm3587, %v3535, %v2283
  %v3601 = vsel %vm3587, %v3536, %v2285
  %v3602 = vsel %vm3587, %v3537, %v2287
  %v3603 = vsel %vm3587, %v3538, %v2289
  %v3604 = vsel %vm3587, %v3539, %v2291
  %v3605 = vsel %vm3587, %v3540, %v2293
  %v3606 = vsel %vm3587, %v3541, %v2295
  %v3607 = vsel %vm3587, %v3542, %v2297
  %v3608 = vsel %vm3587, %v3543, %v2299
  %v3609 = vsel %vm3587, %v3544, %v2301
  %v3610 = vsel %vm3587, %v3545, %v2303
  %v3611 = vsel %vm3587, %v3546, %v2305
  %v3612 = vsel %vm3587, %v3547, %v2307
  %v3613 = vsel %vm3587, %v3548, %v2309
  %v3614 = vsel %vm3587, %v3549, %v2311
  %v3615 = vsel %vm3587, %v3550, %v2313
  %v3616 = vsel %vm3587, %v3551, %v2315
  %v3617 = vsel %vm3587, %v3552, %v2317
  %v3618 = vsel %vm3587, %v3553, %v2319
  %v3619 = vsel %vm3587, %v3554, %v2321
  %v3620 = vsel %vm3587, %v3555, %v2323
  %v3621 = vsel %vm3587, %v3556, %v2325
  %v3622 = vsel %vm3587, %v3557, %v2327
  %v3623 = vsel %vm3587, %v3558, %v2329
  %v3624 = vsel %vm3587, %v3559, %v2331
  %v3625 = vsel %vm3587, %v3560, %v2333
  %v3626 = vsel %vm3587, %v3561, %v2335
  %v3627 = vsel %vm3587, %v3562, %v2337
  %v3628 = vsel %vm3587, %v3563, %v2339
  %v3629 = vsel %vm3587, %v3564, %v2341
  %v3630 = vsel %vm3587, %v3565, %v2343
  %v3631 = vsel %vm3587, %v3566, %v2345
  %v3632 = vsel %vm3587, %v3567, %v2347
  %v3633 = vsel %vm3587, %v3568, %v2349
  %v3634 = vsel %vm3587, %v3569, %v2351
  %v3635 = vsel %vm3587, %v3570, %v2353
  %v3636 = vsel %vm3587, %v3571, %v2355
  %v3637 = vsel %vm3587, %v3572, %v2357
  %v3638 = vsel %vm3587, %v3573, %v2359
  %v3639 = vsel %vm3587, %v3574, %v2361
  %v3640 = vsel %vm3587, %v3575, %v2363
  %v3641 = vsel %vm3587, %v3576, %v2365
  %v3642 = vsel %vm3587, %v3577, %v2367
  %v3643 = vsel %vm3587, %v3578, %v2369
  %v3644 = vsel %vm3587, %v3579, %v2371
  %v3645 = vsel %vm3587, %v3580, %v2373
  %v3646 = vsel %vm3587, %v3581, %v2375
  %v3647 = vsel %vm3587, %v3582, %v2377
  %v3648 = vsel %vm3587, %v3583, %v2379
  %v3649 = vsel %vm3587, %v3584, %v2381
  %v3650 = vsel %vm3587, %v3585, %v2383
  %v3651 = vsel %vm3587, %v3586, %v2385
  %vm3652 = vcmask 130048
  %v3653 = vsel %vm3652, %v3588, %v2463
  %v3654 = vsel %vm3652, %v3589, %v2465
  %v3655 = vsel %vm3652, %v3590, %v2467
  %v3656 = vsel %vm3652, %v3591, %v2469
  %v3657 = vsel %vm3652, %v3592, %v2471
  %v3658 = vsel %vm3652, %v3593, %v2473
  %v3659 = vsel %vm3652, %v3594, %v2475
  %v3660 = vsel %vm3652, %v3595, %v2477
  %v3661 = vsel %vm3652, %v3596, %v2479
  %v3662 = vsel %vm3652, %v3597, %v2481
  %v3663 = vsel %vm3652, %v3598, %v2483
  %v3664 = vsel %vm3652, %v3599, %v2485
  %v3665 = vsel %vm3652, %v3600, %v2487
  %v3666 = vsel %vm3652, %v3601, %v2489
  %v3667 = vsel %vm3652, %v3602, %v2491
  %v3668 = vsel %vm3652, %v3603, %v2493
  %v3669 = vsel %vm3652, %v3604, %v2495
  %v3670 = vsel %vm3652, %v3605, %v2497
  %v3671 = vsel %vm3652, %v3606, %v2499
  %v3672 = vsel %vm3652, %v3607, %v2501
  %v3673 = vsel %vm3652, %v3608, %v2503
  %v3674 = vsel %vm3652, %v3609, %v2505
  %v3675 = vsel %vm3652, %v3610, %v2507
  %v3676 = vsel %vm3652, %v3611, %v2509
  %v3677 = vsel %vm3652, %v3612, %v2511
  %v3678 = vsel %vm3652, %v3613, %v2513
  %v3679 = vsel %vm3652, %v3614, %v2515
  %v3680 = vsel %vm3652, %v3615, %v2517
  %v3681 = vsel %vm3652, %v3616, %v2519
  %v3682 = vsel %vm3652, %v3617, %v2521
  %v3683 = vsel %vm3652, %v3618, %v2523
  %v3684 = vsel %vm3652, %v3619, %v2525
  %v3685 = vsel %vm3652, %v3620, %v2527
  %v3686 = vsel %vm3652, %v3621, %v2529
  %v3687 = vsel %vm3652, %v3622, %v2531
  %v3688 = vsel %vm3652, %v3623, %v2533
  %v3689 = vsel %vm3652, %v3624, %v2535
  %v3690 = vsel %vm3652, %v3625, %v2537
  %v3691 = vsel %vm3652, %v3626, %v2539
  %v3692 = vsel %vm3652, %v3627, %v2541
  %v3693 = vsel %vm3652, %v3628, %v2543
  %v3694 = vsel %vm3652, %v3629, %v2545
  %v3695 = vsel %vm3652, %v3630, %v2547
  %v3696 = vsel %vm3652, %v3631, %v2549
  %v3697 = vsel %vm3652, %v3632, %v2551
  %v3698 = vsel %vm3652, %v3633, %v2553
  %v3699 = vsel %vm3652, %v3634, %v2555
  %v3700 = vsel %vm3652, %v3635, %v2557
  %v3701 = vsel %vm3652, %v3636, %v2559
  %v3702 = vsel %vm3652, %v3637, %v2561
  %v3703 = vsel %vm3652, %v3638, %v2563
  %v3704 = vsel %vm3652, %v3639, %v2565
  %v3705 = vsel %vm3652, %v3640, %v2567
  %v3706 = vsel %vm3652, %v3641, %v2569
  %v3707 = vsel %vm3652, %v3642, %v2571
  %v3708 = vsel %vm3652, %v3643, %v2573
  %v3709 = vsel %vm3652, %v3644, %v2575
  %v3710 = vsel %vm3652, %v3645, %v2577
  %v3711 = vsel %vm3652, %v3646, %v2579
  %v3712 = vsel %vm3652, %v3647, %v2581
  %v3713 = vsel %vm3652, %v3648, %v2583
  %v3714 = vsel %vm3652, %v3649, %v2585
  %v3715 = vsel %vm3652, %v3650, %v2587
  %v3716 = vsel %vm3652, %v3651, %v2589
  %vm3717 = vcmask 162816
  %v3718 = vsel %vm3717, %v3653, %v2665
  %v3719 = vsel %vm3717, %v3654, %v2667
  %v3720 = vsel %vm3717, %v3655, %v2669
  %v3721 = vsel %vm3717, %v3656, %v2671
  %v3722 = vsel %vm3717, %v3657, %v2673
  %v3723 = vsel %vm3717, %v3658, %v2675
  %v3724 = vsel %vm3717, %v3659, %v2677
  %v3725 = vsel %vm3717, %v3660, %v2679
  %v3726 = vsel %vm3717, %v3661, %v2681
  %v3727 = vsel %vm3717, %v3662, %v2683
  %v3728 = vsel %vm3717, %v3663, %v2685
  %v3729 = vsel %vm3717, %v3664, %v2687
  %v3730 = vsel %vm3717, %v3665, %v2689
  %v3731 = vsel %vm3717, %v3666, %v2691
  %v3732 = vsel %vm3717, %v3667, %v2693
  %v3733 = vsel %vm3717, %v3668, %v2695
  %v3734 = vsel %vm3717, %v3669, %v2697
  %v3735 = vsel %vm3717, %v3670, %v2699
  %v3736 = vsel %vm3717, %v3671, %v2701
  %v3737 = vsel %vm3717, %v3672, %v2703
  %v3738 = vsel %vm3717, %v3673, %v2705
  %v3739 = vsel %vm3717, %v3674, %v2707
  %v3740 = vsel %vm3717, %v3675, %v2709
  %v3741 = vsel %vm3717, %v3676, %v2711
  %v3742 = vsel %vm3717, %v3677, %v2713
  %v3743 = vsel %vm3717, %v3678, %v2715
  %v3744 = vsel %vm3717, %v3679, %v2717
  %v3745 = vsel %vm3717, %v3680, %v2719
  %v3746 = vsel %vm3717, %v3681, %v2721
  %v3747 = vsel %vm3717, %v3682, %v2723
  %v3748 = vsel %vm3717, %v3683, %v2725
  %v3749 = vsel %vm3717, %v3684, %v2727
  %v3750 = vsel %vm3717, %v3685, %v2729
  %v3751 = vsel %vm3717, %v3686, %v2731
  %v3752 = vsel %vm3717, %v3687, %v2733
  %v3753 = vsel %vm3717, %v3688, %v2735
  %v3754 = vsel %vm3717, %v3689, %v2737
  %v3755 = vsel %vm3717, %v3690, %v2739
  %v3756 = vsel %vm3717, %v3691, %v2741
  %v3757 = vsel %vm3717, %v3692, %v2743
  %v3758 = vsel %vm3717, %v3693, %v2745
  %v3759 = vsel %vm3717, %v3694, %v2747
  %v3760 = vsel %vm3717, %v3695, %v2749
  %v3761 = vsel %vm3717, %v3696, %v2751
  %v3762 = vsel %vm3717, %v3697, %v2753
  %v3763 = vsel %vm3717, %v3698, %v2755
  %v3764 = vsel %vm3717, %v3699, %v2757
  %v3765 = vsel %vm3717, %v3700, %v2759
  %v3766 = vsel %vm3717, %v3701, %v2761
  %v3767 = vsel %vm3717, %v3702, %v2763
  %v3768 = vsel %vm3717, %v3703, %v2765
  %v3769 = vsel %vm3717, %v3704, %v2767
  %v3770 = vsel %vm3717, %v3705, %v2769
  %v3771 = vsel %vm3717, %v3706, %v2771
  %v3772 = vsel %vm3717, %v3707, %v2773
  %v3773 = vsel %vm3717, %v3708, %v2775
  %v3774 = vsel %vm3717, %v3709, %v2777
  %v3775 = vsel %vm3717, %v3710, %v2779
  %v3776 = vsel %vm3717, %v3711, %v2781
  %v3777 = vsel %vm3717, %v3712, %v2783
  %v3778 = vsel %vm3717, %v3713, %v2785
  %v3779 = vsel %vm3717, %v3714, %v2787
  %v3780 = vsel %vm3717, %v3715, %v2789
  %v3781 = vsel %vm3717, %v3716, %v2791
  %vm3782 = vcmask 195584
  %v3783 = vsel %vm3782, %v3718, %v2861
  %v3784 = vsel %vm3782, %v3719, %v2863
  %v3785 = vsel %vm3782, %v3720, %v2865
  %v3786 = vsel %vm3782, %v3721, %v2867
  %v3787 = vsel %vm3782, %v3722, %v2869
  %v3788 = vsel %vm3782, %v3723, %v2871
  %v3789 = vsel %vm3782, %v3724, %v2873
  %v3790 = vsel %vm3782, %v3725, %v2875
  %v3791 = vsel %vm3782, %v3726, %v2877
  %v3792 = vsel %vm3782, %v3727, %v2879
  %v3793 = vsel %vm3782, %v3728, %v2881
  %v3794 = vsel %vm3782, %v3729, %v2883
  %v3795 = vsel %vm3782, %v3730, %v2885
  %v3796 = vsel %vm3782, %v3731, %v2887
  %v3797 = vsel %vm3782, %v3732, %v2889
  %v3798 = vsel %vm3782, %v3733, %v2891
  %v3799 = vsel %vm3782, %v3734, %v2893
  %v3800 = vsel %vm3782, %v3735, %v2895
  %v3801 = vsel %vm3782, %v3736, %v2897
  %v3802 = vsel %vm3782, %v3737, %v2899
  %v3803 = vsel %vm3782, %v3738, %v2901
  %v3804 = vsel %vm3782, %v3739, %v2903
  %v3805 = vsel %vm3782, %v3740, %v2905
  %v3806 = vsel %vm3782, %v3741, %v2907
  %v3807 = vsel %vm3782, %v3742, %v2909
  %v3808 = vsel %vm3782, %v3743, %v2911
  %v3809 = vsel %vm3782, %v3744, %v2913
  %v3810 = vsel %vm3782, %v3745, %v2915
  %v3811 = vsel %vm3782, %v3746, %v2917
  %v3812 = vsel %vm3782, %v3747, %v2919
  %v3813 = vsel %vm3782, %v3748, %v2921
  %v3814 = vsel %vm3782, %v3749, %v2923
  %v3815 = vsel %vm3782, %v3750, %v2925
  %v3816 = vsel %vm3782, %v3751, %v2927
  %v3817 = vsel %vm3782, %v3752, %v2929
  %v3818 = vsel %vm3782, %v3753, %v2931
  %v3819 = vsel %vm3782, %v3754, %v2933
  %v3820 = vsel %vm3782, %v3755, %v2935
  %v3821 = vsel %vm3782, %v3756, %v2937
  %v3822 = vsel %vm3782, %v3757, %v2939
  %v3823 = vsel %vm3782, %v3758, %v2941
  %v3824 = vsel %vm3782, %v3759, %v2943
  %v3825 = vsel %vm3782, %v3760, %v2945
  %v3826 = vsel %vm3782, %v3761, %v2947
  %v3827 = vsel %vm3782, %v3762, %v2949
  %v3828 = vsel %vm3782, %v3763, %v2951
  %v3829 = vsel %vm3782, %v3764, %v2953
  %v3830 = vsel %vm3782, %v3765, %v2955
  %v3831 = vsel %vm3782, %v3766, %v2957
  %v3832 = vsel %vm3782, %v3767, %v2959
  %v3833 = vsel %vm3782, %v3768, %v2961
  %v3834 = vsel %vm3782, %v3769, %v2963
  %v3835 = vsel %vm3782, %v3770, %v2965
  %v3836 = vsel %vm3782, %v3771, %v2967
  %v3837 = vsel %vm3782, %v3772, %v2969
  %v3838 = vsel %vm3782, %v3773, %v2971
  %v3839 = vsel %vm3782, %v3774, %v2973
  %v3840 = vsel %vm3782, %v3775, %v2975
  %v3841 = vsel %vm3782, %v3776, %v2977
  %v3842 = vsel %vm3782, %v3777, %v2979
  %v3843 = vsel %vm3782, %v3778, %v2981
  %v3844 = vsel %vm3782, %v3779, %v2983
  %v3845 = vsel %vm3782, %v3780, %v2985
  %v3846 = vsel %vm3782, %v3781, %v2987
  %vm3847 = vcmask 228352
  %v3848 = vsel %vm3847, %v3783, %v3065
  %v3849 = vsel %vm3847, %v3784, %v3067
  %v3850 = vsel %vm3847, %v3785, %v3069
  %v3851 = vsel %vm3847, %v3786, %v3071
  %v3852 = vsel %vm3847, %v3787, %v3073
  %v3853 = vsel %vm3847, %v3788, %v3075
  %v3854 = vsel %vm3847, %v3789, %v3077
  %v3855 = vsel %vm3847, %v3790, %v3079
  %v3856 = vsel %vm3847, %v3791, %v3081
  %v3857 = vsel %vm3847, %v3792, %v3083
  %v3858 = vsel %vm3847, %v3793, %v3085
  %v3859 = vsel %vm3847, %v3794, %v3087
  %v3860 = vsel %vm3847, %v3795, %v3089
  %v3861 = vsel %vm3847, %v3796, %v3091
  %v3862 = vsel %vm3847, %v3797, %v3093
  %v3863 = vsel %vm3847, %v3798, %v3095
  %v3864 = vsel %vm3847, %v3799, %v3097
  %v3865 = vsel %vm3847, %v3800, %v3099
  %v3866 = vsel %vm3847, %v3801, %v3101
  %v3867 = vsel %vm3847, %v3802, %v3103
  %v3868 = vsel %vm3847, %v3803, %v3105
  %v3869 = vsel %vm3847, %v3804, %v3107
  %v3870 = vsel %vm3847, %v3805, %v3109
  %v3871 = vsel %vm3847, %v3806, %v3111
  %v3872 = vsel %vm3847, %v3807, %v3113
  %v3873 = vsel %vm3847, %v3808, %v3115
  %v3874 = vsel %vm3847, %v3809, %v3117
  %v3875 = vsel %vm3847, %v3810, %v3119
  %v3876 = vsel %vm3847, %v3811, %v3121
  %v3877 = vsel %vm3847, %v3812, %v3123
  %v3878 = vsel %vm3847, %v3813, %v3125
  %v3879 = vsel %vm3847, %v3814, %v3127
  %v3880 = vsel %vm3847, %v3815, %v3129
  %v3881 = vsel %vm3847, %v3816, %v3131
  %v3882 = vsel %vm3847, %v3817, %v3133
  %v3883 = vsel %vm3847, %v3818, %v3135
  %v3884 = vsel %vm3847, %v3819, %v3137
  %v3885 = vsel %vm3847, %v3820, %v3139
  %v3886 = vsel %vm3847, %v3821, %v3141
  %v3887 = vsel %vm3847, %v3822, %v3143
  %v3888 = vsel %vm3847, %v3823, %v3145
  %v3889 = vsel %vm3847, %v3824, %v3147
  %v3890 = vsel %vm3847, %v3825, %v3149
  %v3891 = vsel %vm3847, %v3826, %v3151
  %v3892 = vsel %vm3847, %v3827, %v3153
  %v3893 = vsel %vm3847, %v3828, %v3155
  %v3894 = vsel %vm3847, %v3829, %v3157
  %v3895 = vsel %vm3847, %v3830, %v3159
  %v3896 = vsel %vm3847, %v3831, %v3161
  %v3897 = vsel %vm3847, %v3832, %v3163
  %v3898 = vsel %vm3847, %v3833, %v3165
  %v3899 = vsel %vm3847, %v3834, %v3167
  %v3900 = vsel %vm3847, %v3835, %v3169
  %v3901 = vsel %vm3847, %v3836, %v3171
  %v3902 = vsel %vm3847, %v3837, %v3173
  %v3903 = vsel %vm3847, %v3838, %v3175
  %v3904 = vsel %vm3847, %v3839, %v3177
  %v3905 = vsel %vm3847, %v3840, %v3179
  %v3906 = vsel %vm3847, %v3841, %v3181
  %v3907 = vsel %vm3847, %v3842, %v3183
  %v3908 = vsel %vm3847, %v3843, %v3185
  %v3909 = vsel %vm3847, %v3844, %v3187
  %v3910 = vsel %vm3847, %v3845, %v3189
  %v3911 = vsel %vm3847, %v3846, %v3191
  %vm3912 = vcmask 261120
  %v3913 = vsel %vm3912, %v3848, %v3267
  %v3914 = vsel %vm3912, %v3849, %v3269
  %v3915 = vsel %vm3912, %v3850, %v3271
  %v3916 = vsel %vm3912, %v3851, %v3273
  %v3917 = vsel %vm3912, %v3852, %v3275
  %v3918 = vsel %vm3912, %v3853, %v3277
  %v3919 = vsel %vm3912, %v3854, %v3279
  %v3920 = vsel %vm3912, %v3855, %v3281
  %v3921 = vsel %vm3912, %v3856, %v3283
  %v3922 = vsel %vm3912, %v3857, %v3285
  %v3923 = vsel %vm3912, %v3858, %v3287
  %v3924 = vsel %vm3912, %v3859, %v3289
  %v3925 = vsel %vm3912, %v3860, %v3291
  %v3926 = vsel %vm3912, %v3861, %v3293
  %v3927 = vsel %vm3912, %v3862, %v3295
  %v3928 = vsel %vm3912, %v3863, %v3297
  %v3929 = vsel %vm3912, %v3864, %v3299
  %v3930 = vsel %vm3912, %v3865, %v3301
  %v3931 = vsel %vm3912, %v3866, %v3303
  %v3932 = vsel %vm3912, %v3867, %v3305
  %v3933 = vsel %vm3912, %v3868, %v3307
  %v3934 = vsel %vm3912, %v3869, %v3309
  %v3935 = vsel %vm3912, %v3870, %v3311
  %v3936 = vsel %vm3912, %v3871, %v3313
  %v3937 = vsel %vm3912, %v3872, %v3315
  %v3938 = vsel %vm3912, %v3873, %v3317
  %v3939 = vsel %vm3912, %v3874, %v3319
  %v3940 = vsel %vm3912, %v3875, %v3321
  %v3941 = vsel %vm3912, %v3876, %v3323
  %v3942 = vsel %vm3912, %v3877, %v3325
  %v3943 = vsel %vm3912, %v3878, %v3327
  %v3944 = vsel %vm3912, %v3879, %v3329
  %v3945 = vsel %vm3912, %v3880, %v3331
  %v3946 = vsel %vm3912, %v3881, %v3333
  %v3947 = vsel %vm3912, %v3882, %v3335
  %v3948 = vsel %vm3912, %v3883, %v3337
  %v3949 = vsel %vm3912, %v3884, %v3339
  %v3950 = vsel %vm3912, %v3885, %v3341
  %v3951 = vsel %vm3912, %v3886, %v3343
  %v3952 = vsel %vm3912, %v3887, %v3345
  %v3953 = vsel %vm3912, %v3888, %v3347
  %v3954 = vsel %vm3912, %v3889, %v3349
  %v3955 = vsel %vm3912, %v3890, %v3351
  %v3956 = vsel %vm3912, %v3891, %v3353
  %v3957 = vsel %vm3912, %v3892, %v3355
  %v3958 = vsel %vm3912, %v3893, %v3357
  %v3959 = vsel %vm3912, %v3894, %v3359
  %v3960 = vsel %vm3912, %v3895, %v3361
  %v3961 = vsel %vm3912, %v3896, %v3363
  %v3962 = vsel %vm3912, %v3897, %v3365
  %v3963 = vsel %vm3912, %v3898, %v3367
  %v3964 = vsel %vm3912, %v3899, %v3369
  %v3965 = vsel %vm3912, %v3900, %v3371
  %v3966 = vsel %vm3912, %v3901, %v3373
  %v3967 = vsel %vm3912, %v3902, %v3375
  %v3968 = vsel %vm3912, %v3903, %v3377
  %v3969 = vsel %vm3912, %v3904, %v3379
  %v3970 = vsel %vm3912, %v3905, %v3381
  %v3971 = vsel %vm3912, %v3906, %v3383
  %v3972 = vsel %vm3912, %v3907, %v3385
  %v3973 = vsel %vm3912, %v3908, %v3387
  %v3974 = vsel %vm3912, %v3909, %v3389
  %v3975 = vsel %vm3912, %v3910, %v3391
  %v3976 = vsel %vm3912, %v3911, %v3393
  %v3977 = vpack.c.bf16 %v3914, %v3913
  %v3978 = vpack.c.bf16 %v3916, %v3915
  %v3979 = vpack.c.bf16 %v3918, %v3917
  %v3980 = vpack.c.bf16 %v3920, %v3919
  %v3981 = vpack.c.bf16 %v3922, %v3921
  %v3982 = vpack.c.bf16 %v3924, %v3923
  %v3983 = vpack.c.bf16 %v3926, %v3925
  %v3984 = vpack.c.bf16 %v3928, %v3927
  %v3985 = vpack.c.bf16 %v3930, %v3929
  %v3986 = vpack.c.bf16 %v3932, %v3931
  %v3987 = vpack.c.bf16 %v3934, %v3933
  %v3988 = vpack.c.bf16 %v3936, %v3935
  %v3989 = vpack.c.bf16 %v3938, %v3937
  %v3990 = vpack.c.bf16 %v3940, %v3939
  %v3991 = vpack.c.bf16 %v3942, %v3941
  %v3992 = vpack.c.bf16 %v3944, %v3943
  %v3993 = vpack.c.bf16 %v3946, %v3945
  %v3994 = vpack.c.bf16 %v3948, %v3947
  %v3995 = vpack.c.bf16 %v3950, %v3949
  %v3996 = vpack.c.bf16 %v3952, %v3951
  %v3997 = vpack.c.bf16 %v3954, %v3953
  %v3998 = vpack.c.bf16 %v3956, %v3955
  %v3999 = vpack.c.bf16 %v3958, %v3957
  %v4000 = vpack.c.bf16 %v3960, %v3959
  %v4001 = vpack.c.bf16 %v3962, %v3961
  %v4002 = vpack.c.bf16 %v3964, %v3963
  %v4003 = vpack.c.bf16 %v3966, %v3965
  %v4004 = vpack.c.bf16 %v3968, %v3967
  %v4005 = vpack.c.bf16 %v3970, %v3969
  %v4006 = vpack.c.bf16 %v3972, %v3971
  %v4007 = vpack.c.bf16 %v3974, %v3973
  %v4008 = vpack.c.bf16 %v3976, %v3975
  %v4009 = vld [vmem:[%s3] sm:$0xf]
  %v4010 = vld [vmem:[%s3 + $0x4] sm:$0xf]
  %v4011 = vld [vmem:[%s3 + $0x8] sm:$0xf]
  %v4012 = vld [vmem:[%s3 + $0xc] sm:$0xf]
  %v4013 = vld [vmem:[%s3 + $0x10] sm:$0x3]
  %v4019 = vunpack.c.l.b16 %v4009
  %v4020 = vunpack.c.l.b16 %v4010
  %v4021 = vunpack.c.l.b16 %v4011
  %v4022 = vunpack.c.l.b16 %v4012
  %v4023 = vunpack.c.l.b16 %v4013
  %v4024 = vpack.c.b16 %v4020, %v4019
  %v4025 = vpack.c.b16 %v4022, %v4021
  %v4026 = vpack.c.b16 %v4023, %v4023
  %vm4029 = vcmask 293888
  %v4031 = vsel %vm4029, %v3977, 0
  %v4034 = vsel %vm4029, %v3978, 0
  %v4037 = vsel %vm4029, %v3979, 0
  %v4040 = vsel %vm4029, %v3980, 0
  %v4043 = vsel %vm4029, %v3981, 0
  %v4046 = vsel %vm4029, %v3982, 0
  %v4049 = vsel %vm4029, %v3983, 0
  %v4052 = vsel %vm4029, %v3984, 0
  %v4055 = vsel %vm4029, %v3985, 0
  %v4058 = vsel %vm4029, %v3986, 0
  %v4061 = vsel %vm4029, %v3987, 0
  %v4064 = vsel %vm4029, %v3988, 0
  %v4067 = vsel %vm4029, %v3989, 0
  %v4070 = vsel %vm4029, %v3990, 0
  %v4073 = vsel %vm4029, %v3991, 0
  %v4076 = vsel %vm4029, %v3992, 0
  %v4079 = vsel %vm4029, %v3993, 0
  %v4082 = vsel %vm4029, %v3994, 0
  %v4085 = vsel %vm4029, %v3995, 0
  %v4088 = vsel %vm4029, %v3996, 0
  %v4091 = vsel %vm4029, %v3997, 0
  %v4094 = vsel %vm4029, %v3998, 0
  %v4097 = vsel %vm4029, %v3999, 0
  %v4100 = vsel %vm4029, %v4000, 0
  %v4103 = vsel %vm4029, %v4001, 0
  %v4106 = vsel %vm4029, %v4002, 0
  %v4109 = vsel %vm4029, %v4003, 0
  %v4112 = vsel %vm4029, %v4004, 0
  %v4115 = vsel %vm4029, %v4005, 0
  %v4118 = vsel %vm4029, %v4006, 0
  %v4121 = vsel %vm4029, %v4007, 0
  %v4124 = vsel %vm4029, %v4008, 0
  %v4127 = vsel %vm355, %v4026, 0
  %4129 = vmatprep.subr.bf16.mxu0 0
  %4130 = vmatpush1.bf16.msra.mxu0 %v4024
  %4131 = vmatprep.subr.bf16.mxu0 0
  %4132 = vmatpush1.bf16.msra.mxu0 %v4025
  %4133 = vmatprep.subr.bf16.mxu0 0
  %4134 = vmatpush1.bf16.msra.mxu0 %v4127
  %4135 = vmatprep.subr.bf16.mxu0 0
  %4136 = vmatpush1.bf16.msra.mxu0 0
  %4137 = vmatprep.subr.bf16.mxu0 0
  %4138 = vmatpush1.bf16.msra.mxu0 0
  %4139 = vmatprep.subr.bf16.mxu0 0
  %4140 = vmatpush1.bf16.msra.mxu0 0
  %4141 = vmatprep.subr.bf16.mxu0 0
  %4142 = vmatpush1.bf16.msra.mxu0 0
  %4143 = vmatprep.subr.bf16.mxu0 0
  %4144 = vmatpush1.bf16.msra.mxu0 0
  %4145 = vmatprep.subr.bf16.mxu0 0
  %4146 = vmatpush1.bf16.msra.mxu0 0
  %4147 = vmatprep.subr.bf16.mxu0 0
  %4148 = vmatpush1.bf16.msra.mxu0 0
  %4149 = vmatprep.subr.bf16.mxu0 0
  %4150 = vmatpush1.bf16.msra.mxu0 0
  %4151 = vmatprep.subr.bf16.mxu0 0
  %4152 = vmatpush1.bf16.msra.mxu0 0
  %4153 = vmatprep.subr.bf16.mxu0 0
  %4154 = vmatpush1.bf16.msra.mxu0 0
  %4155 = vmatprep.subr.bf16.mxu0 0
  %4156 = vmatpush1.bf16.msra.mxu0 0
  %4157 = vmatprep.subr.bf16.mxu0 0
  %4158 = vmatpush1.bf16.msra.mxu0 0
  %4159 = vmatprep.subr.bf16.mxu0 0
  %4160 = vmatpush1.bf16.msra.mxu0 0
  %4161 = vmatprep.mubr.bf16.mxu0 0
  %4162 = vmatmul.mubr.bf16.gmra.mrb[0].mxu0 %v4031
  %v4163 = vpop.f32.mrb[0].mxu0
  %v4164 = vadd.f32 0.0, %v4163
  %v4165 = vpop.f32.mrb[0].mxu0
  %v4166 = vpop.f32.mrb[0].mxu0
  %v4167 = vadd.f32 0.0, %v4166
  %v4168 = vpop.f32.mrb[0].mxu0
  %4169 = vmatprep.mubr.bf16.mxu0 0
  %4170 = vmatmul.mubr.bf16.gmra.mrb[0].mxu0 %v4034
  %v4171 = vpop.f32.mrb[0].mxu0
  %v4172 = vadd.f32 0.0, %v4171
  %v4173 = vpop.f32.mrb[0].mxu0
  %v4174 = vpop.f32.mrb[0].mxu0
  %v4175 = vadd.f32 0.0, %v4174
  %v4176 = vpop.f32.mrb[0].mxu0
  %4177 = vmatprep.mubr.bf16.mxu0 0
  %4178 = vmatmul.mubr.bf16.gmra.mrb[0].mxu0 %v4037
  %v4179 = vpop.f32.mrb[0].mxu0
  %v4180 = vadd.f32 0.0, %v4179
  %v4181 = vpop.f32.mrb[0].mxu0
  %v4182 = vpop.f32.mrb[0].mxu0
  %v4183 = vadd.f32 0.0, %v4182
  %v4184 = vpop.f32.mrb[0].mxu0
  %4185 = vmatprep.mubr.bf16.mxu0 0
  %4186 = vmatmul.mubr.bf16.gmra.mrb[0].mxu0 %v4040
  %v4187 = vpop.f32.mrb[0].mxu0
  %v4188 = vadd.f32 0.0, %v4187
  %v4189 = vpop.f32.mrb[0].mxu0
  %v4190 = vpop.f32.mrb[0].mxu0
  %v4191 = vadd.f32 0.0, %v4190
  %v4192 = vpop.f32.mrb[0].mxu0
  %4193 = vmatprep.mubr.bf16.mxu0 0
  %4194 = vmatmul.mubr.bf16.gmra.mrb[0].mxu0 %v4043
  %v4195 = vpop.f32.mrb[0].mxu0
  %v4196 = vadd.f32 0.0, %v4195
  %v4197 = vpop.f32.mrb[0].mxu0
  %v4198 = vpop.f32.mrb[0].mxu0
  %v4199 = vadd.f32 0.0, %v4198
  %v4200 = vpop.f32.mrb[0].mxu0
  %4201 = vmatprep.mubr.bf16.mxu0 0
  %4202 = vmatmul.mubr.bf16.gmra.mrb[0].mxu0 %v4046
  %v4203 = vpop.f32.mrb[0].mxu0
  %v4204 = vadd.f32 0.0, %v4203
  %v4205 = vpop.f32.mrb[0].mxu0
  %v4206 = vpop.f32.mrb[0].mxu0
  %v4207 = vadd.f32 0.0, %v4206
  %v4208 = vpop.f32.mrb[0].mxu0
  %4209 = vmatprep.mubr.bf16.mxu0 0
  %4210 = vmatmul.mubr.bf16.gmra.mrb[0].mxu0 %v4049
  %v4211 = vpop.f32.mrb[0].mxu0
  %v4212 = vadd.f32 0.0, %v4211
  %v4213 = vpop.f32.mrb[0].mxu0
  %v4214 = vpop.f32.mrb[0].mxu0
  %v4215 = vadd.f32 0.0, %v4214
  %v4216 = vpop.f32.mrb[0].mxu0
  %4217 = vmatprep.mubr.bf16.mxu0 0
  %4218 = vmatmul.mubr.bf16.gmra.mrb[0].mxu0 %v4052
  %v4219 = vpop.f32.mrb[0].mxu0
  %v4220 = vadd.f32 0.0, %v4219
  %v4221 = vpop.f32.mrb[0].mxu0
  %v4222 = vpop.f32.mrb[0].mxu0
  %v4223 = vadd.f32 0.0, %v4222
  %v4224 = vpop.f32.mrb[0].mxu0
  %4225 = vmatprep.mubr.bf16.mxu0 0
  %4226 = vmatmul.mubr.bf16.gmra.mrb[0].mxu0 %v4055
  %v4227 = vpop.f32.mrb[0].mxu0
  %v4228 = vadd.f32 0.0, %v4227
  %v4229 = vpop.f32.mrb[0].mxu0
  %v4230 = vpop.f32.mrb[0].mxu0
  %v4231 = vadd.f32 0.0, %v4230
  %v4232 = vpop.f32.mrb[0].mxu0
  %4233 = vmatprep.mubr.bf16.mxu0 0
  %4234 = vmatmul.mubr.bf16.gmra.mrb[0].mxu0 %v4058
  %v4235 = vpop.f32.mrb[0].mxu0
  %v4236 = vadd.f32 0.0, %v4235
  %v4237 = vpop.f32.mrb[0].mxu0
  %v4238 = vpop.f32.mrb[0].mxu0
  %v4239 = vadd.f32 0.0, %v4238
  %v4240 = vpop.f32.mrb[0].mxu0
  %4241 = vmatprep.mubr.bf16.mxu0 0
  %4242 = vmatmul.mubr.bf16.gmra.mrb[0].mxu0 %v4061
  %v4243 = vpop.f32.mrb[0].mxu0
  %v4244 = vadd.f32 0.0, %v4243
  %v4245 = vpop.f32.mrb[0].mxu0
  %v4246 = vpop.f32.mrb[0].mxu0
  %v4247 = vadd.f32 0.0, %v4246
  %v4248 = vpop.f32.mrb[0].mxu0
  %4249 = vmatprep.mubr.bf16.mxu0 0
  %4250 = vmatmul.mubr.bf16.gmra.mrb[0].mxu0 %v4064
  %v4251 = vpop.f32.mrb[0].mxu0
  %v4252 = vadd.f32 0.0, %v4251
  %v4253 = vpop.f32.mrb[0].mxu0
  %v4254 = vpop.f32.mrb[0].mxu0
  %v4255 = vadd.f32 0.0, %v4254
  %v4256 = vpop.f32.mrb[0].mxu0
  %4257 = vmatprep.mubr.bf16.mxu0 0
  %4258 = vmatmul.mubr.bf16.gmra.mrb[0].mxu0 %v4067
  %v4259 = vpop.f32.mrb[0].mxu0
  %v4260 = vadd.f32 0.0, %v4259
  %v4261 = vpop.f32.mrb[0].mxu0
  %v4262 = vpop.f32.mrb[0].mxu0
  %v4263 = vadd.f32 0.0, %v4262
  %v4264 = vpop.f32.mrb[0].mxu0
  %4265 = vmatprep.mubr.bf16.mxu0 0
  %4266 = vmatmul.mubr.bf16.gmra.mrb[0].mxu0 %v4070
  %v4267 = vpop.f32.mrb[0].mxu0
  %v4268 = vadd.f32 0.0, %v4267
  %v4269 = vpop.f32.mrb[0].mxu0
  %v4270 = vpop.f32.mrb[0].mxu0
  %v4271 = vadd.f32 0.0, %v4270
  %v4272 = vpop.f32.mrb[0].mxu0
  %4273 = vmatprep.mubr.bf16.mxu0 0
  %4274 = vmatmul.mubr.bf16.gmra.mrb[0].mxu0 %v4073
  %v4275 = vpop.f32.mrb[0].mxu0
  %v4276 = vadd.f32 0.0, %v4275
  %v4277 = vpop.f32.mrb[0].mxu0
  %v4278 = vpop.f32.mrb[0].mxu0
  %v4279 = vadd.f32 0.0, %v4278
  %v4280 = vpop.f32.mrb[0].mxu0
  %4281 = vmatprep.mubr.bf16.mxu0 0
  %4282 = vmatmul.mubr.bf16.gmra.mrb[0].mxu0 %v4076
  %v4283 = vpop.f32.mrb[0].mxu0
  %v4284 = vadd.f32 0.0, %v4283
  %v4285 = vpop.f32.mrb[0].mxu0
  %v4286 = vpop.f32.mrb[0].mxu0
  %v4287 = vadd.f32 0.0, %v4286
  %v4288 = vpop.f32.mrb[0].mxu0
  %4289 = vmatprep.mubr.bf16.mxu0 0
  %4290 = vmatmul.mubr.bf16.gmra.mrb[0].mxu0 %v4079
  %v4291 = vpop.f32.mrb[0].mxu0
  %v4292 = vadd.f32 0.0, %v4291
  %v4293 = vpop.f32.mrb[0].mxu0
  %v4294 = vpop.f32.mrb[0].mxu0
  %v4295 = vadd.f32 0.0, %v4294
  %v4296 = vpop.f32.mrb[0].mxu0
  %4297 = vmatprep.mubr.bf16.mxu0 0
  %4298 = vmatmul.mubr.bf16.gmra.mrb[0].mxu0 %v4082
  %v4299 = vpop.f32.mrb[0].mxu0
  %v4300 = vadd.f32 0.0, %v4299
  %v4301 = vpop.f32.mrb[0].mxu0
  %v4302 = vpop.f32.mrb[0].mxu0
  %v4303 = vadd.f32 0.0, %v4302
  %v4304 = vpop.f32.mrb[0].mxu0
  %4305 = vmatprep.mubr.bf16.mxu0 0
  %4306 = vmatmul.mubr.bf16.gmra.mrb[0].mxu0 %v4085
  %v4307 = vpop.f32.mrb[0].mxu0
  %v4308 = vadd.f32 0.0, %v4307
  %v4309 = vpop.f32.mrb[0].mxu0
  %v4310 = vpop.f32.mrb[0].mxu0
  %v4311 = vadd.f32 0.0, %v4310
  %v4312 = vpop.f32.mrb[0].mxu0
  %4313 = vmatprep.mubr.bf16.mxu0 0
  %4314 = vmatmul.mubr.bf16.gmra.mrb[0].mxu0 %v4088
  %v4315 = vpop.f32.mrb[0].mxu0
  %v4316 = vadd.f32 0.0, %v4315
  %v4317 = vpop.f32.mrb[0].mxu0
  %v4318 = vpop.f32.mrb[0].mxu0
  %v4319 = vadd.f32 0.0, %v4318
  %v4320 = vpop.f32.mrb[0].mxu0
  %4321 = vmatprep.mubr.bf16.mxu0 0
  %4322 = vmatmul.mubr.bf16.gmra.mrb[0].mxu0 %v4091
  %v4323 = vpop.f32.mrb[0].mxu0
  %v4324 = vadd.f32 0.0, %v4323
  %v4325 = vpop.f32.mrb[0].mxu0
  %v4326 = vpop.f32.mrb[0].mxu0
  %v4327 = vadd.f32 0.0, %v4326
  %v4328 = vpop.f32.mrb[0].mxu0
  %4329 = vmatprep.mubr.bf16.mxu0 0
  %4330 = vmatmul.mubr.bf16.gmra.mrb[0].mxu0 %v4094
  %v4331 = vpop.f32.mrb[0].mxu0
  %v4332 = vadd.f32 0.0, %v4331
  %v4333 = vpop.f32.mrb[0].mxu0
  %v4334 = vpop.f32.mrb[0].mxu0
  %v4335 = vadd.f32 0.0, %v4334
  %v4336 = vpop.f32.mrb[0].mxu0
  %4337 = vmatprep.mubr.bf16.mxu0 0
  %4338 = vmatmul.mubr.bf16.gmra.mrb[0].mxu0 %v4097
  %v4339 = vpop.f32.mrb[0].mxu0
  %v4340 = vadd.f32 0.0, %v4339
  %v4341 = vpop.f32.mrb[0].mxu0
  %v4342 = vpop.f32.mrb[0].mxu0
  %v4343 = vadd.f32 0.0, %v4342
  %v4344 = vpop.f32.mrb[0].mxu0
  %4345 = vmatprep.mubr.bf16.mxu0 0
  %4346 = vmatmul.mubr.bf16.gmra.mrb[0].mxu0 %v4100
  %v4347 = vpop.f32.mrb[0].mxu0
  %v4348 = vadd.f32 0.0, %v4347
  %v4349 = vpop.f32.mrb[0].mxu0
  %v4350 = vpop.f32.mrb[0].mxu0
  %v4351 = vadd.f32 0.0, %v4350
  %v4352 = vpop.f32.mrb[0].mxu0
  %4353 = vmatprep.mubr.bf16.mxu0 0
  %4354 = vmatmul.mubr.bf16.gmra.mrb[0].mxu0 %v4103
  %v4355 = vpop.f32.mrb[0].mxu0
  %v4356 = vadd.f32 0.0, %v4355
  %v4357 = vpop.f32.mrb[0].mxu0
  %v4358 = vpop.f32.mrb[0].mxu0
  %v4359 = vadd.f32 0.0, %v4358
  %v4360 = vpop.f32.mrb[0].mxu0
  %4361 = vmatprep.mubr.bf16.mxu0 0
  %4362 = vmatmul.mubr.bf16.gmra.mrb[0].mxu0 %v4106
  %v4363 = vpop.f32.mrb[0].mxu0
  %v4364 = vadd.f32 0.0, %v4363
  %v4365 = vpop.f32.mrb[0].mxu0
  %v4366 = vpop.f32.mrb[0].mxu0
  %v4367 = vadd.f32 0.0, %v4366
  %v4368 = vpop.f32.mrb[0].mxu0
  %4369 = vmatprep.mubr.bf16.mxu0 0
  %4370 = vmatmul.mubr.bf16.gmra.mrb[0].mxu0 %v4109
  %v4371 = vpop.f32.mrb[0].mxu0
  %v4372 = vadd.f32 0.0, %v4371
  %v4373 = vpop.f32.mrb[0].mxu0
  %v4374 = vpop.f32.mrb[0].mxu0
  %v4375 = vadd.f32 0.0, %v4374
  %v4376 = vpop.f32.mrb[0].mxu0
  %4377 = vmatprep.mubr.bf16.mxu0 0
  %4378 = vmatmul.mubr.bf16.gmra.mrb[0].mxu0 %v4112
  %v4379 = vpop.f32.mrb[0].mxu0
  %v4380 = vadd.f32 0.0, %v4379
  %v4381 = vpop.f32.mrb[0].mxu0
  %v4382 = vpop.f32.mrb[0].mxu0
  %v4383 = vadd.f32 0.0, %v4382
  %v4384 = vpop.f32.mrb[0].mxu0
  %4385 = vmatprep.mubr.bf16.mxu0 0
  %4386 = vmatmul.mubr.bf16.gmra.mrb[0].mxu0 %v4115
  %v4387 = vpop.f32.mrb[0].mxu0
  %v4388 = vadd.f32 0.0, %v4387
  %v4389 = vpop.f32.mrb[0].mxu0
  %v4390 = vpop.f32.mrb[0].mxu0
  %v4391 = vadd.f32 0.0, %v4390
  %v4392 = vpop.f32.mrb[0].mxu0
  %4393 = vmatprep.mubr.bf16.mxu0 0
  %4394 = vmatmul.mubr.bf16.gmra.mrb[0].mxu0 %v4118
  %v4395 = vpop.f32.mrb[0].mxu0
  %v4396 = vadd.f32 0.0, %v4395
  %v4397 = vpop.f32.mrb[0].mxu0
  %v4398 = vpop.f32.mrb[0].mxu0
  %v4399 = vadd.f32 0.0, %v4398
  %v4400 = vpop.f32.mrb[0].mxu0
  %4401 = vmatprep.mubr.bf16.mxu0 0
  %4402 = vmatmul.mubr.bf16.gmra.mrb[0].mxu0 %v4121
  %v4403 = vpop.f32.mrb[0].mxu0
  %v4404 = vadd.f32 0.0, %v4403
  %v4405 = vpop.f32.mrb[0].mxu0
  %v4406 = vpop.f32.mrb[0].mxu0
  %v4407 = vadd.f32 0.0, %v4406
  %v4408 = vpop.f32.mrb[0].mxu0
  %4409 = vmatprep.mubr.bf16.mxu0 0
  %4410 = vmatmul.mubr.bf16.gmra.mrb[0].mxu0 %v4124
  %v4411 = vpop.f32.mrb[0].mxu0
  %v4412 = vadd.f32 0.0, %v4411
  %v4413 = vpop.f32.mrb[0].mxu0
  %v4414 = vpop.f32.mrb[0].mxu0
  %v4415 = vadd.f32 0.0, %v4414
  %v4416 = vpop.f32.mrb[0].mxu0
  %4417 = vdwg.mxu0
  %v4418 = vld [vmem:[%s4] sm:$0x3]
  %v4419 = vsel %vm258, %v4164, 0.0
  %v4420 = vsel %vm258, %v4167, 0.0
  %v4421 = vadd.f32 %v4419, %v4420
  %v4422 = vsel %vm258, %v4172, 0.0
  %v4423 = vadd.f32 %v4421, %v4422
  %v4424 = vsel %vm258, %v4175, 0.0
  %v4425 = vadd.f32 %v4423, %v4424
  %v4426 = vsel %vm258, %v4180, 0.0
  %v4427 = vadd.f32 %v4425, %v4426
  %v4428 = vsel %vm258, %v4183, 0.0
  %v4429 = vadd.f32 %v4427, %v4428
  %v4430 = vsel %vm258, %v4188, 0.0
  %v4431 = vadd.f32 %v4429, %v4430
  %v4432 = vsel %vm258, %v4191, 0.0
  %v4433 = vadd.f32 %v4431, %v4432
  %v4434 = vsel %vm258, %v4196, 0.0
  %v4435 = vadd.f32 %v4433, %v4434
  %v4436 = vsel %vm258, %v4199, 0.0
  %v4437 = vadd.f32 %v4435, %v4436
  %v4438 = vsel %vm258, %v4204, 0.0
  %v4439 = vadd.f32 %v4437, %v4438
  %v4440 = vsel %vm258, %v4207, 0.0
  %v4441 = vadd.f32 %v4439, %v4440
  %v4442 = vsel %vm258, %v4212, 0.0
  %v4443 = vadd.f32 %v4441, %v4442
  %v4444 = vsel %vm258, %v4215, 0.0
  %v4445 = vadd.f32 %v4443, %v4444
  %v4446 = vsel %vm258, %v4220, 0.0
  %v4447 = vadd.f32 %v4445, %v4446
  %v4448 = vsel %vm258, %v4223, 0.0
  %v4449 = vadd.f32 %v4447, %v4448
  %v4450 = vsel %vm258, %v4228, 0.0
  %v4451 = vadd.f32 %v4449, %v4450
  %v4452 = vsel %vm258, %v4231, 0.0
  %v4453 = vadd.f32 %v4451, %v4452
  %v4454 = vsel %vm258, %v4236, 0.0
  %v4455 = vadd.f32 %v4453, %v4454
  %v4456 = vsel %vm258, %v4239, 0.0
  %v4457 = vadd.f32 %v4455, %v4456
  %v4458 = vsel %vm258, %v4244, 0.0
  %v4459 = vadd.f32 %v4457, %v4458
  %v4460 = vsel %vm258, %v4247, 0.0
  %v4461 = vadd.f32 %v4459, %v4460
  %v4462 = vsel %vm258, %v4252, 0.0
  %v4463 = vadd.f32 %v4461, %v4462
  %v4464 = vsel %vm258, %v4255, 0.0
  %v4465 = vadd.f32 %v4463, %v4464
  %v4466 = vsel %vm258, %v4260, 0.0
  %v4467 = vadd.f32 %v4465, %v4466
  %v4468 = vsel %vm258, %v4263, 0.0
  %v4469 = vadd.f32 %v4467, %v4468
  %v4470 = vsel %vm258, %v4268, 0.0
  %v4471 = vadd.f32 %v4469, %v4470
  %v4472 = vsel %vm258, %v4271, 0.0
  %v4473 = vadd.f32 %v4471, %v4472
  %v4474 = vsel %vm258, %v4276, 0.0
  %v4475 = vadd.f32 %v4473, %v4474
  %v4476 = vsel %vm258, %v4279, 0.0
  %v4477 = vadd.f32 %v4475, %v4476
  %v4478 = vsel %vm258, %v4284, 0.0
  %v4479 = vadd.f32 %v4477, %v4478
  %v4480 = vsel %vm258, %v4287, 0.0
  %v4481 = vadd.f32 %v4479, %v4480
  %v4482 = vsel %vm258, %v4292, 0.0
  %v4483 = vadd.f32 %v4481, %v4482
  %v4484 = vsel %vm258, %v4295, 0.0
  %v4485 = vadd.f32 %v4483, %v4484
  %v4486 = vsel %vm258, %v4300, 0.0
  %v4487 = vadd.f32 %v4485, %v4486
  %v4488 = vsel %vm258, %v4303, 0.0
  %v4489 = vadd.f32 %v4487, %v4488
  %v4490 = vsel %vm258, %v4308, 0.0
  %v4491 = vadd.f32 %v4489, %v4490
  %v4492 = vsel %vm258, %v4311, 0.0
  %v4493 = vadd.f32 %v4491, %v4492
  %v4494 = vsel %vm258, %v4316, 0.0
  %v4495 = vadd.f32 %v4493, %v4494
  %v4496 = vsel %vm258, %v4319, 0.0
  %v4497 = vadd.f32 %v4495, %v4496
  %v4498 = vsel %vm258, %v4324, 0.0
  %v4499 = vadd.f32 %v4497, %v4498
  %v4500 = vsel %vm258, %v4327, 0.0
  %v4501 = vadd.f32 %v4499, %v4500
  %v4502 = vsel %vm258, %v4332, 0.0
  %v4503 = vadd.f32 %v4501, %v4502
  %v4504 = vsel %vm258, %v4335, 0.0
  %v4505 = vadd.f32 %v4503, %v4504
  %v4506 = vsel %vm258, %v4340, 0.0
  %v4507 = vadd.f32 %v4505, %v4506
  %v4508 = vsel %vm258, %v4343, 0.0
  %v4509 = vadd.f32 %v4507, %v4508
  %v4510 = vsel %vm258, %v4348, 0.0
  %v4511 = vadd.f32 %v4509, %v4510
  %v4512 = vsel %vm258, %v4351, 0.0
  %v4513 = vadd.f32 %v4511, %v4512
  %v4514 = vsel %vm258, %v4356, 0.0
  %v4515 = vadd.f32 %v4513, %v4514
  %v4516 = vsel %vm258, %v4359, 0.0
  %v4517 = vadd.f32 %v4515, %v4516
  %v4518 = vsel %vm258, %v4364, 0.0
  %v4519 = vadd.f32 %v4517, %v4518
  %v4520 = vsel %vm258, %v4367, 0.0
  %v4521 = vadd.f32 %v4519, %v4520
  %v4522 = vsel %vm258, %v4372, 0.0
  %v4523 = vadd.f32 %v4521, %v4522
  %v4524 = vsel %vm258, %v4375, 0.0
  %v4525 = vadd.f32 %v4523, %v4524
  %v4526 = vsel %vm258, %v4380, 0.0
  %v4527 = vadd.f32 %v4525, %v4526
  %v4528 = vsel %vm258, %v4383, 0.0
  %v4529 = vadd.f32 %v4527, %v4528
  %v4530 = vsel %vm258, %v4388, 0.0
  %v4531 = vadd.f32 %v4529, %v4530
  %v4532 = vsel %vm258, %v4391, 0.0
  %v4533 = vadd.f32 %v4531, %v4532
  %v4534 = vsel %vm258, %v4396, 0.0
  %v4535 = vadd.f32 %v4533, %v4534
  %v4536 = vsel %vm258, %v4399, 0.0
  %v4537 = vadd.f32 %v4535, %v4536
  %v4538 = vsel %vm258, %v4404, 0.0
  %v4539 = vadd.f32 %v4537, %v4538
  %v4540 = vsel %vm258, %v4407, 0.0
  %v4541 = vadd.f32 %v4539, %v4540
  %v4542 = vsel %vm258, %v4412, 0.0
  %v4543 = vadd.f32 %v4541, %v4542
  %v4544 = vsel %vm258, %v4415, 0.0
  %v4545 = vadd.f32 %v4543, %v4544
  %v4546 = vrot.slane %v4545, 4
  %v4547 = vadd.f32 %v4545, %v4546
  %v4548 = vrot.slane %v4547, 2
  %v4549 = vadd.f32 %v4547, %v4548
  %v4550 = vrot.slane %v4549, 1
  %v4551 = vadd.f32 %v4549, %v4550
  %v4552 = vmul.f32 %v4164, %v4164
  %v4553 = vmul.f32 %v4167, %v4167
  %v4554 = vmul.f32 %v4172, %v4172
  %v4555 = vmul.f32 %v4175, %v4175
  %v4556 = vmul.f32 %v4180, %v4180
  %v4557 = vmul.f32 %v4183, %v4183
  %v4558 = vmul.f32 %v4188, %v4188
  %v4559 = vmul.f32 %v4191, %v4191
  %v4560 = vmul.f32 %v4196, %v4196
  %v4561 = vmul.f32 %v4199, %v4199
  %v4562 = vmul.f32 %v4204, %v4204
  %v4563 = vmul.f32 %v4207, %v4207
  %v4564 = vmul.f32 %v4212, %v4212
  %v4565 = vmul.f32 %v4215, %v4215
  %v4566 = vmul.f32 %v4220, %v4220
  %v4567 = vmul.f32 %v4223, %v4223
  %v4568 = vmul.f32 %v4228, %v4228
  %v4569 = vmul.f32 %v4231, %v4231
  %v4570 = vmul.f32 %v4236, %v4236
  %v4571 = vmul.f32 %v4239, %v4239
  %v4572 = vmul.f32 %v4244, %v4244
  %v4573 = vmul.f32 %v4247, %v4247
  %v4574 = vmul.f32 %v4252, %v4252
  %v4575 = vmul.f32 %v4255, %v4255
  %v4576 = vmul.f32 %v4260, %v4260
  %v4577 = vmul.f32 %v4263, %v4263
  %v4578 = vmul.f32 %v4268, %v4268
  %v4579 = vmul.f32 %v4271, %v4271
  %v4580 = vmul.f32 %v4276, %v4276
  %v4581 = vmul.f32 %v4279, %v4279
  %v4582 = vmul.f32 %v4284, %v4284
  %v4583 = vmul.f32 %v4287, %v4287
  %v4584 = vmul.f32 %v4292, %v4292
  %v4585 = vmul.f32 %v4295, %v4295
  %v4586 = vmul.f32 %v4300, %v4300
  %v4587 = vmul.f32 %v4303, %v4303
  %v4588 = vmul.f32 %v4308, %v4308
  %v4589 = vmul.f32 %v4311, %v4311
  %v4590 = vmul.f32 %v4316, %v4316
  %v4591 = vmul.f32 %v4319, %v4319
  %v4592 = vmul.f32 %v4324, %v4324
  %v4593 = vmul.f32 %v4327, %v4327
  %v4594 = vmul.f32 %v4332, %v4332
  %v4595 = vmul.f32 %v4335, %v4335
  %v4596 = vmul.f32 %v4340, %v4340
  %v4597 = vmul.f32 %v4343, %v4343
  %v4598 = vmul.f32 %v4348, %v4348
  %v4599 = vmul.f32 %v4351, %v4351
  %v4600 = vmul.f32 %v4356, %v4356
  %v4601 = vmul.f32 %v4359, %v4359
  %v4602 = vmul.f32 %v4364, %v4364
  %v4603 = vmul.f32 %v4367, %v4367
  %v4604 = vmul.f32 %v4372, %v4372
  %v4605 = vmul.f32 %v4375, %v4375
  %v4606 = vmul.f32 %v4380, %v4380
  %v4607 = vmul.f32 %v4383, %v4383
  %v4608 = vmul.f32 %v4388, %v4388
  %v4609 = vmul.f32 %v4391, %v4391
  %v4610 = vmul.f32 %v4396, %v4396
  %v4611 = vmul.f32 %v4399, %v4399
  %v4612 = vmul.f32 %v4404, %v4404
  %v4613 = vmul.f32 %v4407, %v4407
  %v4614 = vmul.f32 %v4412, %v4412
  %v4615 = vmul.f32 %v4415, %v4415
  %v4616 = vsel %vm258, %v4552, 0.0
  %v4617 = vsel %vm258, %v4553, 0.0
  %v4618 = vadd.f32 %v4616, %v4617
  %v4619 = vsel %vm258, %v4554, 0.0
  %v4620 = vadd.f32 %v4618, %v4619
  %v4621 = vsel %vm258, %v4555, 0.0
  %v4622 = vadd.f32 %v4620, %v4621
  %v4623 = vsel %vm258, %v4556, 0.0
  %v4624 = vadd.f32 %v4622, %v4623
  %v4625 = vsel %vm258, %v4557, 0.0
  %v4626 = vadd.f32 %v4624, %v4625
  %v4627 = vsel %vm258, %v4558, 0.0
  %v4628 = vadd.f32 %v4626, %v4627
  %v4629 = vsel %vm258, %v4559, 0.0
  %v4630 = vadd.f32 %v4628, %v4629
  %v4631 = vsel %vm258, %v4560, 0.0
  %v4632 = vadd.f32 %v4630, %v4631
  %v4633 = vsel %vm258, %v4561, 0.0
  %v4634 = vadd.f32 %v4632, %v4633
  %v4635 = vsel %vm258, %v4562, 0.0
  %v4636 = vadd.f32 %v4634, %v4635
  %v4637 = vsel %vm258, %v4563, 0.0
  %v4638 = vadd.f32 %v4636, %v4637
  %v4639 = vsel %vm258, %v4564, 0.0
  %v4640 = vadd.f32 %v4638, %v4639
  %v4641 = vsel %vm258, %v4565, 0.0
  %v4642 = vadd.f32 %v4640, %v4641
  %v4643 = vsel %vm258, %v4566, 0.0
  %v4644 = vadd.f32 %v4642, %v4643
  %v4645 = vsel %vm258, %v4567, 0.0
  %v4646 = vadd.f32 %v4644, %v4645
  %v4647 = vsel %vm258, %v4568, 0.0
  %v4648 = vadd.f32 %v4646, %v4647
  %v4649 = vsel %vm258, %v4569, 0.0
  %v4650 = vadd.f32 %v4648, %v4649
  %v4651 = vsel %vm258, %v4570, 0.0
  %v4652 = vadd.f32 %v4650, %v4651
  %v4653 = vsel %vm258, %v4571, 0.0
  %v4654 = vadd.f32 %v4652, %v4653
  %v4655 = vsel %vm258, %v4572, 0.0
  %v4656 = vadd.f32 %v4654, %v4655
  %v4657 = vsel %vm258, %v4573, 0.0
  %v4658 = vadd.f32 %v4656, %v4657
  %v4659 = vsel %vm258, %v4574, 0.0
  %v4660 = vadd.f32 %v4658, %v4659
  %v4661 = vsel %vm258, %v4575, 0.0
  %v4662 = vadd.f32 %v4660, %v4661
  %v4663 = vsel %vm258, %v4576, 0.0
  %v4664 = vadd.f32 %v4662, %v4663
  %v4665 = vsel %vm258, %v4577, 0.0
  %v4666 = vadd.f32 %v4664, %v4665
  %v4667 = vsel %vm258, %v4578, 0.0
  %v4668 = vadd.f32 %v4666, %v4667
  %v4669 = vsel %vm258, %v4579, 0.0
  %v4670 = vadd.f32 %v4668, %v4669
  %v4671 = vsel %vm258, %v4580, 0.0
  %v4672 = vadd.f32 %v4670, %v4671
  %v4673 = vsel %vm258, %v4581, 0.0
  %v4674 = vadd.f32 %v4672, %v4673
  %v4675 = vsel %vm258, %v4582, 0.0
  %v4676 = vadd.f32 %v4674, %v4675
  %v4677 = vsel %vm258, %v4583, 0.0
  %v4678 = vadd.f32 %v4676, %v4677
  %v4679 = vsel %vm258, %v4584, 0.0
  %v4680 = vadd.f32 %v4678, %v4679
  %v4681 = vsel %vm258, %v4585, 0.0
  %v4682 = vadd.f32 %v4680, %v4681
  %v4683 = vsel %vm258, %v4586, 0.0
  %v4684 = vadd.f32 %v4682, %v4683
  %v4685 = vsel %vm258, %v4587, 0.0
  %v4686 = vadd.f32 %v4684, %v4685
  %v4687 = vsel %vm258, %v4588, 0.0
  %v4688 = vadd.f32 %v4686, %v4687
  %v4689 = vsel %vm258, %v4589, 0.0
  %v4690 = vadd.f32 %v4688, %v4689
  %v4691 = vsel %vm258, %v4590, 0.0
  %v4692 = vadd.f32 %v4690, %v4691
  %v4693 = vsel %vm258, %v4591, 0.0
  %v4694 = vadd.f32 %v4692, %v4693
  %v4695 = vsel %vm258, %v4592, 0.0
  %v4696 = vadd.f32 %v4694, %v4695
  %v4697 = vsel %vm258, %v4593, 0.0
  %v4698 = vadd.f32 %v4696, %v4697
  %v4699 = vsel %vm258, %v4594, 0.0
  %v4700 = vadd.f32 %v4698, %v4699
  %v4701 = vsel %vm258, %v4595, 0.0
  %v4702 = vadd.f32 %v4700, %v4701
  %v4703 = vsel %vm258, %v4596, 0.0
  %v4704 = vadd.f32 %v4702, %v4703
  %v4705 = vsel %vm258, %v4597, 0.0
  %v4706 = vadd.f32 %v4704, %v4705
  %v4707 = vsel %vm258, %v4598, 0.0
  %v4708 = vadd.f32 %v4706, %v4707
  %v4709 = vsel %vm258, %v4599, 0.0
  %v4710 = vadd.f32 %v4708, %v4709
  %v4711 = vsel %vm258, %v4600, 0.0
  %v4712 = vadd.f32 %v4710, %v4711
  %v4713 = vsel %vm258, %v4601, 0.0
  %v4714 = vadd.f32 %v4712, %v4713
  %v4715 = vsel %vm258, %v4602, 0.0
  %v4716 = vadd.f32 %v4714, %v4715
  %v4717 = vsel %vm258, %v4603, 0.0
  %v4718 = vadd.f32 %v4716, %v4717
  %v4719 = vsel %vm258, %v4604, 0.0
  %v4720 = vadd.f32 %v4718, %v4719
  %v4721 = vsel %vm258, %v4605, 0.0
  %v4722 = vadd.f32 %v4720, %v4721
  %v4723 = vsel %vm258, %v4606, 0.0
  %v4724 = vadd.f32 %v4722, %v4723
  %v4725 = vsel %vm258, %v4607, 0.0
  %v4726 = vadd.f32 %v4724, %v4725
  %v4727 = vsel %vm258, %v4608, 0.0
  %v4728 = vadd.f32 %v4726, %v4727
  %v4729 = vsel %vm258, %v4609, 0.0
  %v4730 = vadd.f32 %v4728, %v4729
  %v4731 = vsel %vm258, %v4610, 0.0
  %v4732 = vadd.f32 %v4730, %v4731
  %v4733 = vsel %vm258, %v4611, 0.0
  %v4734 = vadd.f32 %v4732, %v4733
  %v4735 = vsel %vm258, %v4612, 0.0
  %v4736 = vadd.f32 %v4734, %v4735
  %v4737 = vsel %vm258, %v4613, 0.0
  %v4738 = vadd.f32 %v4736, %v4737
  %v4739 = vsel %vm258, %v4614, 0.0
  %v4740 = vadd.f32 %v4738, %v4739
  %v4741 = vsel %vm258, %v4615, 0.0
  %v4742 = vadd.f32 %v4740, %v4741
  %v4743 = vrot.slane %v4742, 4
  %v4744 = vadd.f32 %v4742, %v4743
  %v4745 = vrot.slane %v4744, 2
  %v4746 = vadd.f32 %v4744, %v4745
  %v4747 = vrot.slane %v4746, 1
  %v4748 = vadd.f32 %v4746, %v4747
  %v4749 = vmul.f32 %v4551, 0.001953125
  %v4750 = vmul.f32 %v4748, 0.001953125
  %v4751 = vmul.f32 %v4749, %v4749
  %v4752 = vsub.f32 %v4750, %v4751
  %v4753 = vmax.f32 %v4752, 0.0
  %v4754 = vadd.f32 %v4753, 1e-05
  %v4755 = vrsqrt.pop %v4754
  %v4756 = vmul.f32 %v4418, %v4755
  %v4757 = vmul.f32 %v4756, %v4749
  %v4759 = vrot.slane %v4757, 7
  %v4761 = vsub.f32 %v4418, %v4759
  %v4762 = vlaneseq
  %v4763 = vshrl.u32 %v4762, 7
  %v4764 = vsub.s32 0, %v4763
  %v4765 = vrot.slane %v4756, %v4764
  %v4766 = vmul.f32 %v4164, %v4765
  %v4767 = vmul.f32 %v4167, %v4765
  %v4768 = vmul.f32 %v4172, %v4765
  %v4769 = vmul.f32 %v4175, %v4765
  %v4770 = vmul.f32 %v4180, %v4765
  %v4771 = vmul.f32 %v4183, %v4765
  %v4772 = vmul.f32 %v4188, %v4765
  %v4773 = vmul.f32 %v4191, %v4765
  %v4774 = vmul.f32 %v4196, %v4765
  %v4775 = vmul.f32 %v4199, %v4765
  %v4776 = vmul.f32 %v4204, %v4765
  %v4777 = vmul.f32 %v4207, %v4765
  %v4778 = vmul.f32 %v4212, %v4765
  %v4779 = vmul.f32 %v4215, %v4765
  %v4780 = vmul.f32 %v4220, %v4765
  %v4781 = vmul.f32 %v4223, %v4765
  %v4782 = vmul.f32 %v4228, %v4765
  %v4783 = vmul.f32 %v4231, %v4765
  %v4784 = vmul.f32 %v4236, %v4765
  %v4785 = vmul.f32 %v4239, %v4765
  %v4786 = vmul.f32 %v4244, %v4765
  %v4787 = vmul.f32 %v4247, %v4765
  %v4788 = vmul.f32 %v4252, %v4765
  %v4789 = vmul.f32 %v4255, %v4765
  %v4790 = vmul.f32 %v4260, %v4765
  %v4791 = vmul.f32 %v4263, %v4765
  %v4792 = vmul.f32 %v4268, %v4765
  %v4793 = vmul.f32 %v4271, %v4765
  %v4794 = vmul.f32 %v4276, %v4765
  %v4795 = vmul.f32 %v4279, %v4765
  %v4796 = vmul.f32 %v4284, %v4765
  %v4797 = vmul.f32 %v4287, %v4765
  %v4798 = vmul.f32 %v4292, %v4765
  %v4799 = vmul.f32 %v4295, %v4765
  %v4800 = vmul.f32 %v4300, %v4765
  %v4801 = vmul.f32 %v4303, %v4765
  %v4802 = vmul.f32 %v4308, %v4765
  %v4803 = vmul.f32 %v4311, %v4765
  %v4804 = vmul.f32 %v4316, %v4765
  %v4805 = vmul.f32 %v4319, %v4765
  %v4806 = vmul.f32 %v4324, %v4765
  %v4807 = vmul.f32 %v4327, %v4765
  %v4808 = vmul.f32 %v4332, %v4765
  %v4809 = vmul.f32 %v4335, %v4765
  %v4810 = vmul.f32 %v4340, %v4765
  %v4811 = vmul.f32 %v4343, %v4765
  %v4812 = vmul.f32 %v4348, %v4765
  %v4813 = vmul.f32 %v4351, %v4765
  %v4814 = vmul.f32 %v4356, %v4765
  %v4815 = vmul.f32 %v4359, %v4765
  %v4816 = vmul.f32 %v4364, %v4765
  %v4817 = vmul.f32 %v4367, %v4765
  %v4818 = vmul.f32 %v4372, %v4765
  %v4819 = vmul.f32 %v4375, %v4765
  %v4820 = vmul.f32 %v4380, %v4765
  %v4821 = vmul.f32 %v4383, %v4765
  %v4822 = vmul.f32 %v4388, %v4765
  %v4823 = vmul.f32 %v4391, %v4765
  %v4824 = vmul.f32 %v4396, %v4765
  %v4825 = vmul.f32 %v4399, %v4765
  %v4826 = vmul.f32 %v4404, %v4765
  %v4827 = vmul.f32 %v4407, %v4765
  %v4828 = vmul.f32 %v4412, %v4765
  %v4829 = vmul.f32 %v4415, %v4765
  %v4830 = vlaneseq
  %v4831 = vshrl.u32 %v4830, 7
  %v4832 = vsub.s32 1, %v4831
  %v4833 = vrot.slane %v4761, %v4832
  %v4834 = vadd.f32 %v4766, %v4833
  %v4835 = vadd.f32 %v4767, %v4833
  %v4836 = vadd.f32 %v4768, %v4833
  %v4837 = vadd.f32 %v4769, %v4833
  %v4838 = vadd.f32 %v4770, %v4833
  %v4839 = vadd.f32 %v4771, %v4833
  %v4840 = vadd.f32 %v4772, %v4833
  %v4841 = vadd.f32 %v4773, %v4833
  %v4842 = vadd.f32 %v4774, %v4833
  %v4843 = vadd.f32 %v4775, %v4833
  %v4844 = vadd.f32 %v4776, %v4833
  %v4845 = vadd.f32 %v4777, %v4833
  %v4846 = vadd.f32 %v4778, %v4833
  %v4847 = vadd.f32 %v4779, %v4833
  %v4848 = vadd.f32 %v4780, %v4833
  %v4849 = vadd.f32 %v4781, %v4833
  %v4850 = vadd.f32 %v4782, %v4833
  %v4851 = vadd.f32 %v4783, %v4833
  %v4852 = vadd.f32 %v4784, %v4833
  %v4853 = vadd.f32 %v4785, %v4833
  %v4854 = vadd.f32 %v4786, %v4833
  %v4855 = vadd.f32 %v4787, %v4833
  %v4856 = vadd.f32 %v4788, %v4833
  %v4857 = vadd.f32 %v4789, %v4833
  %v4858 = vadd.f32 %v4790, %v4833
  %v4859 = vadd.f32 %v4791, %v4833
  %v4860 = vadd.f32 %v4792, %v4833
  %v4861 = vadd.f32 %v4793, %v4833
  %v4862 = vadd.f32 %v4794, %v4833
  %v4863 = vadd.f32 %v4795, %v4833
  %v4864 = vadd.f32 %v4796, %v4833
  %v4865 = vadd.f32 %v4797, %v4833
  %v4866 = vadd.f32 %v4798, %v4833
  %v4867 = vadd.f32 %v4799, %v4833
  %v4868 = vadd.f32 %v4800, %v4833
  %v4869 = vadd.f32 %v4801, %v4833
  %v4870 = vadd.f32 %v4802, %v4833
  %v4871 = vadd.f32 %v4803, %v4833
  %v4872 = vadd.f32 %v4804, %v4833
  %v4873 = vadd.f32 %v4805, %v4833
  %v4874 = vadd.f32 %v4806, %v4833
  %v4875 = vadd.f32 %v4807, %v4833
  %v4876 = vadd.f32 %v4808, %v4833
  %v4877 = vadd.f32 %v4809, %v4833
  %v4878 = vadd.f32 %v4810, %v4833
  %v4879 = vadd.f32 %v4811, %v4833
  %v4880 = vadd.f32 %v4812, %v4833
  %v4881 = vadd.f32 %v4813, %v4833
  %v4882 = vadd.f32 %v4814, %v4833
  %v4883 = vadd.f32 %v4815, %v4833
  %v4884 = vadd.f32 %v4816, %v4833
  %v4885 = vadd.f32 %v4817, %v4833
  %v4886 = vadd.f32 %v4818, %v4833
  %v4887 = vadd.f32 %v4819, %v4833
  %v4888 = vadd.f32 %v4820, %v4833
  %v4889 = vadd.f32 %v4821, %v4833
  %v4890 = vadd.f32 %v4822, %v4833
  %v4891 = vadd.f32 %v4823, %v4833
  %v4892 = vadd.f32 %v4824, %v4833
  %v4893 = vadd.f32 %v4825, %v4833
  %v4894 = vadd.f32 %v4826, %v4833
  %v4895 = vadd.f32 %v4827, %v4833
  %v4896 = vadd.f32 %v4828, %v4833
  %v4897 = vadd.f32 %v4829, %v4833
  %v4898 = vmax.f32 %v4834, 0.0
  %v4899 = vmax.f32 %v4835, 0.0
  %v4900 = vmax.f32 %v4836, 0.0
  %v4901 = vmax.f32 %v4837, 0.0
  %v4902 = vmax.f32 %v4838, 0.0
  %v4903 = vmax.f32 %v4839, 0.0
  %v4904 = vmax.f32 %v4840, 0.0
  %v4905 = vmax.f32 %v4841, 0.0
  %v4906 = vmax.f32 %v4842, 0.0
  %v4907 = vmax.f32 %v4843, 0.0
  %v4908 = vmax.f32 %v4844, 0.0
  %v4909 = vmax.f32 %v4845, 0.0
  %v4910 = vmax.f32 %v4846, 0.0
  %v4911 = vmax.f32 %v4847, 0.0
  %v4912 = vmax.f32 %v4848, 0.0
  %v4913 = vmax.f32 %v4849, 0.0
  %v4914 = vmax.f32 %v4850, 0.0
  %v4915 = vmax.f32 %v4851, 0.0
  %v4916 = vmax.f32 %v4852, 0.0
  %v4917 = vmax.f32 %v4853, 0.0
  %v4918 = vmax.f32 %v4854, 0.0
  %v4919 = vmax.f32 %v4855, 0.0
  %v4920 = vmax.f32 %v4856, 0.0
  %v4921 = vmax.f32 %v4857, 0.0
  %v4922 = vmax.f32 %v4858, 0.0
  %v4923 = vmax.f32 %v4859, 0.0
  %v4924 = vmax.f32 %v4860, 0.0
  %v4925 = vmax.f32 %v4861, 0.0
  %v4926 = vmax.f32 %v4862, 0.0
  %v4927 = vmax.f32 %v4863, 0.0
  %v4928 = vmax.f32 %v4864, 0.0
  %v4929 = vmax.f32 %v4865, 0.0
  %v4930 = vmax.f32 %v4866, 0.0
  %v4931 = vmax.f32 %v4867, 0.0
  %v4932 = vmax.f32 %v4868, 0.0
  %v4933 = vmax.f32 %v4869, 0.0
  %v4934 = vmax.f32 %v4870, 0.0
  %v4935 = vmax.f32 %v4871, 0.0
  %v4936 = vmax.f32 %v4872, 0.0
  %v4937 = vmax.f32 %v4873, 0.0
  %v4938 = vmax.f32 %v4874, 0.0
  %v4939 = vmax.f32 %v4875, 0.0
  %v4940 = vmax.f32 %v4876, 0.0
  %v4941 = vmax.f32 %v4877, 0.0
  %v4942 = vmax.f32 %v4878, 0.0
  %v4943 = vmax.f32 %v4879, 0.0
  %v4944 = vmax.f32 %v4880, 0.0
  %v4945 = vmax.f32 %v4881, 0.0
  %v4946 = vmax.f32 %v4882, 0.0
  %v4947 = vmax.f32 %v4883, 0.0
  %v4948 = vmax.f32 %v4884, 0.0
  %v4949 = vmax.f32 %v4885, 0.0
  %v4950 = vmax.f32 %v4886, 0.0
  %v4951 = vmax.f32 %v4887, 0.0
  %v4952 = vmax.f32 %v4888, 0.0
  %v4953 = vmax.f32 %v4889, 0.0
  %v4954 = vmax.f32 %v4890, 0.0
  %v4955 = vmax.f32 %v4891, 0.0
  %v4956 = vmax.f32 %v4892, 0.0
  %v4957 = vmax.f32 %v4893, 0.0
  %v4958 = vmax.f32 %v4894, 0.0
  %v4959 = vmax.f32 %v4895, 0.0
  %v4960 = vmax.f32 %v4896, 0.0
  %v4961 = vmax.f32 %v4897, 0.0
  %v4962 = vpack.c.bf16 %v4899, %v4898
  %v4963 = vpack.c.bf16 %v4901, %v4900
  %v4964 = vpack.c.bf16 %v4903, %v4902
  %v4965 = vpack.c.bf16 %v4905, %v4904
  %v4966 = vpack.c.bf16 %v4907, %v4906
  %v4967 = vpack.c.bf16 %v4909, %v4908
  %v4968 = vpack.c.bf16 %v4911, %v4910
  %v4969 = vpack.c.bf16 %v4913, %v4912
  %v4970 = vpack.c.bf16 %v4915, %v4914
  %v4971 = vpack.c.bf16 %v4917, %v4916
  %v4972 = vpack.c.bf16 %v4919, %v4918
  %v4973 = vpack.c.bf16 %v4921, %v4920
  %v4974 = vpack.c.bf16 %v4923, %v4922
  %v4975 = vpack.c.bf16 %v4925, %v4924
  %v4976 = vpack.c.bf16 %v4927, %v4926
  %v4977 = vpack.c.bf16 %v4929, %v4928
  %v4978 = vpack.c.bf16 %v4931, %v4930
  %v4979 = vpack.c.bf16 %v4933, %v4932
  %v4980 = vpack.c.bf16 %v4935, %v4934
  %v4981 = vpack.c.bf16 %v4937, %v4936
  %v4982 = vpack.c.bf16 %v4939, %v4938
  %v4983 = vpack.c.bf16 %v4941, %v4940
  %v4984 = vpack.c.bf16 %v4943, %v4942
  %v4985 = vpack.c.bf16 %v4945, %v4944
  %v4986 = vpack.c.bf16 %v4947, %v4946
  %v4987 = vpack.c.bf16 %v4949, %v4948
  %v4988 = vpack.c.bf16 %v4951, %v4950
  %v4989 = vpack.c.bf16 %v4953, %v4952
  %v4990 = vpack.c.bf16 %v4955, %v4954
  %v4991 = vpack.c.bf16 %v4957, %v4956
  %v4992 = vpack.c.bf16 %v4959, %v4958
  %v4993 = vpack.c.bf16 %v4961, %v4960
  %v4994 = vld [vmem:[%s5] sm:$0x3]
  %v4996 = vsel %vm258, %v4962, 0
  %v4999 = vsel %vm258, %v4963, 0
  %v5002 = vsel %vm258, %v4964, 0
  %v5005 = vsel %vm258, %v4965, 0
  %v5008 = vsel %vm258, %v4966, 0
  %v5011 = vsel %vm258, %v4967, 0
  %v5014 = vsel %vm258, %v4968, 0
  %v5017 = vsel %vm258, %v4969, 0
  %v5020 = vsel %vm258, %v4970, 0
  %v5023 = vsel %vm258, %v4971, 0
  %v5026 = vsel %vm258, %v4972, 0
  %v5029 = vsel %vm258, %v4973, 0
  %v5032 = vsel %vm258, %v4974, 0
  %v5035 = vsel %vm258, %v4975, 0
  %v5038 = vsel %vm258, %v4976, 0
  %v5041 = vsel %vm258, %v4977, 0
  %v5044 = vsel %vm258, %v4978, 0
  %v5047 = vsel %vm258, %v4979, 0
  %v5050 = vsel %vm258, %v4980, 0
  %v5053 = vsel %vm258, %v4981, 0
  %v5056 = vsel %vm258, %v4982, 0
  %v5059 = vsel %vm258, %v4983, 0
  %v5062 = vsel %vm258, %v4984, 0
  %v5065 = vsel %vm258, %v4985, 0
  %v5068 = vsel %vm258, %v4986, 0
  %v5071 = vsel %vm258, %v4987, 0
  %v5074 = vsel %vm258, %v4988, 0
  %v5077 = vsel %vm258, %v4989, 0
  %v5080 = vsel %vm258, %v4990, 0
  %v5083 = vsel %vm258, %v4991, 0
  %v5086 = vsel %vm258, %v4992, 0
  %v5089 = vsel %vm258, %v4993, 0
  %v5092 = vsel %vm355, %v4994, 0
  %5094 = vmatprep.subr.bf16.mxu0 0
  %5095 = vmatpush1.bf16.msra.mxu0 %v5092
  %5096 = vmatprep.subr.bf16.mxu0 0
  %5097 = vmatpush1.bf16.msra.mxu0 0
  %5098 = vmatprep.subr.bf16.mxu0 0
  %5099 = vmatpush1.bf16.msra.mxu0 0
  %5100 = vmatprep.subr.bf16.mxu0 0
  %5101 = vmatpush1.bf16.msra.mxu0 0
  %5102 = vmatprep.subr.bf16.mxu0 0
  %5103 = vmatpush1.bf16.msra.mxu0 0
  %5104 = vmatprep.subr.bf16.mxu0 0
  %5105 = vmatpush1.bf16.msra.mxu0 0
  %5106 = vmatprep.subr.bf16.mxu0 0
  %5107 = vmatpush1.bf16.msra.mxu0 0
  %5108 = vmatprep.subr.bf16.mxu0 0
  %5109 = vmatpush1.bf16.msra.mxu0 0
  %5110 = vmatprep.subr.bf16.mxu0 0
  %5111 = vmatpush1.bf16.msra.mxu0 0
  %5112 = vmatprep.subr.bf16.mxu0 0
  %5113 = vmatpush1.bf16.msra.mxu0 0
  %5114 = vmatprep.subr.bf16.mxu0 0
  %5115 = vmatpush1.bf16.msra.mxu0 0
  %5116 = vmatprep.subr.bf16.mxu0 0
  %5117 = vmatpush1.bf16.msra.mxu0 0
  %5118 = vmatprep.subr.bf16.mxu0 0
  %5119 = vmatpush1.bf16.msra.mxu0 0
  %5120 = vmatprep.subr.bf16.mxu0 0
  %5121 = vmatpush1.bf16.msra.mxu0 0
  %5122 = vmatprep.subr.bf16.mxu0 0
  %5123 = vmatpush1.bf16.msra.mxu0 0
  %5124 = vmatprep.subr.bf16.mxu0 0
  %5125 = vmatpush1.bf16.msra.mxu0 0
  %5126 = vmatprep.mubr.bf16.mxu0 0
  %5127 = vmatmul.mubr.bf16.gmra.mrb[0].mxu0 %v4996
  %v5128 = vpop.f32.mrb[0].mxu0
  %v5129 = vadd.f32 0.0, %v5128
  %v5130 = vpop.f32.mrb[0].mxu0
  %v5131 = vpop.f32.mrb[0].mxu0
  %v5132 = vadd.f32 0.0, %v5131
  %v5133 = vpop.f32.mrb[0].mxu0
  %5134 = vmatprep.mubr.bf16.mxu0 0
  %5135 = vmatmul.mubr.bf16.gmra.mrb[0].mxu0 %v4999
  %v5136 = vpop.f32.mrb[0].mxu0
  %v5137 = vadd.f32 0.0, %v5136
  %v5138 = vpop.f32.mrb[0].mxu0
  %v5139 = vpop.f32.mrb[0].mxu0
  %v5140 = vadd.f32 0.0, %v5139
  %v5141 = vpop.f32.mrb[0].mxu0
  %5142 = vmatprep.mubr.bf16.mxu0 0
  %5143 = vmatmul.mubr.bf16.gmra.mrb[0].mxu0 %v5002
  %v5144 = vpop.f32.mrb[0].mxu0
  %v5145 = vadd.f32 0.0, %v5144
  %v5146 = vpop.f32.mrb[0].mxu0
  %v5147 = vpop.f32.mrb[0].mxu0
  %v5148 = vadd.f32 0.0, %v5147
  %v5149 = vpop.f32.mrb[0].mxu0
  %5150 = vmatprep.mubr.bf16.mxu0 0
  %5151 = vmatmul.mubr.bf16.gmra.mrb[0].mxu0 %v5005
  %v5152 = vpop.f32.mrb[0].mxu0
  %v5153 = vadd.f32 0.0, %v5152
  %v5154 = vpop.f32.mrb[0].mxu0
  %v5155 = vpop.f32.mrb[0].mxu0
  %v5156 = vadd.f32 0.0, %v5155
  %v5157 = vpop.f32.mrb[0].mxu0
  %5158 = vmatprep.mubr.bf16.mxu0 0
  %5159 = vmatmul.mubr.bf16.gmra.mrb[0].mxu0 %v5008
  %v5160 = vpop.f32.mrb[0].mxu0
  %v5161 = vadd.f32 0.0, %v5160
  %v5162 = vpop.f32.mrb[0].mxu0
  %v5163 = vpop.f32.mrb[0].mxu0
  %v5164 = vadd.f32 0.0, %v5163
  %v5165 = vpop.f32.mrb[0].mxu0
  %5166 = vmatprep.mubr.bf16.mxu0 0
  %5167 = vmatmul.mubr.bf16.gmra.mrb[0].mxu0 %v5011
  %v5168 = vpop.f32.mrb[0].mxu0
  %v5169 = vadd.f32 0.0, %v5168
  %v5170 = vpop.f32.mrb[0].mxu0
  %v5171 = vpop.f32.mrb[0].mxu0
  %v5172 = vadd.f32 0.0, %v5171
  %v5173 = vpop.f32.mrb[0].mxu0
  %5174 = vmatprep.mubr.bf16.mxu0 0
  %5175 = vmatmul.mubr.bf16.gmra.mrb[0].mxu0 %v5014
  %v5176 = vpop.f32.mrb[0].mxu0
  %v5177 = vadd.f32 0.0, %v5176
  %v5178 = vpop.f32.mrb[0].mxu0
  %v5179 = vpop.f32.mrb[0].mxu0
  %v5180 = vadd.f32 0.0, %v5179
  %v5181 = vpop.f32.mrb[0].mxu0
  %5182 = vmatprep.mubr.bf16.mxu0 0
  %5183 = vmatmul.mubr.bf16.gmra.mrb[0].mxu0 %v5017
  %v5184 = vpop.f32.mrb[0].mxu0
  %v5185 = vadd.f32 0.0, %v5184
  %v5186 = vpop.f32.mrb[0].mxu0
  %v5187 = vpop.f32.mrb[0].mxu0
  %v5188 = vadd.f32 0.0, %v5187
  %v5189 = vpop.f32.mrb[0].mxu0
  %5190 = vmatprep.mubr.bf16.mxu0 0
  %5191 = vmatmul.mubr.bf16.gmra.mrb[0].mxu0 %v5020
  %v5192 = vpop.f32.mrb[0].mxu0
  %v5193 = vadd.f32 0.0, %v5192
  %v5194 = vpop.f32.mrb[0].mxu0
  %v5195 = vpop.f32.mrb[0].mxu0
  %v5196 = vadd.f32 0.0, %v5195
  %v5197 = vpop.f32.mrb[0].mxu0
  %5198 = vmatprep.mubr.bf16.mxu0 0
  %5199 = vmatmul.mubr.bf16.gmra.mrb[0].mxu0 %v5023
  %v5200 = vpop.f32.mrb[0].mxu0
  %v5201 = vadd.f32 0.0, %v5200
  %v5202 = vpop.f32.mrb[0].mxu0
  %v5203 = vpop.f32.mrb[0].mxu0
  %v5204 = vadd.f32 0.0, %v5203
  %v5205 = vpop.f32.mrb[0].mxu0
  %5206 = vmatprep.mubr.bf16.mxu0 0
  %5207 = vmatmul.mubr.bf16.gmra.mrb[0].mxu0 %v5026
  %v5208 = vpop.f32.mrb[0].mxu0
  %v5209 = vadd.f32 0.0, %v5208
  %v5210 = vpop.f32.mrb[0].mxu0
  %v5211 = vpop.f32.mrb[0].mxu0
  %v5212 = vadd.f32 0.0, %v5211
  %v5213 = vpop.f32.mrb[0].mxu0
  %5214 = vmatprep.mubr.bf16.mxu0 0
  %5215 = vmatmul.mubr.bf16.gmra.mrb[0].mxu0 %v5029
  %v5216 = vpop.f32.mrb[0].mxu0
  %v5217 = vadd.f32 0.0, %v5216
  %v5218 = vpop.f32.mrb[0].mxu0
  %v5219 = vpop.f32.mrb[0].mxu0
  %v5220 = vadd.f32 0.0, %v5219
  %v5221 = vpop.f32.mrb[0].mxu0
  %5222 = vmatprep.mubr.bf16.mxu0 0
  %5223 = vmatmul.mubr.bf16.gmra.mrb[0].mxu0 %v5032
  %v5224 = vpop.f32.mrb[0].mxu0
  %v5225 = vadd.f32 0.0, %v5224
  %v5226 = vpop.f32.mrb[0].mxu0
  %v5227 = vpop.f32.mrb[0].mxu0
  %v5228 = vadd.f32 0.0, %v5227
  %v5229 = vpop.f32.mrb[0].mxu0
  %5230 = vmatprep.mubr.bf16.mxu0 0
  %5231 = vmatmul.mubr.bf16.gmra.mrb[0].mxu0 %v5035
  %v5232 = vpop.f32.mrb[0].mxu0
  %v5233 = vadd.f32 0.0, %v5232
  %v5234 = vpop.f32.mrb[0].mxu0
  %v5235 = vpop.f32.mrb[0].mxu0
  %v5236 = vadd.f32 0.0, %v5235
  %v5237 = vpop.f32.mrb[0].mxu0
  %5238 = vmatprep.mubr.bf16.mxu0 0
  %5239 = vmatmul.mubr.bf16.gmra.mrb[0].mxu0 %v5038
  %v5240 = vpop.f32.mrb[0].mxu0
  %v5241 = vadd.f32 0.0, %v5240
  %v5242 = vpop.f32.mrb[0].mxu0
  %v5243 = vpop.f32.mrb[0].mxu0
  %v5244 = vadd.f32 0.0, %v5243
  %v5245 = vpop.f32.mrb[0].mxu0
  %5246 = vmatprep.mubr.bf16.mxu0 0
  %5247 = vmatmul.mubr.bf16.gmra.mrb[0].mxu0 %v5041
  %v5248 = vpop.f32.mrb[0].mxu0
  %v5249 = vadd.f32 0.0, %v5248
  %v5250 = vpop.f32.mrb[0].mxu0
  %v5251 = vpop.f32.mrb[0].mxu0
  %v5252 = vadd.f32 0.0, %v5251
  %v5253 = vpop.f32.mrb[0].mxu0
  %5254 = vmatprep.mubr.bf16.mxu0 0
  %5255 = vmatmul.mubr.bf16.gmra.mrb[0].mxu0 %v5044
  %v5256 = vpop.f32.mrb[0].mxu0
  %v5257 = vadd.f32 0.0, %v5256
  %v5258 = vpop.f32.mrb[0].mxu0
  %v5259 = vpop.f32.mrb[0].mxu0
  %v5260 = vadd.f32 0.0, %v5259
  %v5261 = vpop.f32.mrb[0].mxu0
  %5262 = vmatprep.mubr.bf16.mxu0 0
  %5263 = vmatmul.mubr.bf16.gmra.mrb[0].mxu0 %v5047
  %v5264 = vpop.f32.mrb[0].mxu0
  %v5265 = vadd.f32 0.0, %v5264
  %v5266 = vpop.f32.mrb[0].mxu0
  %v5267 = vpop.f32.mrb[0].mxu0
  %v5268 = vadd.f32 0.0, %v5267
  %v5269 = vpop.f32.mrb[0].mxu0
  %5270 = vmatprep.mubr.bf16.mxu0 0
  %5271 = vmatmul.mubr.bf16.gmra.mrb[0].mxu0 %v5050
  %v5272 = vpop.f32.mrb[0].mxu0
  %v5273 = vadd.f32 0.0, %v5272
  %v5274 = vpop.f32.mrb[0].mxu0
  %v5275 = vpop.f32.mrb[0].mxu0
  %v5276 = vadd.f32 0.0, %v5275
  %v5277 = vpop.f32.mrb[0].mxu0
  %5278 = vmatprep.mubr.bf16.mxu0 0
  %5279 = vmatmul.mubr.bf16.gmra.mrb[0].mxu0 %v5053
  %v5280 = vpop.f32.mrb[0].mxu0
  %v5281 = vadd.f32 0.0, %v5280
  %v5282 = vpop.f32.mrb[0].mxu0
  %v5283 = vpop.f32.mrb[0].mxu0
  %v5284 = vadd.f32 0.0, %v5283
  %v5285 = vpop.f32.mrb[0].mxu0
  %5286 = vmatprep.mubr.bf16.mxu0 0
  %5287 = vmatmul.mubr.bf16.gmra.mrb[0].mxu0 %v5056
  %v5288 = vpop.f32.mrb[0].mxu0
  %v5289 = vadd.f32 0.0, %v5288
  %v5290 = vpop.f32.mrb[0].mxu0
  %v5291 = vpop.f32.mrb[0].mxu0
  %v5292 = vadd.f32 0.0, %v5291
  %v5293 = vpop.f32.mrb[0].mxu0
  %5294 = vmatprep.mubr.bf16.mxu0 0
  %5295 = vmatmul.mubr.bf16.gmra.mrb[0].mxu0 %v5059
  %v5296 = vpop.f32.mrb[0].mxu0
  %v5297 = vadd.f32 0.0, %v5296
  %v5298 = vpop.f32.mrb[0].mxu0
  %v5299 = vpop.f32.mrb[0].mxu0
  %v5300 = vadd.f32 0.0, %v5299
  %v5301 = vpop.f32.mrb[0].mxu0
  %5302 = vmatprep.mubr.bf16.mxu0 0
  %5303 = vmatmul.mubr.bf16.gmra.mrb[0].mxu0 %v5062
  %v5304 = vpop.f32.mrb[0].mxu0
  %v5305 = vadd.f32 0.0, %v5304
  %v5306 = vpop.f32.mrb[0].mxu0
  %v5307 = vpop.f32.mrb[0].mxu0
  %v5308 = vadd.f32 0.0, %v5307
  %v5309 = vpop.f32.mrb[0].mxu0
  %5310 = vmatprep.mubr.bf16.mxu0 0
  %5311 = vmatmul.mubr.bf16.gmra.mrb[0].mxu0 %v5065
  %v5312 = vpop.f32.mrb[0].mxu0
  %v5313 = vadd.f32 0.0, %v5312
  %v5314 = vpop.f32.mrb[0].mxu0
  %v5315 = vpop.f32.mrb[0].mxu0
  %v5316 = vadd.f32 0.0, %v5315
  %v5317 = vpop.f32.mrb[0].mxu0
  %5318 = vmatprep.mubr.bf16.mxu0 0
  %5319 = vmatmul.mubr.bf16.gmra.mrb[0].mxu0 %v5068
  %v5320 = vpop.f32.mrb[0].mxu0
  %v5321 = vadd.f32 0.0, %v5320
  %v5322 = vpop.f32.mrb[0].mxu0
  %v5323 = vpop.f32.mrb[0].mxu0
  %v5324 = vadd.f32 0.0, %v5323
  %v5325 = vpop.f32.mrb[0].mxu0
  %5326 = vmatprep.mubr.bf16.mxu0 0
  %5327 = vmatmul.mubr.bf16.gmra.mrb[0].mxu0 %v5071
  %v5328 = vpop.f32.mrb[0].mxu0
  %v5329 = vadd.f32 0.0, %v5328
  %v5330 = vpop.f32.mrb[0].mxu0
  %v5331 = vpop.f32.mrb[0].mxu0
  %v5332 = vadd.f32 0.0, %v5331
  %v5333 = vpop.f32.mrb[0].mxu0
  %5334 = vmatprep.mubr.bf16.mxu0 0
  %5335 = vmatmul.mubr.bf16.gmra.mrb[0].mxu0 %v5074
  %v5336 = vpop.f32.mrb[0].mxu0
  %v5337 = vadd.f32 0.0, %v5336
  %v5338 = vpop.f32.mrb[0].mxu0
  %v5339 = vpop.f32.mrb[0].mxu0
  %v5340 = vadd.f32 0.0, %v5339
  %v5341 = vpop.f32.mrb[0].mxu0
  %5342 = vmatprep.mubr.bf16.mxu0 0
  %5343 = vmatmul.mubr.bf16.gmra.mrb[0].mxu0 %v5077
  %v5344 = vpop.f32.mrb[0].mxu0
  %v5345 = vadd.f32 0.0, %v5344
  %v5346 = vpop.f32.mrb[0].mxu0
  %v5347 = vpop.f32.mrb[0].mxu0
  %v5348 = vadd.f32 0.0, %v5347
  %v5349 = vpop.f32.mrb[0].mxu0
  %5350 = vmatprep.mubr.bf16.mxu0 0
  %5351 = vmatmul.mubr.bf16.gmra.mrb[0].mxu0 %v5080
  %v5352 = vpop.f32.mrb[0].mxu0
  %v5353 = vadd.f32 0.0, %v5352
  %v5354 = vpop.f32.mrb[0].mxu0
  %v5355 = vpop.f32.mrb[0].mxu0
  %v5356 = vadd.f32 0.0, %v5355
  %v5357 = vpop.f32.mrb[0].mxu0
  %5358 = vmatprep.mubr.bf16.mxu0 0
  %5359 = vmatmul.mubr.bf16.gmra.mrb[0].mxu0 %v5083
  %v5360 = vpop.f32.mrb[0].mxu0
  %v5361 = vadd.f32 0.0, %v5360
  %v5362 = vpop.f32.mrb[0].mxu0
  %v5363 = vpop.f32.mrb[0].mxu0
  %v5364 = vadd.f32 0.0, %v5363
  %v5365 = vpop.f32.mrb[0].mxu0
  %5366 = vmatprep.mubr.bf16.mxu0 0
  %5367 = vmatmul.mubr.bf16.gmra.mrb[0].mxu0 %v5086
  %v5368 = vpop.f32.mrb[0].mxu0
  %v5369 = vadd.f32 0.0, %v5368
  %v5370 = vpop.f32.mrb[0].mxu0
  %v5371 = vpop.f32.mrb[0].mxu0
  %v5372 = vadd.f32 0.0, %v5371
  %v5373 = vpop.f32.mrb[0].mxu0
  %5374 = vmatprep.mubr.bf16.mxu0 0
  %5375 = vmatmul.mubr.bf16.gmra.mrb[0].mxu0 %v5089
  %v5376 = vpop.f32.mrb[0].mxu0
  %v5377 = vadd.f32 0.0, %v5376
  %v5378 = vpop.f32.mrb[0].mxu0
  %v5379 = vpop.f32.mrb[0].mxu0
  %v5380 = vadd.f32 0.0, %v5379
  %v5381 = vpop.f32.mrb[0].mxu0
  %5382 = vdwg.mxu0
  %v5383 = vld [vmem:[%s6] sm:$0x3]
  %v5384 = vsel %vm3522, %v5129, 0.0
  %v5385 = vsel %vm3522, %v5132, 0.0
  %v5386 = vadd.f32 %v5384, %v5385
  %v5387 = vsel %vm3522, %v5137, 0.0
  %v5388 = vadd.f32 %v5386, %v5387
  %v5389 = vsel %vm3522, %v5140, 0.0
  %v5390 = vadd.f32 %v5388, %v5389
  %v5391 = vsel %vm3522, %v5145, 0.0
  %v5392 = vadd.f32 %v5390, %v5391
  %v5393 = vsel %vm3522, %v5148, 0.0
  %v5394 = vadd.f32 %v5392, %v5393
  %v5395 = vsel %vm3522, %v5153, 0.0
  %v5396 = vadd.f32 %v5394, %v5395
  %v5397 = vsel %vm3522, %v5156, 0.0
  %v5398 = vadd.f32 %v5396, %v5397
  %v5399 = vsel %vm3522, %v5161, 0.0
  %v5400 = vadd.f32 %v5398, %v5399
  %v5401 = vsel %vm3522, %v5164, 0.0
  %v5402 = vadd.f32 %v5400, %v5401
  %v5403 = vsel %vm3522, %v5169, 0.0
  %v5404 = vadd.f32 %v5402, %v5403
  %v5405 = vsel %vm3522, %v5172, 0.0
  %v5406 = vadd.f32 %v5404, %v5405
  %v5407 = vsel %vm3522, %v5177, 0.0
  %v5408 = vadd.f32 %v5406, %v5407
  %v5409 = vsel %vm3522, %v5180, 0.0
  %v5410 = vadd.f32 %v5408, %v5409
  %v5411 = vsel %vm3522, %v5185, 0.0
  %v5412 = vadd.f32 %v5410, %v5411
  %v5413 = vsel %vm3522, %v5188, 0.0
  %v5414 = vadd.f32 %v5412, %v5413
  %v5415 = vsel %vm3522, %v5193, 0.0
  %v5416 = vadd.f32 %v5414, %v5415
  %v5417 = vsel %vm3522, %v5196, 0.0
  %v5418 = vadd.f32 %v5416, %v5417
  %v5419 = vsel %vm3522, %v5201, 0.0
  %v5420 = vadd.f32 %v5418, %v5419
  %v5421 = vsel %vm3522, %v5204, 0.0
  %v5422 = vadd.f32 %v5420, %v5421
  %v5423 = vsel %vm3522, %v5209, 0.0
  %v5424 = vadd.f32 %v5422, %v5423
  %v5425 = vsel %vm3522, %v5212, 0.0
  %v5426 = vadd.f32 %v5424, %v5425
  %v5427 = vsel %vm3522, %v5217, 0.0
  %v5428 = vadd.f32 %v5426, %v5427
  %v5429 = vsel %vm3522, %v5220, 0.0
  %v5430 = vadd.f32 %v5428, %v5429
  %v5431 = vsel %vm3522, %v5225, 0.0
  %v5432 = vadd.f32 %v5430, %v5431
  %v5433 = vsel %vm3522, %v5228, 0.0
  %v5434 = vadd.f32 %v5432, %v5433
  %v5435 = vsel %vm3522, %v5233, 0.0
  %v5436 = vadd.f32 %v5434, %v5435
  %v5437 = vsel %vm3522, %v5236, 0.0
  %v5438 = vadd.f32 %v5436, %v5437
  %v5439 = vsel %vm3522, %v5241, 0.0
  %v5440 = vadd.f32 %v5438, %v5439
  %v5441 = vsel %vm3522, %v5244, 0.0
  %v5442 = vadd.f32 %v5440, %v5441
  %v5443 = vsel %vm3522, %v5249, 0.0
  %v5444 = vadd.f32 %v5442, %v5443
  %v5445 = vsel %vm3522, %v5252, 0.0
  %v5446 = vadd.f32 %v5444, %v5445
  %v5447 = vsel %vm3522, %v5257, 0.0
  %v5448 = vadd.f32 %v5446, %v5447
  %v5449 = vsel %vm3522, %v5260, 0.0
  %v5450 = vadd.f32 %v5448, %v5449
  %v5451 = vsel %vm3522, %v5265, 0.0
  %v5452 = vadd.f32 %v5450, %v5451
  %v5453 = vsel %vm3522, %v5268, 0.0
  %v5454 = vadd.f32 %v5452, %v5453
  %v5455 = vsel %vm3522, %v5273, 0.0
  %v5456 = vadd.f32 %v5454, %v5455
  %v5457 = vsel %vm3522, %v5276, 0.0
  %v5458 = vadd.f32 %v5456, %v5457
  %v5459 = vsel %vm3522, %v5281, 0.0
  %v5460 = vadd.f32 %v5458, %v5459
  %v5461 = vsel %vm3522, %v5284, 0.0
  %v5462 = vadd.f32 %v5460, %v5461
  %v5463 = vsel %vm3522, %v5289, 0.0
  %v5464 = vadd.f32 %v5462, %v5463
  %v5465 = vsel %vm3522, %v5292, 0.0
  %v5466 = vadd.f32 %v5464, %v5465
  %v5467 = vsel %vm3522, %v5297, 0.0
  %v5468 = vadd.f32 %v5466, %v5467
  %v5469 = vsel %vm3522, %v5300, 0.0
  %v5470 = vadd.f32 %v5468, %v5469
  %v5471 = vsel %vm3522, %v5305, 0.0
  %v5472 = vadd.f32 %v5470, %v5471
  %v5473 = vsel %vm3522, %v5308, 0.0
  %v5474 = vadd.f32 %v5472, %v5473
  %v5475 = vsel %vm3522, %v5313, 0.0
  %v5476 = vadd.f32 %v5474, %v5475
  %v5477 = vsel %vm3522, %v5316, 0.0
  %v5478 = vadd.f32 %v5476, %v5477
  %v5479 = vsel %vm3522, %v5321, 0.0
  %v5480 = vadd.f32 %v5478, %v5479
  %v5481 = vsel %vm3522, %v5324, 0.0
  %v5482 = vadd.f32 %v5480, %v5481
  %v5483 = vsel %vm3522, %v5329, 0.0
  %v5484 = vadd.f32 %v5482, %v5483
  %v5485 = vsel %vm3522, %v5332, 0.0
  %v5486 = vadd.f32 %v5484, %v5485
  %v5487 = vsel %vm3522, %v5337, 0.0
  %v5488 = vadd.f32 %v5486, %v5487
  %v5489 = vsel %vm3522, %v5340, 0.0
  %v5490 = vadd.f32 %v5488, %v5489
  %v5491 = vsel %vm3522, %v5345, 0.0
  %v5492 = vadd.f32 %v5490, %v5491
  %v5493 = vsel %vm3522, %v5348, 0.0
  %v5494 = vadd.f32 %v5492, %v5493
  %v5495 = vsel %vm3522, %v5353, 0.0
  %v5496 = vadd.f32 %v5494, %v5495
  %v5497 = vsel %vm3522, %v5356, 0.0
  %v5498 = vadd.f32 %v5496, %v5497
  %v5499 = vsel %vm3522, %v5361, 0.0
  %v5500 = vadd.f32 %v5498, %v5499
  %v5501 = vsel %vm3522, %v5364, 0.0
  %v5502 = vadd.f32 %v5500, %v5501
  %v5503 = vsel %vm3522, %v5369, 0.0
  %v5504 = vadd.f32 %v5502, %v5503
  %v5505 = vsel %vm3522, %v5372, 0.0
  %v5506 = vadd.f32 %v5504, %v5505
  %v5507 = vsel %vm3522, %v5377, 0.0
  %v5508 = vadd.f32 %v5506, %v5507
  %v5509 = vsel %vm3522, %v5380, 0.0
  %v5510 = vadd.f32 %v5508, %v5509
  %v5511 = vrot.slane %v5510, 4
  %v5512 = vadd.f32 %v5510, %v5511
  %v5513 = vrot.slane %v5512, 2
  %v5514 = vadd.f32 %v5512, %v5513
  %v5515 = vrot.slane %v5514, 1
  %v5516 = vadd.f32 %v5514, %v5515
  %v5517 = vmul.f32 %v5129, %v5129
  %v5518 = vmul.f32 %v5132, %v5132
  %v5519 = vmul.f32 %v5137, %v5137
  %v5520 = vmul.f32 %v5140, %v5140
  %v5521 = vmul.f32 %v5145, %v5145
  %v5522 = vmul.f32 %v5148, %v5148
  %v5523 = vmul.f32 %v5153, %v5153
  %v5524 = vmul.f32 %v5156, %v5156
  %v5525 = vmul.f32 %v5161, %v5161
  %v5526 = vmul.f32 %v5164, %v5164
  %v5527 = vmul.f32 %v5169, %v5169
  %v5528 = vmul.f32 %v5172, %v5172
  %v5529 = vmul.f32 %v5177, %v5177
  %v5530 = vmul.f32 %v5180, %v5180
  %v5531 = vmul.f32 %v5185, %v5185
  %v5532 = vmul.f32 %v5188, %v5188
  %v5533 = vmul.f32 %v5193, %v5193
  %v5534 = vmul.f32 %v5196, %v5196
  %v5535 = vmul.f32 %v5201, %v5201
  %v5536 = vmul.f32 %v5204, %v5204
  %v5537 = vmul.f32 %v5209, %v5209
  %v5538 = vmul.f32 %v5212, %v5212
  %v5539 = vmul.f32 %v5217, %v5217
  %v5540 = vmul.f32 %v5220, %v5220
  %v5541 = vmul.f32 %v5225, %v5225
  %v5542 = vmul.f32 %v5228, %v5228
  %v5543 = vmul.f32 %v5233, %v5233
  %v5544 = vmul.f32 %v5236, %v5236
  %v5545 = vmul.f32 %v5241, %v5241
  %v5546 = vmul.f32 %v5244, %v5244
  %v5547 = vmul.f32 %v5249, %v5249
  %v5548 = vmul.f32 %v5252, %v5252
  %v5549 = vmul.f32 %v5257, %v5257
  %v5550 = vmul.f32 %v5260, %v5260
  %v5551 = vmul.f32 %v5265, %v5265
  %v5552 = vmul.f32 %v5268, %v5268
  %v5553 = vmul.f32 %v5273, %v5273
  %v5554 = vmul.f32 %v5276, %v5276
  %v5555 = vmul.f32 %v5281, %v5281
  %v5556 = vmul.f32 %v5284, %v5284
  %v5557 = vmul.f32 %v5289, %v5289
  %v5558 = vmul.f32 %v5292, %v5292
  %v5559 = vmul.f32 %v5297, %v5297
  %v5560 = vmul.f32 %v5300, %v5300
  %v5561 = vmul.f32 %v5305, %v5305
  %v5562 = vmul.f32 %v5308, %v5308
  %v5563 = vmul.f32 %v5313, %v5313
  %v5564 = vmul.f32 %v5316, %v5316
  %v5565 = vmul.f32 %v5321, %v5321
  %v5566 = vmul.f32 %v5324, %v5324
  %v5567 = vmul.f32 %v5329, %v5329
  %v5568 = vmul.f32 %v5332, %v5332
  %v5569 = vmul.f32 %v5337, %v5337
  %v5570 = vmul.f32 %v5340, %v5340
  %v5571 = vmul.f32 %v5345, %v5345
  %v5572 = vmul.f32 %v5348, %v5348
  %v5573 = vmul.f32 %v5353, %v5353
  %v5574 = vmul.f32 %v5356, %v5356
  %v5575 = vmul.f32 %v5361, %v5361
  %v5576 = vmul.f32 %v5364, %v5364
  %v5577 = vmul.f32 %v5369, %v5369
  %v5578 = vmul.f32 %v5372, %v5372
  %v5579 = vmul.f32 %v5377, %v5377
  %v5580 = vmul.f32 %v5380, %v5380
  %v5581 = vsel %vm3522, %v5517, 0.0
  %v5582 = vsel %vm3522, %v5518, 0.0
  %v5583 = vadd.f32 %v5581, %v5582
  %v5584 = vsel %vm3522, %v5519, 0.0
  %v5585 = vadd.f32 %v5583, %v5584
  %v5586 = vsel %vm3522, %v5520, 0.0
  %v5587 = vadd.f32 %v5585, %v5586
  %v5588 = vsel %vm3522, %v5521, 0.0
  %v5589 = vadd.f32 %v5587, %v5588
  %v5590 = vsel %vm3522, %v5522, 0.0
  %v5591 = vadd.f32 %v5589, %v5590
  %v5592 = vsel %vm3522, %v5523, 0.0
  %v5593 = vadd.f32 %v5591, %v5592
  %v5594 = vsel %vm3522, %v5524, 0.0
  %v5595 = vadd.f32 %v5593, %v5594
  %v5596 = vsel %vm3522, %v5525, 0.0
  %v5597 = vadd.f32 %v5595, %v5596
  %v5598 = vsel %vm3522, %v5526, 0.0
  %v5599 = vadd.f32 %v5597, %v5598
  %v5600 = vsel %vm3522, %v5527, 0.0
  %v5601 = vadd.f32 %v5599, %v5600
  %v5602 = vsel %vm3522, %v5528, 0.0
  %v5603 = vadd.f32 %v5601, %v5602
  %v5604 = vsel %vm3522, %v5529, 0.0
  %v5605 = vadd.f32 %v5603, %v5604
  %v5606 = vsel %vm3522, %v5530, 0.0
  %v5607 = vadd.f32 %v5605, %v5606
  %v5608 = vsel %vm3522, %v5531, 0.0
  %v5609 = vadd.f32 %v5607, %v5608
  %v5610 = vsel %vm3522, %v5532, 0.0
  %v5611 = vadd.f32 %v5609, %v5610
  %v5612 = vsel %vm3522, %v5533, 0.0
  %v5613 = vadd.f32 %v5611, %v5612
  %v5614 = vsel %vm3522, %v5534, 0.0
  %v5615 = vadd.f32 %v5613, %v5614
  %v5616 = vsel %vm3522, %v5535, 0.0
  %v5617 = vadd.f32 %v5615, %v5616
  %v5618 = vsel %vm3522, %v5536, 0.0
  %v5619 = vadd.f32 %v5617, %v5618
  %v5620 = vsel %vm3522, %v5537, 0.0
  %v5621 = vadd.f32 %v5619, %v5620
  %v5622 = vsel %vm3522, %v5538, 0.0
  %v5623 = vadd.f32 %v5621, %v5622
  %v5624 = vsel %vm3522, %v5539, 0.0
  %v5625 = vadd.f32 %v5623, %v5624
  %v5626 = vsel %vm3522, %v5540, 0.0
  %v5627 = vadd.f32 %v5625, %v5626
  %v5628 = vsel %vm3522, %v5541, 0.0
  %v5629 = vadd.f32 %v5627, %v5628
  %v5630 = vsel %vm3522, %v5542, 0.0
  %v5631 = vadd.f32 %v5629, %v5630
  %v5632 = vsel %vm3522, %v5543, 0.0
  %v5633 = vadd.f32 %v5631, %v5632
  %v5634 = vsel %vm3522, %v5544, 0.0
  %v5635 = vadd.f32 %v5633, %v5634
  %v5636 = vsel %vm3522, %v5545, 0.0
  %v5637 = vadd.f32 %v5635, %v5636
  %v5638 = vsel %vm3522, %v5546, 0.0
  %v5639 = vadd.f32 %v5637, %v5638
  %v5640 = vsel %vm3522, %v5547, 0.0
  %v5641 = vadd.f32 %v5639, %v5640
  %v5642 = vsel %vm3522, %v5548, 0.0
  %v5643 = vadd.f32 %v5641, %v5642
  %v5644 = vsel %vm3522, %v5549, 0.0
  %v5645 = vadd.f32 %v5643, %v5644
  %v5646 = vsel %vm3522, %v5550, 0.0
  %v5647 = vadd.f32 %v5645, %v5646
  %v5648 = vsel %vm3522, %v5551, 0.0
  %v5649 = vadd.f32 %v5647, %v5648
  %v5650 = vsel %vm3522, %v5552, 0.0
  %v5651 = vadd.f32 %v5649, %v5650
  %v5652 = vsel %vm3522, %v5553, 0.0
  %v5653 = vadd.f32 %v5651, %v5652
  %v5654 = vsel %vm3522, %v5554, 0.0
  %v5655 = vadd.f32 %v5653, %v5654
  %v5656 = vsel %vm3522, %v5555, 0.0
  %v5657 = vadd.f32 %v5655, %v5656
  %v5658 = vsel %vm3522, %v5556, 0.0
  %v5659 = vadd.f32 %v5657, %v5658
  %v5660 = vsel %vm3522, %v5557, 0.0
  %v5661 = vadd.f32 %v5659, %v5660
  %v5662 = vsel %vm3522, %v5558, 0.0
  %v5663 = vadd.f32 %v5661, %v5662
  %v5664 = vsel %vm3522, %v5559, 0.0
  %v5665 = vadd.f32 %v5663, %v5664
  %v5666 = vsel %vm3522, %v5560, 0.0
  %v5667 = vadd.f32 %v5665, %v5666
  %v5668 = vsel %vm3522, %v5561, 0.0
  %v5669 = vadd.f32 %v5667, %v5668
  %v5670 = vsel %vm3522, %v5562, 0.0
  %v5671 = vadd.f32 %v5669, %v5670
  %v5672 = vsel %vm3522, %v5563, 0.0
  %v5673 = vadd.f32 %v5671, %v5672
  %v5674 = vsel %vm3522, %v5564, 0.0
  %v5675 = vadd.f32 %v5673, %v5674
  %v5676 = vsel %vm3522, %v5565, 0.0
  %v5677 = vadd.f32 %v5675, %v5676
  %v5678 = vsel %vm3522, %v5566, 0.0
  %v5679 = vadd.f32 %v5677, %v5678
  %v5680 = vsel %vm3522, %v5567, 0.0
  %v5681 = vadd.f32 %v5679, %v5680
  %v5682 = vsel %vm3522, %v5568, 0.0
  %v5683 = vadd.f32 %v5681, %v5682
  %v5684 = vsel %vm3522, %v5569, 0.0
  %v5685 = vadd.f32 %v5683, %v5684
  %v5686 = vsel %vm3522, %v5570, 0.0
  %v5687 = vadd.f32 %v5685, %v5686
  %v5688 = vsel %vm3522, %v5571, 0.0
  %v5689 = vadd.f32 %v5687, %v5688
  %v5690 = vsel %vm3522, %v5572, 0.0
  %v5691 = vadd.f32 %v5689, %v5690
  %v5692 = vsel %vm3522, %v5573, 0.0
  %v5693 = vadd.f32 %v5691, %v5692
  %v5694 = vsel %vm3522, %v5574, 0.0
  %v5695 = vadd.f32 %v5693, %v5694
  %v5696 = vsel %vm3522, %v5575, 0.0
  %v5697 = vadd.f32 %v5695, %v5696
  %v5698 = vsel %vm3522, %v5576, 0.0
  %v5699 = vadd.f32 %v5697, %v5698
  %v5700 = vsel %vm3522, %v5577, 0.0
  %v5701 = vadd.f32 %v5699, %v5700
  %v5702 = vsel %vm3522, %v5578, 0.0
  %v5703 = vadd.f32 %v5701, %v5702
  %v5704 = vsel %vm3522, %v5579, 0.0
  %v5705 = vadd.f32 %v5703, %v5704
  %v5706 = vsel %vm3522, %v5580, 0.0
  %v5707 = vadd.f32 %v5705, %v5706
  %v5708 = vrot.slane %v5707, 4
  %v5709 = vadd.f32 %v5707, %v5708
  %v5710 = vrot.slane %v5709, 2
  %v5711 = vadd.f32 %v5709, %v5710
  %v5712 = vrot.slane %v5711, 1
  %v5713 = vadd.f32 %v5711, %v5712
  %v5714 = vmul.f32 %v5516, 0.001953125
  %v5715 = vmul.f32 %v5713, 0.001953125
  %v5716 = vmul.f32 %v5714, %v5714
  %v5717 = vsub.f32 %v5715, %v5716
  %v5718 = vmax.f32 %v5717, 0.0
  %v5719 = vadd.f32 %v5718, 1e-05
  %v5720 = vrsqrt.pop %v5719
  %v5721 = vmul.f32 %v5383, %v5720
  %v5722 = vmul.f32 %v5721, %v5714
  %v5724 = vrot.slane %v5722, 7
  %v5726 = vsub.f32 %v5383, %v5724
  %v5727 = vlaneseq
  %v5728 = vshrl.u32 %v5727, 7
  %v5729 = vsub.s32 0, %v5728
  %v5730 = vrot.slane %v5721, %v5729
  %v5731 = vmul.f32 %v5129, %v5730
  %v5732 = vmul.f32 %v5132, %v5730
  %v5733 = vmul.f32 %v5137, %v5730
  %v5734 = vmul.f32 %v5140, %v5730
  %v5735 = vmul.f32 %v5145, %v5730
  %v5736 = vmul.f32 %v5148, %v5730
  %v5737 = vmul.f32 %v5153, %v5730
  %v5738 = vmul.f32 %v5156, %v5730
  %v5739 = vmul.f32 %v5161, %v5730
  %v5740 = vmul.f32 %v5164, %v5730
  %v5741 = vmul.f32 %v5169, %v5730
  %v5742 = vmul.f32 %v5172, %v5730
  %v5743 = vmul.f32 %v5177, %v5730
  %v5744 = vmul.f32 %v5180, %v5730
  %v5745 = vmul.f32 %v5185, %v5730
  %v5746 = vmul.f32 %v5188, %v5730
  %v5747 = vmul.f32 %v5193, %v5730
  %v5748 = vmul.f32 %v5196, %v5730
  %v5749 = vmul.f32 %v5201, %v5730
  %v5750 = vmul.f32 %v5204, %v5730
  %v5751 = vmul.f32 %v5209, %v5730
  %v5752 = vmul.f32 %v5212, %v5730
  %v5753 = vmul.f32 %v5217, %v5730
  %v5754 = vmul.f32 %v5220, %v5730
  %v5755 = vmul.f32 %v5225, %v5730
  %v5756 = vmul.f32 %v5228, %v5730
  %v5757 = vmul.f32 %v5233, %v5730
  %v5758 = vmul.f32 %v5236, %v5730
  %v5759 = vmul.f32 %v5241, %v5730
  %v5760 = vmul.f32 %v5244, %v5730
  %v5761 = vmul.f32 %v5249, %v5730
  %v5762 = vmul.f32 %v5252, %v5730
  %v5763 = vmul.f32 %v5257, %v5730
  %v5764 = vmul.f32 %v5260, %v5730
  %v5765 = vmul.f32 %v5265, %v5730
  %v5766 = vmul.f32 %v5268, %v5730
  %v5767 = vmul.f32 %v5273, %v5730
  %v5768 = vmul.f32 %v5276, %v5730
  %v5769 = vmul.f32 %v5281, %v5730
  %v5770 = vmul.f32 %v5284, %v5730
  %v5771 = vmul.f32 %v5289, %v5730
  %v5772 = vmul.f32 %v5292, %v5730
  %v5773 = vmul.f32 %v5297, %v5730
  %v5774 = vmul.f32 %v5300, %v5730
  %v5775 = vmul.f32 %v5305, %v5730
  %v5776 = vmul.f32 %v5308, %v5730
  %v5777 = vmul.f32 %v5313, %v5730
  %v5778 = vmul.f32 %v5316, %v5730
  %v5779 = vmul.f32 %v5321, %v5730
  %v5780 = vmul.f32 %v5324, %v5730
  %v5781 = vmul.f32 %v5329, %v5730
  %v5782 = vmul.f32 %v5332, %v5730
  %v5783 = vmul.f32 %v5337, %v5730
  %v5784 = vmul.f32 %v5340, %v5730
  %v5785 = vmul.f32 %v5345, %v5730
  %v5786 = vmul.f32 %v5348, %v5730
  %v5787 = vmul.f32 %v5353, %v5730
  %v5788 = vmul.f32 %v5356, %v5730
  %v5789 = vmul.f32 %v5361, %v5730
  %v5790 = vmul.f32 %v5364, %v5730
  %v5791 = vmul.f32 %v5369, %v5730
  %v5792 = vmul.f32 %v5372, %v5730
  %v5793 = vmul.f32 %v5377, %v5730
  %v5794 = vmul.f32 %v5380, %v5730
  %v5795 = vlaneseq
  %v5796 = vshrl.u32 %v5795, 7
  %v5797 = vsub.s32 1, %v5796
  %v5798 = vrot.slane %v5726, %v5797
  %v5799 = vadd.f32 %v5731, %v5798
  %v5800 = vadd.f32 %v5732, %v5798
  %v5801 = vadd.f32 %v5733, %v5798
  %v5802 = vadd.f32 %v5734, %v5798
  %v5803 = vadd.f32 %v5735, %v5798
  %v5804 = vadd.f32 %v5736, %v5798
  %v5805 = vadd.f32 %v5737, %v5798
  %v5806 = vadd.f32 %v5738, %v5798
  %v5807 = vadd.f32 %v5739, %v5798
  %v5808 = vadd.f32 %v5740, %v5798
  %v5809 = vadd.f32 %v5741, %v5798
  %v5810 = vadd.f32 %v5742, %v5798
  %v5811 = vadd.f32 %v5743, %v5798
  %v5812 = vadd.f32 %v5744, %v5798
  %v5813 = vadd.f32 %v5745, %v5798
  %v5814 = vadd.f32 %v5746, %v5798
  %v5815 = vadd.f32 %v5747, %v5798
  %v5816 = vadd.f32 %v5748, %v5798
  %v5817 = vadd.f32 %v5749, %v5798
  %v5818 = vadd.f32 %v5750, %v5798
  %v5819 = vadd.f32 %v5751, %v5798
  %v5820 = vadd.f32 %v5752, %v5798
  %v5821 = vadd.f32 %v5753, %v5798
  %v5822 = vadd.f32 %v5754, %v5798
  %v5823 = vadd.f32 %v5755, %v5798
  %v5824 = vadd.f32 %v5756, %v5798
  %v5825 = vadd.f32 %v5757, %v5798
  %v5826 = vadd.f32 %v5758, %v5798
  %v5827 = vadd.f32 %v5759, %v5798
  %v5828 = vadd.f32 %v5760, %v5798
  %v5829 = vadd.f32 %v5761, %v5798
  %v5830 = vadd.f32 %v5762, %v5798
  %v5831 = vadd.f32 %v5763, %v5798
  %v5832 = vadd.f32 %v5764, %v5798
  %v5833 = vadd.f32 %v5765, %v5798
  %v5834 = vadd.f32 %v5766, %v5798
  %v5835 = vadd.f32 %v5767, %v5798
  %v5836 = vadd.f32 %v5768, %v5798
  %v5837 = vadd.f32 %v5769, %v5798
  %v5838 = vadd.f32 %v5770, %v5798
  %v5839 = vadd.f32 %v5771, %v5798
  %v5840 = vadd.f32 %v5772, %v5798
  %v5841 = vadd.f32 %v5773, %v5798
  %v5842 = vadd.f32 %v5774, %v5798
  %v5843 = vadd.f32 %v5775, %v5798
  %v5844 = vadd.f32 %v5776, %v5798
  %v5845 = vadd.f32 %v5777, %v5798
  %v5846 = vadd.f32 %v5778, %v5798
  %v5847 = vadd.f32 %v5779, %v5798
  %v5848 = vadd.f32 %v5780, %v5798
  %v5849 = vadd.f32 %v5781, %v5798
  %v5850 = vadd.f32 %v5782, %v5798
  %v5851 = vadd.f32 %v5783, %v5798
  %v5852 = vadd.f32 %v5784, %v5798
  %v5853 = vadd.f32 %v5785, %v5798
  %v5854 = vadd.f32 %v5786, %v5798
  %v5855 = vadd.f32 %v5787, %v5798
  %v5856 = vadd.f32 %v5788, %v5798
  %v5857 = vadd.f32 %v5789, %v5798
  %v5858 = vadd.f32 %v5790, %v5798
  %v5859 = vadd.f32 %v5791, %v5798
  %v5860 = vadd.f32 %v5792, %v5798
  %v5861 = vadd.f32 %v5793, %v5798
  %v5862 = vadd.f32 %v5794, %v5798
  %v5863 = vld [vmem:[%s7] sm:$0x3]
  %v5865 = vsel %vm355, %v5863, 0
  %5867 = vmatprep.subr.bf16.mxu0 0
  %5868 = vmatpush1.bf16.msra.mxu0 %v5865
  %5869 = vmatprep.subr.bf16.mxu0 0
  %5870 = vmatpush1.bf16.msra.mxu0 0
  %5871 = vmatprep.subr.bf16.mxu0 0
  %5872 = vmatpush1.bf16.msra.mxu0 0
  %5873 = vmatprep.subr.bf16.mxu0 0
  %5874 = vmatpush1.bf16.msra.mxu0 0
  %5875 = vmatprep.subr.bf16.mxu0 0
  %5876 = vmatpush1.bf16.msra.mxu0 0
  %5877 = vmatprep.subr.bf16.mxu0 0
  %5878 = vmatpush1.bf16.msra.mxu0 0
  %5879 = vmatprep.subr.bf16.mxu0 0
  %5880 = vmatpush1.bf16.msra.mxu0 0
  %5881 = vmatprep.subr.bf16.mxu0 0
  %5882 = vmatpush1.bf16.msra.mxu0 0
  %5883 = vmatprep.subr.bf16.mxu0 0
  %5884 = vmatpush1.bf16.msra.mxu0 0
  %5885 = vmatprep.subr.bf16.mxu0 0
  %5886 = vmatpush1.bf16.msra.mxu0 0
  %5887 = vmatprep.subr.bf16.mxu0 0
  %5888 = vmatpush1.bf16.msra.mxu0 0
  %5889 = vmatprep.subr.bf16.mxu0 0
  %5890 = vmatpush1.bf16.msra.mxu0 0
  %5891 = vmatprep.subr.bf16.mxu0 0
  %5892 = vmatpush1.bf16.msra.mxu0 0
  %5893 = vmatprep.subr.bf16.mxu0 0
  %5894 = vmatpush1.bf16.msra.mxu0 0
  %5895 = vmatprep.subr.bf16.mxu0 0
  %5896 = vmatpush1.bf16.msra.mxu0 0
  %5897 = vmatprep.subr.bf16.mxu0 0
  %5898 = vmatpush1.bf16.msra.mxu0 0
  %5899 = vmatprep.mubr.bf16.mxu0 0
  %5900 = vmatmul.mubr.bf16.gmra.mrb[0].mxu0 %v260
  %v5901 = vpop.f32.mrb[0].mxu0
  %v5902 = vadd.f32 0.0, %v5901
  %v5903 = vpop.f32.mrb[0].mxu0
  %v5904 = vpop.f32.mrb[0].mxu0
  %v5905 = vadd.f32 0.0, %v5904
  %v5906 = vpop.f32.mrb[0].mxu0
  %5907 = vmatprep.mubr.bf16.mxu0 0
  %5908 = vmatmul.mubr.bf16.gmra.mrb[0].mxu0 %v263
  %v5909 = vpop.f32.mrb[0].mxu0
  %v5910 = vadd.f32 0.0, %v5909
  %v5911 = vpop.f32.mrb[0].mxu0
  %v5912 = vpop.f32.mrb[0].mxu0
  %v5913 = vadd.f32 0.0, %v5912
  %v5914 = vpop.f32.mrb[0].mxu0
  %5915 = vmatprep.mubr.bf16.mxu0 0
  %5916 = vmatmul.mubr.bf16.gmra.mrb[0].mxu0 %v266
  %v5917 = vpop.f32.mrb[0].mxu0
  %v5918 = vadd.f32 0.0, %v5917
  %v5919 = vpop.f32.mrb[0].mxu0
  %v5920 = vpop.f32.mrb[0].mxu0
  %v5921 = vadd.f32 0.0, %v5920
  %v5922 = vpop.f32.mrb[0].mxu0
  %5923 = vmatprep.mubr.bf16.mxu0 0
  %5924 = vmatmul.mubr.bf16.gmra.mrb[0].mxu0 %v269
  %v5925 = vpop.f32.mrb[0].mxu0
  %v5926 = vadd.f32 0.0, %v5925
  %v5927 = vpop.f32.mrb[0].mxu0
  %v5928 = vpop.f32.mrb[0].mxu0
  %v5929 = vadd.f32 0.0, %v5928
  %v5930 = vpop.f32.mrb[0].mxu0
  %5931 = vmatprep.mubr.bf16.mxu0 0
  %5932 = vmatmul.mubr.bf16.gmra.mrb[0].mxu0 %v272
  %v5933 = vpop.f32.mrb[0].mxu0
  %v5934 = vadd.f32 0.0, %v5933
  %v5935 = vpop.f32.mrb[0].mxu0
  %v5936 = vpop.f32.mrb[0].mxu0
  %v5937 = vadd.f32 0.0, %v5936
  %v5938 = vpop.f32.mrb[0].mxu0
  %5939 = vmatprep.mubr.bf16.mxu0 0
  %5940 = vmatmul.mubr.bf16.gmra.mrb[0].mxu0 %v275
  %v5941 = vpop.f32.mrb[0].mxu0
  %v5942 = vadd.f32 0.0, %v5941
  %v5943 = vpop.f32.mrb[0].mxu0
  %v5944 = vpop.f32.mrb[0].mxu0
  %v5945 = vadd.f32 0.0, %v5944
  %v5946 = vpop.f32.mrb[0].mxu0
  %5947 = vmatprep.mubr.bf16.mxu0 0
  %5948 = vmatmul.mubr.bf16.gmra.mrb[0].mxu0 %v278
  %v5949 = vpop.f32.mrb[0].mxu0
  %v5950 = vadd.f32 0.0, %v5949
  %v5951 = vpop.f32.mrb[0].mxu0
  %v5952 = vpop.f32.mrb[0].mxu0
  %v5953 = vadd.f32 0.0, %v5952
  %v5954 = vpop.f32.mrb[0].mxu0
  %5955 = vmatprep.mubr.bf16.mxu0 0
  %5956 = vmatmul.mubr.bf16.gmra.mrb[0].mxu0 %v281
  %v5957 = vpop.f32.mrb[0].mxu0
  %v5958 = vadd.f32 0.0, %v5957
  %v5959 = vpop.f32.mrb[0].mxu0
  %v5960 = vpop.f32.mrb[0].mxu0
  %v5961 = vadd.f32 0.0, %v5960
  %v5962 = vpop.f32.mrb[0].mxu0
  %5963 = vmatprep.mubr.bf16.mxu0 0
  %5964 = vmatmul.mubr.bf16.gmra.mrb[0].mxu0 %v284
  %v5965 = vpop.f32.mrb[0].mxu0
  %v5966 = vadd.f32 0.0, %v5965
  %v5967 = vpop.f32.mrb[0].mxu0
  %v5968 = vpop.f32.mrb[0].mxu0
  %v5969 = vadd.f32 0.0, %v5968
  %v5970 = vpop.f32.mrb[0].mxu0
  %5971 = vmatprep.mubr.bf16.mxu0 0
  %5972 = vmatmul.mubr.bf16.gmra.mrb[0].mxu0 %v287
  %v5973 = vpop.f32.mrb[0].mxu0
  %v5974 = vadd.f32 0.0, %v5973
  %v5975 = vpop.f32.mrb[0].mxu0
  %v5976 = vpop.f32.mrb[0].mxu0
  %v5977 = vadd.f32 0.0, %v5976
  %v5978 = vpop.f32.mrb[0].mxu0
  %5979 = vmatprep.mubr.bf16.mxu0 0
  %5980 = vmatmul.mubr.bf16.gmra.mrb[0].mxu0 %v290
  %v5981 = vpop.f32.mrb[0].mxu0
  %v5982 = vadd.f32 0.0, %v5981
  %v5983 = vpop.f32.mrb[0].mxu0
  %v5984 = vpop.f32.mrb[0].mxu0
  %v5985 = vadd.f32 0.0, %v5984
  %v5986 = vpop.f32.mrb[0].mxu0
  %5987 = vmatprep.mubr.bf16.mxu0 0
  %5988 = vmatmul.mubr.bf16.gmra.mrb[0].mxu0 %v293
  %v5989 = vpop.f32.mrb[0].mxu0
  %v5990 = vadd.f32 0.0, %v5989
  %v5991 = vpop.f32.mrb[0].mxu0
  %v5992 = vpop.f32.mrb[0].mxu0
  %v5993 = vadd.f32 0.0, %v5992
  %v5994 = vpop.f32.mrb[0].mxu0
  %5995 = vmatprep.mubr.bf16.mxu0 0
  %5996 = vmatmul.mubr.bf16.gmra.mrb[0].mxu0 %v296
  %v5997 = vpop.f32.mrb[0].mxu0
  %v5998 = vadd.f32 0.0, %v5997
  %v5999 = vpop.f32.mrb[0].mxu0
  %v6000 = vpop.f32.mrb[0].mxu0
  %v6001 = vadd.f32 0.0, %v6000
  %v6002 = vpop.f32.mrb[0].mxu0
  %6003 = vmatprep.mubr.bf16.mxu0 0
  %6004 = vmatmul.mubr.bf16.gmra.mrb[0].mxu0 %v299
  %v6005 = vpop.f32.mrb[0].mxu0
  %v6006 = vadd.f32 0.0, %v6005
  %v6007 = vpop.f32.mrb[0].mxu0
  %v6008 = vpop.f32.mrb[0].mxu0
  %v6009 = vadd.f32 0.0, %v6008
  %v6010 = vpop.f32.mrb[0].mxu0
  %6011 = vmatprep.mubr.bf16.mxu0 0
  %6012 = vmatmul.mubr.bf16.gmra.mrb[0].mxu0 %v302
  %v6013 = vpop.f32.mrb[0].mxu0
  %v6014 = vadd.f32 0.0, %v6013
  %v6015 = vpop.f32.mrb[0].mxu0
  %v6016 = vpop.f32.mrb[0].mxu0
  %v6017 = vadd.f32 0.0, %v6016
  %v6018 = vpop.f32.mrb[0].mxu0
  %6019 = vmatprep.mubr.bf16.mxu0 0
  %6020 = vmatmul.mubr.bf16.gmra.mrb[0].mxu0 %v305
  %v6021 = vpop.f32.mrb[0].mxu0
  %v6022 = vadd.f32 0.0, %v6021
  %v6023 = vpop.f32.mrb[0].mxu0
  %v6024 = vpop.f32.mrb[0].mxu0
  %v6025 = vadd.f32 0.0, %v6024
  %v6026 = vpop.f32.mrb[0].mxu0
  %6027 = vmatprep.mubr.bf16.mxu0 0
  %6028 = vmatmul.mubr.bf16.gmra.mrb[0].mxu0 %v308
  %v6029 = vpop.f32.mrb[0].mxu0
  %v6030 = vadd.f32 0.0, %v6029
  %v6031 = vpop.f32.mrb[0].mxu0
  %v6032 = vpop.f32.mrb[0].mxu0
  %v6033 = vadd.f32 0.0, %v6032
  %v6034 = vpop.f32.mrb[0].mxu0
  %6035 = vmatprep.mubr.bf16.mxu0 0
  %6036 = vmatmul.mubr.bf16.gmra.mrb[0].mxu0 %v311
  %v6037 = vpop.f32.mrb[0].mxu0
  %v6038 = vadd.f32 0.0, %v6037
  %v6039 = vpop.f32.mrb[0].mxu0
  %v6040 = vpop.f32.mrb[0].mxu0
  %v6041 = vadd.f32 0.0, %v6040
  %v6042 = vpop.f32.mrb[0].mxu0
  %6043 = vmatprep.mubr.bf16.mxu0 0
  %6044 = vmatmul.mubr.bf16.gmra.mrb[0].mxu0 %v314
  %v6045 = vpop.f32.mrb[0].mxu0
  %v6046 = vadd.f32 0.0, %v6045
  %v6047 = vpop.f32.mrb[0].mxu0
  %v6048 = vpop.f32.mrb[0].mxu0
  %v6049 = vadd.f32 0.0, %v6048
  %v6050 = vpop.f32.mrb[0].mxu0
  %6051 = vmatprep.mubr.bf16.mxu0 0
  %6052 = vmatmul.mubr.bf16.gmra.mrb[0].mxu0 %v317
  %v6053 = vpop.f32.mrb[0].mxu0
  %v6054 = vadd.f32 0.0, %v6053
  %v6055 = vpop.f32.mrb[0].mxu0
  %v6056 = vpop.f32.mrb[0].mxu0
  %v6057 = vadd.f32 0.0, %v6056
  %v6058 = vpop.f32.mrb[0].mxu0
  %6059 = vmatprep.mubr.bf16.mxu0 0
  %6060 = vmatmul.mubr.bf16.gmra.mrb[0].mxu0 %v320
  %v6061 = vpop.f32.mrb[0].mxu0
  %v6062 = vadd.f32 0.0, %v6061
  %v6063 = vpop.f32.mrb[0].mxu0
  %v6064 = vpop.f32.mrb[0].mxu0
  %v6065 = vadd.f32 0.0, %v6064
  %v6066 = vpop.f32.mrb[0].mxu0
  %6067 = vmatprep.mubr.bf16.mxu0 0
  %6068 = vmatmul.mubr.bf16.gmra.mrb[0].mxu0 %v323
  %v6069 = vpop.f32.mrb[0].mxu0
  %v6070 = vadd.f32 0.0, %v6069
  %v6071 = vpop.f32.mrb[0].mxu0
  %v6072 = vpop.f32.mrb[0].mxu0
  %v6073 = vadd.f32 0.0, %v6072
  %v6074 = vpop.f32.mrb[0].mxu0
  %6075 = vmatprep.mubr.bf16.mxu0 0
  %6076 = vmatmul.mubr.bf16.gmra.mrb[0].mxu0 %v326
  %v6077 = vpop.f32.mrb[0].mxu0
  %v6078 = vadd.f32 0.0, %v6077
  %v6079 = vpop.f32.mrb[0].mxu0
  %v6080 = vpop.f32.mrb[0].mxu0
  %v6081 = vadd.f32 0.0, %v6080
  %v6082 = vpop.f32.mrb[0].mxu0
  %6083 = vmatprep.mubr.bf16.mxu0 0
  %6084 = vmatmul.mubr.bf16.gmra.mrb[0].mxu0 %v329
  %v6085 = vpop.f32.mrb[0].mxu0
  %v6086 = vadd.f32 0.0, %v6085
  %v6087 = vpop.f32.mrb[0].mxu0
  %v6088 = vpop.f32.mrb[0].mxu0
  %v6089 = vadd.f32 0.0, %v6088
  %v6090 = vpop.f32.mrb[0].mxu0
  %6091 = vmatprep.mubr.bf16.mxu0 0
  %6092 = vmatmul.mubr.bf16.gmra.mrb[0].mxu0 %v332
  %v6093 = vpop.f32.mrb[0].mxu0
  %v6094 = vadd.f32 0.0, %v6093
  %v6095 = vpop.f32.mrb[0].mxu0
  %v6096 = vpop.f32.mrb[0].mxu0
  %v6097 = vadd.f32 0.0, %v6096
  %v6098 = vpop.f32.mrb[0].mxu0
  %6099 = vmatprep.mubr.bf16.mxu0 0
  %6100 = vmatmul.mubr.bf16.gmra.mrb[0].mxu0 %v335
  %v6101 = vpop.f32.mrb[0].mxu0
  %v6102 = vadd.f32 0.0, %v6101
  %v6103 = vpop.f32.mrb[0].mxu0
  %v6104 = vpop.f32.mrb[0].mxu0
  %v6105 = vadd.f32 0.0, %v6104
  %v6106 = vpop.f32.mrb[0].mxu0
  %6107 = vmatprep.mubr.bf16.mxu0 0
  %6108 = vmatmul.mubr.bf16.gmra.mrb[0].mxu0 %v338
  %v6109 = vpop.f32.mrb[0].mxu0
  %v6110 = vadd.f32 0.0, %v6109
  %v6111 = vpop.f32.mrb[0].mxu0
  %v6112 = vpop.f32.mrb[0].mxu0
  %v6113 = vadd.f32 0.0, %v6112
  %v6114 = vpop.f32.mrb[0].mxu0
  %6115 = vmatprep.mubr.bf16.mxu0 0
  %6116 = vmatmul.mubr.bf16.gmra.mrb[0].mxu0 %v341
  %v6117 = vpop.f32.mrb[0].mxu0
  %v6118 = vadd.f32 0.0, %v6117
  %v6119 = vpop.f32.mrb[0].mxu0
  %v6120 = vpop.f32.mrb[0].mxu0
  %v6121 = vadd.f32 0.0, %v6120
  %v6122 = vpop.f32.mrb[0].mxu0
  %6123 = vmatprep.mubr.bf16.mxu0 0
  %6124 = vmatmul.mubr.bf16.gmra.mrb[0].mxu0 %v344
  %v6125 = vpop.f32.mrb[0].mxu0
  %v6126 = vadd.f32 0.0, %v6125
  %v6127 = vpop.f32.mrb[0].mxu0
  %v6128 = vpop.f32.mrb[0].mxu0
  %v6129 = vadd.f32 0.0, %v6128
  %v6130 = vpop.f32.mrb[0].mxu0
  %6131 = vmatprep.mubr.bf16.mxu0 0
  %6132 = vmatmul.mubr.bf16.gmra.mrb[0].mxu0 %v347
  %v6133 = vpop.f32.mrb[0].mxu0
  %v6134 = vadd.f32 0.0, %v6133
  %v6135 = vpop.f32.mrb[0].mxu0
  %v6136 = vpop.f32.mrb[0].mxu0
  %v6137 = vadd.f32 0.0, %v6136
  %v6138 = vpop.f32.mrb[0].mxu0
  %6139 = vmatprep.mubr.bf16.mxu0 0
  %6140 = vmatmul.mubr.bf16.gmra.mrb[0].mxu0 %v350
  %v6141 = vpop.f32.mrb[0].mxu0
  %v6142 = vadd.f32 0.0, %v6141
  %v6143 = vpop.f32.mrb[0].mxu0
  %v6144 = vpop.f32.mrb[0].mxu0
  %v6145 = vadd.f32 0.0, %v6144
  %v6146 = vpop.f32.mrb[0].mxu0
  %6147 = vmatprep.mubr.bf16.mxu0 0
  %6148 = vmatmul.mubr.bf16.gmra.mrb[0].mxu0 %v353
  %v6149 = vpop.f32.mrb[0].mxu0
  %v6150 = vadd.f32 0.0, %v6149
  %v6151 = vpop.f32.mrb[0].mxu0
  %v6152 = vpop.f32.mrb[0].mxu0
  %v6153 = vadd.f32 0.0, %v6152
  %v6154 = vpop.f32.mrb[0].mxu0
  %6155 = vdwg.mxu0
  %v6156 = vld [vmem:[%s8] sm:$0x3]
  %v6157 = vsel %vm3522, %v5902, 0.0
  %v6158 = vsel %vm3522, %v5905, 0.0
  %v6159 = vadd.f32 %v6157, %v6158
  %v6160 = vsel %vm3522, %v5910, 0.0
  %v6161 = vadd.f32 %v6159, %v6160
  %v6162 = vsel %vm3522, %v5913, 0.0
  %v6163 = vadd.f32 %v6161, %v6162
  %v6164 = vsel %vm3522, %v5918, 0.0
  %v6165 = vadd.f32 %v6163, %v6164
  %v6166 = vsel %vm3522, %v5921, 0.0
  %v6167 = vadd.f32 %v6165, %v6166
  %v6168 = vsel %vm3522, %v5926, 0.0
  %v6169 = vadd.f32 %v6167, %v6168
  %v6170 = vsel %vm3522, %v5929, 0.0
  %v6171 = vadd.f32 %v6169, %v6170
  %v6172 = vsel %vm3522, %v5934, 0.0
  %v6173 = vadd.f32 %v6171, %v6172
  %v6174 = vsel %vm3522, %v5937, 0.0
  %v6175 = vadd.f32 %v6173, %v6174
  %v6176 = vsel %vm3522, %v5942, 0.0
  %v6177 = vadd.f32 %v6175, %v6176
  %v6178 = vsel %vm3522, %v5945, 0.0
  %v6179 = vadd.f32 %v6177, %v6178
  %v6180 = vsel %vm3522, %v5950, 0.0
  %v6181 = vadd.f32 %v6179, %v6180
  %v6182 = vsel %vm3522, %v5953, 0.0
  %v6183 = vadd.f32 %v6181, %v6182
  %v6184 = vsel %vm3522, %v5958, 0.0
  %v6185 = vadd.f32 %v6183, %v6184
  %v6186 = vsel %vm3522, %v5961, 0.0
  %v6187 = vadd.f32 %v6185, %v6186
  %v6188 = vsel %vm3522, %v5966, 0.0
  %v6189 = vadd.f32 %v6187, %v6188
  %v6190 = vsel %vm3522, %v5969, 0.0
  %v6191 = vadd.f32 %v6189, %v6190
  %v6192 = vsel %vm3522, %v5974, 0.0
  %v6193 = vadd.f32 %v6191, %v6192
  %v6194 = vsel %vm3522, %v5977, 0.0
  %v6195 = vadd.f32 %v6193, %v6194
  %v6196 = vsel %vm3522, %v5982, 0.0
  %v6197 = vadd.f32 %v6195, %v6196
  %v6198 = vsel %vm3522, %v5985, 0.0
  %v6199 = vadd.f32 %v6197, %v6198
  %v6200 = vsel %vm3522, %v5990, 0.0
  %v6201 = vadd.f32 %v6199, %v6200
  %v6202 = vsel %vm3522, %v5993, 0.0
  %v6203 = vadd.f32 %v6201, %v6202
  %v6204 = vsel %vm3522, %v5998, 0.0
  %v6205 = vadd.f32 %v6203, %v6204
  %v6206 = vsel %vm3522, %v6001, 0.0
  %v6207 = vadd.f32 %v6205, %v6206
  %v6208 = vsel %vm3522, %v6006, 0.0
  %v6209 = vadd.f32 %v6207, %v6208
  %v6210 = vsel %vm3522, %v6009, 0.0
  %v6211 = vadd.f32 %v6209, %v6210
  %v6212 = vsel %vm3522, %v6014, 0.0
  %v6213 = vadd.f32 %v6211, %v6212
  %v6214 = vsel %vm3522, %v6017, 0.0
  %v6215 = vadd.f32 %v6213, %v6214
  %v6216 = vsel %vm3522, %v6022, 0.0
  %v6217 = vadd.f32 %v6215, %v6216
  %v6218 = vsel %vm3522, %v6025, 0.0
  %v6219 = vadd.f32 %v6217, %v6218
  %v6220 = vsel %vm3522, %v6030, 0.0
  %v6221 = vadd.f32 %v6219, %v6220
  %v6222 = vsel %vm3522, %v6033, 0.0
  %v6223 = vadd.f32 %v6221, %v6222
  %v6224 = vsel %vm3522, %v6038, 0.0
  %v6225 = vadd.f32 %v6223, %v6224
  %v6226 = vsel %vm3522, %v6041, 0.0
  %v6227 = vadd.f32 %v6225, %v6226
  %v6228 = vsel %vm3522, %v6046, 0.0
  %v6229 = vadd.f32 %v6227, %v6228
  %v6230 = vsel %vm3522, %v6049, 0.0
  %v6231 = vadd.f32 %v6229, %v6230
  %v6232 = vsel %vm3522, %v6054, 0.0
  %v6233 = vadd.f32 %v6231, %v6232
  %v6234 = vsel %vm3522, %v6057, 0.0
  %v6235 = vadd.f32 %v6233, %v6234
  %v6236 = vsel %vm3522, %v6062, 0.0
  %v6237 = vadd.f32 %v6235, %v6236
  %v6238 = vsel %vm3522, %v6065, 0.0
  %v6239 = vadd.f32 %v6237, %v6238
  %v6240 = vsel %vm3522, %v6070, 0.0
  %v6241 = vadd.f32 %v6239, %v6240
  %v6242 = vsel %vm3522, %v6073, 0.0
  %v6243 = vadd.f32 %v6241, %v6242
  %v6244 = vsel %vm3522, %v6078, 0.0
  %v6245 = vadd.f32 %v6243, %v6244
  %v6246 = vsel %vm3522, %v6081, 0.0
  %v6247 = vadd.f32 %v6245, %v6246
  %v6248 = vsel %vm3522, %v6086, 0.0
  %v6249 = vadd.f32 %v6247, %v6248
  %v6250 = vsel %vm3522, %v6089, 0.0
  %v6251 = vadd.f32 %v6249, %v6250
  %v6252 = vsel %vm3522, %v6094, 0.0
  %v6253 = vadd.f32 %v6251, %v6252
  %v6254 = vsel %vm3522, %v6097, 0.0
  %v6255 = vadd.f32 %v6253, %v6254
  %v6256 = vsel %vm3522, %v6102, 0.0
  %v6257 = vadd.f32 %v6255, %v6256
  %v6258 = vsel %vm3522, %v6105, 0.0
  %v6259 = vadd.f32 %v6257, %v6258
  %v6260 = vsel %vm3522, %v6110, 0.0
  %v6261 = vadd.f32 %v6259, %v6260
  %v6262 = vsel %vm3522, %v6113, 0.0
  %v6263 = vadd.f32 %v6261, %v6262
  %v6264 = vsel %vm3522, %v6118, 0.0
  %v6265 = vadd.f32 %v6263, %v6264
  %v6266 = vsel %vm3522, %v6121, 0.0
  %v6267 = vadd.f32 %v6265, %v6266
  %v6268 = vsel %vm3522, %v6126, 0.0
  %v6269 = vadd.f32 %v6267, %v6268
  %v6270 = vsel %vm3522, %v6129, 0.0
  %v6271 = vadd.f32 %v6269, %v6270
  %v6272 = vsel %vm3522, %v6134, 0.0
  %v6273 = vadd.f32 %v6271, %v6272
  %v6274 = vsel %vm3522, %v6137, 0.0
  %v6275 = vadd.f32 %v6273, %v6274
  %v6276 = vsel %vm3522, %v6142, 0.0
  %v6277 = vadd.f32 %v6275, %v6276
  %v6278 = vsel %vm3522, %v6145, 0.0
  %v6279 = vadd.f32 %v6277, %v6278
  %v6280 = vsel %vm3522, %v6150, 0.0
  %v6281 = vadd.f32 %v6279, %v6280
  %v6282 = vsel %vm3522, %v6153, 0.0
  %v6283 = vadd.f32 %v6281, %v6282
  %v6284 = vrot.slane %v6283, 4
  %v6285 = vadd.f32 %v6283, %v6284
  %v6286 = vrot.slane %v6285, 2
  %v6287 = vadd.f32 %v6285, %v6286
  %v6288 = vrot.slane %v6287, 1
  %v6289 = vadd.f32 %v6287, %v6288
  %v6290 = vmul.f32 %v5902, %v5902
  %v6291 = vmul.f32 %v5905, %v5905
  %v6292 = vmul.f32 %v5910, %v5910
  %v6293 = vmul.f32 %v5913, %v5913
  %v6294 = vmul.f32 %v5918, %v5918
  %v6295 = vmul.f32 %v5921, %v5921
  %v6296 = vmul.f32 %v5926, %v5926
  %v6297 = vmul.f32 %v5929, %v5929
  %v6298 = vmul.f32 %v5934, %v5934
  %v6299 = vmul.f32 %v5937, %v5937
  %v6300 = vmul.f32 %v5942, %v5942
  %v6301 = vmul.f32 %v5945, %v5945
  %v6302 = vmul.f32 %v5950, %v5950
  %v6303 = vmul.f32 %v5953, %v5953
  %v6304 = vmul.f32 %v5958, %v5958
  %v6305 = vmul.f32 %v5961, %v5961
  %v6306 = vmul.f32 %v5966, %v5966
  %v6307 = vmul.f32 %v5969, %v5969
  %v6308 = vmul.f32 %v5974, %v5974
  %v6309 = vmul.f32 %v5977, %v5977
  %v6310 = vmul.f32 %v5982, %v5982
  %v6311 = vmul.f32 %v5985, %v5985
  %v6312 = vmul.f32 %v5990, %v5990
  %v6313 = vmul.f32 %v5993, %v5993
  %v6314 = vmul.f32 %v5998, %v5998
  %v6315 = vmul.f32 %v6001, %v6001
  %v6316 = vmul.f32 %v6006, %v6006
  %v6317 = vmul.f32 %v6009, %v6009
  %v6318 = vmul.f32 %v6014, %v6014
  %v6319 = vmul.f32 %v6017, %v6017
  %v6320 = vmul.f32 %v6022, %v6022
  %v6321 = vmul.f32 %v6025, %v6025
  %v6322 = vmul.f32 %v6030, %v6030
  %v6323 = vmul.f32 %v6033, %v6033
  %v6324 = vmul.f32 %v6038, %v6038
  %v6325 = vmul.f32 %v6041, %v6041
  %v6326 = vmul.f32 %v6046, %v6046
  %v6327 = vmul.f32 %v6049, %v6049
  %v6328 = vmul.f32 %v6054, %v6054
  %v6329 = vmul.f32 %v6057, %v6057
  %v6330 = vmul.f32 %v6062, %v6062
  %v6331 = vmul.f32 %v6065, %v6065
  %v6332 = vmul.f32 %v6070, %v6070
  %v6333 = vmul.f32 %v6073, %v6073
  %v6334 = vmul.f32 %v6078, %v6078
  %v6335 = vmul.f32 %v6081, %v6081
  %v6336 = vmul.f32 %v6086, %v6086
  %v6337 = vmul.f32 %v6089, %v6089
  %v6338 = vmul.f32 %v6094, %v6094
  %v6339 = vmul.f32 %v6097, %v6097
  %v6340 = vmul.f32 %v6102, %v6102
  %v6341 = vmul.f32 %v6105, %v6105
  %v6342 = vmul.f32 %v6110, %v6110
  %v6343 = vmul.f32 %v6113, %v6113
  %v6344 = vmul.f32 %v6118, %v6118
  %v6345 = vmul.f32 %v6121, %v6121
  %v6346 = vmul.f32 %v6126, %v6126
  %v6347 = vmul.f32 %v6129, %v6129
  %v6348 = vmul.f32 %v6134, %v6134
  %v6349 = vmul.f32 %v6137, %v6137
  %v6350 = vmul.f32 %v6142, %v6142
  %v6351 = vmul.f32 %v6145, %v6145
  %v6352 = vmul.f32 %v6150, %v6150
  %v6353 = vmul.f32 %v6153, %v6153
  %v6354 = vsel %vm3522, %v6290, 0.0
  %v6355 = vsel %vm3522, %v6291, 0.0
  %v6356 = vadd.f32 %v6354, %v6355
  %v6357 = vsel %vm3522, %v6292, 0.0
  %v6358 = vadd.f32 %v6356, %v6357
  %v6359 = vsel %vm3522, %v6293, 0.0
  %v6360 = vadd.f32 %v6358, %v6359
  %v6361 = vsel %vm3522, %v6294, 0.0
  %v6362 = vadd.f32 %v6360, %v6361
  %v6363 = vsel %vm3522, %v6295, 0.0
  %v6364 = vadd.f32 %v6362, %v6363
  %v6365 = vsel %vm3522, %v6296, 0.0
  %v6366 = vadd.f32 %v6364, %v6365
  %v6367 = vsel %vm3522, %v6297, 0.0
  %v6368 = vadd.f32 %v6366, %v6367
  %v6369 = vsel %vm3522, %v6298, 0.0
  %v6370 = vadd.f32 %v6368, %v6369
  %v6371 = vsel %vm3522, %v6299, 0.0
  %v6372 = vadd.f32 %v6370, %v6371
  %v6373 = vsel %vm3522, %v6300, 0.0
  %v6374 = vadd.f32 %v6372, %v6373
  %v6375 = vsel %vm3522, %v6301, 0.0
  %v6376 = vadd.f32 %v6374, %v6375
  %v6377 = vsel %vm3522, %v6302, 0.0
  %v6378 = vadd.f32 %v6376, %v6377
  %v6379 = vsel %vm3522, %v6303, 0.0
  %v6380 = vadd.f32 %v6378, %v6379
  %v6381 = vsel %vm3522, %v6304, 0.0
  %v6382 = vadd.f32 %v6380, %v6381
  %v6383 = vsel %vm3522, %v6305, 0.0
  %v6384 = vadd.f32 %v6382, %v6383
  %v6385 = vsel %vm3522, %v6306, 0.0
  %v6386 = vadd.f32 %v6384, %v6385
  %v6387 = vsel %vm3522, %v6307, 0.0
  %v6388 = vadd.f32 %v6386, %v6387
  %v6389 = vsel %vm3522, %v6308, 0.0
  %v6390 = vadd.f32 %v6388, %v6389
  %v6391 = vsel %vm3522, %v6309, 0.0
  %v6392 = vadd.f32 %v6390, %v6391
  %v6393 = vsel %vm3522, %v6310, 0.0
  %v6394 = vadd.f32 %v6392, %v6393
  %v6395 = vsel %vm3522, %v6311, 0.0
  %v6396 = vadd.f32 %v6394, %v6395
  %v6397 = vsel %vm3522, %v6312, 0.0
  %v6398 = vadd.f32 %v6396, %v6397
  %v6399 = vsel %vm3522, %v6313, 0.0
  %v6400 = vadd.f32 %v6398, %v6399
  %v6401 = vsel %vm3522, %v6314, 0.0
  %v6402 = vadd.f32 %v6400, %v6401
  %v6403 = vsel %vm3522, %v6315, 0.0
  %v6404 = vadd.f32 %v6402, %v6403
  %v6405 = vsel %vm3522, %v6316, 0.0
  %v6406 = vadd.f32 %v6404, %v6405
  %v6407 = vsel %vm3522, %v6317, 0.0
  %v6408 = vadd.f32 %v6406, %v6407
  %v6409 = vsel %vm3522, %v6318, 0.0
  %v6410 = vadd.f32 %v6408, %v6409
  %v6411 = vsel %vm3522, %v6319, 0.0
  %v6412 = vadd.f32 %v6410, %v6411
  %v6413 = vsel %vm3522, %v6320, 0.0
  %v6414 = vadd.f32 %v6412, %v6413
  %v6415 = vsel %vm3522, %v6321, 0.0
  %v6416 = vadd.f32 %v6414, %v6415
  %v6417 = vsel %vm3522, %v6322, 0.0
  %v6418 = vadd.f32 %v6416, %v6417
  %v6419 = vsel %vm3522, %v6323, 0.0
  %v6420 = vadd.f32 %v6418, %v6419
  %v6421 = vsel %vm3522, %v6324, 0.0
  %v6422 = vadd.f32 %v6420, %v6421
  %v6423 = vsel %vm3522, %v6325, 0.0
  %v6424 = vadd.f32 %v6422, %v6423
  %v6425 = vsel %vm3522, %v6326, 0.0
  %v6426 = vadd.f32 %v6424, %v6425
  %v6427 = vsel %vm3522, %v6327, 0.0
  %v6428 = vadd.f32 %v6426, %v6427
  %v6429 = vsel %vm3522, %v6328, 0.0
  %v6430 = vadd.f32 %v6428, %v6429
  %v6431 = vsel %vm3522, %v6329, 0.0
  %v6432 = vadd.f32 %v6430, %v6431
  %v6433 = vsel %vm3522, %v6330, 0.0
  %v6434 = vadd.f32 %v6432, %v6433
  %v6435 = vsel %vm3522, %v6331, 0.0
  %v6436 = vadd.f32 %v6434, %v6435
  %v6437 = vsel %vm3522, %v6332, 0.0
  %v6438 = vadd.f32 %v6436, %v6437
  %v6439 = vsel %vm3522, %v6333, 0.0
  %v6440 = vadd.f32 %v6438, %v6439
  %v6441 = vsel %vm3522, %v6334, 0.0
  %v6442 = vadd.f32 %v6440, %v6441
  %v6443 = vsel %vm3522, %v6335, 0.0
  %v6444 = vadd.f32 %v6442, %v6443
  %v6445 = vsel %vm3522, %v6336, 0.0
  %v6446 = vadd.f32 %v6444, %v6445
  %v6447 = vsel %vm3522, %v6337, 0.0
  %v6448 = vadd.f32 %v6446, %v6447
  %v6449 = vsel %vm3522, %v6338, 0.0
  %v6450 = vadd.f32 %v6448, %v6449
  %v6451 = vsel %vm3522, %v6339, 0.0
  %v6452 = vadd.f32 %v6450, %v6451
  %v6453 = vsel %vm3522, %v6340, 0.0
  %v6454 = vadd.f32 %v6452, %v6453
  %v6455 = vsel %vm3522, %v6341, 0.0
  %v6456 = vadd.f32 %v6454, %v6455
  %v6457 = vsel %vm3522, %v6342, 0.0
  %v6458 = vadd.f32 %v6456, %v6457
  %v6459 = vsel %vm3522, %v6343, 0.0
  %v6460 = vadd.f32 %v6458, %v6459
  %v6461 = vsel %vm3522, %v6344, 0.0
  %v6462 = vadd.f32 %v6460, %v6461
  %v6463 = vsel %vm3522, %v6345, 0.0
  %v6464 = vadd.f32 %v6462, %v6463
  %v6465 = vsel %vm3522, %v6346, 0.0
  %v6466 = vadd.f32 %v6464, %v6465
  %v6467 = vsel %vm3522, %v6347, 0.0
  %v6468 = vadd.f32 %v6466, %v6467
  %v6469 = vsel %vm3522, %v6348, 0.0
  %v6470 = vadd.f32 %v6468, %v6469
  %v6471 = vsel %vm3522, %v6349, 0.0
  %v6472 = vadd.f32 %v6470, %v6471
  %v6473 = vsel %vm3522, %v6350, 0.0
  %v6474 = vadd.f32 %v6472, %v6473
  %v6475 = vsel %vm3522, %v6351, 0.0
  %v6476 = vadd.f32 %v6474, %v6475
  %v6477 = vsel %vm3522, %v6352, 0.0
  %v6478 = vadd.f32 %v6476, %v6477
  %v6479 = vsel %vm3522, %v6353, 0.0
  %v6480 = vadd.f32 %v6478, %v6479
  %v6481 = vrot.slane %v6480, 4
  %v6482 = vadd.f32 %v6480, %v6481
  %v6483 = vrot.slane %v6482, 2
  %v6484 = vadd.f32 %v6482, %v6483
  %v6485 = vrot.slane %v6484, 1
  %v6486 = vadd.f32 %v6484, %v6485
  %v6487 = vmul.f32 %v6289, 0.001953125
  %v6488 = vmul.f32 %v6486, 0.001953125
  %v6489 = vmul.f32 %v6487, %v6487
  %v6490 = vsub.f32 %v6488, %v6489
  %v6491 = vmax.f32 %v6490, 0.0
  %v6492 = vadd.f32 %v6491, 1e-05
  %v6493 = vrsqrt.pop %v6492
  %v6494 = vmul.f32 %v6156, %v6493
  %v6495 = vmul.f32 %v6494, %v6487
  %v6497 = vrot.slane %v6495, 7
  %v6499 = vsub.f32 %v6156, %v6497
  %v6500 = vlaneseq
  %v6501 = vshrl.u32 %v6500, 7
  %v6502 = vsub.s32 0, %v6501
  %v6503 = vrot.slane %v6494, %v6502
  %v6504 = vmul.f32 %v5902, %v6503
  %v6505 = vmul.f32 %v5905, %v6503
  %v6506 = vmul.f32 %v5910, %v6503
  %v6507 = vmul.f32 %v5913, %v6503
  %v6508 = vmul.f32 %v5918, %v6503
  %v6509 = vmul.f32 %v5921, %v6503
  %v6510 = vmul.f32 %v5926, %v6503
  %v6511 = vmul.f32 %v5929, %v6503
  %v6512 = vmul.f32 %v5934, %v6503
  %v6513 = vmul.f32 %v5937, %v6503
  %v6514 = vmul.f32 %v5942, %v6503
  %v6515 = vmul.f32 %v5945, %v6503
  %v6516 = vmul.f32 %v5950, %v6503
  %v6517 = vmul.f32 %v5953, %v6503
  %v6518 = vmul.f32 %v5958, %v6503
  %v6519 = vmul.f32 %v5961, %v6503
  %v6520 = vmul.f32 %v5966, %v6503
  %v6521 = vmul.f32 %v5969, %v6503
  %v6522 = vmul.f32 %v5974, %v6503
  %v6523 = vmul.f32 %v5977, %v6503
  %v6524 = vmul.f32 %v5982, %v6503
  %v6525 = vmul.f32 %v5985, %v6503
  %v6526 = vmul.f32 %v5990, %v6503
  %v6527 = vmul.f32 %v5993, %v6503
  %v6528 = vmul.f32 %v5998, %v6503
  %v6529 = vmul.f32 %v6001, %v6503
  %v6530 = vmul.f32 %v6006, %v6503
  %v6531 = vmul.f32 %v6009, %v6503
  %v6532 = vmul.f32 %v6014, %v6503
  %v6533 = vmul.f32 %v6017, %v6503
  %v6534 = vmul.f32 %v6022, %v6503
  %v6535 = vmul.f32 %v6025, %v6503
  %v6536 = vmul.f32 %v6030, %v6503
  %v6537 = vmul.f32 %v6033, %v6503
  %v6538 = vmul.f32 %v6038, %v6503
  %v6539 = vmul.f32 %v6041, %v6503
  %v6540 = vmul.f32 %v6046, %v6503
  %v6541 = vmul.f32 %v6049, %v6503
  %v6542 = vmul.f32 %v6054, %v6503
  %v6543 = vmul.f32 %v6057, %v6503
  %v6544 = vmul.f32 %v6062, %v6503
  %v6545 = vmul.f32 %v6065, %v6503
  %v6546 = vmul.f32 %v6070, %v6503
  %v6547 = vmul.f32 %v6073, %v6503
  %v6548 = vmul.f32 %v6078, %v6503
  %v6549 = vmul.f32 %v6081, %v6503
  %v6550 = vmul.f32 %v6086, %v6503
  %v6551 = vmul.f32 %v6089, %v6503
  %v6552 = vmul.f32 %v6094, %v6503
  %v6553 = vmul.f32 %v6097, %v6503
  %v6554 = vmul.f32 %v6102, %v6503
  %v6555 = vmul.f32 %v6105, %v6503
  %v6556 = vmul.f32 %v6110, %v6503
  %v6557 = vmul.f32 %v6113, %v6503
  %v6558 = vmul.f32 %v6118, %v6503
  %v6559 = vmul.f32 %v6121, %v6503
  %v6560 = vmul.f32 %v6126, %v6503
  %v6561 = vmul.f32 %v6129, %v6503
  %v6562 = vmul.f32 %v6134, %v6503
  %v6563 = vmul.f32 %v6137, %v6503
  %v6564 = vmul.f32 %v6142, %v6503
  %v6565 = vmul.f32 %v6145, %v6503
  %v6566 = vmul.f32 %v6150, %v6503
  %v6567 = vmul.f32 %v6153, %v6503
  %v6568 = vlaneseq
  %v6569 = vshrl.u32 %v6568, 7
  %v6570 = vsub.s32 1, %v6569
  %v6571 = vrot.slane %v6499, %v6570
  %v6572 = vadd.f32 %v6504, %v6571
  %v6573 = vadd.f32 %v6505, %v6571
  %v6574 = vadd.f32 %v6506, %v6571
  %v6575 = vadd.f32 %v6507, %v6571
  %v6576 = vadd.f32 %v6508, %v6571
  %v6577 = vadd.f32 %v6509, %v6571
  %v6578 = vadd.f32 %v6510, %v6571
  %v6579 = vadd.f32 %v6511, %v6571
  %v6580 = vadd.f32 %v6512, %v6571
  %v6581 = vadd.f32 %v6513, %v6571
  %v6582 = vadd.f32 %v6514, %v6571
  %v6583 = vadd.f32 %v6515, %v6571
  %v6584 = vadd.f32 %v6516, %v6571
  %v6585 = vadd.f32 %v6517, %v6571
  %v6586 = vadd.f32 %v6518, %v6571
  %v6587 = vadd.f32 %v6519, %v6571
  %v6588 = vadd.f32 %v6520, %v6571
  %v6589 = vadd.f32 %v6521, %v6571
  %v6590 = vadd.f32 %v6522, %v6571
  %v6591 = vadd.f32 %v6523, %v6571
  %v6592 = vadd.f32 %v6524, %v6571
  %v6593 = vadd.f32 %v6525, %v6571
  %v6594 = vadd.f32 %v6526, %v6571
  %v6595 = vadd.f32 %v6527, %v6571
  %v6596 = vadd.f32 %v6528, %v6571
  %v6597 = vadd.f32 %v6529, %v6571
  %v6598 = vadd.f32 %v6530, %v6571
  %v6599 = vadd.f32 %v6531, %v6571
  %v6600 = vadd.f32 %v6532, %v6571
  %v6601 = vadd.f32 %v6533, %v6571
  %v6602 = vadd.f32 %v6534, %v6571
  %v6603 = vadd.f32 %v6535, %v6571
  %v6604 = vadd.f32 %v6536, %v6571
  %v6605 = vadd.f32 %v6537, %v6571
  %v6606 = vadd.f32 %v6538, %v6571
  %v6607 = vadd.f32 %v6539, %v6571
  %v6608 = vadd.f32 %v6540, %v6571
  %v6609 = vadd.f32 %v6541, %v6571
  %v6610 = vadd.f32 %v6542, %v6571
  %v6611 = vadd.f32 %v6543, %v6571
  %v6612 = vadd.f32 %v6544, %v6571
  %v6613 = vadd.f32 %v6545, %v6571
  %v6614 = vadd.f32 %v6546, %v6571
  %v6615 = vadd.f32 %v6547, %v6571
  %v6616 = vadd.f32 %v6548, %v6571
  %v6617 = vadd.f32 %v6549, %v6571
  %v6618 = vadd.f32 %v6550, %v6571
  %v6619 = vadd.f32 %v6551, %v6571
  %v6620 = vadd.f32 %v6552, %v6571
  %v6621 = vadd.f32 %v6553, %v6571
  %v6622 = vadd.f32 %v6554, %v6571
  %v6623 = vadd.f32 %v6555, %v6571
  %v6624 = vadd.f32 %v6556, %v6571
  %v6625 = vadd.f32 %v6557, %v6571
  %v6626 = vadd.f32 %v6558, %v6571
  %v6627 = vadd.f32 %v6559, %v6571
  %v6628 = vadd.f32 %v6560, %v6571
  %v6629 = vadd.f32 %v6561, %v6571
  %v6630 = vadd.f32 %v6562, %v6571
  %v6631 = vadd.f32 %v6563, %v6571
  %v6632 = vadd.f32 %v6564, %v6571
  %v6633 = vadd.f32 %v6565, %v6571
  %v6634 = vadd.f32 %v6566, %v6571
  %v6635 = vadd.f32 %v6567, %v6571
  %v6636 = vadd.f32 %v5799, %v6572
  %v6637 = vadd.f32 %v5800, %v6573
  %v6638 = vadd.f32 %v5801, %v6574
  %v6639 = vadd.f32 %v5802, %v6575
  %v6640 = vadd.f32 %v5803, %v6576
  %v6641 = vadd.f32 %v5804, %v6577
  %v6642 = vadd.f32 %v5805, %v6578
  %v6643 = vadd.f32 %v5806, %v6579
  %v6644 = vadd.f32 %v5807, %v6580
  %v6645 = vadd.f32 %v5808, %v6581
  %v6646 = vadd.f32 %v5809, %v6582
  %v6647 = vadd.f32 %v5810, %v6583
  %v6648 = vadd.f32 %v5811, %v6584
  %v6649 = vadd.f32 %v5812, %v6585
  %v6650 = vadd.f32 %v5813, %v6586
  %v6651 = vadd.f32 %v5814, %v6587
  %v6652 = vadd.f32 %v5815, %v6588
  %v6653 = vadd.f32 %v5816, %v6589
  %v6654 = vadd.f32 %v5817, %v6590
  %v6655 = vadd.f32 %v5818, %v6591
  %v6656 = vadd.f32 %v5819, %v6592
  %v6657 = vadd.f32 %v5820, %v6593
  %v6658 = vadd.f32 %v5821, %v6594
  %v6659 = vadd.f32 %v5822, %v6595
  %v6660 = vadd.f32 %v5823, %v6596
  %v6661 = vadd.f32 %v5824, %v6597
  %v6662 = vadd.f32 %v5825, %v6598
  %v6663 = vadd.f32 %v5826, %v6599
  %v6664 = vadd.f32 %v5827, %v6600
  %v6665 = vadd.f32 %v5828, %v6601
  %v6666 = vadd.f32 %v5829, %v6602
  %v6667 = vadd.f32 %v5830, %v6603
  %v6668 = vadd.f32 %v5831, %v6604
  %v6669 = vadd.f32 %v5832, %v6605
  %v6670 = vadd.f32 %v5833, %v6606
  %v6671 = vadd.f32 %v5834, %v6607
  %v6672 = vadd.f32 %v5835, %v6608
  %v6673 = vadd.f32 %v5836, %v6609
  %v6674 = vadd.f32 %v5837, %v6610
  %v6675 = vadd.f32 %v5838, %v6611
  %v6676 = vadd.f32 %v5839, %v6612
  %v6677 = vadd.f32 %v5840, %v6613
  %v6678 = vadd.f32 %v5841, %v6614
  %v6679 = vadd.f32 %v5842, %v6615
  %v6680 = vadd.f32 %v5843, %v6616
  %v6681 = vadd.f32 %v5844, %v6617
  %v6682 = vadd.f32 %v5845, %v6618
  %v6683 = vadd.f32 %v5846, %v6619
  %v6684 = vadd.f32 %v5847, %v6620
  %v6685 = vadd.f32 %v5848, %v6621
  %v6686 = vadd.f32 %v5849, %v6622
  %v6687 = vadd.f32 %v5850, %v6623
  %v6688 = vadd.f32 %v5851, %v6624
  %v6689 = vadd.f32 %v5852, %v6625
  %v6690 = vadd.f32 %v5853, %v6626
  %v6691 = vadd.f32 %v5854, %v6627
  %v6692 = vadd.f32 %v5855, %v6628
  %v6693 = vadd.f32 %v5856, %v6629
  %v6694 = vadd.f32 %v5857, %v6630
  %v6695 = vadd.f32 %v5858, %v6631
  %v6696 = vadd.f32 %v5859, %v6632
  %v6697 = vadd.f32 %v5860, %v6633
  %v6698 = vadd.f32 %v5861, %v6634
  %v6699 = vadd.f32 %v5862, %v6635
  %v6700 = vmax.f32 %v6636, 0.0
  %v6701 = vmax.f32 %v6637, 0.0
  %v6702 = vmax.f32 %v6638, 0.0
  %v6703 = vmax.f32 %v6639, 0.0
  %v6704 = vmax.f32 %v6640, 0.0
  %v6705 = vmax.f32 %v6641, 0.0
  %v6706 = vmax.f32 %v6642, 0.0
  %v6707 = vmax.f32 %v6643, 0.0
  %v6708 = vmax.f32 %v6644, 0.0
  %v6709 = vmax.f32 %v6645, 0.0
  %v6710 = vmax.f32 %v6646, 0.0
  %v6711 = vmax.f32 %v6647, 0.0
  %v6712 = vmax.f32 %v6648, 0.0
  %v6713 = vmax.f32 %v6649, 0.0
  %v6714 = vmax.f32 %v6650, 0.0
  %v6715 = vmax.f32 %v6651, 0.0
  %v6716 = vmax.f32 %v6652, 0.0
  %v6717 = vmax.f32 %v6653, 0.0
  %v6718 = vmax.f32 %v6654, 0.0
  %v6719 = vmax.f32 %v6655, 0.0
  %v6720 = vmax.f32 %v6656, 0.0
  %v6721 = vmax.f32 %v6657, 0.0
  %v6722 = vmax.f32 %v6658, 0.0
  %v6723 = vmax.f32 %v6659, 0.0
  %v6724 = vmax.f32 %v6660, 0.0
  %v6725 = vmax.f32 %v6661, 0.0
  %v6726 = vmax.f32 %v6662, 0.0
  %v6727 = vmax.f32 %v6663, 0.0
  %v6728 = vmax.f32 %v6664, 0.0
  %v6729 = vmax.f32 %v6665, 0.0
  %v6730 = vmax.f32 %v6666, 0.0
  %v6731 = vmax.f32 %v6667, 0.0
  %v6732 = vmax.f32 %v6668, 0.0
  %v6733 = vmax.f32 %v6669, 0.0
  %v6734 = vmax.f32 %v6670, 0.0
  %v6735 = vmax.f32 %v6671, 0.0
  %v6736 = vmax.f32 %v6672, 0.0
  %v6737 = vmax.f32 %v6673, 0.0
  %v6738 = vmax.f32 %v6674, 0.0
  %v6739 = vmax.f32 %v6675, 0.0
  %v6740 = vmax.f32 %v6676, 0.0
  %v6741 = vmax.f32 %v6677, 0.0
  %v6742 = vmax.f32 %v6678, 0.0
  %v6743 = vmax.f32 %v6679, 0.0
  %v6744 = vmax.f32 %v6680, 0.0
  %v6745 = vmax.f32 %v6681, 0.0
  %v6746 = vmax.f32 %v6682, 0.0
  %v6747 = vmax.f32 %v6683, 0.0
  %v6748 = vmax.f32 %v6684, 0.0
  %v6749 = vmax.f32 %v6685, 0.0
  %v6750 = vmax.f32 %v6686, 0.0
  %v6751 = vmax.f32 %v6687, 0.0
  %v6752 = vmax.f32 %v6688, 0.0
  %v6753 = vmax.f32 %v6689, 0.0
  %v6754 = vmax.f32 %v6690, 0.0
  %v6755 = vmax.f32 %v6691, 0.0
  %v6756 = vmax.f32 %v6692, 0.0
  %v6757 = vmax.f32 %v6693, 0.0
  %v6758 = vmax.f32 %v6694, 0.0
  %v6759 = vmax.f32 %v6695, 0.0
  %v6760 = vmax.f32 %v6696, 0.0
  %v6761 = vmax.f32 %v6697, 0.0
  %v6762 = vmax.f32 %v6698, 0.0
  %v6763 = vmax.f32 %v6699, 0.0
  %6764 = vst.msk [vmem:[%s9] sm:$0xff] %vm3522, %v6700
  %6765 = vst.msk [vmem:[%s9 + $0x8] sm:$0xff] %vm3522, %v6701
  %6766 = vst.msk [vmem:[%s9 + $0x10] sm:$0xff] %vm3522, %v6702
  %6767 = vst.msk [vmem:[%s9 + $0x18] sm:$0xff] %vm3522, %v6703
  %6768 = vst.msk [vmem:[%s9 + $0x20] sm:$0xff] %vm3522, %v6704
  %6769 = vst.msk [vmem:[%s9 + $0x28] sm:$0xff] %vm3522, %v6705
  %6770 = vst.msk [vmem:[%s9 + $0x30] sm:$0xff] %vm3522, %v6706
  %6771 = vst.msk [vmem:[%s9 + $0x38] sm:$0xff] %vm3522, %v6707
  %6772 = vst.msk [vmem:[%s9 + $0x40] sm:$0xff] %vm3522, %v6708
  %6773 = vst.msk [vmem:[%s9 + $0x48] sm:$0xff] %vm3522, %v6709
  %6774 = vst.msk [vmem:[%s9 + $0x50] sm:$0xff] %vm3522, %v6710
  %6775 = vst.msk [vmem:[%s9 + $0x58] sm:$0xff] %vm3522, %v6711
  %6776 = vst.msk [vmem:[%s9 + $0x60] sm:$0xff] %vm3522, %v6712
  %6777 = vst.msk [vmem:[%s9 + $0x68] sm:$0xff] %vm3522, %v6713
  %6778 = vst.msk [vmem:[%s9 + $0x70] sm:$0xff] %vm3522, %v6714
  %6779 = vst.msk [vmem:[%s9 + $0x78] sm:$0xff] %vm3522, %v6715
  %6780 = vst.msk [vmem:[%s9 + $0x80] sm:$0xff] %vm3522, %v6716
  %6781 = vst.msk [vmem:[%s9 + $0x88] sm:$0xff] %vm3522, %v6717
  %6782 = vst.msk [vmem:[%s9 + $0x90] sm:$0xff] %vm3522, %v6718
  %6783 = vst.msk [vmem:[%s9 + $0x98] sm:$0xff] %vm3522, %v6719
  %6784 = vst.msk [vmem:[%s9 + $0xa0] sm:$0xff] %vm3522, %v6720
  %6785 = vst.msk [vmem:[%s9 + $0xa8] sm:$0xff] %vm3522, %v6721
  %6786 = vst.msk [vmem:[%s9 + $0xb0] sm:$0xff] %vm3522, %v6722
  %6787 = vst.msk [vmem:[%s9 + $0xb8] sm:$0xff] %vm3522, %v6723
  %6788 = vst.msk [vmem:[%s9 + $0xc0] sm:$0xff] %vm3522, %v6724
  %6789 = vst.msk [vmem:[%s9 + $0xc8] sm:$0xff] %vm3522, %v6725
  %6790 = vst.msk [vmem:[%s9 + $0xd0] sm:$0xff] %vm3522, %v6726
  %6791 = vst.msk [vmem:[%s9 + $0xd8] sm:$0xff] %vm3522, %v6727
  %6792 = vst.msk [vmem:[%s9 + $0xe0] sm:$0xff] %vm3522, %v6728
  %6793 = vst.msk [vmem:[%s9 + $0xe8] sm:$0xff] %vm3522, %v6729
  %6794 = vst.msk [vmem:[%s9 + $0xf0] sm:$0xff] %vm3522, %v6730
  %6795 = vst.msk [vmem:[%s9 + $0xf8] sm:$0xff] %vm3522, %v6731
  %6796 = vst.msk [vmem:[%s9 + $0x100] sm:$0xff] %vm3522, %v6732
  %6797 = vst.msk [vmem:[%s9 + $0x108] sm:$0xff] %vm3522, %v6733
  %6798 = vst.msk [vmem:[%s9 + $0x110] sm:$0xff] %vm3522, %v6734
  %6799 = vst.msk [vmem:[%s9 + $0x118] sm:$0xff] %vm3522, %v6735
  %6800 = vst.msk [vmem:[%s9 + $0x120] sm:$0xff] %vm3522, %v6736
  %6801 = vst.msk [vmem:[%s9 + $0x128] sm:$0xff] %vm3522, %v6737
  %6802 = vst.msk [vmem:[%s9 + $0x130] sm:$0xff] %vm3522, %v6738
  %6803 = vst.msk [vmem:[%s9 + $0x138] sm:$0xff] %vm3522, %v6739
  %6804 = vst.msk [vmem:[%s9 + $0x140] sm:$0xff] %vm3522, %v6740
  %6805 = vst.msk [vmem:[%s9 + $0x148] sm:$0xff] %vm3522, %v6741
  %6806 = vst.msk [vmem:[%s9 + $0x150] sm:$0xff] %vm3522, %v6742
  %6807 = vst.msk [vmem:[%s9 + $0x158] sm:$0xff] %vm3522, %v6743
  %6808 = vst.msk [vmem:[%s9 + $0x160] sm:$0xff] %vm3522, %v6744
  %6809 = vst.msk [vmem:[%s9 + $0x168] sm:$0xff] %vm3522, %v6745
  %6810 = vst.msk [vmem:[%s9 + $0x170] sm:$0xff] %vm3522, %v6746
  %6811 = vst.msk [vmem:[%s9 + $0x178] sm:$0xff] %vm3522, %v6747
  %6812 = vst.msk [vmem:[%s9 + $0x180] sm:$0xff] %vm3522, %v6748
  %6813 = vst.msk [vmem:[%s9 + $0x188] sm:$0xff] %vm3522, %v6749
  %6814 = vst.msk [vmem:[%s9 + $0x190] sm:$0xff] %vm3522, %v6750
  %6815 = vst.msk [vmem:[%s9 + $0x198] sm:$0xff] %vm3522, %v6751
  %6816 = vst.msk [vmem:[%s9 + $0x1a0] sm:$0xff] %vm3522, %v6752
  %6817 = vst.msk [vmem:[%s9 + $0x1a8] sm:$0xff] %vm3522, %v6753
  %6818 = vst.msk [vmem:[%s9 + $0x1b0] sm:$0xff] %vm3522, %v6754
  %6819 = vst.msk [vmem:[%s9 + $0x1b8] sm:$0xff] %vm3522, %v6755
  %6820 = vst.msk [vmem:[%s9 + $0x1c0] sm:$0xff] %vm3522, %v6756
  %6821 = vst.msk [vmem:[%s9 + $0x1c8] sm:$0xff] %vm3522, %v6757
  %6822 = vst.msk [vmem:[%s9 + $0x1d0] sm:$0xff] %vm3522, %v6758
  %6823 = vst.msk [vmem:[%s9 + $0x1d8] sm:$0xff] %vm3522, %v6759
  %6824 = vst.msk [vmem:[%s9 + $0x1e0] sm:$0xff] %vm3522, %v6760
  %6825 = vst.msk [vmem:[%s9 + $0x1e8] sm:$0xff] %vm3522, %v6761
  %6826 = vst.msk [vmem:[%s9 + $0x1f0] sm:$0xff] %vm3522, %v6762
  %6827 = vst.msk [vmem:[%s9 + $0x1f8] sm:$0xff] %vm3522, %v6763
  // Predicated region
  $region38: #{tpu_custom_call.1} parent=0 // pred_check
    _
  $region39: #{tpu_custom_call.1} parent=0 // pred_check_branch
    %6829 = sbr.rel (0) target = $region41
  $region40: #{tpu_custom_call.1} parent=0 // pred_region
    _
  $region41: #{tpu_custom_call.1} parent=0 // pred_fallthru
    _
  // Predicated region
  $region42: #{tpu_custom_call.1} parent=0 // pred_check
    _
  $region43: #{tpu_custom_call.1} parent=0 // pred_check_branch
    %6831 = sbr.rel (0) target = $region45
  $region44: #{tpu_custom_call.1} parent=0 // pred_region
    _
  $region45: #{tpu_custom_call.1} parent=0 // pred_fallthru
    _

</llo_original>
